<compile_context>
chip_gen: v7x
topology: tpu7x:2x2x1
jax: 0.10.0
libtpu: 0.0.40
codegen_flags: <defaults>
</compile_context>

<pallas_src>
import functools

import jax
import jax.numpy as jnp
import numpy as np
from jax.experimental import pallas as pl
from jax.experimental.pallas import tpu as pltpu


def _cbam_kernel(x_ref, w1t_ref, w2_ref, mask_ref, wsp_ref, out_ref, *, bt, width):
    # x_ref:    (Bt, C, HW) VMEM
    # w1t_ref:  (C, hid)    VMEM   (transpose of ChannelAttention.f1 weight)
    # w2_ref:   (C, hid)    VMEM   (ChannelAttention.f2 weight)
    # mask_ref: (49, HW)    VMEM   per-tap zero-padding validity masks (f32)
    # wsp_ref:  (98,)       SMEM   7x7x2 conv weights, index = c*49 + i*7 + j
    # out_ref:  (Bt, C, HW) VMEM
    hw = x_ref.shape[2]
    w1t = w1t_ref[...]                                   # (C, hid)
    w2 = w2_ref[...]                                     # (C, hid)

    for bi in range(bt):
        x = x_ref[bi]                                    # (C, HW) f32

        # ---- channel attention: tiny MLP on the VPU (no MXU round trip) ----
        avg = jnp.mean(x, axis=1, keepdims=True)         # (C, 1)
        mx = jnp.max(x, axis=1, keepdims=True)           # (C, 1)
        h_a = jnp.sum(w1t * avg, axis=0, keepdims=True)  # (1, hid)
        h_m = jnp.sum(w1t * mx, axis=0, keepdims=True)   # (1, hid)
        h_a = h_a * jax.nn.sigmoid(h_a)                  # SiLU
        h_m = h_m * jax.nn.sigmoid(h_m)
        y_a = jnp.sum(w2 * h_a, axis=1, keepdims=True)   # (C, 1)
        y_m = jnp.sum(w2 * h_m, axis=1, keepdims=True)   # (C, 1)
        ca = jax.nn.sigmoid(y_a + y_m)                   # (C, 1)
        out1 = x * ca                                    # (C, HW)

        # ---- spatial attention, fully in flat lane-dense layout ------------
        fmean = jnp.mean(out1, axis=0, keepdims=True)    # (1, HW)
        fmax = jnp.max(out1, axis=0, keepdims=True)      # (1, HW)
        feat = jnp.concatenate([fmean, fmax], axis=0)    # (2, HW)
        feat2 = jnp.concatenate([feat, feat], axis=1)    # (2, 2*HW): cyclic view

        acc = jnp.zeros((1, hw), jnp.float32)
        for i in range(7):
            for j in range(7):
                k = i * 7 + j
                d = ((i - 3) * width + (j - 3)) % hw
                win = feat2[:, d:d + hw]                 # feat[:, (n + d) mod HW]
                tap = (wsp_ref[k] * win[0:1, :] +
                       wsp_ref[49 + k] * win[1:2, :])    # (1, HW)
                acc = acc + mask_ref[k:k + 1, :] * tap   # zero-padding via mask
        sa = jax.nn.sigmoid(acc)                         # (1, HW)

        # lane-dense epilogue store (HW on lanes, unmasked vst)
        out_ref[bi] = (out1 * sa).astype(out_ref.dtype)


def _conv_masks(H, W):
    """(49, H*W) f32 validity masks implementing zero-padding of the 7x7 conv."""
    n = np.arange(H * W)
    row = n // W
    col = n % W
    m = np.zeros((49, H * W), np.float32)
    for i in range(7):
        for j in range(7):
            valid = ((row + i - 3 >= 0) & (row + i - 3 < H) &
                     (col + j - 3 >= 0) & (col + j - 3 < W))
            m[i * 7 + j] = valid.astype(np.float32)
    return jnp.asarray(m)


def _pick_batch_tile(B, C, HW, target_bytes=512 * 1024, max_bt=4):
    """Batch tile: amortize per-grid-step overhead, stay well under scoped VMEM
    (budget fits v5e's 16 MiB / v7x's 32 MiB defaults with double buffering)."""
    per_batch = C * HW * 4
    bt = max(1, min(B, max_bt, max(1, target_bytes // max(per_batch, 1))))
    while B % bt != 0:
        bt -= 1
    return bt


def cbam_forward(x, w1, w2, wsp):
    """x: (B,C,H,W) f32; w1: (C//r, C) = f1 weight; w2: (C, C//r) = f2 weight;
    wsp: (2,7,7) = SpatialAttention conv weight."""
    B, C, H, W = x.shape
    HW = H * W
    hid = w1.shape[0]

    x2 = x.reshape(B, C, HW).astype(jnp.float32)
    w1t = jnp.asarray(w1, jnp.float32).T                 # (C, hid)
    w2f = jnp.asarray(w2, jnp.float32)                   # (C, hid)
    wspf = jnp.asarray(wsp, jnp.float32).reshape(-1)     # (98,), c*49 + i*7 + j
    masks = _conv_masks(H, W)                            # (49, HW)

    bt = _pick_batch_tile(B, C, HW)
    kernel = functools.partial(_cbam_kernel, bt=bt, width=W)

    out = pl.pallas_call(
        kernel,
        out_shape=jax.ShapeDtypeStruct((B, C, HW), jnp.float32),
        grid=(B // bt,),
        in_specs=[pl.BlockSpec((bt, C, HW), lambda b: (b, 0, 0)),
                  pl.BlockSpec((C, hid), lambda b: (0, 0)),
                  pl.BlockSpec((C, hid), lambda b: (0, 0)),
                  pl.BlockSpec((49, HW), lambda b: (0, 0)),
                  pl.BlockSpec(memory_space=pltpu.MemorySpace.SMEM)],
        out_specs=pl.BlockSpec((bt, C, HW), lambda b: (b, 0, 0)),
        compiler_params=pltpu.CompilerParams(
            dimension_semantics=("parallel",)),   # batch axis -> both TCs on v7x
    )(x2, w1t, w2f, masks, wspf)
    return out.reshape(B, C, H, W).astype(x.dtype)


def cbam_reference(x, w1, w2, wsp):
    """Pure-JAX reference mirroring the PyTorch forward (for validation)."""
    avg = x.mean(axis=(2, 3))          # (B, C)
    mx = x.max(axis=(2, 3))            # (B, C)

    def mlp(p):
        h = p @ w1.T
        h = h * jax.nn.sigmoid(h)      # SiLU
        return h @ w2.T

    ca = jax.nn.sigmoid(mlp(avg) + mlp(mx))[:, :, None, None]
    out1 = ca * x
    feat = jnp.stack([out1.mean(axis=1), out1.max(axis=1)], axis=1)  # (B,2,H,W)
    sa = jax.lax.conv_general_dilated(
        feat, wsp[None].astype(jnp.float32), (1, 1), [(3, 3), (3, 3)],
        dimension_numbers=("NCHW", "OIHW", "NCHW"))
    sa = jax.nn.sigmoid(sa)
    return sa * out1


if __name__ == "__main__":
    B, C, H, W = 2, 32, 16, 16
    ratio = 16
    hid = C // ratio

    key = jax.random.PRNGKey(0)
    kx, k1, k2, k3 = jax.random.split(key, 4)
    x = jax.random.normal(kx, (B, C, H, W), jnp.float32)
    w1 = jax.random.normal(k1, (hid, C), jnp.float32) * 0.1    # ChannelAttention.f1
    w2 = jax.random.normal(k2, (C, hid), jnp.float32) * 0.1    # ChannelAttention.f2
    wsp = jax.random.normal(k3, (2, 7, 7), jnp.float32) * 0.1  # SpatialAttention.conv

    out = jax.block_until_ready(cbam_forward(x, w1, w2, wsp))
    ref = jax.block_until_ready(cbam_reference(x, w1, w2, wsp))
    assert out.shape == (B, C, H, W)
    assert jnp.allclose(out, ref, atol=1e-4, rtol=1e-4), "mismatch vs reference"
    print("KERNEL_OK")
</pallas_src>

<mosaic_0001>
module attributes {stable_mosaic.version = 11 : i64} {
  func.func @_cbam_kernel(%arg0: i32, %arg1: memref<2x32x256xf32, #tpu.memory_space<vmem>>, %arg2: memref<32x2xf32, #tpu.memory_space<vmem>>, %arg3: memref<32x2xf32, #tpu.memory_space<vmem>>, %arg4: memref<49x256xf32, #tpu.memory_space<vmem>>, %arg5: memref<98xf32, #tpu.memory_space<smem>>, %arg6: memref<2x32x256xf32, #tpu.memory_space<vmem>>) attributes {dimension_semantics = [#tpu.dimension_semantics<parallel>], iteration_bounds = array<i64: 1>, scalar_prefetch = 0 : i64, scratch_operands = 0 : i64, tpu.core_type = #tpu.core_type<tc>, window_params = [{transform_indices = @transform_0, window_bounds = array<i64: 2, 32, 256>}, {pipeline_mode = #tpu.pipeline_mode<synchronous>, transform_indices = @transform_1, window_bounds = array<i64: 32, 2>}, {pipeline_mode = #tpu.pipeline_mode<synchronous>, transform_indices = @transform_2, window_bounds = array<i64: 32, 2>}, {pipeline_mode = #tpu.pipeline_mode<synchronous>, transform_indices = @transform_3, window_bounds = array<i64: 49, 256>}, {transform_indices = @transform_4, window_bounds = array<i64: 98>}, {transform_indices = @transform_5, window_bounds = array<i64: 2, 32, 256>}]} {
    %c0 = arith.constant 0 : index
    %c0_0 = arith.constant 0 : index
    %0 = vector.load %arg2[%c0, %c0_0] : memref<32x2xf32, #tpu.memory_space<vmem>>, vector<32x2xf32>
    %c0_1 = arith.constant 0 : index
    %c0_2 = arith.constant 0 : index
    %1 = vector.load %arg3[%c0_1, %c0_2] : memref<32x2xf32, #tpu.memory_space<vmem>>, vector<32x2xf32>
    %c0_3 = arith.constant 0 : index
    %c0_4 = arith.constant 0 : index
    %c0_5 = arith.constant 0 : index
    %2 = vector.load %arg1[%c0_3, %c0_4, %c0_5] : memref<2x32x256xf32, #tpu.memory_space<vmem>>, vector<1x32x256xf32>
    %3 = vector.shape_cast %2 : vector<1x32x256xf32> to vector<32x256xf32>
    %cst = arith.constant dense<0.000000e+00> : vector<32xf32>
    %4 = vector.multi_reduction <add>, %3, %cst [1] : vector<32x256xf32> to vector<32xf32>
    %5 = vector.shape_cast %4 : vector<32xf32> to vector<32x1xf32>
    %cst_6 = arith.constant 2.560000e+02 : f32
    %6 = vector.broadcast %cst_6 : f32 to vector<32x1xf32>
    %7 = arith.divf %5, %6 : vector<32x1xf32>
    %cst_7 = arith.constant dense<0xFF800000> : vector<32xf32>
    %8 = vector.multi_reduction <maximumf>, %3, %cst_7 [1] : vector<32x256xf32> to vector<32xf32>
    %9 = vector.shape_cast %8 : vector<32xf32> to vector<32x1xf32>
    %10 = vector.broadcast %7 : vector<32x1xf32> to vector<32x2xf32>
    %11 = arith.mulf %0, %10 : vector<32x2xf32>
    %cst_8 = arith.constant dense<0.000000e+00> : vector<2xf32>
    %12 = vector.multi_reduction <add>, %11, %cst_8 [0] : vector<32x2xf32> to vector<2xf32>
    %13 = vector.shape_cast %12 : vector<2xf32> to vector<1x2xf32>
    %14 = vector.broadcast %9 : vector<32x1xf32> to vector<32x2xf32>
    %15 = arith.mulf %0, %14 : vector<32x2xf32>
    %cst_9 = arith.constant dense<0.000000e+00> : vector<2xf32>
    %16 = vector.multi_reduction <add>, %15, %cst_9 [0] : vector<32x2xf32> to vector<2xf32>
    %17 = vector.shape_cast %16 : vector<2xf32> to vector<1x2xf32>
    %18 = arith.negf %13 : vector<1x2xf32>
    %19 = math.exp %18 : vector<1x2xf32>
    %cst_10 = arith.constant 1.000000e+00 : f32
    %20 = vector.broadcast %cst_10 : f32 to vector<1x2xf32>
    %21 = arith.addf %20, %19 : vector<1x2xf32>
    %22 = arith.divf %20, %21 : vector<1x2xf32>
    %23 = arith.mulf %13, %22 : vector<1x2xf32>
    %24 = arith.negf %17 : vector<1x2xf32>
    %25 = math.exp %24 : vector<1x2xf32>
    %cst_11 = arith.constant 1.000000e+00 : f32
    %26 = vector.broadcast %cst_11 : f32 to vector<1x2xf32>
    %27 = arith.addf %26, %25 : vector<1x2xf32>
    %28 = arith.divf %26, %27 : vector<1x2xf32>
    %29 = arith.mulf %17, %28 : vector<1x2xf32>
    %30 = vector.broadcast %23 : vector<1x2xf32> to vector<32x2xf32>
    %31 = arith.mulf %1, %30 : vector<32x2xf32>
    %cst_12 = arith.constant dense<0.000000e+00> : vector<32xf32>
    %32 = vector.multi_reduction <add>, %31, %cst_12 [1] : vector<32x2xf32> to vector<32xf32>
    %33 = vector.shape_cast %32 : vector<32xf32> to vector<32x1xf32>
    %34 = vector.broadcast %29 : vector<1x2xf32> to vector<32x2xf32>
    %35 = arith.mulf %1, %34 : vector<32x2xf32>
    %cst_13 = arith.constant dense<0.000000e+00> : vector<32xf32>
    %36 = vector.multi_reduction <add>, %35, %cst_13 [1] : vector<32x2xf32> to vector<32xf32>
    %37 = vector.shape_cast %36 : vector<32xf32> to vector<32x1xf32>
    %38 = arith.addf %33, %37 : vector<32x1xf32>
    %39 = arith.negf %38 : vector<32x1xf32>
    %40 = math.exp %39 : vector<32x1xf32>
    %cst_14 = arith.constant 1.000000e+00 : f32
    %41 = vector.broadcast %cst_14 : f32 to vector<32x1xf32>
    %42 = arith.addf %41, %40 : vector<32x1xf32>
    %43 = arith.divf %41, %42 : vector<32x1xf32>
    %44 = vector.broadcast %43 : vector<32x1xf32> to vector<32x256xf32>
    %45 = arith.mulf %3, %44 : vector<32x256xf32>
    %cst_15 = arith.constant dense<0.000000e+00> : vector<256xf32>
    %46 = vector.multi_reduction <add>, %45, %cst_15 [0] : vector<32x256xf32> to vector<256xf32>
    %47 = vector.shape_cast %46 : vector<256xf32> to vector<1x256xf32>
    %cst_16 = arith.constant 3.200000e+01 : f32
    %48 = vector.broadcast %cst_16 : f32 to vector<1x256xf32>
    %49 = arith.divf %47, %48 : vector<1x256xf32>
    %cst_17 = arith.constant dense<0xFF800000> : vector<256xf32>
    %50 = vector.multi_reduction <maximumf>, %45, %cst_17 [0] : vector<32x256xf32> to vector<256xf32>
    %51 = vector.shape_cast %50 : vector<256xf32> to vector<1x256xf32>
    %52 = tpu.concatenate %49, %51 in 0 : vector<1x256xf32>, vector<1x256xf32> -> vector<2x256xf32>
    %53 = tpu.concatenate %52, %52 in 1 : vector<2x256xf32>, vector<2x256xf32> -> vector<2x512xf32>
    %cst_18 = arith.constant 0.000000e+00 : f32
    %54 = vector.broadcast %cst_18 : f32 to vector<1x256xf32>
    %55 = vector.extract_strided_slice %53 {offsets = [0, 205], sizes = [2, 256], strides = [1, 1]} : vector<2x512xf32> to vector<2x256xf32>
    %c0_19 = arith.constant 0 : index
    %56 = memref.load %arg5[%c0_19] : memref<98xf32, #tpu.memory_space<smem>>
    %57 = vector.extract_strided_slice %55 {offsets = [0, 0], sizes = [1, 256], strides = [1, 1]} : vector<2x256xf32> to vector<1x256xf32>
    %58 = vector.broadcast %56 : f32 to vector<1x256xf32>
    %59 = arith.mulf %58, %57 : vector<1x256xf32>
    %c49 = arith.constant 49 : index
    %60 = memref.load %arg5[%c49] : memref<98xf32, #tpu.memory_space<smem>>
    %61 = vector.extract_strided_slice %55 {offsets = [1, 0], sizes = [1, 256], strides = [1, 1]} : vector<2x256xf32> to vector<1x256xf32>
    %62 = vector.broadcast %60 : f32 to vector<1x256xf32>
    %63 = arith.mulf %62, %61 : vector<1x256xf32>
    %64 = arith.addf %59, %63 : vector<1x256xf32>
    %c0_20 = arith.constant 0 : index
    %c0_21 = arith.constant 0 : index
    %65 = vector.load %arg4[%c0_20, %c0_21] : memref<49x256xf32, #tpu.memory_space<vmem>>, vector<1x256xf32>
    %66 = arith.mulf %65, %64 : vector<1x256xf32>
    %67 = arith.addf %54, %66 : vector<1x256xf32>
    %68 = vector.extract_strided_slice %53 {offsets = [0, 206], sizes = [2, 256], strides = [1, 1]} : vector<2x512xf32> to vector<2x256xf32>
    %c1 = arith.constant 1 : index
    %69 = memref.load %arg5[%c1] : memref<98xf32, #tpu.memory_space<smem>>
    %70 = vector.extract_strided_slice %68 {offsets = [0, 0], sizes = [1, 256], strides = [1, 1]} : vector<2x256xf32> to vector<1x256xf32>
    %71 = vector.broadcast %69 : f32 to vector<1x256xf32>
    %72 = arith.mulf %71, %70 : vector<1x256xf32>
    %c50 = arith.constant 50 : index
    %73 = memref.load %arg5[%c50] : memref<98xf32, #tpu.memory_space<smem>>
    %74 = vector.extract_strided_slice %68 {offsets = [1, 0], sizes = [1, 256], strides = [1, 1]} : vector<2x256xf32> to vector<1x256xf32>
    %75 = vector.broadcast %73 : f32 to vector<1x256xf32>
    %76 = arith.mulf %75, %74 : vector<1x256xf32>
    %77 = arith.addf %72, %76 : vector<1x256xf32>
    %c1_22 = arith.constant 1 : index
    %c0_23 = arith.constant 0 : index
    %78 = vector.load %arg4[%c1_22, %c0_23] : memref<49x256xf32, #tpu.memory_space<vmem>>, vector<1x256xf32>
    %79 = arith.mulf %78, %77 : vector<1x256xf32>
    %80 = arith.addf %67, %79 : vector<1x256xf32>
    %81 = vector.extract_strided_slice %53 {offsets = [0, 207], sizes = [2, 256], strides = [1, 1]} : vector<2x512xf32> to vector<2x256xf32>
    %c2 = arith.constant 2 : index
    %82 = memref.load %arg5[%c2] : memref<98xf32, #tpu.memory_space<smem>>
    %83 = vector.extract_strided_slice %81 {offsets = [0, 0], sizes = [1, 256], strides = [1, 1]} : vector<2x256xf32> to vector<1x256xf32>
    %84 = vector.broadcast %82 : f32 to vector<1x256xf32>
    %85 = arith.mulf %84, %83 : vector<1x256xf32>
    %c51 = arith.constant 51 : index
    %86 = memref.load %arg5[%c51] : memref<98xf32, #tpu.memory_space<smem>>
    %87 = vector.extract_strided_slice %81 {offsets = [1, 0], sizes = [1, 256], strides = [1, 1]} : vector<2x256xf32> to vector<1x256xf32>
    %88 = vector.broadcast %86 : f32 to vector<1x256xf32>
    %89 = arith.mulf %88, %87 : vector<1x256xf32>
    %90 = arith.addf %85, %89 : vector<1x256xf32>
    %c2_24 = arith.constant 2 : index
    %c0_25 = arith.constant 0 : index
    %91 = vector.load %arg4[%c2_24, %c0_25] : memref<49x256xf32, #tpu.memory_space<vmem>>, vector<1x256xf32>
    %92 = arith.mulf %91, %90 : vector<1x256xf32>
    %93 = arith.addf %80, %92 : vector<1x256xf32>
    %94 = vector.extract_strided_slice %53 {offsets = [0, 208], sizes = [2, 256], strides = [1, 1]} : vector<2x512xf32> to vector<2x256xf32>
    %c3 = arith.constant 3 : index
    %95 = memref.load %arg5[%c3] : memref<98xf32, #tpu.memory_space<smem>>
    %96 = vector.extract_strided_slice %94 {offsets = [0, 0], sizes = [1, 256], strides = [1, 1]} : vector<2x256xf32> to vector<1x256xf32>
    %97 = vector.broadcast %95 : f32 to vector<1x256xf32>
    %98 = arith.mulf %97, %96 : vector<1x256xf32>
    %c52 = arith.constant 52 : index
    %99 = memref.load %arg5[%c52] : memref<98xf32, #tpu.memory_space<smem>>
    %100 = vector.extract_strided_slice %94 {offsets = [1, 0], sizes = [1, 256], strides = [1, 1]} : vector<2x256xf32> to vector<1x256xf32>
    %101 = vector.broadcast %99 : f32 to vector<1x256xf32>
    %102 = arith.mulf %101, %100 : vector<1x256xf32>
    %103 = arith.addf %98, %102 : vector<1x256xf32>
    %c3_26 = arith.constant 3 : index
    %c0_27 = arith.constant 0 : index
    %104 = vector.load %arg4[%c3_26, %c0_27] : memref<49x256xf32, #tpu.memory_space<vmem>>, vector<1x256xf32>
    %105 = arith.mulf %104, %103 : vector<1x256xf32>
    %106 = arith.addf %93, %105 : vector<1x256xf32>
    %107 = vector.extract_strided_slice %53 {offsets = [0, 209], sizes = [2, 256], strides = [1, 1]} : vector<2x512xf32> to vector<2x256xf32>
    %c4 = arith.constant 4 : index
    %108 = memref.load %arg5[%c4] : memref<98xf32, #tpu.memory_space<smem>>
    %109 = vector.extract_strided_slice %107 {offsets = [0, 0], sizes = [1, 256], strides = [1, 1]} : vector<2x256xf32> to vector<1x256xf32>
    %110 = vector.broadcast %108 : f32 to vector<1x256xf32>
    %111 = arith.mulf %110, %109 : vector<1x256xf32>
    %c53 = arith.constant 53 : index
    %112 = memref.load %arg5[%c53] : memref<98xf32, #tpu.memory_space<smem>>
    %113 = vector.extract_strided_slice %107 {offsets = [1, 0], sizes = [1, 256], strides = [1, 1]} : vector<2x256xf32> to vector<1x256xf32>
    %114 = vector.broadcast %112 : f32 to vector<1x256xf32>
    %115 = arith.mulf %114, %113 : vector<1x256xf32>
    %116 = arith.addf %111, %115 : vector<1x256xf32>
    %c4_28 = arith.constant 4 : index
    %c0_29 = arith.constant 0 : index
    %117 = vector.load %arg4[%c4_28, %c0_29] : memref<49x256xf32, #tpu.memory_space<vmem>>, vector<1x256xf32>
    %118 = arith.mulf %117, %116 : vector<1x256xf32>
    %119 = arith.addf %106, %118 : vector<1x256xf32>
    %120 = vector.extract_strided_slice %53 {offsets = [0, 210], sizes = [2, 256], strides = [1, 1]} : vector<2x512xf32> to vector<2x256xf32>
    %c5 = arith.constant 5 : index
    %121 = memref.load %arg5[%c5] : memref<98xf32, #tpu.memory_space<smem>>
    %122 = vector.extract_strided_slice %120 {offsets = [0, 0], sizes = [1, 256], strides = [1, 1]} : vector<2x256xf32> to vector<1x256xf32>
    %123 = vector.broadcast %121 : f32 to vector<1x256xf32>
    %124 = arith.mulf %123, %122 : vector<1x256xf32>
    %c54 = arith.constant 54 : index
    %125 = memref.load %arg5[%c54] : memref<98xf32, #tpu.memory_space<smem>>
    %126 = vector.extract_strided_slice %120 {offsets = [1, 0], sizes = [1, 256], strides = [1, 1]} : vector<2x256xf32> to vector<1x256xf32>
    %127 = vector.broadcast %125 : f32 to vector<1x256xf32>
    %128 = arith.mulf %127, %126 : vector<1x256xf32>
    %129 = arith.addf %124, %128 : vector<1x256xf32>
    %c5_30 = arith.constant 5 : index
    %c0_31 = arith.constant 0 : index
    %130 = vector.load %arg4[%c5_30, %c0_31] : memref<49x256xf32, #tpu.memory_space<vmem>>, vector<1x256xf32>
    %131 = arith.mulf %130, %129 : vector<1x256xf32>
    %132 = arith.addf %119, %131 : vector<1x256xf32>
    %133 = vector.extract_strided_slice %53 {offsets = [0, 211], sizes = [2, 256], strides = [1, 1]} : vector<2x512xf32> to vector<2x256xf32>
    %c6 = arith.constant 6 : index
    %134 = memref.load %arg5[%c6] : memref<98xf32, #tpu.memory_space<smem>>
    %135 = vector.extract_strided_slice %133 {offsets = [0, 0], sizes = [1, 256], strides = [1, 1]} : vector<2x256xf32> to vector<1x256xf32>
    %136 = vector.broadcast %134 : f32 to vector<1x256xf32>
    %137 = arith.mulf %136, %135 : vector<1x256xf32>
    %c55 = arith.constant 55 : index
    %138 = memref.load %arg5[%c55] : memref<98xf32, #tpu.memory_space<smem>>
    %139 = vector.extract_strided_slice %133 {offsets = [1, 0], sizes = [1, 256], strides = [1, 1]} : vector<2x256xf32> to vector<1x256xf32>
    %140 = vector.broadcast %138 : f32 to vector<1x256xf32>
    %141 = arith.mulf %140, %139 : vector<1x256xf32>
    %142 = arith.addf %137, %141 : vector<1x256xf32>
    %c6_32 = arith.constant 6 : index
    %c0_33 = arith.constant 0 : index
    %143 = vector.load %arg4[%c6_32, %c0_33] : memref<49x256xf32, #tpu.memory_space<vmem>>, vector<1x256xf32>
    %144 = arith.mulf %143, %142 : vector<1x256xf32>
    %145 = arith.addf %132, %144 : vector<1x256xf32>
    %146 = vector.extract_strided_slice %53 {offsets = [0, 221], sizes = [2, 256], strides = [1, 1]} : vector<2x512xf32> to vector<2x256xf32>
    %c7 = arith.constant 7 : index
    %147 = memref.load %arg5[%c7] : memref<98xf32, #tpu.memory_space<smem>>
    %148 = vector.extract_strided_slice %146 {offsets = [0, 0], sizes = [1, 256], strides = [1, 1]} : vector<2x256xf32> to vector<1x256xf32>
    %149 = vector.broadcast %147 : f32 to vector<1x256xf32>
    %150 = arith.mulf %149, %148 : vector<1x256xf32>
    %c56 = arith.constant 56 : index
    %151 = memref.load %arg5[%c56] : memref<98xf32, #tpu.memory_space<smem>>
    %152 = vector.extract_strided_slice %146 {offsets = [1, 0], sizes = [1, 256], strides = [1, 1]} : vector<2x256xf32> to vector<1x256xf32>
    %153 = vector.broadcast %151 : f32 to vector<1x256xf32>
    %154 = arith.mulf %153, %152 : vector<1x256xf32>
    %155 = arith.addf %150, %154 : vector<1x256xf32>
    %c7_34 = arith.constant 7 : index
    %c0_35 = arith.constant 0 : index
    %156 = vector.load %arg4[%c7_34, %c0_35] : memref<49x256xf32, #tpu.memory_space<vmem>>, vector<1x256xf32>
    %157 = arith.mulf %156, %155 : vector<1x256xf32>
    %158 = arith.addf %145, %157 : vector<1x256xf32>
    %159 = vector.extract_strided_slice %53 {offsets = [0, 222], sizes = [2, 256], strides = [1, 1]} : vector<2x512xf32> to vector<2x256xf32>
    %c8 = arith.constant 8 : index
    %160 = memref.load %arg5[%c8] : memref<98xf32, #tpu.memory_space<smem>>
    %161 = vector.extract_strided_slice %159 {offsets = [0, 0], sizes = [1, 256], strides = [1, 1]} : vector<2x256xf32> to vector<1x256xf32>
    %162 = vector.broadcast %160 : f32 to vector<1x256xf32>
    %163 = arith.mulf %162, %161 : vector<1x256xf32>
    %c57 = arith.constant 57 : index
    %164 = memref.load %arg5[%c57] : memref<98xf32, #tpu.memory_space<smem>>
    %165 = vector.extract_strided_slice %159 {offsets = [1, 0], sizes = [1, 256], strides = [1, 1]} : vector<2x256xf32> to vector<1x256xf32>
    %166 = vector.broadcast %164 : f32 to vector<1x256xf32>
    %167 = arith.mulf %166, %165 : vector<1x256xf32>
    %168 = arith.addf %163, %167 : vector<1x256xf32>
    %c8_36 = arith.constant 8 : index
    %c0_37 = arith.constant 0 : index
    %169 = vector.load %arg4[%c8_36, %c0_37] : memref<49x256xf32, #tpu.memory_space<vmem>>, vector<1x256xf32>
    %170 = arith.mulf %169, %168 : vector<1x256xf32>
    %171 = arith.addf %158, %170 : vector<1x256xf32>
    %172 = vector.extract_strided_slice %53 {offsets = [0, 223], sizes = [2, 256], strides = [1, 1]} : vector<2x512xf32> to vector<2x256xf32>
    %c9 = arith.constant 9 : index
    %173 = memref.load %arg5[%c9] : memref<98xf32, #tpu.memory_space<smem>>
    %174 = vector.extract_strided_slice %172 {offsets = [0, 0], sizes = [1, 256], strides = [1, 1]} : vector<2x256xf32> to vector<1x256xf32>
    %175 = vector.broadcast %173 : f32 to vector<1x256xf32>
    %176 = arith.mulf %175, %174 : vector<1x256xf32>
    %c58 = arith.constant 58 : index
    %177 = memref.load %arg5[%c58] : memref<98xf32, #tpu.memory_space<smem>>
    %178 = vector.extract_strided_slice %172 {offsets = [1, 0], sizes = [1, 256], strides = [1, 1]} : vector<2x256xf32> to vector<1x256xf32>
    %179 = vector.broadcast %177 : f32 to vector<1x256xf32>
    %180 = arith.mulf %179, %178 : vector<1x256xf32>
    %181 = arith.addf %176, %180 : vector<1x256xf32>
    %c9_38 = arith.constant 9 : index
    %c0_39 = arith.constant 0 : index
    %182 = vector.load %arg4[%c9_38, %c0_39] : memref<49x256xf32, #tpu.memory_space<vmem>>, vector<1x256xf32>
    %183 = arith.mulf %182, %181 : vector<1x256xf32>
    %184 = arith.addf %171, %183 : vector<1x256xf32>
    %185 = vector.extract_strided_slice %53 {offsets = [0, 224], sizes = [2, 256], strides = [1, 1]} : vector<2x512xf32> to vector<2x256xf32>
    %c10 = arith.constant 10 : index
    %186 = memref.load %arg5[%c10] : memref<98xf32, #tpu.memory_space<smem>>
    %187 = vector.extract_strided_slice %185 {offsets = [0, 0], sizes = [1, 256], strides = [1, 1]} : vector<2x256xf32> to vector<1x256xf32>
    %188 = vector.broadcast %186 : f32 to vector<1x256xf32>
    %189 = arith.mulf %188, %187 : vector<1x256xf32>
    %c59 = arith.constant 59 : index
    %190 = memref.load %arg5[%c59] : memref<98xf32, #tpu.memory_space<smem>>
    %191 = vector.extract_strided_slice %185 {offsets = [1, 0], sizes = [1, 256], strides = [1, 1]} : vector<2x256xf32> to vector<1x256xf32>
    %192 = vector.broadcast %190 : f32 to vector<1x256xf32>
    %193 = arith.mulf %192, %191 : vector<1x256xf32>
    %194 = arith.addf %189, %193 : vector<1x256xf32>
    %c10_40 = arith.constant 10 : index
    %c0_41 = arith.constant 0 : index
    %195 = vector.load %arg4[%c10_40, %c0_41] : memref<49x256xf32, #tpu.memory_space<vmem>>, vector<1x256xf32>
    %196 = arith.mulf %195, %194 : vector<1x256xf32>
    %197 = arith.addf %184, %196 : vector<1x256xf32>
    %198 = vector.extract_strided_slice %53 {offsets = [0, 225], sizes = [2, 256], strides = [1, 1]} : vector<2x512xf32> to vector<2x256xf32>
    %c11 = arith.constant 11 : index
    %199 = memref.load %arg5[%c11] : memref<98xf32, #tpu.memory_space<smem>>
    %200 = vector.extract_strided_slice %198 {offsets = [0, 0], sizes = [1, 256], strides = [1, 1]} : vector<2x256xf32> to vector<1x256xf32>
    %201 = vector.broadcast %199 : f32 to vector<1x256xf32>
    %202 = arith.mulf %201, %200 : vector<1x256xf32>
    %c60 = arith.constant 60 : index
    %203 = memref.load %arg5[%c60] : memref<98xf32, #tpu.memory_space<smem>>
    %204 = vector.extract_strided_slice %198 {offsets = [1, 0], sizes = [1, 256], strides = [1, 1]} : vector<2x256xf32> to vector<1x256xf32>
    %205 = vector.broadcast %203 : f32 to vector<1x256xf32>
    %206 = arith.mulf %205, %204 : vector<1x256xf32>
    %207 = arith.addf %202, %206 : vector<1x256xf32>
    %c11_42 = arith.constant 11 : index
    %c0_43 = arith.constant 0 : index
    %208 = vector.load %arg4[%c11_42, %c0_43] : memref<49x256xf32, #tpu.memory_space<vmem>>, vector<1x256xf32>
    %209 = arith.mulf %208, %207 : vector<1x256xf32>
    %210 = arith.addf %197, %209 : vector<1x256xf32>
    %211 = vector.extract_strided_slice %53 {offsets = [0, 226], sizes = [2, 256], strides = [1, 1]} : vector<2x512xf32> to vector<2x256xf32>
    %c12 = arith.constant 12 : index
    %212 = memref.load %arg5[%c12] : memref<98xf32, #tpu.memory_space<smem>>
    %213 = vector.extract_strided_slice %211 {offsets = [0, 0], sizes = [1, 256], strides = [1, 1]} : vector<2x256xf32> to vector<1x256xf32>
    %214 = vector.broadcast %212 : f32 to vector<1x256xf32>
    %215 = arith.mulf %214, %213 : vector<1x256xf32>
    %c61 = arith.constant 61 : index
    %216 = memref.load %arg5[%c61] : memref<98xf32, #tpu.memory_space<smem>>
    %217 = vector.extract_strided_slice %211 {offsets = [1, 0], sizes = [1, 256], strides = [1, 1]} : vector<2x256xf32> to vector<1x256xf32>
    %218 = vector.broadcast %216 : f32 to vector<1x256xf32>
    %219 = arith.mulf %218, %217 : vector<1x256xf32>
    %220 = arith.addf %215, %219 : vector<1x256xf32>
    %c12_44 = arith.constant 12 : index
    %c0_45 = arith.constant 0 : index
    %221 = vector.load %arg4[%c12_44, %c0_45] : memref<49x256xf32, #tpu.memory_space<vmem>>, vector<1x256xf32>
    %222 = arith.mulf %221, %220 : vector<1x256xf32>
    %223 = arith.addf %210, %222 : vector<1x256xf32>
    %224 = vector.extract_strided_slice %53 {offsets = [0, 227], sizes = [2, 256], strides = [1, 1]} : vector<2x512xf32> to vector<2x256xf32>
    %c13 = arith.constant 13 : index
    %225 = memref.load %arg5[%c13] : memref<98xf32, #tpu.memory_space<smem>>
    %226 = vector.extract_strided_slice %224 {offsets = [0, 0], sizes = [1, 256], strides = [1, 1]} : vector<2x256xf32> to vector<1x256xf32>
    %227 = vector.broadcast %225 : f32 to vector<1x256xf32>
    %228 = arith.mulf %227, %226 : vector<1x256xf32>
    %c62 = arith.constant 62 : index
    %229 = memref.load %arg5[%c62] : memref<98xf32, #tpu.memory_space<smem>>
    %230 = vector.extract_strided_slice %224 {offsets = [1, 0], sizes = [1, 256], strides = [1, 1]} : vector<2x256xf32> to vector<1x256xf32>
    %231 = vector.broadcast %229 : f32 to vector<1x256xf32>
    %232 = arith.mulf %231, %230 : vector<1x256xf32>
    %233 = arith.addf %228, %232 : vector<1x256xf32>
    %c13_46 = arith.constant 13 : index
    %c0_47 = arith.constant 0 : index
    %234 = vector.load %arg4[%c13_46, %c0_47] : memref<49x256xf32, #tpu.memory_space<vmem>>, vector<1x256xf32>
    %235 = arith.mulf %234, %233 : vector<1x256xf32>
    %236 = arith.addf %223, %235 : vector<1x256xf32>
    %237 = vector.extract_strided_slice %53 {offsets = [0, 237], sizes = [2, 256], strides = [1, 1]} : vector<2x512xf32> to vector<2x256xf32>
    %c14 = arith.constant 14 : index
    %238 = memref.load %arg5[%c14] : memref<98xf32, #tpu.memory_space<smem>>
    %239 = vector.extract_strided_slice %237 {offsets = [0, 0], sizes = [1, 256], strides = [1, 1]} : vector<2x256xf32> to vector<1x256xf32>
    %240 = vector.broadcast %238 : f32 to vector<1x256xf32>
    %241 = arith.mulf %240, %239 : vector<1x256xf32>
    %c63 = arith.constant 63 : index
    %242 = memref.load %arg5[%c63] : memref<98xf32, #tpu.memory_space<smem>>
    %243 = vector.extract_strided_slice %237 {offsets = [1, 0], sizes = [1, 256], strides = [1, 1]} : vector<2x256xf32> to vector<1x256xf32>
    %244 = vector.broadcast %242 : f32 to vector<1x256xf32>
    %245 = arith.mulf %244, %243 : vector<1x256xf32>
    %246 = arith.addf %241, %245 : vector<1x256xf32>
    %c14_48 = arith.constant 14 : index
    %c0_49 = arith.constant 0 : index
    %247 = vector.load %arg4[%c14_48, %c0_49] : memref<49x256xf32, #tpu.memory_space<vmem>>, vector<1x256xf32>
    %248 = arith.mulf %247, %246 : vector<1x256xf32>
    %249 = arith.addf %236, %248 : vector<1x256xf32>
    %250 = vector.extract_strided_slice %53 {offsets = [0, 238], sizes = [2, 256], strides = [1, 1]} : vector<2x512xf32> to vector<2x256xf32>
    %c15 = arith.constant 15 : index
    %251 = memref.load %arg5[%c15] : memref<98xf32, #tpu.memory_space<smem>>
    %252 = vector.extract_strided_slice %250 {offsets = [0, 0], sizes = [1, 256], strides = [1, 1]} : vector<2x256xf32> to vector<1x256xf32>
    %253 = vector.broadcast %251 : f32 to vector<1x256xf32>
    %254 = arith.mulf %253, %252 : vector<1x256xf32>
    %c64 = arith.constant 64 : index
    %255 = memref.load %arg5[%c64] : memref<98xf32, #tpu.memory_space<smem>>
    %256 = vector.extract_strided_slice %250 {offsets = [1, 0], sizes = [1, 256], strides = [1, 1]} : vector<2x256xf32> to vector<1x256xf32>
    %257 = vector.broadcast %255 : f32 to vector<1x256xf32>
    %258 = arith.mulf %257, %256 : vector<1x256xf32>
    %259 = arith.addf %254, %258 : vector<1x256xf32>
    %c15_50 = arith.constant 15 : index
    %c0_51 = arith.constant 0 : index
    %260 = vector.load %arg4[%c15_50, %c0_51] : memref<49x256xf32, #tpu.memory_space<vmem>>, vector<1x256xf32>
    %261 = arith.mulf %260, %259 : vector<1x256xf32>
    %262 = arith.addf %249, %261 : vector<1x256xf32>
    %263 = vector.extract_strided_slice %53 {offsets = [0, 239], sizes = [2, 256], strides = [1, 1]} : vector<2x512xf32> to vector<2x256xf32>
    %c16 = arith.constant 16 : index
    %264 = memref.load %arg5[%c16] : memref<98xf32, #tpu.memory_space<smem>>
    %265 = vector.extract_strided_slice %263 {offsets = [0, 0], sizes = [1, 256], strides = [1, 1]} : vector<2x256xf32> to vector<1x256xf32>
    %266 = vector.broadcast %264 : f32 to vector<1x256xf32>
    %267 = arith.mulf %266, %265 : vector<1x256xf32>
    %c65 = arith.constant 65 : index
    %268 = memref.load %arg5[%c65] : memref<98xf32, #tpu.memory_space<smem>>
    %269 = vector.extract_strided_slice %263 {offsets = [1, 0], sizes = [1, 256], strides = [1, 1]} : vector<2x256xf32> to vector<1x256xf32>
    %270 = vector.broadcast %268 : f32 to vector<1x256xf32>
    %271 = arith.mulf %270, %269 : vector<1x256xf32>
    %272 = arith.addf %267, %271 : vector<1x256xf32>
    %c16_52 = arith.constant 16 : index
    %c0_53 = arith.constant 0 : index
    %273 = vector.load %arg4[%c16_52, %c0_53] : memref<49x256xf32, #tpu.memory_space<vmem>>, vector<1x256xf32>
    %274 = arith.mulf %273, %272 : vector<1x256xf32>
    %275 = arith.addf %262, %274 : vector<1x256xf32>
    %276 = vector.extract_strided_slice %53 {offsets = [0, 240], sizes = [2, 256], strides = [1, 1]} : vector<2x512xf32> to vector<2x256xf32>
    %c17 = arith.constant 17 : index
    %277 = memref.load %arg5[%c17] : memref<98xf32, #tpu.memory_space<smem>>
    %278 = vector.extract_strided_slice %276 {offsets = [0, 0], sizes = [1, 256], strides = [1, 1]} : vector<2x256xf32> to vector<1x256xf32>
    %279 = vector.broadcast %277 : f32 to vector<1x256xf32>
    %280 = arith.mulf %279, %278 : vector<1x256xf32>
    %c66 = arith.constant 66 : index
    %281 = memref.load %arg5[%c66] : memref<98xf32, #tpu.memory_space<smem>>
    %282 = vector.extract_strided_slice %276 {offsets = [1, 0], sizes = [1, 256], strides = [1, 1]} : vector<2x256xf32> to vector<1x256xf32>
    %283 = vector.broadcast %281 : f32 to vector<1x256xf32>
    %284 = arith.mulf %283, %282 : vector<1x256xf32>
    %285 = arith.addf %280, %284 : vector<1x256xf32>
    %c17_54 = arith.constant 17 : index
    %c0_55 = arith.constant 0 : index
    %286 = vector.load %arg4[%c17_54, %c0_55] : memref<49x256xf32, #tpu.memory_space<vmem>>, vector<1x256xf32>
    %287 = arith.mulf %286, %285 : vector<1x256xf32>
    %288 = arith.addf %275, %287 : vector<1x256xf32>
    %289 = vector.extract_strided_slice %53 {offsets = [0, 241], sizes = [2, 256], strides = [1, 1]} : vector<2x512xf32> to vector<2x256xf32>
    %c18 = arith.constant 18 : index
    %290 = memref.load %arg5[%c18] : memref<98xf32, #tpu.memory_space<smem>>
    %291 = vector.extract_strided_slice %289 {offsets = [0, 0], sizes = [1, 256], strides = [1, 1]} : vector<2x256xf32> to vector<1x256xf32>
    %292 = vector.broadcast %290 : f32 to vector<1x256xf32>
    %293 = arith.mulf %292, %291 : vector<1x256xf32>
    %c67 = arith.constant 67 : index
    %294 = memref.load %arg5[%c67] : memref<98xf32, #tpu.memory_space<smem>>
    %295 = vector.extract_strided_slice %289 {offsets = [1, 0], sizes = [1, 256], strides = [1, 1]} : vector<2x256xf32> to vector<1x256xf32>
    %296 = vector.broadcast %294 : f32 to vector<1x256xf32>
    %297 = arith.mulf %296, %295 : vector<1x256xf32>
    %298 = arith.addf %293, %297 : vector<1x256xf32>
    %c18_56 = arith.constant 18 : index
    %c0_57 = arith.constant 0 : index
    %299 = vector.load %arg4[%c18_56, %c0_57] : memref<49x256xf32, #tpu.memory_space<vmem>>, vector<1x256xf32>
    %300 = arith.mulf %299, %298 : vector<1x256xf32>
    %301 = arith.addf %288, %300 : vector<1x256xf32>
    %302 = vector.extract_strided_slice %53 {offsets = [0, 242], sizes = [2, 256], strides = [1, 1]} : vector<2x512xf32> to vector<2x256xf32>
    %c19 = arith.constant 19 : index
    %303 = memref.load %arg5[%c19] : memref<98xf32, #tpu.memory_space<smem>>
    %304 = vector.extract_strided_slice %302 {offsets = [0, 0], sizes = [1, 256], strides = [1, 1]} : vector<2x256xf32> to vector<1x256xf32>
    %305 = vector.broadcast %303 : f32 to vector<1x256xf32>
    %306 = arith.mulf %305, %304 : vector<1x256xf32>
    %c68 = arith.constant 68 : index
    %307 = memref.load %arg5[%c68] : memref<98xf32, #tpu.memory_space<smem>>
    %308 = vector.extract_strided_slice %302 {offsets = [1, 0], sizes = [1, 256], strides = [1, 1]} : vector<2x256xf32> to vector<1x256xf32>
    %309 = vector.broadcast %307 : f32 to vector<1x256xf32>
    %310 = arith.mulf %309, %308 : vector<1x256xf32>
    %311 = arith.addf %306, %310 : vector<1x256xf32>
    %c19_58 = arith.constant 19 : index
    %c0_59 = arith.constant 0 : index
    %312 = vector.load %arg4[%c19_58, %c0_59] : memref<49x256xf32, #tpu.memory_space<vmem>>, vector<1x256xf32>
    %313 = arith.mulf %312, %311 : vector<1x256xf32>
    %314 = arith.addf %301, %313 : vector<1x256xf32>
    %315 = vector.extract_strided_slice %53 {offsets = [0, 243], sizes = [2, 256], strides = [1, 1]} : vector<2x512xf32> to vector<2x256xf32>
    %c20 = arith.constant 20 : index
    %316 = memref.load %arg5[%c20] : memref<98xf32, #tpu.memory_space<smem>>
    %317 = vector.extract_strided_slice %315 {offsets = [0, 0], sizes = [1, 256], strides = [1, 1]} : vector<2x256xf32> to vector<1x256xf32>
    %318 = vector.broadcast %316 : f32 to vector<1x256xf32>
    %319 = arith.mulf %318, %317 : vector<1x256xf32>
    %c69 = arith.constant 69 : index
    %320 = memref.load %arg5[%c69] : memref<98xf32, #tpu.memory_space<smem>>
    %321 = vector.extract_strided_slice %315 {offsets = [1, 0], sizes = [1, 256], strides = [1, 1]} : vector<2x256xf32> to vector<1x256xf32>
    %322 = vector.broadcast %320 : f32 to vector<1x256xf32>
    %323 = arith.mulf %322, %321 : vector<1x256xf32>
    %324 = arith.addf %319, %323 : vector<1x256xf32>
    %c20_60 = arith.constant 20 : index
    %c0_61 = arith.constant 0 : index
    %325 = vector.load %arg4[%c20_60, %c0_61] : memref<49x256xf32, #tpu.memory_space<vmem>>, vector<1x256xf32>
    %326 = arith.mulf %325, %324 : vector<1x256xf32>
    %327 = arith.addf %314, %326 : vector<1x256xf32>
    %328 = vector.extract_strided_slice %53 {offsets = [0, 253], sizes = [2, 256], strides = [1, 1]} : vector<2x512xf32> to vector<2x256xf32>
    %c21 = arith.constant 21 : index
    %329 = memref.load %arg5[%c21] : memref<98xf32, #tpu.memory_space<smem>>
    %330 = vector.extract_strided_slice %328 {offsets = [0, 0], sizes = [1, 256], strides = [1, 1]} : vector<2x256xf32> to vector<1x256xf32>
    %331 = vector.broadcast %329 : f32 to vector<1x256xf32>
    %332 = arith.mulf %331, %330 : vector<1x256xf32>
    %c70 = arith.constant 70 : index
    %333 = memref.load %arg5[%c70] : memref<98xf32, #tpu.memory_space<smem>>
    %334 = vector.extract_strided_slice %328 {offsets = [1, 0], sizes = [1, 256], strides = [1, 1]} : vector<2x256xf32> to vector<1x256xf32>
    %335 = vector.broadcast %333 : f32 to vector<1x256xf32>
    %336 = arith.mulf %335, %334 : vector<1x256xf32>
    %337 = arith.addf %332, %336 : vector<1x256xf32>
    %c21_62 = arith.constant 21 : index
    %c0_63 = arith.constant 0 : index
    %338 = vector.load %arg4[%c21_62, %c0_63] : memref<49x256xf32, #tpu.memory_space<vmem>>, vector<1x256xf32>
    %339 = arith.mulf %338, %337 : vector<1x256xf32>
    %340 = arith.addf %327, %339 : vector<1x256xf32>
    %341 = vector.extract_strided_slice %53 {offsets = [0, 254], sizes = [2, 256], strides = [1, 1]} : vector<2x512xf32> to vector<2x256xf32>
    %c22 = arith.constant 22 : index
    %342 = memref.load %arg5[%c22] : memref<98xf32, #tpu.memory_space<smem>>
    %343 = vector.extract_strided_slice %341 {offsets = [0, 0], sizes = [1, 256], strides = [1, 1]} : vector<2x256xf32> to vector<1x256xf32>
    %344 = vector.broadcast %342 : f32 to vector<1x256xf32>
    %345 = arith.mulf %344, %343 : vector<1x256xf32>
    %c71 = arith.constant 71 : index
    %346 = memref.load %arg5[%c71] : memref<98xf32, #tpu.memory_space<smem>>
    %347 = vector.extract_strided_slice %341 {offsets = [1, 0], sizes = [1, 256], strides = [1, 1]} : vector<2x256xf32> to vector<1x256xf32>
    %348 = vector.broadcast %346 : f32 to vector<1x256xf32>
    %349 = arith.mulf %348, %347 : vector<1x256xf32>
    %350 = arith.addf %345, %349 : vector<1x256xf32>
    %c22_64 = arith.constant 22 : index
    %c0_65 = arith.constant 0 : index
    %351 = vector.load %arg4[%c22_64, %c0_65] : memref<49x256xf32, #tpu.memory_space<vmem>>, vector<1x256xf32>
    %352 = arith.mulf %351, %350 : vector<1x256xf32>
    %353 = arith.addf %340, %352 : vector<1x256xf32>
    %354 = vector.extract_strided_slice %53 {offsets = [0, 255], sizes = [2, 256], strides = [1, 1]} : vector<2x512xf32> to vector<2x256xf32>
    %c23 = arith.constant 23 : index
    %355 = memref.load %arg5[%c23] : memref<98xf32, #tpu.memory_space<smem>>
    %356 = vector.extract_strided_slice %354 {offsets = [0, 0], sizes = [1, 256], strides = [1, 1]} : vector<2x256xf32> to vector<1x256xf32>
    %357 = vector.broadcast %355 : f32 to vector<1x256xf32>
    %358 = arith.mulf %357, %356 : vector<1x256xf32>
    %c72 = arith.constant 72 : index
    %359 = memref.load %arg5[%c72] : memref<98xf32, #tpu.memory_space<smem>>
    %360 = vector.extract_strided_slice %354 {offsets = [1, 0], sizes = [1, 256], strides = [1, 1]} : vector<2x256xf32> to vector<1x256xf32>
    %361 = vector.broadcast %359 : f32 to vector<1x256xf32>
    %362 = arith.mulf %361, %360 : vector<1x256xf32>
    %363 = arith.addf %358, %362 : vector<1x256xf32>
    %c23_66 = arith.constant 23 : index
    %c0_67 = arith.constant 0 : index
    %364 = vector.load %arg4[%c23_66, %c0_67] : memref<49x256xf32, #tpu.memory_space<vmem>>, vector<1x256xf32>
    %365 = arith.mulf %364, %363 : vector<1x256xf32>
    %366 = arith.addf %353, %365 : vector<1x256xf32>
    %367 = vector.extract_strided_slice %53 {offsets = [0, 0], sizes = [2, 256], strides = [1, 1]} : vector<2x512xf32> to vector<2x256xf32>
    %c24 = arith.constant 24 : index
    %368 = memref.load %arg5[%c24] : memref<98xf32, #tpu.memory_space<smem>>
    %369 = vector.extract_strided_slice %367 {offsets = [0, 0], sizes = [1, 256], strides = [1, 1]} : vector<2x256xf32> to vector<1x256xf32>
    %370 = vector.broadcast %368 : f32 to vector<1x256xf32>
    %371 = arith.mulf %370, %369 : vector<1x256xf32>
    %c73 = arith.constant 73 : index
    %372 = memref.load %arg5[%c73] : memref<98xf32, #tpu.memory_space<smem>>
    %373 = vector.extract_strided_slice %367 {offsets = [1, 0], sizes = [1, 256], strides = [1, 1]} : vector<2x256xf32> to vector<1x256xf32>
    %374 = vector.broadcast %372 : f32 to vector<1x256xf32>
    %375 = arith.mulf %374, %373 : vector<1x256xf32>
    %376 = arith.addf %371, %375 : vector<1x256xf32>
    %c24_68 = arith.constant 24 : index
    %c0_69 = arith.constant 0 : index
    %377 = vector.load %arg4[%c24_68, %c0_69] : memref<49x256xf32, #tpu.memory_space<vmem>>, vector<1x256xf32>
    %378 = arith.mulf %377, %376 : vector<1x256xf32>
    %379 = arith.addf %366, %378 : vector<1x256xf32>
    %380 = vector.extract_strided_slice %53 {offsets = [0, 1], sizes = [2, 256], strides = [1, 1]} : vector<2x512xf32> to vector<2x256xf32>
    %c25 = arith.constant 25 : index
    %381 = memref.load %arg5[%c25] : memref<98xf32, #tpu.memory_space<smem>>
    %382 = vector.extract_strided_slice %380 {offsets = [0, 0], sizes = [1, 256], strides = [1, 1]} : vector<2x256xf32> to vector<1x256xf32>
    %383 = vector.broadcast %381 : f32 to vector<1x256xf32>
    %384 = arith.mulf %383, %382 : vector<1x256xf32>
    %c74 = arith.constant 74 : index
    %385 = memref.load %arg5[%c74] : memref<98xf32, #tpu.memory_space<smem>>
    %386 = vector.extract_strided_slice %380 {offsets = [1, 0], sizes = [1, 256], strides = [1, 1]} : vector<2x256xf32> to vector<1x256xf32>
    %387 = vector.broadcast %385 : f32 to vector<1x256xf32>
    %388 = arith.mulf %387, %386 : vector<1x256xf32>
    %389 = arith.addf %384, %388 : vector<1x256xf32>
    %c25_70 = arith.constant 25 : index
    %c0_71 = arith.constant 0 : index
    %390 = vector.load %arg4[%c25_70, %c0_71] : memref<49x256xf32, #tpu.memory_space<vmem>>, vector<1x256xf32>
    %391 = arith.mulf %390, %389 : vector<1x256xf32>
    %392 = arith.addf %379, %391 : vector<1x256xf32>
    %393 = vector.extract_strided_slice %53 {offsets = [0, 2], sizes = [2, 256], strides = [1, 1]} : vector<2x512xf32> to vector<2x256xf32>
    %c26 = arith.constant 26 : index
    %394 = memref.load %arg5[%c26] : memref<98xf32, #tpu.memory_space<smem>>
    %395 = vector.extract_strided_slice %393 {offsets = [0, 0], sizes = [1, 256], strides = [1, 1]} : vector<2x256xf32> to vector<1x256xf32>
    %396 = vector.broadcast %394 : f32 to vector<1x256xf32>
    %397 = arith.mulf %396, %395 : vector<1x256xf32>
    %c75 = arith.constant 75 : index
    %398 = memref.load %arg5[%c75] : memref<98xf32, #tpu.memory_space<smem>>
    %399 = vector.extract_strided_slice %393 {offsets = [1, 0], sizes = [1, 256], strides = [1, 1]} : vector<2x256xf32> to vector<1x256xf32>
    %400 = vector.broadcast %398 : f32 to vector<1x256xf32>
    %401 = arith.mulf %400, %399 : vector<1x256xf32>
    %402 = arith.addf %397, %401 : vector<1x256xf32>
    %c26_72 = arith.constant 26 : index
    %c0_73 = arith.constant 0 : index
    %403 = vector.load %arg4[%c26_72, %c0_73] : memref<49x256xf32, #tpu.memory_space<vmem>>, vector<1x256xf32>
    %404 = arith.mulf %403, %402 : vector<1x256xf32>
    %405 = arith.addf %392, %404 : vector<1x256xf32>
    %406 = vector.extract_strided_slice %53 {offsets = [0, 3], sizes = [2, 256], strides = [1, 1]} : vector<2x512xf32> to vector<2x256xf32>
    %c27 = arith.constant 27 : index
    %407 = memref.load %arg5[%c27] : memref<98xf32, #tpu.memory_space<smem>>
    %408 = vector.extract_strided_slice %406 {offsets = [0, 0], sizes = [1, 256], strides = [1, 1]} : vector<2x256xf32> to vector<1x256xf32>
    %409 = vector.broadcast %407 : f32 to vector<1x256xf32>
    %410 = arith.mulf %409, %408 : vector<1x256xf32>
    %c76 = arith.constant 76 : index
    %411 = memref.load %arg5[%c76] : memref<98xf32, #tpu.memory_space<smem>>
    %412 = vector.extract_strided_slice %406 {offsets = [1, 0], sizes = [1, 256], strides = [1, 1]} : vector<2x256xf32> to vector<1x256xf32>
    %413 = vector.broadcast %411 : f32 to vector<1x256xf32>
    %414 = arith.mulf %413, %412 : vector<1x256xf32>
    %415 = arith.addf %410, %414 : vector<1x256xf32>
    %c27_74 = arith.constant 27 : index
    %c0_75 = arith.constant 0 : index
    %416 = vector.load %arg4[%c27_74, %c0_75] : memref<49x256xf32, #tpu.memory_space<vmem>>, vector<1x256xf32>
    %417 = arith.mulf %416, %415 : vector<1x256xf32>
    %418 = arith.addf %405, %417 : vector<1x256xf32>
    %419 = vector.extract_strided_slice %53 {offsets = [0, 13], sizes = [2, 256], strides = [1, 1]} : vector<2x512xf32> to vector<2x256xf32>
    %c28 = arith.constant 28 : index
    %420 = memref.load %arg5[%c28] : memref<98xf32, #tpu.memory_space<smem>>
    %421 = vector.extract_strided_slice %419 {offsets = [0, 0], sizes = [1, 256], strides = [1, 1]} : vector<2x256xf32> to vector<1x256xf32>
    %422 = vector.broadcast %420 : f32 to vector<1x256xf32>
    %423 = arith.mulf %422, %421 : vector<1x256xf32>
    %c77 = arith.constant 77 : index
    %424 = memref.load %arg5[%c77] : memref<98xf32, #tpu.memory_space<smem>>
    %425 = vector.extract_strided_slice %419 {offsets = [1, 0], sizes = [1, 256], strides = [1, 1]} : vector<2x256xf32> to vector<1x256xf32>
    %426 = vector.broadcast %424 : f32 to vector<1x256xf32>
    %427 = arith.mulf %426, %425 : vector<1x256xf32>
    %428 = arith.addf %423, %427 : vector<1x256xf32>
    %c28_76 = arith.constant 28 : index
    %c0_77 = arith.constant 0 : index
    %429 = vector.load %arg4[%c28_76, %c0_77] : memref<49x256xf32, #tpu.memory_space<vmem>>, vector<1x256xf32>
    %430 = arith.mulf %429, %428 : vector<1x256xf32>
    %431 = arith.addf %418, %430 : vector<1x256xf32>
    %432 = vector.extract_strided_slice %53 {offsets = [0, 14], sizes = [2, 256], strides = [1, 1]} : vector<2x512xf32> to vector<2x256xf32>
    %c29 = arith.constant 29 : index
    %433 = memref.load %arg5[%c29] : memref<98xf32, #tpu.memory_space<smem>>
    %434 = vector.extract_strided_slice %432 {offsets = [0, 0], sizes = [1, 256], strides = [1, 1]} : vector<2x256xf32> to vector<1x256xf32>
    %435 = vector.broadcast %433 : f32 to vector<1x256xf32>
    %436 = arith.mulf %435, %434 : vector<1x256xf32>
    %c78 = arith.constant 78 : index
    %437 = memref.load %arg5[%c78] : memref<98xf32, #tpu.memory_space<smem>>
    %438 = vector.extract_strided_slice %432 {offsets = [1, 0], sizes = [1, 256], strides = [1, 1]} : vector<2x256xf32> to vector<1x256xf32>
    %439 = vector.broadcast %437 : f32 to vector<1x256xf32>
    %440 = arith.mulf %439, %438 : vector<1x256xf32>
    %441 = arith.addf %436, %440 : vector<1x256xf32>
    %c29_78 = arith.constant 29 : index
    %c0_79 = arith.constant 0 : index
    %442 = vector.load %arg4[%c29_78, %c0_79] : memref<49x256xf32, #tpu.memory_space<vmem>>, vector<1x256xf32>
    %443 = arith.mulf %442, %441 : vector<1x256xf32>
    %444 = arith.addf %431, %443 : vector<1x256xf32>
    %445 = vector.extract_strided_slice %53 {offsets = [0, 15], sizes = [2, 256], strides = [1, 1]} : vector<2x512xf32> to vector<2x256xf32>
    %c30 = arith.constant 30 : index
    %446 = memref.load %arg5[%c30] : memref<98xf32, #tpu.memory_space<smem>>
    %447 = vector.extract_strided_slice %445 {offsets = [0, 0], sizes = [1, 256], strides = [1, 1]} : vector<2x256xf32> to vector<1x256xf32>
    %448 = vector.broadcast %446 : f32 to vector<1x256xf32>
    %449 = arith.mulf %448, %447 : vector<1x256xf32>
    %c79 = arith.constant 79 : index
    %450 = memref.load %arg5[%c79] : memref<98xf32, #tpu.memory_space<smem>>
    %451 = vector.extract_strided_slice %445 {offsets = [1, 0], sizes = [1, 256], strides = [1, 1]} : vector<2x256xf32> to vector<1x256xf32>
    %452 = vector.broadcast %450 : f32 to vector<1x256xf32>
    %453 = arith.mulf %452, %451 : vector<1x256xf32>
    %454 = arith.addf %449, %453 : vector<1x256xf32>
    %c30_80 = arith.constant 30 : index
    %c0_81 = arith.constant 0 : index
    %455 = vector.load %arg4[%c30_80, %c0_81] : memref<49x256xf32, #tpu.memory_space<vmem>>, vector<1x256xf32>
    %456 = arith.mulf %455, %454 : vector<1x256xf32>
    %457 = arith.addf %444, %456 : vector<1x256xf32>
    %458 = vector.extract_strided_slice %53 {offsets = [0, 16], sizes = [2, 256], strides = [1, 1]} : vector<2x512xf32> to vector<2x256xf32>
    %c31 = arith.constant 31 : index
    %459 = memref.load %arg5[%c31] : memref<98xf32, #tpu.memory_space<smem>>
    %460 = vector.extract_strided_slice %458 {offsets = [0, 0], sizes = [1, 256], strides = [1, 1]} : vector<2x256xf32> to vector<1x256xf32>
    %461 = vector.broadcast %459 : f32 to vector<1x256xf32>
    %462 = arith.mulf %461, %460 : vector<1x256xf32>
    %c80 = arith.constant 80 : index
    %463 = memref.load %arg5[%c80] : memref<98xf32, #tpu.memory_space<smem>>
    %464 = vector.extract_strided_slice %458 {offsets = [1, 0], sizes = [1, 256], strides = [1, 1]} : vector<2x256xf32> to vector<1x256xf32>
    %465 = vector.broadcast %463 : f32 to vector<1x256xf32>
    %466 = arith.mulf %465, %464 : vector<1x256xf32>
    %467 = arith.addf %462, %466 : vector<1x256xf32>
    %c31_82 = arith.constant 31 : index
    %c0_83 = arith.constant 0 : index
    %468 = vector.load %arg4[%c31_82, %c0_83] : memref<49x256xf32, #tpu.memory_space<vmem>>, vector<1x256xf32>
    %469 = arith.mulf %468, %467 : vector<1x256xf32>
    %470 = arith.addf %457, %469 : vector<1x256xf32>
    %471 = vector.extract_strided_slice %53 {offsets = [0, 17], sizes = [2, 256], strides = [1, 1]} : vector<2x512xf32> to vector<2x256xf32>
    %c32 = arith.constant 32 : index
    %472 = memref.load %arg5[%c32] : memref<98xf32, #tpu.memory_space<smem>>
    %473 = vector.extract_strided_slice %471 {offsets = [0, 0], sizes = [1, 256], strides = [1, 1]} : vector<2x256xf32> to vector<1x256xf32>
    %474 = vector.broadcast %472 : f32 to vector<1x256xf32>
    %475 = arith.mulf %474, %473 : vector<1x256xf32>
    %c81 = arith.constant 81 : index
    %476 = memref.load %arg5[%c81] : memref<98xf32, #tpu.memory_space<smem>>
    %477 = vector.extract_strided_slice %471 {offsets = [1, 0], sizes = [1, 256], strides = [1, 1]} : vector<2x256xf32> to vector<1x256xf32>
    %478 = vector.broadcast %476 : f32 to vector<1x256xf32>
    %479 = arith.mulf %478, %477 : vector<1x256xf32>
    %480 = arith.addf %475, %479 : vector<1x256xf32>
    %c32_84 = arith.constant 32 : index
    %c0_85 = arith.constant 0 : index
    %481 = vector.load %arg4[%c32_84, %c0_85] : memref<49x256xf32, #tpu.memory_space<vmem>>, vector<1x256xf32>
    %482 = arith.mulf %481, %480 : vector<1x256xf32>
    %483 = arith.addf %470, %482 : vector<1x256xf32>
    %484 = vector.extract_strided_slice %53 {offsets = [0, 18], sizes = [2, 256], strides = [1, 1]} : vector<2x512xf32> to vector<2x256xf32>
    %c33 = arith.constant 33 : index
    %485 = memref.load %arg5[%c33] : memref<98xf32, #tpu.memory_space<smem>>
    %486 = vector.extract_strided_slice %484 {offsets = [0, 0], sizes = [1, 256], strides = [1, 1]} : vector<2x256xf32> to vector<1x256xf32>
    %487 = vector.broadcast %485 : f32 to vector<1x256xf32>
    %488 = arith.mulf %487, %486 : vector<1x256xf32>
    %c82 = arith.constant 82 : index
    %489 = memref.load %arg5[%c82] : memref<98xf32, #tpu.memory_space<smem>>
    %490 = vector.extract_strided_slice %484 {offsets = [1, 0], sizes = [1, 256], strides = [1, 1]} : vector<2x256xf32> to vector<1x256xf32>
    %491 = vector.broadcast %489 : f32 to vector<1x256xf32>
    %492 = arith.mulf %491, %490 : vector<1x256xf32>
    %493 = arith.addf %488, %492 : vector<1x256xf32>
    %c33_86 = arith.constant 33 : index
    %c0_87 = arith.constant 0 : index
    %494 = vector.load %arg4[%c33_86, %c0_87] : memref<49x256xf32, #tpu.memory_space<vmem>>, vector<1x256xf32>
    %495 = arith.mulf %494, %493 : vector<1x256xf32>
    %496 = arith.addf %483, %495 : vector<1x256xf32>
    %497 = vector.extract_strided_slice %53 {offsets = [0, 19], sizes = [2, 256], strides = [1, 1]} : vector<2x512xf32> to vector<2x256xf32>
    %c34 = arith.constant 34 : index
    %498 = memref.load %arg5[%c34] : memref<98xf32, #tpu.memory_space<smem>>
    %499 = vector.extract_strided_slice %497 {offsets = [0, 0], sizes = [1, 256], strides = [1, 1]} : vector<2x256xf32> to vector<1x256xf32>
    %500 = vector.broadcast %498 : f32 to vector<1x256xf32>
    %501 = arith.mulf %500, %499 : vector<1x256xf32>
    %c83 = arith.constant 83 : index
    %502 = memref.load %arg5[%c83] : memref<98xf32, #tpu.memory_space<smem>>
    %503 = vector.extract_strided_slice %497 {offsets = [1, 0], sizes = [1, 256], strides = [1, 1]} : vector<2x256xf32> to vector<1x256xf32>
    %504 = vector.broadcast %502 : f32 to vector<1x256xf32>
    %505 = arith.mulf %504, %503 : vector<1x256xf32>
    %506 = arith.addf %501, %505 : vector<1x256xf32>
    %c34_88 = arith.constant 34 : index
    %c0_89 = arith.constant 0 : index
    %507 = vector.load %arg4[%c34_88, %c0_89] : memref<49x256xf32, #tpu.memory_space<vmem>>, vector<1x256xf32>
    %508 = arith.mulf %507, %506 : vector<1x256xf32>
    %509 = arith.addf %496, %508 : vector<1x256xf32>
    %510 = vector.extract_strided_slice %53 {offsets = [0, 29], sizes = [2, 256], strides = [1, 1]} : vector<2x512xf32> to vector<2x256xf32>
    %c35 = arith.constant 35 : index
    %511 = memref.load %arg5[%c35] : memref<98xf32, #tpu.memory_space<smem>>
    %512 = vector.extract_strided_slice %510 {offsets = [0, 0], sizes = [1, 256], strides = [1, 1]} : vector<2x256xf32> to vector<1x256xf32>
    %513 = vector.broadcast %511 : f32 to vector<1x256xf32>
    %514 = arith.mulf %513, %512 : vector<1x256xf32>
    %c84 = arith.constant 84 : index
    %515 = memref.load %arg5[%c84] : memref<98xf32, #tpu.memory_space<smem>>
    %516 = vector.extract_strided_slice %510 {offsets = [1, 0], sizes = [1, 256], strides = [1, 1]} : vector<2x256xf32> to vector<1x256xf32>
    %517 = vector.broadcast %515 : f32 to vector<1x256xf32>
    %518 = arith.mulf %517, %516 : vector<1x256xf32>
    %519 = arith.addf %514, %518 : vector<1x256xf32>
    %c35_90 = arith.constant 35 : index
    %c0_91 = arith.constant 0 : index
    %520 = vector.load %arg4[%c35_90, %c0_91] : memref<49x256xf32, #tpu.memory_space<vmem>>, vector<1x256xf32>
    %521 = arith.mulf %520, %519 : vector<1x256xf32>
    %522 = arith.addf %509, %521 : vector<1x256xf32>
    %523 = vector.extract_strided_slice %53 {offsets = [0, 30], sizes = [2, 256], strides = [1, 1]} : vector<2x512xf32> to vector<2x256xf32>
    %c36 = arith.constant 36 : index
    %524 = memref.load %arg5[%c36] : memref<98xf32, #tpu.memory_space<smem>>
    %525 = vector.extract_strided_slice %523 {offsets = [0, 0], sizes = [1, 256], strides = [1, 1]} : vector<2x256xf32> to vector<1x256xf32>
    %526 = vector.broadcast %524 : f32 to vector<1x256xf32>
    %527 = arith.mulf %526, %525 : vector<1x256xf32>
    %c85 = arith.constant 85 : index
    %528 = memref.load %arg5[%c85] : memref<98xf32, #tpu.memory_space<smem>>
    %529 = vector.extract_strided_slice %523 {offsets = [1, 0], sizes = [1, 256], strides = [1, 1]} : vector<2x256xf32> to vector<1x256xf32>
    %530 = vector.broadcast %528 : f32 to vector<1x256xf32>
    %531 = arith.mulf %530, %529 : vector<1x256xf32>
    %532 = arith.addf %527, %531 : vector<1x256xf32>
    %c36_92 = arith.constant 36 : index
    %c0_93 = arith.constant 0 : index
    %533 = vector.load %arg4[%c36_92, %c0_93] : memref<49x256xf32, #tpu.memory_space<vmem>>, vector<1x256xf32>
    %534 = arith.mulf %533, %532 : vector<1x256xf32>
    %535 = arith.addf %522, %534 : vector<1x256xf32>
    %536 = vector.extract_strided_slice %53 {offsets = [0, 31], sizes = [2, 256], strides = [1, 1]} : vector<2x512xf32> to vector<2x256xf32>
    %c37 = arith.constant 37 : index
    %537 = memref.load %arg5[%c37] : memref<98xf32, #tpu.memory_space<smem>>
    %538 = vector.extract_strided_slice %536 {offsets = [0, 0], sizes = [1, 256], strides = [1, 1]} : vector<2x256xf32> to vector<1x256xf32>
    %539 = vector.broadcast %537 : f32 to vector<1x256xf32>
    %540 = arith.mulf %539, %538 : vector<1x256xf32>
    %c86 = arith.constant 86 : index
    %541 = memref.load %arg5[%c86] : memref<98xf32, #tpu.memory_space<smem>>
    %542 = vector.extract_strided_slice %536 {offsets = [1, 0], sizes = [1, 256], strides = [1, 1]} : vector<2x256xf32> to vector<1x256xf32>
    %543 = vector.broadcast %541 : f32 to vector<1x256xf32>
    %544 = arith.mulf %543, %542 : vector<1x256xf32>
    %545 = arith.addf %540, %544 : vector<1x256xf32>
    %c37_94 = arith.constant 37 : index
    %c0_95 = arith.constant 0 : index
    %546 = vector.load %arg4[%c37_94, %c0_95] : memref<49x256xf32, #tpu.memory_space<vmem>>, vector<1x256xf32>
    %547 = arith.mulf %546, %545 : vector<1x256xf32>
    %548 = arith.addf %535, %547 : vector<1x256xf32>
    %549 = vector.extract_strided_slice %53 {offsets = [0, 32], sizes = [2, 256], strides = [1, 1]} : vector<2x512xf32> to vector<2x256xf32>
    %c38 = arith.constant 38 : index
    %550 = memref.load %arg5[%c38] : memref<98xf32, #tpu.memory_space<smem>>
    %551 = vector.extract_strided_slice %549 {offsets = [0, 0], sizes = [1, 256], strides = [1, 1]} : vector<2x256xf32> to vector<1x256xf32>
    %552 = vector.broadcast %550 : f32 to vector<1x256xf32>
    %553 = arith.mulf %552, %551 : vector<1x256xf32>
    %c87 = arith.constant 87 : index
    %554 = memref.load %arg5[%c87] : memref<98xf32, #tpu.memory_space<smem>>
    %555 = vector.extract_strided_slice %549 {offsets = [1, 0], sizes = [1, 256], strides = [1, 1]} : vector<2x256xf32> to vector<1x256xf32>
    %556 = vector.broadcast %554 : f32 to vector<1x256xf32>
    %557 = arith.mulf %556, %555 : vector<1x256xf32>
    %558 = arith.addf %553, %557 : vector<1x256xf32>
    %c38_96 = arith.constant 38 : index
    %c0_97 = arith.constant 0 : index
    %559 = vector.load %arg4[%c38_96, %c0_97] : memref<49x256xf32, #tpu.memory_space<vmem>>, vector<1x256xf32>
    %560 = arith.mulf %559, %558 : vector<1x256xf32>
    %561 = arith.addf %548, %560 : vector<1x256xf32>
    %562 = vector.extract_strided_slice %53 {offsets = [0, 33], sizes = [2, 256], strides = [1, 1]} : vector<2x512xf32> to vector<2x256xf32>
    %c39 = arith.constant 39 : index
    %563 = memref.load %arg5[%c39] : memref<98xf32, #tpu.memory_space<smem>>
    %564 = vector.extract_strided_slice %562 {offsets = [0, 0], sizes = [1, 256], strides = [1, 1]} : vector<2x256xf32> to vector<1x256xf32>
    %565 = vector.broadcast %563 : f32 to vector<1x256xf32>
    %566 = arith.mulf %565, %564 : vector<1x256xf32>
    %c88 = arith.constant 88 : index
    %567 = memref.load %arg5[%c88] : memref<98xf32, #tpu.memory_space<smem>>
    %568 = vector.extract_strided_slice %562 {offsets = [1, 0], sizes = [1, 256], strides = [1, 1]} : vector<2x256xf32> to vector<1x256xf32>
    %569 = vector.broadcast %567 : f32 to vector<1x256xf32>
    %570 = arith.mulf %569, %568 : vector<1x256xf32>
    %571 = arith.addf %566, %570 : vector<1x256xf32>
    %c39_98 = arith.constant 39 : index
    %c0_99 = arith.constant 0 : index
    %572 = vector.load %arg4[%c39_98, %c0_99] : memref<49x256xf32, #tpu.memory_space<vmem>>, vector<1x256xf32>
    %573 = arith.mulf %572, %571 : vector<1x256xf32>
    %574 = arith.addf %561, %573 : vector<1x256xf32>
    %575 = vector.extract_strided_slice %53 {offsets = [0, 34], sizes = [2, 256], strides = [1, 1]} : vector<2x512xf32> to vector<2x256xf32>
    %c40 = arith.constant 40 : index
    %576 = memref.load %arg5[%c40] : memref<98xf32, #tpu.memory_space<smem>>
    %577 = vector.extract_strided_slice %575 {offsets = [0, 0], sizes = [1, 256], strides = [1, 1]} : vector<2x256xf32> to vector<1x256xf32>
    %578 = vector.broadcast %576 : f32 to vector<1x256xf32>
    %579 = arith.mulf %578, %577 : vector<1x256xf32>
    %c89 = arith.constant 89 : index
    %580 = memref.load %arg5[%c89] : memref<98xf32, #tpu.memory_space<smem>>
    %581 = vector.extract_strided_slice %575 {offsets = [1, 0], sizes = [1, 256], strides = [1, 1]} : vector<2x256xf32> to vector<1x256xf32>
    %582 = vector.broadcast %580 : f32 to vector<1x256xf32>
    %583 = arith.mulf %582, %581 : vector<1x256xf32>
    %584 = arith.addf %579, %583 : vector<1x256xf32>
    %c40_100 = arith.constant 40 : index
    %c0_101 = arith.constant 0 : index
    %585 = vector.load %arg4[%c40_100, %c0_101] : memref<49x256xf32, #tpu.memory_space<vmem>>, vector<1x256xf32>
    %586 = arith.mulf %585, %584 : vector<1x256xf32>
    %587 = arith.addf %574, %586 : vector<1x256xf32>
    %588 = vector.extract_strided_slice %53 {offsets = [0, 35], sizes = [2, 256], strides = [1, 1]} : vector<2x512xf32> to vector<2x256xf32>
    %c41 = arith.constant 41 : index
    %589 = memref.load %arg5[%c41] : memref<98xf32, #tpu.memory_space<smem>>
    %590 = vector.extract_strided_slice %588 {offsets = [0, 0], sizes = [1, 256], strides = [1, 1]} : vector<2x256xf32> to vector<1x256xf32>
    %591 = vector.broadcast %589 : f32 to vector<1x256xf32>
    %592 = arith.mulf %591, %590 : vector<1x256xf32>
    %c90 = arith.constant 90 : index
    %593 = memref.load %arg5[%c90] : memref<98xf32, #tpu.memory_space<smem>>
    %594 = vector.extract_strided_slice %588 {offsets = [1, 0], sizes = [1, 256], strides = [1, 1]} : vector<2x256xf32> to vector<1x256xf32>
    %595 = vector.broadcast %593 : f32 to vector<1x256xf32>
    %596 = arith.mulf %595, %594 : vector<1x256xf32>
    %597 = arith.addf %592, %596 : vector<1x256xf32>
    %c41_102 = arith.constant 41 : index
    %c0_103 = arith.constant 0 : index
    %598 = vector.load %arg4[%c41_102, %c0_103] : memref<49x256xf32, #tpu.memory_space<vmem>>, vector<1x256xf32>
    %599 = arith.mulf %598, %597 : vector<1x256xf32>
    %600 = arith.addf %587, %599 : vector<1x256xf32>
    %601 = vector.extract_strided_slice %53 {offsets = [0, 45], sizes = [2, 256], strides = [1, 1]} : vector<2x512xf32> to vector<2x256xf32>
    %c42 = arith.constant 42 : index
    %602 = memref.load %arg5[%c42] : memref<98xf32, #tpu.memory_space<smem>>
    %603 = vector.extract_strided_slice %601 {offsets = [0, 0], sizes = [1, 256], strides = [1, 1]} : vector<2x256xf32> to vector<1x256xf32>
    %604 = vector.broadcast %602 : f32 to vector<1x256xf32>
    %605 = arith.mulf %604, %603 : vector<1x256xf32>
    %c91 = arith.constant 91 : index
    %606 = memref.load %arg5[%c91] : memref<98xf32, #tpu.memory_space<smem>>
    %607 = vector.extract_strided_slice %601 {offsets = [1, 0], sizes = [1, 256], strides = [1, 1]} : vector<2x256xf32> to vector<1x256xf32>
    %608 = vector.broadcast %606 : f32 to vector<1x256xf32>
    %609 = arith.mulf %608, %607 : vector<1x256xf32>
    %610 = arith.addf %605, %609 : vector<1x256xf32>
    %c42_104 = arith.constant 42 : index
    %c0_105 = arith.constant 0 : index
    %611 = vector.load %arg4[%c42_104, %c0_105] : memref<49x256xf32, #tpu.memory_space<vmem>>, vector<1x256xf32>
    %612 = arith.mulf %611, %610 : vector<1x256xf32>
    %613 = arith.addf %600, %612 : vector<1x256xf32>
    %614 = vector.extract_strided_slice %53 {offsets = [0, 46], sizes = [2, 256], strides = [1, 1]} : vector<2x512xf32> to vector<2x256xf32>
    %c43 = arith.constant 43 : index
    %615 = memref.load %arg5[%c43] : memref<98xf32, #tpu.memory_space<smem>>
    %616 = vector.extract_strided_slice %614 {offsets = [0, 0], sizes = [1, 256], strides = [1, 1]} : vector<2x256xf32> to vector<1x256xf32>
    %617 = vector.broadcast %615 : f32 to vector<1x256xf32>
    %618 = arith.mulf %617, %616 : vector<1x256xf32>
    %c92 = arith.constant 92 : index
    %619 = memref.load %arg5[%c92] : memref<98xf32, #tpu.memory_space<smem>>
    %620 = vector.extract_strided_slice %614 {offsets = [1, 0], sizes = [1, 256], strides = [1, 1]} : vector<2x256xf32> to vector<1x256xf32>
    %621 = vector.broadcast %619 : f32 to vector<1x256xf32>
    %622 = arith.mulf %621, %620 : vector<1x256xf32>
    %623 = arith.addf %618, %622 : vector<1x256xf32>
    %c43_106 = arith.constant 43 : index
    %c0_107 = arith.constant 0 : index
    %624 = vector.load %arg4[%c43_106, %c0_107] : memref<49x256xf32, #tpu.memory_space<vmem>>, vector<1x256xf32>
    %625 = arith.mulf %624, %623 : vector<1x256xf32>
    %626 = arith.addf %613, %625 : vector<1x256xf32>
    %627 = vector.extract_strided_slice %53 {offsets = [0, 47], sizes = [2, 256], strides = [1, 1]} : vector<2x512xf32> to vector<2x256xf32>
    %c44 = arith.constant 44 : index
    %628 = memref.load %arg5[%c44] : memref<98xf32, #tpu.memory_space<smem>>
    %629 = vector.extract_strided_slice %627 {offsets = [0, 0], sizes = [1, 256], strides = [1, 1]} : vector<2x256xf32> to vector<1x256xf32>
    %630 = vector.broadcast %628 : f32 to vector<1x256xf32>
    %631 = arith.mulf %630, %629 : vector<1x256xf32>
    %c93 = arith.constant 93 : index
    %632 = memref.load %arg5[%c93] : memref<98xf32, #tpu.memory_space<smem>>
    %633 = vector.extract_strided_slice %627 {offsets = [1, 0], sizes = [1, 256], strides = [1, 1]} : vector<2x256xf32> to vector<1x256xf32>
    %634 = vector.broadcast %632 : f32 to vector<1x256xf32>
    %635 = arith.mulf %634, %633 : vector<1x256xf32>
    %636 = arith.addf %631, %635 : vector<1x256xf32>
    %c44_108 = arith.constant 44 : index
    %c0_109 = arith.constant 0 : index
    %637 = vector.load %arg4[%c44_108, %c0_109] : memref<49x256xf32, #tpu.memory_space<vmem>>, vector<1x256xf32>
    %638 = arith.mulf %637, %636 : vector<1x256xf32>
    %639 = arith.addf %626, %638 : vector<1x256xf32>
    %640 = vector.extract_strided_slice %53 {offsets = [0, 48], sizes = [2, 256], strides = [1, 1]} : vector<2x512xf32> to vector<2x256xf32>
    %c45 = arith.constant 45 : index
    %641 = memref.load %arg5[%c45] : memref<98xf32, #tpu.memory_space<smem>>
    %642 = vector.extract_strided_slice %640 {offsets = [0, 0], sizes = [1, 256], strides = [1, 1]} : vector<2x256xf32> to vector<1x256xf32>
    %643 = vector.broadcast %641 : f32 to vector<1x256xf32>
    %644 = arith.mulf %643, %642 : vector<1x256xf32>
    %c94 = arith.constant 94 : index
    %645 = memref.load %arg5[%c94] : memref<98xf32, #tpu.memory_space<smem>>
    %646 = vector.extract_strided_slice %640 {offsets = [1, 0], sizes = [1, 256], strides = [1, 1]} : vector<2x256xf32> to vector<1x256xf32>
    %647 = vector.broadcast %645 : f32 to vector<1x256xf32>
    %648 = arith.mulf %647, %646 : vector<1x256xf32>
    %649 = arith.addf %644, %648 : vector<1x256xf32>
    %c45_110 = arith.constant 45 : index
    %c0_111 = arith.constant 0 : index
    %650 = vector.load %arg4[%c45_110, %c0_111] : memref<49x256xf32, #tpu.memory_space<vmem>>, vector<1x256xf32>
    %651 = arith.mulf %650, %649 : vector<1x256xf32>
    %652 = arith.addf %639, %651 : vector<1x256xf32>
    %653 = vector.extract_strided_slice %53 {offsets = [0, 49], sizes = [2, 256], strides = [1, 1]} : vector<2x512xf32> to vector<2x256xf32>
    %c46 = arith.constant 46 : index
    %654 = memref.load %arg5[%c46] : memref<98xf32, #tpu.memory_space<smem>>
    %655 = vector.extract_strided_slice %653 {offsets = [0, 0], sizes = [1, 256], strides = [1, 1]} : vector<2x256xf32> to vector<1x256xf32>
    %656 = vector.broadcast %654 : f32 to vector<1x256xf32>
    %657 = arith.mulf %656, %655 : vector<1x256xf32>
    %c95 = arith.constant 95 : index
    %658 = memref.load %arg5[%c95] : memref<98xf32, #tpu.memory_space<smem>>
    %659 = vector.extract_strided_slice %653 {offsets = [1, 0], sizes = [1, 256], strides = [1, 1]} : vector<2x256xf32> to vector<1x256xf32>
    %660 = vector.broadcast %658 : f32 to vector<1x256xf32>
    %661 = arith.mulf %660, %659 : vector<1x256xf32>
    %662 = arith.addf %657, %661 : vector<1x256xf32>
    %c46_112 = arith.constant 46 : index
    %c0_113 = arith.constant 0 : index
    %663 = vector.load %arg4[%c46_112, %c0_113] : memref<49x256xf32, #tpu.memory_space<vmem>>, vector<1x256xf32>
    %664 = arith.mulf %663, %662 : vector<1x256xf32>
    %665 = arith.addf %652, %664 : vector<1x256xf32>
    %666 = vector.extract_strided_slice %53 {offsets = [0, 50], sizes = [2, 256], strides = [1, 1]} : vector<2x512xf32> to vector<2x256xf32>
    %c47 = arith.constant 47 : index
    %667 = memref.load %arg5[%c47] : memref<98xf32, #tpu.memory_space<smem>>
    %668 = vector.extract_strided_slice %666 {offsets = [0, 0], sizes = [1, 256], strides = [1, 1]} : vector<2x256xf32> to vector<1x256xf32>
    %669 = vector.broadcast %667 : f32 to vector<1x256xf32>
    %670 = arith.mulf %669, %668 : vector<1x256xf32>
    %c96 = arith.constant 96 : index
    %671 = memref.load %arg5[%c96] : memref<98xf32, #tpu.memory_space<smem>>
    %672 = vector.extract_strided_slice %666 {offsets = [1, 0], sizes = [1, 256], strides = [1, 1]} : vector<2x256xf32> to vector<1x256xf32>
    %673 = vector.broadcast %671 : f32 to vector<1x256xf32>
    %674 = arith.mulf %673, %672 : vector<1x256xf32>
    %675 = arith.addf %670, %674 : vector<1x256xf32>
    %c47_114 = arith.constant 47 : index
    %c0_115 = arith.constant 0 : index
    %676 = vector.load %arg4[%c47_114, %c0_115] : memref<49x256xf32, #tpu.memory_space<vmem>>, vector<1x256xf32>
    %677 = arith.mulf %676, %675 : vector<1x256xf32>
    %678 = arith.addf %665, %677 : vector<1x256xf32>
    %679 = vector.extract_strided_slice %53 {offsets = [0, 51], sizes = [2, 256], strides = [1, 1]} : vector<2x512xf32> to vector<2x256xf32>
    %c48 = arith.constant 48 : index
    %680 = memref.load %arg5[%c48] : memref<98xf32, #tpu.memory_space<smem>>
    %681 = vector.extract_strided_slice %679 {offsets = [0, 0], sizes = [1, 256], strides = [1, 1]} : vector<2x256xf32> to vector<1x256xf32>
    %682 = vector.broadcast %680 : f32 to vector<1x256xf32>
    %683 = arith.mulf %682, %681 : vector<1x256xf32>
    %c97 = arith.constant 97 : index
    %684 = memref.load %arg5[%c97] : memref<98xf32, #tpu.memory_space<smem>>
    %685 = vector.extract_strided_slice %679 {offsets = [1, 0], sizes = [1, 256], strides = [1, 1]} : vector<2x256xf32> to vector<1x256xf32>
    %686 = vector.broadcast %684 : f32 to vector<1x256xf32>
    %687 = arith.mulf %686, %685 : vector<1x256xf32>
    %688 = arith.addf %683, %687 : vector<1x256xf32>
    %c48_116 = arith.constant 48 : index
    %c0_117 = arith.constant 0 : index
    %689 = vector.load %arg4[%c48_116, %c0_117] : memref<49x256xf32, #tpu.memory_space<vmem>>, vector<1x256xf32>
    %690 = arith.mulf %689, %688 : vector<1x256xf32>
    %691 = arith.addf %678, %690 : vector<1x256xf32>
    %692 = arith.negf %691 : vector<1x256xf32>
    %693 = math.exp %692 : vector<1x256xf32>
    %cst_118 = arith.constant 1.000000e+00 : f32
    %694 = vector.broadcast %cst_118 : f32 to vector<1x256xf32>
    %695 = arith.addf %694, %693 : vector<1x256xf32>
    %696 = arith.divf %694, %695 : vector<1x256xf32>
    %697 = vector.broadcast %696 : vector<1x256xf32> to vector<32x256xf32>
    %698 = arith.mulf %45, %697 : vector<32x256xf32>
    %c0_119 = arith.constant 0 : index
    %c0_120 = arith.constant 0 : index
    %c0_121 = arith.constant 0 : index
    %699 = vector.load %arg6[%c0_119, %c0_120, %c0_121] : memref<2x32x256xf32, #tpu.memory_space<vmem>>, vector<1x32x256xf32>
    %700 = vector.shape_cast %699 : vector<1x32x256xf32> to vector<32x256xf32>
    %701 = vector.shape_cast %698 : vector<32x256xf32> to vector<1x32x256xf32>
    tpu.vector_store %arg6[%c0_119, %c0_120, %c0_121], %701 {strides = array<i32>} : memref<2x32x256xf32, #tpu.memory_space<vmem>>, vector<1x32x256xf32>,
    %c1_122 = arith.constant 1 : index
    %c0_123 = arith.constant 0 : index
    %c0_124 = arith.constant 0 : index
    %702 = vector.load %arg1[%c1_122, %c0_123, %c0_124] : memref<2x32x256xf32, #tpu.memory_space<vmem>>, vector<1x32x256xf32>
    %703 = vector.shape_cast %702 : vector<1x32x256xf32> to vector<32x256xf32>
    %cst_125 = arith.constant dense<0.000000e+00> : vector<32xf32>
    %704 = vector.multi_reduction <add>, %703, %cst_125 [1] : vector<32x256xf32> to vector<32xf32>
    %705 = vector.shape_cast %704 : vector<32xf32> to vector<32x1xf32>
    %cst_126 = arith.constant 2.560000e+02 : f32
    %706 = vector.broadcast %cst_126 : f32 to vector<32x1xf32>
    %707 = arith.divf %705, %706 : vector<32x1xf32>
    %cst_127 = arith.constant dense<0xFF800000> : vector<32xf32>
    %708 = vector.multi_reduction <maximumf>, %703, %cst_127 [1] : vector<32x256xf32> to vector<32xf32>
    %709 = vector.shape_cast %708 : vector<32xf32> to vector<32x1xf32>
    %710 = vector.broadcast %707 : vector<32x1xf32> to vector<32x2xf32>
    %711 = arith.mulf %0, %710 : vector<32x2xf32>
    %cst_128 = arith.constant dense<0.000000e+00> : vector<2xf32>
    %712 = vector.multi_reduction <add>, %711, %cst_128 [0] : vector<32x2xf32> to vector<2xf32>
    %713 = vector.shape_cast %712 : vector<2xf32> to vector<1x2xf32>
    %714 = vector.broadcast %709 : vector<32x1xf32> to vector<32x2xf32>
    %715 = arith.mulf %0, %714 : vector<32x2xf32>
    %cst_129 = arith.constant dense<0.000000e+00> : vector<2xf32>
    %716 = vector.multi_reduction <add>, %715, %cst_129 [0] : vector<32x2xf32> to vector<2xf32>
    %717 = vector.shape_cast %716 : vector<2xf32> to vector<1x2xf32>
    %718 = arith.negf %713 : vector<1x2xf32>
    %719 = math.exp %718 : vector<1x2xf32>
    %cst_130 = arith.constant 1.000000e+00 : f32
    %720 = vector.broadcast %cst_130 : f32 to vector<1x2xf32>
    %721 = arith.addf %720, %719 : vector<1x2xf32>
    %722 = arith.divf %720, %721 : vector<1x2xf32>
    %723 = arith.mulf %713, %722 : vector<1x2xf32>
    %724 = arith.negf %717 : vector<1x2xf32>
    %725 = math.exp %724 : vector<1x2xf32>
    %cst_131 = arith.constant 1.000000e+00 : f32
    %726 = vector.broadcast %cst_131 : f32 to vector<1x2xf32>
    %727 = arith.addf %726, %725 : vector<1x2xf32>
    %728 = arith.divf %726, %727 : vector<1x2xf32>
    %729 = arith.mulf %717, %728 : vector<1x2xf32>
    %730 = vector.broadcast %723 : vector<1x2xf32> to vector<32x2xf32>
    %731 = arith.mulf %1, %730 : vector<32x2xf32>
    %cst_132 = arith.constant dense<0.000000e+00> : vector<32xf32>
    %732 = vector.multi_reduction <add>, %731, %cst_132 [1] : vector<32x2xf32> to vector<32xf32>
    %733 = vector.shape_cast %732 : vector<32xf32> to vector<32x1xf32>
    %734 = vector.broadcast %729 : vector<1x2xf32> to vector<32x2xf32>
    %735 = arith.mulf %1, %734 : vector<32x2xf32>
    %cst_133 = arith.constant dense<0.000000e+00> : vector<32xf32>
    %736 = vector.multi_reduction <add>, %735, %cst_133 [1] : vector<32x2xf32> to vector<32xf32>
    %737 = vector.shape_cast %736 : vector<32xf32> to vector<32x1xf32>
    %738 = arith.addf %733, %737 : vector<32x1xf32>
    %739 = arith.negf %738 : vector<32x1xf32>
    %740 = math.exp %739 : vector<32x1xf32>
    %cst_134 = arith.constant 1.000000e+00 : f32
    %741 = vector.broadcast %cst_134 : f32 to vector<32x1xf32>
    %742 = arith.addf %741, %740 : vector<32x1xf32>
    %743 = arith.divf %741, %742 : vector<32x1xf32>
    %744 = vector.broadcast %743 : vector<32x1xf32> to vector<32x256xf32>
    %745 = arith.mulf %703, %744 : vector<32x256xf32>
    %cst_135 = arith.constant dense<0.000000e+00> : vector<256xf32>
    %746 = vector.multi_reduction <add>, %745, %cst_135 [0] : vector<32x256xf32> to vector<256xf32>
    %747 = vector.shape_cast %746 : vector<256xf32> to vector<1x256xf32>
    %cst_136 = arith.constant 3.200000e+01 : f32
    %748 = vector.broadcast %cst_136 : f32 to vector<1x256xf32>
    %749 = arith.divf %747, %748 : vector<1x256xf32>
    %cst_137 = arith.constant dense<0xFF800000> : vector<256xf32>
    %750 = vector.multi_reduction <maximumf>, %745, %cst_137 [0] : vector<32x256xf32> to vector<256xf32>
    %751 = vector.shape_cast %750 : vector<256xf32> to vector<1x256xf32>
    %752 = tpu.concatenate %749, %751 in 0 : vector<1x256xf32>, vector<1x256xf32> -> vector<2x256xf32>
    %753 = tpu.concatenate %752, %752 in 1 : vector<2x256xf32>, vector<2x256xf32> -> vector<2x512xf32>
    %cst_138 = arith.constant 0.000000e+00 : f32
    %754 = vector.broadcast %cst_138 : f32 to vector<1x256xf32>
    %755 = vector.extract_strided_slice %753 {offsets = [0, 205], sizes = [2, 256], strides = [1, 1]} : vector<2x512xf32> to vector<2x256xf32>
    %c0_139 = arith.constant 0 : index
    %756 = memref.load %arg5[%c0_139] : memref<98xf32, #tpu.memory_space<smem>>
    %757 = vector.extract_strided_slice %755 {offsets = [0, 0], sizes = [1, 256], strides = [1, 1]} : vector<2x256xf32> to vector<1x256xf32>
    %758 = vector.broadcast %756 : f32 to vector<1x256xf32>
    %759 = arith.mulf %758, %757 : vector<1x256xf32>
    %c49_140 = arith.constant 49 : index
    %760 = memref.load %arg5[%c49_140] : memref<98xf32, #tpu.memory_space<smem>>
    %761 = vector.extract_strided_slice %755 {offsets = [1, 0], sizes = [1, 256], strides = [1, 1]} : vector<2x256xf32> to vector<1x256xf32>
    %762 = vector.broadcast %760 : f32 to vector<1x256xf32>
    %763 = arith.mulf %762, %761 : vector<1x256xf32>
    %764 = arith.addf %759, %763 : vector<1x256xf32>
    %c0_141 = arith.constant 0 : index
    %c0_142 = arith.constant 0 : index
    %765 = vector.load %arg4[%c0_141, %c0_142] : memref<49x256xf32, #tpu.memory_space<vmem>>, vector<1x256xf32>
    %766 = arith.mulf %765, %764 : vector<1x256xf32>
    %767 = arith.addf %754, %766 : vector<1x256xf32>
    %768 = vector.extract_strided_slice %753 {offsets = [0, 206], sizes = [2, 256], strides = [1, 1]} : vector<2x512xf32> to vector<2x256xf32>
    %c1_143 = arith.constant 1 : index
    %769 = memref.load %arg5[%c1_143] : memref<98xf32, #tpu.memory_space<smem>>
    %770 = vector.extract_strided_slice %768 {offsets = [0, 0], sizes = [1, 256], strides = [1, 1]} : vector<2x256xf32> to vector<1x256xf32>
    %771 = vector.broadcast %769 : f32 to vector<1x256xf32>
    %772 = arith.mulf %771, %770 : vector<1x256xf32>
    %c50_144 = arith.constant 50 : index
    %773 = memref.load %arg5[%c50_144] : memref<98xf32, #tpu.memory_space<smem>>
    %774 = vector.extract_strided_slice %768 {offsets = [1, 0], sizes = [1, 256], strides = [1, 1]} : vector<2x256xf32> to vector<1x256xf32>
    %775 = vector.broadcast %773 : f32 to vector<1x256xf32>
    %776 = arith.mulf %775, %774 : vector<1x256xf32>
    %777 = arith.addf %772, %776 : vector<1x256xf32>
    %c1_145 = arith.constant 1 : index
    %c0_146 = arith.constant 0 : index
    %778 = vector.load %arg4[%c1_145, %c0_146] : memref<49x256xf32, #tpu.memory_space<vmem>>, vector<1x256xf32>
    %779 = arith.mulf %778, %777 : vector<1x256xf32>
    %780 = arith.addf %767, %779 : vector<1x256xf32>
    %781 = vector.extract_strided_slice %753 {offsets = [0, 207], sizes = [2, 256], strides = [1, 1]} : vector<2x512xf32> to vector<2x256xf32>
    %c2_147 = arith.constant 2 : index
    %782 = memref.load %arg5[%c2_147] : memref<98xf32, #tpu.memory_space<smem>>
    %783 = vector.extract_strided_slice %781 {offsets = [0, 0], sizes = [1, 256], strides = [1, 1]} : vector<2x256xf32> to vector<1x256xf32>
    %784 = vector.broadcast %782 : f32 to vector<1x256xf32>
    %785 = arith.mulf %784, %783 : vector<1x256xf32>
    %c51_148 = arith.constant 51 : index
    %786 = memref.load %arg5[%c51_148] : memref<98xf32, #tpu.memory_space<smem>>
    %787 = vector.extract_strided_slice %781 {offsets = [1, 0], sizes = [1, 256], strides = [1, 1]} : vector<2x256xf32> to vector<1x256xf32>
    %788 = vector.broadcast %786 : f32 to vector<1x256xf32>
    %789 = arith.mulf %788, %787 : vector<1x256xf32>
    %790 = arith.addf %785, %789 : vector<1x256xf32>
    %c2_149 = arith.constant 2 : index
    %c0_150 = arith.constant 0 : index
    %791 = vector.load %arg4[%c2_149, %c0_150] : memref<49x256xf32, #tpu.memory_space<vmem>>, vector<1x256xf32>
    %792 = arith.mulf %791, %790 : vector<1x256xf32>
    %793 = arith.addf %780, %792 : vector<1x256xf32>
    %794 = vector.extract_strided_slice %753 {offsets = [0, 208], sizes = [2, 256], strides = [1, 1]} : vector<2x512xf32> to vector<2x256xf32>
    %c3_151 = arith.constant 3 : index
    %795 = memref.load %arg5[%c3_151] : memref<98xf32, #tpu.memory_space<smem>>
    %796 = vector.extract_strided_slice %794 {offsets = [0, 0], sizes = [1, 256], strides = [1, 1]} : vector<2x256xf32> to vector<1x256xf32>
    %797 = vector.broadcast %795 : f32 to vector<1x256xf32>
    %798 = arith.mulf %797, %796 : vector<1x256xf32>
    %c52_152 = arith.constant 52 : index
    %799 = memref.load %arg5[%c52_152] : memref<98xf32, #tpu.memory_space<smem>>
    %800 = vector.extract_strided_slice %794 {offsets = [1, 0], sizes = [1, 256], strides = [1, 1]} : vector<2x256xf32> to vector<1x256xf32>
    %801 = vector.broadcast %799 : f32 to vector<1x256xf32>
    %802 = arith.mulf %801, %800 : vector<1x256xf32>
    %803 = arith.addf %798, %802 : vector<1x256xf32>
    %c3_153 = arith.constant 3 : index
    %c0_154 = arith.constant 0 : index
    %804 = vector.load %arg4[%c3_153, %c0_154] : memref<49x256xf32, #tpu.memory_space<vmem>>, vector<1x256xf32>
    %805 = arith.mulf %804, %803 : vector<1x256xf32>
    %806 = arith.addf %793, %805 : vector<1x256xf32>
    %807 = vector.extract_strided_slice %753 {offsets = [0, 209], sizes = [2, 256], strides = [1, 1]} : vector<2x512xf32> to vector<2x256xf32>
    %c4_155 = arith.constant 4 : index
    %808 = memref.load %arg5[%c4_155] : memref<98xf32, #tpu.memory_space<smem>>
    %809 = vector.extract_strided_slice %807 {offsets = [0, 0], sizes = [1, 256], strides = [1, 1]} : vector<2x256xf32> to vector<1x256xf32>
    %810 = vector.broadcast %808 : f32 to vector<1x256xf32>
    %811 = arith.mulf %810, %809 : vector<1x256xf32>
    %c53_156 = arith.constant 53 : index
    %812 = memref.load %arg5[%c53_156] : memref<98xf32, #tpu.memory_space<smem>>
    %813 = vector.extract_strided_slice %807 {offsets = [1, 0], sizes = [1, 256], strides = [1, 1]} : vector<2x256xf32> to vector<1x256xf32>
    %814 = vector.broadcast %812 : f32 to vector<1x256xf32>
    %815 = arith.mulf %814, %813 : vector<1x256xf32>
    %816 = arith.addf %811, %815 : vector<1x256xf32>
    %c4_157 = arith.constant 4 : index
    %c0_158 = arith.constant 0 : index
    %817 = vector.load %arg4[%c4_157, %c0_158] : memref<49x256xf32, #tpu.memory_space<vmem>>, vector<1x256xf32>
    %818 = arith.mulf %817, %816 : vector<1x256xf32>
    %819 = arith.addf %806, %818 : vector<1x256xf32>
    %820 = vector.extract_strided_slice %753 {offsets = [0, 210], sizes = [2, 256], strides = [1, 1]} : vector<2x512xf32> to vector<2x256xf32>
    %c5_159 = arith.constant 5 : index
    %821 = memref.load %arg5[%c5_159] : memref<98xf32, #tpu.memory_space<smem>>
    %822 = vector.extract_strided_slice %820 {offsets = [0, 0], sizes = [1, 256], strides = [1, 1]} : vector<2x256xf32> to vector<1x256xf32>
    %823 = vector.broadcast %821 : f32 to vector<1x256xf32>
    %824 = arith.mulf %823, %822 : vector<1x256xf32>
    %c54_160 = arith.constant 54 : index
    %825 = memref.load %arg5[%c54_160] : memref<98xf32, #tpu.memory_space<smem>>
    %826 = vector.extract_strided_slice %820 {offsets = [1, 0], sizes = [1, 256], strides = [1, 1]} : vector<2x256xf32> to vector<1x256xf32>
    %827 = vector.broadcast %825 : f32 to vector<1x256xf32>
    %828 = arith.mulf %827, %826 : vector<1x256xf32>
    %829 = arith.addf %824, %828 : vector<1x256xf32>
    %c5_161 = arith.constant 5 : index
    %c0_162 = arith.constant 0 : index
    %830 = vector.load %arg4[%c5_161, %c0_162] : memref<49x256xf32, #tpu.memory_space<vmem>>, vector<1x256xf32>
    %831 = arith.mulf %830, %829 : vector<1x256xf32>
    %832 = arith.addf %819, %831 : vector<1x256xf32>
    %833 = vector.extract_strided_slice %753 {offsets = [0, 211], sizes = [2, 256], strides = [1, 1]} : vector<2x512xf32> to vector<2x256xf32>
    %c6_163 = arith.constant 6 : index
    %834 = memref.load %arg5[%c6_163] : memref<98xf32, #tpu.memory_space<smem>>
    %835 = vector.extract_strided_slice %833 {offsets = [0, 0], sizes = [1, 256], strides = [1, 1]} : vector<2x256xf32> to vector<1x256xf32>
    %836 = vector.broadcast %834 : f32 to vector<1x256xf32>
    %837 = arith.mulf %836, %835 : vector<1x256xf32>
    %c55_164 = arith.constant 55 : index
    %838 = memref.load %arg5[%c55_164] : memref<98xf32, #tpu.memory_space<smem>>
    %839 = vector.extract_strided_slice %833 {offsets = [1, 0], sizes = [1, 256], strides = [1, 1]} : vector<2x256xf32> to vector<1x256xf32>
    %840 = vector.broadcast %838 : f32 to vector<1x256xf32>
    %841 = arith.mulf %840, %839 : vector<1x256xf32>
    %842 = arith.addf %837, %841 : vector<1x256xf32>
    %c6_165 = arith.constant 6 : index
    %c0_166 = arith.constant 0 : index
    %843 = vector.load %arg4[%c6_165, %c0_166] : memref<49x256xf32, #tpu.memory_space<vmem>>, vector<1x256xf32>
    %844 = arith.mulf %843, %842 : vector<1x256xf32>
    %845 = arith.addf %832, %844 : vector<1x256xf32>
    %846 = vector.extract_strided_slice %753 {offsets = [0, 221], sizes = [2, 256], strides = [1, 1]} : vector<2x512xf32> to vector<2x256xf32>
    %c7_167 = arith.constant 7 : index
    %847 = memref.load %arg5[%c7_167] : memref<98xf32, #tpu.memory_space<smem>>
    %848 = vector.extract_strided_slice %846 {offsets = [0, 0], sizes = [1, 256], strides = [1, 1]} : vector<2x256xf32> to vector<1x256xf32>
    %849 = vector.broadcast %847 : f32 to vector<1x256xf32>
    %850 = arith.mulf %849, %848 : vector<1x256xf32>
    %c56_168 = arith.constant 56 : index
    %851 = memref.load %arg5[%c56_168] : memref<98xf32, #tpu.memory_space<smem>>
    %852 = vector.extract_strided_slice %846 {offsets = [1, 0], sizes = [1, 256], strides = [1, 1]} : vector<2x256xf32> to vector<1x256xf32>
    %853 = vector.broadcast %851 : f32 to vector<1x256xf32>
    %854 = arith.mulf %853, %852 : vector<1x256xf32>
    %855 = arith.addf %850, %854 : vector<1x256xf32>
    %c7_169 = arith.constant 7 : index
    %c0_170 = arith.constant 0 : index
    %856 = vector.load %arg4[%c7_169, %c0_170] : memref<49x256xf32, #tpu.memory_space<vmem>>, vector<1x256xf32>
    %857 = arith.mulf %856, %855 : vector<1x256xf32>
    %858 = arith.addf %845, %857 : vector<1x256xf32>
    %859 = vector.extract_strided_slice %753 {offsets = [0, 222], sizes = [2, 256], strides = [1, 1]} : vector<2x512xf32> to vector<2x256xf32>
    %c8_171 = arith.constant 8 : index
    %860 = memref.load %arg5[%c8_171] : memref<98xf32, #tpu.memory_space<smem>>
    %861 = vector.extract_strided_slice %859 {offsets = [0, 0], sizes = [1, 256], strides = [1, 1]} : vector<2x256xf32> to vector<1x256xf32>
    %862 = vector.broadcast %860 : f32 to vector<1x256xf32>
    %863 = arith.mulf %862, %861 : vector<1x256xf32>
    %c57_172 = arith.constant 57 : index
    %864 = memref.load %arg5[%c57_172] : memref<98xf32, #tpu.memory_space<smem>>
    %865 = vector.extract_strided_slice %859 {offsets = [1, 0], sizes = [1, 256], strides = [1, 1]} : vector<2x256xf32> to vector<1x256xf32>
    %866 = vector.broadcast %864 : f32 to vector<1x256xf32>
    %867 = arith.mulf %866, %865 : vector<1x256xf32>
    %868 = arith.addf %863, %867 : vector<1x256xf32>
    %c8_173 = arith.constant 8 : index
    %c0_174 = arith.constant 0 : index
    %869 = vector.load %arg4[%c8_173, %c0_174] : memref<49x256xf32, #tpu.memory_space<vmem>>, vector<1x256xf32>
    %870 = arith.mulf %869, %868 : vector<1x256xf32>
    %871 = arith.addf %858, %870 : vector<1x256xf32>
    %872 = vector.extract_strided_slice %753 {offsets = [0, 223], sizes = [2, 256], strides = [1, 1]} : vector<2x512xf32> to vector<2x256xf32>
    %c9_175 = arith.constant 9 : index
    %873 = memref.load %arg5[%c9_175] : memref<98xf32, #tpu.memory_space<smem>>
    %874 = vector.extract_strided_slice %872 {offsets = [0, 0], sizes = [1, 256], strides = [1, 1]} : vector<2x256xf32> to vector<1x256xf32>
    %875 = vector.broadcast %873 : f32 to vector<1x256xf32>
    %876 = arith.mulf %875, %874 : vector<1x256xf32>
    %c58_176 = arith.constant 58 : index
    %877 = memref.load %arg5[%c58_176] : memref<98xf32, #tpu.memory_space<smem>>
    %878 = vector.extract_strided_slice %872 {offsets = [1, 0], sizes = [1, 256], strides = [1, 1]} : vector<2x256xf32> to vector<1x256xf32>
    %879 = vector.broadcast %877 : f32 to vector<1x256xf32>
    %880 = arith.mulf %879, %878 : vector<1x256xf32>
    %881 = arith.addf %876, %880 : vector<1x256xf32>
    %c9_177 = arith.constant 9 : index
    %c0_178 = arith.constant 0 : index
    %882 = vector.load %arg4[%c9_177, %c0_178] : memref<49x256xf32, #tpu.memory_space<vmem>>, vector<1x256xf32>
    %883 = arith.mulf %882, %881 : vector<1x256xf32>
    %884 = arith.addf %871, %883 : vector<1x256xf32>
    %885 = vector.extract_strided_slice %753 {offsets = [0, 224], sizes = [2, 256], strides = [1, 1]} : vector<2x512xf32> to vector<2x256xf32>
    %c10_179 = arith.constant 10 : index
    %886 = memref.load %arg5[%c10_179] : memref<98xf32, #tpu.memory_space<smem>>
    %887 = vector.extract_strided_slice %885 {offsets = [0, 0], sizes = [1, 256], strides = [1, 1]} : vector<2x256xf32> to vector<1x256xf32>
    %888 = vector.broadcast %886 : f32 to vector<1x256xf32>
    %889 = arith.mulf %888, %887 : vector<1x256xf32>
    %c59_180 = arith.constant 59 : index
    %890 = memref.load %arg5[%c59_180] : memref<98xf32, #tpu.memory_space<smem>>
    %891 = vector.extract_strided_slice %885 {offsets = [1, 0], sizes = [1, 256], strides = [1, 1]} : vector<2x256xf32> to vector<1x256xf32>
    %892 = vector.broadcast %890 : f32 to vector<1x256xf32>
    %893 = arith.mulf %892, %891 : vector<1x256xf32>
    %894 = arith.addf %889, %893 : vector<1x256xf32>
    %c10_181 = arith.constant 10 : index
    %c0_182 = arith.constant 0 : index
    %895 = vector.load %arg4[%c10_181, %c0_182] : memref<49x256xf32, #tpu.memory_space<vmem>>, vector<1x256xf32>
    %896 = arith.mulf %895, %894 : vector<1x256xf32>
    %897 = arith.addf %884, %896 : vector<1x256xf32>
    %898 = vector.extract_strided_slice %753 {offsets = [0, 225], sizes = [2, 256], strides = [1, 1]} : vector<2x512xf32> to vector<2x256xf32>
    %c11_183 = arith.constant 11 : index
    %899 = memref.load %arg5[%c11_183] : memref<98xf32, #tpu.memory_space<smem>>
    %900 = vector.extract_strided_slice %898 {offsets = [0, 0], sizes = [1, 256], strides = [1, 1]} : vector<2x256xf32> to vector<1x256xf32>
    %901 = vector.broadcast %899 : f32 to vector<1x256xf32>
    %902 = arith.mulf %901, %900 : vector<1x256xf32>
    %c60_184 = arith.constant 60 : index
    %903 = memref.load %arg5[%c60_184] : memref<98xf32, #tpu.memory_space<smem>>
    %904 = vector.extract_strided_slice %898 {offsets = [1, 0], sizes = [1, 256], strides = [1, 1]} : vector<2x256xf32> to vector<1x256xf32>
    %905 = vector.broadcast %903 : f32 to vector<1x256xf32>
    %906 = arith.mulf %905, %904 : vector<1x256xf32>
    %907 = arith.addf %902, %906 : vector<1x256xf32>
    %c11_185 = arith.constant 11 : index
    %c0_186 = arith.constant 0 : index
    %908 = vector.load %arg4[%c11_185, %c0_186] : memref<49x256xf32, #tpu.memory_space<vmem>>, vector<1x256xf32>
    %909 = arith.mulf %908, %907 : vector<1x256xf32>
    %910 = arith.addf %897, %909 : vector<1x256xf32>
    %911 = vector.extract_strided_slice %753 {offsets = [0, 226], sizes = [2, 256], strides = [1, 1]} : vector<2x512xf32> to vector<2x256xf32>
    %c12_187 = arith.constant 12 : index
    %912 = memref.load %arg5[%c12_187] : memref<98xf32, #tpu.memory_space<smem>>
    %913 = vector.extract_strided_slice %911 {offsets = [0, 0], sizes = [1, 256], strides = [1, 1]} : vector<2x256xf32> to vector<1x256xf32>
    %914 = vector.broadcast %912 : f32 to vector<1x256xf32>
    %915 = arith.mulf %914, %913 : vector<1x256xf32>
    %c61_188 = arith.constant 61 : index
    %916 = memref.load %arg5[%c61_188] : memref<98xf32, #tpu.memory_space<smem>>
    %917 = vector.extract_strided_slice %911 {offsets = [1, 0], sizes = [1, 256], strides = [1, 1]} : vector<2x256xf32> to vector<1x256xf32>
    %918 = vector.broadcast %916 : f32 to vector<1x256xf32>
    %919 = arith.mulf %918, %917 : vector<1x256xf32>
    %920 = arith.addf %915, %919 : vector<1x256xf32>
    %c12_189 = arith.constant 12 : index
    %c0_190 = arith.constant 0 : index
    %921 = vector.load %arg4[%c12_189, %c0_190] : memref<49x256xf32, #tpu.memory_space<vmem>>, vector<1x256xf32>
    %922 = arith.mulf %921, %920 : vector<1x256xf32>
    %923 = arith.addf %910, %922 : vector<1x256xf32>
    %924 = vector.extract_strided_slice %753 {offsets = [0, 227], sizes = [2, 256], strides = [1, 1]} : vector<2x512xf32> to vector<2x256xf32>
    %c13_191 = arith.constant 13 : index
    %925 = memref.load %arg5[%c13_191] : memref<98xf32, #tpu.memory_space<smem>>
    %926 = vector.extract_strided_slice %924 {offsets = [0, 0], sizes = [1, 256], strides = [1, 1]} : vector<2x256xf32> to vector<1x256xf32>
    %927 = vector.broadcast %925 : f32 to vector<1x256xf32>
    %928 = arith.mulf %927, %926 : vector<1x256xf32>
    %c62_192 = arith.constant 62 : index
    %929 = memref.load %arg5[%c62_192] : memref<98xf32, #tpu.memory_space<smem>>
    %930 = vector.extract_strided_slice %924 {offsets = [1, 0], sizes = [1, 256], strides = [1, 1]} : vector<2x256xf32> to vector<1x256xf32>
    %931 = vector.broadcast %929 : f32 to vector<1x256xf32>
    %932 = arith.mulf %931, %930 : vector<1x256xf32>
    %933 = arith.addf %928, %932 : vector<1x256xf32>
    %c13_193 = arith.constant 13 : index
    %c0_194 = arith.constant 0 : index
    %934 = vector.load %arg4[%c13_193, %c0_194] : memref<49x256xf32, #tpu.memory_space<vmem>>, vector<1x256xf32>
    %935 = arith.mulf %934, %933 : vector<1x256xf32>
    %936 = arith.addf %923, %935 : vector<1x256xf32>
    %937 = vector.extract_strided_slice %753 {offsets = [0, 237], sizes = [2, 256], strides = [1, 1]} : vector<2x512xf32> to vector<2x256xf32>
    %c14_195 = arith.constant 14 : index
    %938 = memref.load %arg5[%c14_195] : memref<98xf32, #tpu.memory_space<smem>>
    %939 = vector.extract_strided_slice %937 {offsets = [0, 0], sizes = [1, 256], strides = [1, 1]} : vector<2x256xf32> to vector<1x256xf32>
    %940 = vector.broadcast %938 : f32 to vector<1x256xf32>
    %941 = arith.mulf %940, %939 : vector<1x256xf32>
    %c63_196 = arith.constant 63 : index
    %942 = memref.load %arg5[%c63_196] : memref<98xf32, #tpu.memory_space<smem>>
    %943 = vector.extract_strided_slice %937 {offsets = [1, 0], sizes = [1, 256], strides = [1, 1]} : vector<2x256xf32> to vector<1x256xf32>
    %944 = vector.broadcast %942 : f32 to vector<1x256xf32>
    %945 = arith.mulf %944, %943 : vector<1x256xf32>
    %946 = arith.addf %941, %945 : vector<1x256xf32>
    %c14_197 = arith.constant 14 : index
    %c0_198 = arith.constant 0 : index
    %947 = vector.load %arg4[%c14_197, %c0_198] : memref<49x256xf32, #tpu.memory_space<vmem>>, vector<1x256xf32>
    %948 = arith.mulf %947, %946 : vector<1x256xf32>
    %949 = arith.addf %936, %948 : vector<1x256xf32>
    %950 = vector.extract_strided_slice %753 {offsets = [0, 238], sizes = [2, 256], strides = [1, 1]} : vector<2x512xf32> to vector<2x256xf32>
    %c15_199 = arith.constant 15 : index
    %951 = memref.load %arg5[%c15_199] : memref<98xf32, #tpu.memory_space<smem>>
    %952 = vector.extract_strided_slice %950 {offsets = [0, 0], sizes = [1, 256], strides = [1, 1]} : vector<2x256xf32> to vector<1x256xf32>
    %953 = vector.broadcast %951 : f32 to vector<1x256xf32>
    %954 = arith.mulf %953, %952 : vector<1x256xf32>
    %c64_200 = arith.constant 64 : index
    %955 = memref.load %arg5[%c64_200] : memref<98xf32, #tpu.memory_space<smem>>
    %956 = vector.extract_strided_slice %950 {offsets = [1, 0], sizes = [1, 256], strides = [1, 1]} : vector<2x256xf32> to vector<1x256xf32>
    %957 = vector.broadcast %955 : f32 to vector<1x256xf32>
    %958 = arith.mulf %957, %956 : vector<1x256xf32>
    %959 = arith.addf %954, %958 : vector<1x256xf32>
    %c15_201 = arith.constant 15 : index
    %c0_202 = arith.constant 0 : index
    %960 = vector.load %arg4[%c15_201, %c0_202] : memref<49x256xf32, #tpu.memory_space<vmem>>, vector<1x256xf32>
    %961 = arith.mulf %960, %959 : vector<1x256xf32>
    %962 = arith.addf %949, %961 : vector<1x256xf32>
    %963 = vector.extract_strided_slice %753 {offsets = [0, 239], sizes = [2, 256], strides = [1, 1]} : vector<2x512xf32> to vector<2x256xf32>
    %c16_203 = arith.constant 16 : index
    %964 = memref.load %arg5[%c16_203] : memref<98xf32, #tpu.memory_space<smem>>
    %965 = vector.extract_strided_slice %963 {offsets = [0, 0], sizes = [1, 256], strides = [1, 1]} : vector<2x256xf32> to vector<1x256xf32>
    %966 = vector.broadcast %964 : f32 to vector<1x256xf32>
    %967 = arith.mulf %966, %965 : vector<1x256xf32>
    %c65_204 = arith.constant 65 : index
    %968 = memref.load %arg5[%c65_204] : memref<98xf32, #tpu.memory_space<smem>>
    %969 = vector.extract_strided_slice %963 {offsets = [1, 0], sizes = [1, 256], strides = [1, 1]} : vector<2x256xf32> to vector<1x256xf32>
    %970 = vector.broadcast %968 : f32 to vector<1x256xf32>
    %971 = arith.mulf %970, %969 : vector<1x256xf32>
    %972 = arith.addf %967, %971 : vector<1x256xf32>
    %c16_205 = arith.constant 16 : index
    %c0_206 = arith.constant 0 : index
    %973 = vector.load %arg4[%c16_205, %c0_206] : memref<49x256xf32, #tpu.memory_space<vmem>>, vector<1x256xf32>
    %974 = arith.mulf %973, %972 : vector<1x256xf32>
    %975 = arith.addf %962, %974 : vector<1x256xf32>
    %976 = vector.extract_strided_slice %753 {offsets = [0, 240], sizes = [2, 256], strides = [1, 1]} : vector<2x512xf32> to vector<2x256xf32>
    %c17_207 = arith.constant 17 : index
    %977 = memref.load %arg5[%c17_207] : memref<98xf32, #tpu.memory_space<smem>>
    %978 = vector.extract_strided_slice %976 {offsets = [0, 0], sizes = [1, 256], strides = [1, 1]} : vector<2x256xf32> to vector<1x256xf32>
    %979 = vector.broadcast %977 : f32 to vector<1x256xf32>
    %980 = arith.mulf %979, %978 : vector<1x256xf32>
    %c66_208 = arith.constant 66 : index
    %981 = memref.load %arg5[%c66_208] : memref<98xf32, #tpu.memory_space<smem>>
    %982 = vector.extract_strided_slice %976 {offsets = [1, 0], sizes = [1, 256], strides = [1, 1]} : vector<2x256xf32> to vector<1x256xf32>
    %983 = vector.broadcast %981 : f32 to vector<1x256xf32>
    %984 = arith.mulf %983, %982 : vector<1x256xf32>
    %985 = arith.addf %980, %984 : vector<1x256xf32>
    %c17_209 = arith.constant 17 : index
    %c0_210 = arith.constant 0 : index
    %986 = vector.load %arg4[%c17_209, %c0_210] : memref<49x256xf32, #tpu.memory_space<vmem>>, vector<1x256xf32>
    %987 = arith.mulf %986, %985 : vector<1x256xf32>
    %988 = arith.addf %975, %987 : vector<1x256xf32>
    %989 = vector.extract_strided_slice %753 {offsets = [0, 241], sizes = [2, 256], strides = [1, 1]} : vector<2x512xf32> to vector<2x256xf32>
    %c18_211 = arith.constant 18 : index
    %990 = memref.load %arg5[%c18_211] : memref<98xf32, #tpu.memory_space<smem>>
    %991 = vector.extract_strided_slice %989 {offsets = [0, 0], sizes = [1, 256], strides = [1, 1]} : vector<2x256xf32> to vector<1x256xf32>
    %992 = vector.broadcast %990 : f32 to vector<1x256xf32>
    %993 = arith.mulf %992, %991 : vector<1x256xf32>
    %c67_212 = arith.constant 67 : index
    %994 = memref.load %arg5[%c67_212] : memref<98xf32, #tpu.memory_space<smem>>
    %995 = vector.extract_strided_slice %989 {offsets = [1, 0], sizes = [1, 256], strides = [1, 1]} : vector<2x256xf32> to vector<1x256xf32>
    %996 = vector.broadcast %994 : f32 to vector<1x256xf32>
    %997 = arith.mulf %996, %995 : vector<1x256xf32>
    %998 = arith.addf %993, %997 : vector<1x256xf32>
    %c18_213 = arith.constant 18 : index
    %c0_214 = arith.constant 0 : index
    %999 = vector.load %arg4[%c18_213, %c0_214] : memref<49x256xf32, #tpu.memory_space<vmem>>, vector<1x256xf32>
    %1000 = arith.mulf %999, %998 : vector<1x256xf32>
    %1001 = arith.addf %988, %1000 : vector<1x256xf32>
    %1002 = vector.extract_strided_slice %753 {offsets = [0, 242], sizes = [2, 256], strides = [1, 1]} : vector<2x512xf32> to vector<2x256xf32>
    %c19_215 = arith.constant 19 : index
    %1003 = memref.load %arg5[%c19_215] : memref<98xf32, #tpu.memory_space<smem>>
    %1004 = vector.extract_strided_slice %1002 {offsets = [0, 0], sizes = [1, 256], strides = [1, 1]} : vector<2x256xf32> to vector<1x256xf32>
    %1005 = vector.broadcast %1003 : f32 to vector<1x256xf32>
    %1006 = arith.mulf %1005, %1004 : vector<1x256xf32>
    %c68_216 = arith.constant 68 : index
    %1007 = memref.load %arg5[%c68_216] : memref<98xf32, #tpu.memory_space<smem>>
    %1008 = vector.extract_strided_slice %1002 {offsets = [1, 0], sizes = [1, 256], strides = [1, 1]} : vector<2x256xf32> to vector<1x256xf32>
    %1009 = vector.broadcast %1007 : f32 to vector<1x256xf32>
    %1010 = arith.mulf %1009, %1008 : vector<1x256xf32>
    %1011 = arith.addf %1006, %1010 : vector<1x256xf32>
    %c19_217 = arith.constant 19 : index
    %c0_218 = arith.constant 0 : index
    %1012 = vector.load %arg4[%c19_217, %c0_218] : memref<49x256xf32, #tpu.memory_space<vmem>>, vector<1x256xf32>
    %1013 = arith.mulf %1012, %1011 : vector<1x256xf32>
    %1014 = arith.addf %1001, %1013 : vector<1x256xf32>
    %1015 = vector.extract_strided_slice %753 {offsets = [0, 243], sizes = [2, 256], strides = [1, 1]} : vector<2x512xf32> to vector<2x256xf32>
    %c20_219 = arith.constant 20 : index
    %1016 = memref.load %arg5[%c20_219] : memref<98xf32, #tpu.memory_space<smem>>
    %1017 = vector.extract_strided_slice %1015 {offsets = [0, 0], sizes = [1, 256], strides = [1, 1]} : vector<2x256xf32> to vector<1x256xf32>
    %1018 = vector.broadcast %1016 : f32 to vector<1x256xf32>
    %1019 = arith.mulf %1018, %1017 : vector<1x256xf32>
    %c69_220 = arith.constant 69 : index
    %1020 = memref.load %arg5[%c69_220] : memref<98xf32, #tpu.memory_space<smem>>
    %1021 = vector.extract_strided_slice %1015 {offsets = [1, 0], sizes = [1, 256], strides = [1, 1]} : vector<2x256xf32> to vector<1x256xf32>
    %1022 = vector.broadcast %1020 : f32 to vector<1x256xf32>
    %1023 = arith.mulf %1022, %1021 : vector<1x256xf32>
    %1024 = arith.addf %1019, %1023 : vector<1x256xf32>
    %c20_221 = arith.constant 20 : index
    %c0_222 = arith.constant 0 : index
    %1025 = vector.load %arg4[%c20_221, %c0_222] : memref<49x256xf32, #tpu.memory_space<vmem>>, vector<1x256xf32>
    %1026 = arith.mulf %1025, %1024 : vector<1x256xf32>
    %1027 = arith.addf %1014, %1026 : vector<1x256xf32>
    %1028 = vector.extract_strided_slice %753 {offsets = [0, 253], sizes = [2, 256], strides = [1, 1]} : vector<2x512xf32> to vector<2x256xf32>
    %c21_223 = arith.constant 21 : index
    %1029 = memref.load %arg5[%c21_223] : memref<98xf32, #tpu.memory_space<smem>>
    %1030 = vector.extract_strided_slice %1028 {offsets = [0, 0], sizes = [1, 256], strides = [1, 1]} : vector<2x256xf32> to vector<1x256xf32>
    %1031 = vector.broadcast %1029 : f32 to vector<1x256xf32>
    %1032 = arith.mulf %1031, %1030 : vector<1x256xf32>
    %c70_224 = arith.constant 70 : index
    %1033 = memref.load %arg5[%c70_224] : memref<98xf32, #tpu.memory_space<smem>>
    %1034 = vector.extract_strided_slice %1028 {offsets = [1, 0], sizes = [1, 256], strides = [1, 1]} : vector<2x256xf32> to vector<1x256xf32>
    %1035 = vector.broadcast %1033 : f32 to vector<1x256xf32>
    %1036 = arith.mulf %1035, %1034 : vector<1x256xf32>
    %1037 = arith.addf %1032, %1036 : vector<1x256xf32>
    %c21_225 = arith.constant 21 : index
    %c0_226 = arith.constant 0 : index
    %1038 = vector.load %arg4[%c21_225, %c0_226] : memref<49x256xf32, #tpu.memory_space<vmem>>, vector<1x256xf32>
    %1039 = arith.mulf %1038, %1037 : vector<1x256xf32>
    %1040 = arith.addf %1027, %1039 : vector<1x256xf32>
    %1041 = vector.extract_strided_slice %753 {offsets = [0, 254], sizes = [2, 256], strides = [1, 1]} : vector<2x512xf32> to vector<2x256xf32>
    %c22_227 = arith.constant 22 : index
    %1042 = memref.load %arg5[%c22_227] : memref<98xf32, #tpu.memory_space<smem>>
    %1043 = vector.extract_strided_slice %1041 {offsets = [0, 0], sizes = [1, 256], strides = [1, 1]} : vector<2x256xf32> to vector<1x256xf32>
    %1044 = vector.broadcast %1042 : f32 to vector<1x256xf32>
    %1045 = arith.mulf %1044, %1043 : vector<1x256xf32>
    %c71_228 = arith.constant 71 : index
    %1046 = memref.load %arg5[%c71_228] : memref<98xf32, #tpu.memory_space<smem>>
    %1047 = vector.extract_strided_slice %1041 {offsets = [1, 0], sizes = [1, 256], strides = [1, 1]} : vector<2x256xf32> to vector<1x256xf32>
    %1048 = vector.broadcast %1046 : f32 to vector<1x256xf32>
    %1049 = arith.mulf %1048, %1047 : vector<1x256xf32>
    %1050 = arith.addf %1045, %1049 : vector<1x256xf32>
    %c22_229 = arith.constant 22 : index
    %c0_230 = arith.constant 0 : index
    %1051 = vector.load %arg4[%c22_229, %c0_230] : memref<49x256xf32, #tpu.memory_space<vmem>>, vector<1x256xf32>
    %1052 = arith.mulf %1051, %1050 : vector<1x256xf32>
    %1053 = arith.addf %1040, %1052 : vector<1x256xf32>
    %1054 = vector.extract_strided_slice %753 {offsets = [0, 255], sizes = [2, 256], strides = [1, 1]} : vector<2x512xf32> to vector<2x256xf32>
    %c23_231 = arith.constant 23 : index
    %1055 = memref.load %arg5[%c23_231] : memref<98xf32, #tpu.memory_space<smem>>
    %1056 = vector.extract_strided_slice %1054 {offsets = [0, 0], sizes = [1, 256], strides = [1, 1]} : vector<2x256xf32> to vector<1x256xf32>
    %1057 = vector.broadcast %1055 : f32 to vector<1x256xf32>
    %1058 = arith.mulf %1057, %1056 : vector<1x256xf32>
    %c72_232 = arith.constant 72 : index
    %1059 = memref.load %arg5[%c72_232] : memref<98xf32, #tpu.memory_space<smem>>
    %1060 = vector.extract_strided_slice %1054 {offsets = [1, 0], sizes = [1, 256], strides = [1, 1]} : vector<2x256xf32> to vector<1x256xf32>
    %1061 = vector.broadcast %1059 : f32 to vector<1x256xf32>
    %1062 = arith.mulf %1061, %1060 : vector<1x256xf32>
    %1063 = arith.addf %1058, %1062 : vector<1x256xf32>
    %c23_233 = arith.constant 23 : index
    %c0_234 = arith.constant 0 : index
    %1064 = vector.load %arg4[%c23_233, %c0_234] : memref<49x256xf32, #tpu.memory_space<vmem>>, vector<1x256xf32>
    %1065 = arith.mulf %1064, %1063 : vector<1x256xf32>
    %1066 = arith.addf %1053, %1065 : vector<1x256xf32>
    %1067 = vector.extract_strided_slice %753 {offsets = [0, 0], sizes = [2, 256], strides = [1, 1]} : vector<2x512xf32> to vector<2x256xf32>
    %c24_235 = arith.constant 24 : index
    %1068 = memref.load %arg5[%c24_235] : memref<98xf32, #tpu.memory_space<smem>>
    %1069 = vector.extract_strided_slice %1067 {offsets = [0, 0], sizes = [1, 256], strides = [1, 1]} : vector<2x256xf32> to vector<1x256xf32>
    %1070 = vector.broadcast %1068 : f32 to vector<1x256xf32>
    %1071 = arith.mulf %1070, %1069 : vector<1x256xf32>
    %c73_236 = arith.constant 73 : index
    %1072 = memref.load %arg5[%c73_236] : memref<98xf32, #tpu.memory_space<smem>>
    %1073 = vector.extract_strided_slice %1067 {offsets = [1, 0], sizes = [1, 256], strides = [1, 1]} : vector<2x256xf32> to vector<1x256xf32>
    %1074 = vector.broadcast %1072 : f32 to vector<1x256xf32>
    %1075 = arith.mulf %1074, %1073 : vector<1x256xf32>
    %1076 = arith.addf %1071, %1075 : vector<1x256xf32>
    %c24_237 = arith.constant 24 : index
    %c0_238 = arith.constant 0 : index
    %1077 = vector.load %arg4[%c24_237, %c0_238] : memref<49x256xf32, #tpu.memory_space<vmem>>, vector<1x256xf32>
    %1078 = arith.mulf %1077, %1076 : vector<1x256xf32>
    %1079 = arith.addf %1066, %1078 : vector<1x256xf32>
    %1080 = vector.extract_strided_slice %753 {offsets = [0, 1], sizes = [2, 256], strides = [1, 1]} : vector<2x512xf32> to vector<2x256xf32>
    %c25_239 = arith.constant 25 : index
    %1081 = memref.load %arg5[%c25_239] : memref<98xf32, #tpu.memory_space<smem>>
    %1082 = vector.extract_strided_slice %1080 {offsets = [0, 0], sizes = [1, 256], strides = [1, 1]} : vector<2x256xf32> to vector<1x256xf32>
    %1083 = vector.broadcast %1081 : f32 to vector<1x256xf32>
    %1084 = arith.mulf %1083, %1082 : vector<1x256xf32>
    %c74_240 = arith.constant 74 : index
    %1085 = memref.load %arg5[%c74_240] : memref<98xf32, #tpu.memory_space<smem>>
    %1086 = vector.extract_strided_slice %1080 {offsets = [1, 0], sizes = [1, 256], strides = [1, 1]} : vector<2x256xf32> to vector<1x256xf32>
    %1087 = vector.broadcast %1085 : f32 to vector<1x256xf32>
    %1088 = arith.mulf %1087, %1086 : vector<1x256xf32>
    %1089 = arith.addf %1084, %1088 : vector<1x256xf32>
    %c25_241 = arith.constant 25 : index
    %c0_242 = arith.constant 0 : index
    %1090 = vector.load %arg4[%c25_241, %c0_242] : memref<49x256xf32, #tpu.memory_space<vmem>>, vector<1x256xf32>
    %1091 = arith.mulf %1090, %1089 : vector<1x256xf32>
    %1092 = arith.addf %1079, %1091 : vector<1x256xf32>
    %1093 = vector.extract_strided_slice %753 {offsets = [0, 2], sizes = [2, 256], strides = [1, 1]} : vector<2x512xf32> to vector<2x256xf32>
    %c26_243 = arith.constant 26 : index
    %1094 = memref.load %arg5[%c26_243] : memref<98xf32, #tpu.memory_space<smem>>
    %1095 = vector.extract_strided_slice %1093 {offsets = [0, 0], sizes = [1, 256], strides = [1, 1]} : vector<2x256xf32> to vector<1x256xf32>
    %1096 = vector.broadcast %1094 : f32 to vector<1x256xf32>
    %1097 = arith.mulf %1096, %1095 : vector<1x256xf32>
    %c75_244 = arith.constant 75 : index
    %1098 = memref.load %arg5[%c75_244] : memref<98xf32, #tpu.memory_space<smem>>
    %1099 = vector.extract_strided_slice %1093 {offsets = [1, 0], sizes = [1, 256], strides = [1, 1]} : vector<2x256xf32> to vector<1x256xf32>
    %1100 = vector.broadcast %1098 : f32 to vector<1x256xf32>
    %1101 = arith.mulf %1100, %1099 : vector<1x256xf32>
    %1102 = arith.addf %1097, %1101 : vector<1x256xf32>
    %c26_245 = arith.constant 26 : index
    %c0_246 = arith.constant 0 : index
    %1103 = vector.load %arg4[%c26_245, %c0_246] : memref<49x256xf32, #tpu.memory_space<vmem>>, vector<1x256xf32>
    %1104 = arith.mulf %1103, %1102 : vector<1x256xf32>
    %1105 = arith.addf %1092, %1104 : vector<1x256xf32>
    %1106 = vector.extract_strided_slice %753 {offsets = [0, 3], sizes = [2, 256], strides = [1, 1]} : vector<2x512xf32> to vector<2x256xf32>
    %c27_247 = arith.constant 27 : index
    %1107 = memref.load %arg5[%c27_247] : memref<98xf32, #tpu.memory_space<smem>>
    %1108 = vector.extract_strided_slice %1106 {offsets = [0, 0], sizes = [1, 256], strides = [1, 1]} : vector<2x256xf32> to vector<1x256xf32>
    %1109 = vector.broadcast %1107 : f32 to vector<1x256xf32>
    %1110 = arith.mulf %1109, %1108 : vector<1x256xf32>
    %c76_248 = arith.constant 76 : index
    %1111 = memref.load %arg5[%c76_248] : memref<98xf32, #tpu.memory_space<smem>>
    %1112 = vector.extract_strided_slice %1106 {offsets = [1, 0], sizes = [1, 256], strides = [1, 1]} : vector<2x256xf32> to vector<1x256xf32>
    %1113 = vector.broadcast %1111 : f32 to vector<1x256xf32>
    %1114 = arith.mulf %1113, %1112 : vector<1x256xf32>
    %1115 = arith.addf %1110, %1114 : vector<1x256xf32>
    %c27_249 = arith.constant 27 : index
    %c0_250 = arith.constant 0 : index
    %1116 = vector.load %arg4[%c27_249, %c0_250] : memref<49x256xf32, #tpu.memory_space<vmem>>, vector<1x256xf32>
    %1117 = arith.mulf %1116, %1115 : vector<1x256xf32>
    %1118 = arith.addf %1105, %1117 : vector<1x256xf32>
    %1119 = vector.extract_strided_slice %753 {offsets = [0, 13], sizes = [2, 256], strides = [1, 1]} : vector<2x512xf32> to vector<2x256xf32>
    %c28_251 = arith.constant 28 : index
    %1120 = memref.load %arg5[%c28_251] : memref<98xf32, #tpu.memory_space<smem>>
    %1121 = vector.extract_strided_slice %1119 {offsets = [0, 0], sizes = [1, 256], strides = [1, 1]} : vector<2x256xf32> to vector<1x256xf32>
    %1122 = vector.broadcast %1120 : f32 to vector<1x256xf32>
    %1123 = arith.mulf %1122, %1121 : vector<1x256xf32>
    %c77_252 = arith.constant 77 : index
    %1124 = memref.load %arg5[%c77_252] : memref<98xf32, #tpu.memory_space<smem>>
    %1125 = vector.extract_strided_slice %1119 {offsets = [1, 0], sizes = [1, 256], strides = [1, 1]} : vector<2x256xf32> to vector<1x256xf32>
    %1126 = vector.broadcast %1124 : f32 to vector<1x256xf32>
    %1127 = arith.mulf %1126, %1125 : vector<1x256xf32>
    %1128 = arith.addf %1123, %1127 : vector<1x256xf32>
    %c28_253 = arith.constant 28 : index
    %c0_254 = arith.constant 0 : index
    %1129 = vector.load %arg4[%c28_253, %c0_254] : memref<49x256xf32, #tpu.memory_space<vmem>>, vector<1x256xf32>
    %1130 = arith.mulf %1129, %1128 : vector<1x256xf32>
    %1131 = arith.addf %1118, %1130 : vector<1x256xf32>
    %1132 = vector.extract_strided_slice %753 {offsets = [0, 14], sizes = [2, 256], strides = [1, 1]} : vector<2x512xf32> to vector<2x256xf32>
    %c29_255 = arith.constant 29 : index
    %1133 = memref.load %arg5[%c29_255] : memref<98xf32, #tpu.memory_space<smem>>
    %1134 = vector.extract_strided_slice %1132 {offsets = [0, 0], sizes = [1, 256], strides = [1, 1]} : vector<2x256xf32> to vector<1x256xf32>
    %1135 = vector.broadcast %1133 : f32 to vector<1x256xf32>
    %1136 = arith.mulf %1135, %1134 : vector<1x256xf32>
    %c78_256 = arith.constant 78 : index
    %1137 = memref.load %arg5[%c78_256] : memref<98xf32, #tpu.memory_space<smem>>
    %1138 = vector.extract_strided_slice %1132 {offsets = [1, 0], sizes = [1, 256], strides = [1, 1]} : vector<2x256xf32> to vector<1x256xf32>
    %1139 = vector.broadcast %1137 : f32 to vector<1x256xf32>
    %1140 = arith.mulf %1139, %1138 : vector<1x256xf32>
    %1141 = arith.addf %1136, %1140 : vector<1x256xf32>
    %c29_257 = arith.constant 29 : index
    %c0_258 = arith.constant 0 : index
    %1142 = vector.load %arg4[%c29_257, %c0_258] : memref<49x256xf32, #tpu.memory_space<vmem>>, vector<1x256xf32>
    %1143 = arith.mulf %1142, %1141 : vector<1x256xf32>
    %1144 = arith.addf %1131, %1143 : vector<1x256xf32>
    %1145 = vector.extract_strided_slice %753 {offsets = [0, 15], sizes = [2, 256], strides = [1, 1]} : vector<2x512xf32> to vector<2x256xf32>
    %c30_259 = arith.constant 30 : index
    %1146 = memref.load %arg5[%c30_259] : memref<98xf32, #tpu.memory_space<smem>>
    %1147 = vector.extract_strided_slice %1145 {offsets = [0, 0], sizes = [1, 256], strides = [1, 1]} : vector<2x256xf32> to vector<1x256xf32>
    %1148 = vector.broadcast %1146 : f32 to vector<1x256xf32>
    %1149 = arith.mulf %1148, %1147 : vector<1x256xf32>
    %c79_260 = arith.constant 79 : index
    %1150 = memref.load %arg5[%c79_260] : memref<98xf32, #tpu.memory_space<smem>>
    %1151 = vector.extract_strided_slice %1145 {offsets = [1, 0], sizes = [1, 256], strides = [1, 1]} : vector<2x256xf32> to vector<1x256xf32>
    %1152 = vector.broadcast %1150 : f32 to vector<1x256xf32>
    %1153 = arith.mulf %1152, %1151 : vector<1x256xf32>
    %1154 = arith.addf %1149, %1153 : vector<1x256xf32>
    %c30_261 = arith.constant 30 : index
    %c0_262 = arith.constant 0 : index
    %1155 = vector.load %arg4[%c30_261, %c0_262] : memref<49x256xf32, #tpu.memory_space<vmem>>, vector<1x256xf32>
    %1156 = arith.mulf %1155, %1154 : vector<1x256xf32>
    %1157 = arith.addf %1144, %1156 : vector<1x256xf32>
    %1158 = vector.extract_strided_slice %753 {offsets = [0, 16], sizes = [2, 256], strides = [1, 1]} : vector<2x512xf32> to vector<2x256xf32>
    %c31_263 = arith.constant 31 : index
    %1159 = memref.load %arg5[%c31_263] : memref<98xf32, #tpu.memory_space<smem>>
    %1160 = vector.extract_strided_slice %1158 {offsets = [0, 0], sizes = [1, 256], strides = [1, 1]} : vector<2x256xf32> to vector<1x256xf32>
    %1161 = vector.broadcast %1159 : f32 to vector<1x256xf32>
    %1162 = arith.mulf %1161, %1160 : vector<1x256xf32>
    %c80_264 = arith.constant 80 : index
    %1163 = memref.load %arg5[%c80_264] : memref<98xf32, #tpu.memory_space<smem>>
    %1164 = vector.extract_strided_slice %1158 {offsets = [1, 0], sizes = [1, 256], strides = [1, 1]} : vector<2x256xf32> to vector<1x256xf32>
    %1165 = vector.broadcast %1163 : f32 to vector<1x256xf32>
    %1166 = arith.mulf %1165, %1164 : vector<1x256xf32>
    %1167 = arith.addf %1162, %1166 : vector<1x256xf32>
    %c31_265 = arith.constant 31 : index
    %c0_266 = arith.constant 0 : index
    %1168 = vector.load %arg4[%c31_265, %c0_266] : memref<49x256xf32, #tpu.memory_space<vmem>>, vector<1x256xf32>
    %1169 = arith.mulf %1168, %1167 : vector<1x256xf32>
    %1170 = arith.addf %1157, %1169 : vector<1x256xf32>
    %1171 = vector.extract_strided_slice %753 {offsets = [0, 17], sizes = [2, 256], strides = [1, 1]} : vector<2x512xf32> to vector<2x256xf32>
    %c32_267 = arith.constant 32 : index
    %1172 = memref.load %arg5[%c32_267] : memref<98xf32, #tpu.memory_space<smem>>
    %1173 = vector.extract_strided_slice %1171 {offsets = [0, 0], sizes = [1, 256], strides = [1, 1]} : vector<2x256xf32> to vector<1x256xf32>
    %1174 = vector.broadcast %1172 : f32 to vector<1x256xf32>
    %1175 = arith.mulf %1174, %1173 : vector<1x256xf32>
    %c81_268 = arith.constant 81 : index
    %1176 = memref.load %arg5[%c81_268] : memref<98xf32, #tpu.memory_space<smem>>
    %1177 = vector.extract_strided_slice %1171 {offsets = [1, 0], sizes = [1, 256], strides = [1, 1]} : vector<2x256xf32> to vector<1x256xf32>
    %1178 = vector.broadcast %1176 : f32 to vector<1x256xf32>
    %1179 = arith.mulf %1178, %1177 : vector<1x256xf32>
    %1180 = arith.addf %1175, %1179 : vector<1x256xf32>
    %c32_269 = arith.constant 32 : index
    %c0_270 = arith.constant 0 : index
    %1181 = vector.load %arg4[%c32_269, %c0_270] : memref<49x256xf32, #tpu.memory_space<vmem>>, vector<1x256xf32>
    %1182 = arith.mulf %1181, %1180 : vector<1x256xf32>
    %1183 = arith.addf %1170, %1182 : vector<1x256xf32>
    %1184 = vector.extract_strided_slice %753 {offsets = [0, 18], sizes = [2, 256], strides = [1, 1]} : vector<2x512xf32> to vector<2x256xf32>
    %c33_271 = arith.constant 33 : index
    %1185 = memref.load %arg5[%c33_271] : memref<98xf32, #tpu.memory_space<smem>>
    %1186 = vector.extract_strided_slice %1184 {offsets = [0, 0], sizes = [1, 256], strides = [1, 1]} : vector<2x256xf32> to vector<1x256xf32>
    %1187 = vector.broadcast %1185 : f32 to vector<1x256xf32>
    %1188 = arith.mulf %1187, %1186 : vector<1x256xf32>
    %c82_272 = arith.constant 82 : index
    %1189 = memref.load %arg5[%c82_272] : memref<98xf32, #tpu.memory_space<smem>>
    %1190 = vector.extract_strided_slice %1184 {offsets = [1, 0], sizes = [1, 256], strides = [1, 1]} : vector<2x256xf32> to vector<1x256xf32>
    %1191 = vector.broadcast %1189 : f32 to vector<1x256xf32>
    %1192 = arith.mulf %1191, %1190 : vector<1x256xf32>
    %1193 = arith.addf %1188, %1192 : vector<1x256xf32>
    %c33_273 = arith.constant 33 : index
    %c0_274 = arith.constant 0 : index
    %1194 = vector.load %arg4[%c33_273, %c0_274] : memref<49x256xf32, #tpu.memory_space<vmem>>, vector<1x256xf32>
    %1195 = arith.mulf %1194, %1193 : vector<1x256xf32>
    %1196 = arith.addf %1183, %1195 : vector<1x256xf32>
    %1197 = vector.extract_strided_slice %753 {offsets = [0, 19], sizes = [2, 256], strides = [1, 1]} : vector<2x512xf32> to vector<2x256xf32>
    %c34_275 = arith.constant 34 : index
    %1198 = memref.load %arg5[%c34_275] : memref<98xf32, #tpu.memory_space<smem>>
    %1199 = vector.extract_strided_slice %1197 {offsets = [0, 0], sizes = [1, 256], strides = [1, 1]} : vector<2x256xf32> to vector<1x256xf32>
    %1200 = vector.broadcast %1198 : f32 to vector<1x256xf32>
    %1201 = arith.mulf %1200, %1199 : vector<1x256xf32>
    %c83_276 = arith.constant 83 : index
    %1202 = memref.load %arg5[%c83_276] : memref<98xf32, #tpu.memory_space<smem>>
    %1203 = vector.extract_strided_slice %1197 {offsets = [1, 0], sizes = [1, 256], strides = [1, 1]} : vector<2x256xf32> to vector<1x256xf32>
    %1204 = vector.broadcast %1202 : f32 to vector<1x256xf32>
    %1205 = arith.mulf %1204, %1203 : vector<1x256xf32>
    %1206 = arith.addf %1201, %1205 : vector<1x256xf32>
    %c34_277 = arith.constant 34 : index
    %c0_278 = arith.constant 0 : index
    %1207 = vector.load %arg4[%c34_277, %c0_278] : memref<49x256xf32, #tpu.memory_space<vmem>>, vector<1x256xf32>
    %1208 = arith.mulf %1207, %1206 : vector<1x256xf32>
    %1209 = arith.addf %1196, %1208 : vector<1x256xf32>
    %1210 = vector.extract_strided_slice %753 {offsets = [0, 29], sizes = [2, 256], strides = [1, 1]} : vector<2x512xf32> to vector<2x256xf32>
    %c35_279 = arith.constant 35 : index
    %1211 = memref.load %arg5[%c35_279] : memref<98xf32, #tpu.memory_space<smem>>
    %1212 = vector.extract_strided_slice %1210 {offsets = [0, 0], sizes = [1, 256], strides = [1, 1]} : vector<2x256xf32> to vector<1x256xf32>
    %1213 = vector.broadcast %1211 : f32 to vector<1x256xf32>
    %1214 = arith.mulf %1213, %1212 : vector<1x256xf32>
    %c84_280 = arith.constant 84 : index
    %1215 = memref.load %arg5[%c84_280] : memref<98xf32, #tpu.memory_space<smem>>
    %1216 = vector.extract_strided_slice %1210 {offsets = [1, 0], sizes = [1, 256], strides = [1, 1]} : vector<2x256xf32> to vector<1x256xf32>
    %1217 = vector.broadcast %1215 : f32 to vector<1x256xf32>
    %1218 = arith.mulf %1217, %1216 : vector<1x256xf32>
    %1219 = arith.addf %1214, %1218 : vector<1x256xf32>
    %c35_281 = arith.constant 35 : index
    %c0_282 = arith.constant 0 : index
    %1220 = vector.load %arg4[%c35_281, %c0_282] : memref<49x256xf32, #tpu.memory_space<vmem>>, vector<1x256xf32>
    %1221 = arith.mulf %1220, %1219 : vector<1x256xf32>
    %1222 = arith.addf %1209, %1221 : vector<1x256xf32>
    %1223 = vector.extract_strided_slice %753 {offsets = [0, 30], sizes = [2, 256], strides = [1, 1]} : vector<2x512xf32> to vector<2x256xf32>
    %c36_283 = arith.constant 36 : index
    %1224 = memref.load %arg5[%c36_283] : memref<98xf32, #tpu.memory_space<smem>>
    %1225 = vector.extract_strided_slice %1223 {offsets = [0, 0], sizes = [1, 256], strides = [1, 1]} : vector<2x256xf32> to vector<1x256xf32>
    %1226 = vector.broadcast %1224 : f32 to vector<1x256xf32>
    %1227 = arith.mulf %1226, %1225 : vector<1x256xf32>
    %c85_284 = arith.constant 85 : index
    %1228 = memref.load %arg5[%c85_284] : memref<98xf32, #tpu.memory_space<smem>>
    %1229 = vector.extract_strided_slice %1223 {offsets = [1, 0], sizes = [1, 256], strides = [1, 1]} : vector<2x256xf32> to vector<1x256xf32>
    %1230 = vector.broadcast %1228 : f32 to vector<1x256xf32>
    %1231 = arith.mulf %1230, %1229 : vector<1x256xf32>
    %1232 = arith.addf %1227, %1231 : vector<1x256xf32>
    %c36_285 = arith.constant 36 : index
    %c0_286 = arith.constant 0 : index
    %1233 = vector.load %arg4[%c36_285, %c0_286] : memref<49x256xf32, #tpu.memory_space<vmem>>, vector<1x256xf32>
    %1234 = arith.mulf %1233, %1232 : vector<1x256xf32>
    %1235 = arith.addf %1222, %1234 : vector<1x256xf32>
    %1236 = vector.extract_strided_slice %753 {offsets = [0, 31], sizes = [2, 256], strides = [1, 1]} : vector<2x512xf32> to vector<2x256xf32>
    %c37_287 = arith.constant 37 : index
    %1237 = memref.load %arg5[%c37_287] : memref<98xf32, #tpu.memory_space<smem>>
    %1238 = vector.extract_strided_slice %1236 {offsets = [0, 0], sizes = [1, 256], strides = [1, 1]} : vector<2x256xf32> to vector<1x256xf32>
    %1239 = vector.broadcast %1237 : f32 to vector<1x256xf32>
    %1240 = arith.mulf %1239, %1238 : vector<1x256xf32>
    %c86_288 = arith.constant 86 : index
    %1241 = memref.load %arg5[%c86_288] : memref<98xf32, #tpu.memory_space<smem>>
    %1242 = vector.extract_strided_slice %1236 {offsets = [1, 0], sizes = [1, 256], strides = [1, 1]} : vector<2x256xf32> to vector<1x256xf32>
    %1243 = vector.broadcast %1241 : f32 to vector<1x256xf32>
    %1244 = arith.mulf %1243, %1242 : vector<1x256xf32>
    %1245 = arith.addf %1240, %1244 : vector<1x256xf32>
    %c37_289 = arith.constant 37 : index
    %c0_290 = arith.constant 0 : index
    %1246 = vector.load %arg4[%c37_289, %c0_290] : memref<49x256xf32, #tpu.memory_space<vmem>>, vector<1x256xf32>
    %1247 = arith.mulf %1246, %1245 : vector<1x256xf32>
    %1248 = arith.addf %1235, %1247 : vector<1x256xf32>
    %1249 = vector.extract_strided_slice %753 {offsets = [0, 32], sizes = [2, 256], strides = [1, 1]} : vector<2x512xf32> to vector<2x256xf32>
    %c38_291 = arith.constant 38 : index
    %1250 = memref.load %arg5[%c38_291] : memref<98xf32, #tpu.memory_space<smem>>
    %1251 = vector.extract_strided_slice %1249 {offsets = [0, 0], sizes = [1, 256], strides = [1, 1]} : vector<2x256xf32> to vector<1x256xf32>
    %1252 = vector.broadcast %1250 : f32 to vector<1x256xf32>
    %1253 = arith.mulf %1252, %1251 : vector<1x256xf32>
    %c87_292 = arith.constant 87 : index
    %1254 = memref.load %arg5[%c87_292] : memref<98xf32, #tpu.memory_space<smem>>
    %1255 = vector.extract_strided_slice %1249 {offsets = [1, 0], sizes = [1, 256], strides = [1, 1]} : vector<2x256xf32> to vector<1x256xf32>
    %1256 = vector.broadcast %1254 : f32 to vector<1x256xf32>
    %1257 = arith.mulf %1256, %1255 : vector<1x256xf32>
    %1258 = arith.addf %1253, %1257 : vector<1x256xf32>
    %c38_293 = arith.constant 38 : index
    %c0_294 = arith.constant 0 : index
    %1259 = vector.load %arg4[%c38_293, %c0_294] : memref<49x256xf32, #tpu.memory_space<vmem>>, vector<1x256xf32>
    %1260 = arith.mulf %1259, %1258 : vector<1x256xf32>
    %1261 = arith.addf %1248, %1260 : vector<1x256xf32>
    %1262 = vector.extract_strided_slice %753 {offsets = [0, 33], sizes = [2, 256], strides = [1, 1]} : vector<2x512xf32> to vector<2x256xf32>
    %c39_295 = arith.constant 39 : index
    %1263 = memref.load %arg5[%c39_295] : memref<98xf32, #tpu.memory_space<smem>>
    %1264 = vector.extract_strided_slice %1262 {offsets = [0, 0], sizes = [1, 256], strides = [1, 1]} : vector<2x256xf32> to vector<1x256xf32>
    %1265 = vector.broadcast %1263 : f32 to vector<1x256xf32>
    %1266 = arith.mulf %1265, %1264 : vector<1x256xf32>
    %c88_296 = arith.constant 88 : index
    %1267 = memref.load %arg5[%c88_296] : memref<98xf32, #tpu.memory_space<smem>>
    %1268 = vector.extract_strided_slice %1262 {offsets = [1, 0], sizes = [1, 256], strides = [1, 1]} : vector<2x256xf32> to vector<1x256xf32>
    %1269 = vector.broadcast %1267 : f32 to vector<1x256xf32>
    %1270 = arith.mulf %1269, %1268 : vector<1x256xf32>
    %1271 = arith.addf %1266, %1270 : vector<1x256xf32>
    %c39_297 = arith.constant 39 : index
    %c0_298 = arith.constant 0 : index
    %1272 = vector.load %arg4[%c39_297, %c0_298] : memref<49x256xf32, #tpu.memory_space<vmem>>, vector<1x256xf32>
    %1273 = arith.mulf %1272, %1271 : vector<1x256xf32>
    %1274 = arith.addf %1261, %1273 : vector<1x256xf32>
    %1275 = vector.extract_strided_slice %753 {offsets = [0, 34], sizes = [2, 256], strides = [1, 1]} : vector<2x512xf32> to vector<2x256xf32>
    %c40_299 = arith.constant 40 : index
    %1276 = memref.load %arg5[%c40_299] : memref<98xf32, #tpu.memory_space<smem>>
    %1277 = vector.extract_strided_slice %1275 {offsets = [0, 0], sizes = [1, 256], strides = [1, 1]} : vector<2x256xf32> to vector<1x256xf32>
    %1278 = vector.broadcast %1276 : f32 to vector<1x256xf32>
    %1279 = arith.mulf %1278, %1277 : vector<1x256xf32>
    %c89_300 = arith.constant 89 : index
    %1280 = memref.load %arg5[%c89_300] : memref<98xf32, #tpu.memory_space<smem>>
    %1281 = vector.extract_strided_slice %1275 {offsets = [1, 0], sizes = [1, 256], strides = [1, 1]} : vector<2x256xf32> to vector<1x256xf32>
    %1282 = vector.broadcast %1280 : f32 to vector<1x256xf32>
    %1283 = arith.mulf %1282, %1281 : vector<1x256xf32>
    %1284 = arith.addf %1279, %1283 : vector<1x256xf32>
    %c40_301 = arith.constant 40 : index
    %c0_302 = arith.constant 0 : index
    %1285 = vector.load %arg4[%c40_301, %c0_302] : memref<49x256xf32, #tpu.memory_space<vmem>>, vector<1x256xf32>
    %1286 = arith.mulf %1285, %1284 : vector<1x256xf32>
    %1287 = arith.addf %1274, %1286 : vector<1x256xf32>
    %1288 = vector.extract_strided_slice %753 {offsets = [0, 35], sizes = [2, 256], strides = [1, 1]} : vector<2x512xf32> to vector<2x256xf32>
    %c41_303 = arith.constant 41 : index
    %1289 = memref.load %arg5[%c41_303] : memref<98xf32, #tpu.memory_space<smem>>
    %1290 = vector.extract_strided_slice %1288 {offsets = [0, 0], sizes = [1, 256], strides = [1, 1]} : vector<2x256xf32> to vector<1x256xf32>
    %1291 = vector.broadcast %1289 : f32 to vector<1x256xf32>
    %1292 = arith.mulf %1291, %1290 : vector<1x256xf32>
    %c90_304 = arith.constant 90 : index
    %1293 = memref.load %arg5[%c90_304] : memref<98xf32, #tpu.memory_space<smem>>
    %1294 = vector.extract_strided_slice %1288 {offsets = [1, 0], sizes = [1, 256], strides = [1, 1]} : vector<2x256xf32> to vector<1x256xf32>
    %1295 = vector.broadcast %1293 : f32 to vector<1x256xf32>
    %1296 = arith.mulf %1295, %1294 : vector<1x256xf32>
    %1297 = arith.addf %1292, %1296 : vector<1x256xf32>
    %c41_305 = arith.constant 41 : index
    %c0_306 = arith.constant 0 : index
    %1298 = vector.load %arg4[%c41_305, %c0_306] : memref<49x256xf32, #tpu.memory_space<vmem>>, vector<1x256xf32>
    %1299 = arith.mulf %1298, %1297 : vector<1x256xf32>
    %1300 = arith.addf %1287, %1299 : vector<1x256xf32>
    %1301 = vector.extract_strided_slice %753 {offsets = [0, 45], sizes = [2, 256], strides = [1, 1]} : vector<2x512xf32> to vector<2x256xf32>
    %c42_307 = arith.constant 42 : index
    %1302 = memref.load %arg5[%c42_307] : memref<98xf32, #tpu.memory_space<smem>>
    %1303 = vector.extract_strided_slice %1301 {offsets = [0, 0], sizes = [1, 256], strides = [1, 1]} : vector<2x256xf32> to vector<1x256xf32>
    %1304 = vector.broadcast %1302 : f32 to vector<1x256xf32>
    %1305 = arith.mulf %1304, %1303 : vector<1x256xf32>
    %c91_308 = arith.constant 91 : index
    %1306 = memref.load %arg5[%c91_308] : memref<98xf32, #tpu.memory_space<smem>>
    %1307 = vector.extract_strided_slice %1301 {offsets = [1, 0], sizes = [1, 256], strides = [1, 1]} : vector<2x256xf32> to vector<1x256xf32>
    %1308 = vector.broadcast %1306 : f32 to vector<1x256xf32>
    %1309 = arith.mulf %1308, %1307 : vector<1x256xf32>
    %1310 = arith.addf %1305, %1309 : vector<1x256xf32>
    %c42_309 = arith.constant 42 : index
    %c0_310 = arith.constant 0 : index
    %1311 = vector.load %arg4[%c42_309, %c0_310] : memref<49x256xf32, #tpu.memory_space<vmem>>, vector<1x256xf32>
    %1312 = arith.mulf %1311, %1310 : vector<1x256xf32>
    %1313 = arith.addf %1300, %1312 : vector<1x256xf32>
    %1314 = vector.extract_strided_slice %753 {offsets = [0, 46], sizes = [2, 256], strides = [1, 1]} : vector<2x512xf32> to vector<2x256xf32>
    %c43_311 = arith.constant 43 : index
    %1315 = memref.load %arg5[%c43_311] : memref<98xf32, #tpu.memory_space<smem>>
    %1316 = vector.extract_strided_slice %1314 {offsets = [0, 0], sizes = [1, 256], strides = [1, 1]} : vector<2x256xf32> to vector<1x256xf32>
    %1317 = vector.broadcast %1315 : f32 to vector<1x256xf32>
    %1318 = arith.mulf %1317, %1316 : vector<1x256xf32>
    %c92_312 = arith.constant 92 : index
    %1319 = memref.load %arg5[%c92_312] : memref<98xf32, #tpu.memory_space<smem>>
    %1320 = vector.extract_strided_slice %1314 {offsets = [1, 0], sizes = [1, 256], strides = [1, 1]} : vector<2x256xf32> to vector<1x256xf32>
    %1321 = vector.broadcast %1319 : f32 to vector<1x256xf32>
    %1322 = arith.mulf %1321, %1320 : vector<1x256xf32>
    %1323 = arith.addf %1318, %1322 : vector<1x256xf32>
    %c43_313 = arith.constant 43 : index
    %c0_314 = arith.constant 0 : index
    %1324 = vector.load %arg4[%c43_313, %c0_314] : memref<49x256xf32, #tpu.memory_space<vmem>>, vector<1x256xf32>
    %1325 = arith.mulf %1324, %1323 : vector<1x256xf32>
    %1326 = arith.addf %1313, %1325 : vector<1x256xf32>
    %1327 = vector.extract_strided_slice %753 {offsets = [0, 47], sizes = [2, 256], strides = [1, 1]} : vector<2x512xf32> to vector<2x256xf32>
    %c44_315 = arith.constant 44 : index
    %1328 = memref.load %arg5[%c44_315] : memref<98xf32, #tpu.memory_space<smem>>
    %1329 = vector.extract_strided_slice %1327 {offsets = [0, 0], sizes = [1, 256], strides = [1, 1]} : vector<2x256xf32> to vector<1x256xf32>
    %1330 = vector.broadcast %1328 : f32 to vector<1x256xf32>
    %1331 = arith.mulf %1330, %1329 : vector<1x256xf32>
    %c93_316 = arith.constant 93 : index
    %1332 = memref.load %arg5[%c93_316] : memref<98xf32, #tpu.memory_space<smem>>
    %1333 = vector.extract_strided_slice %1327 {offsets = [1, 0], sizes = [1, 256], strides = [1, 1]} : vector<2x256xf32> to vector<1x256xf32>
    %1334 = vector.broadcast %1332 : f32 to vector<1x256xf32>
    %1335 = arith.mulf %1334, %1333 : vector<1x256xf32>
    %1336 = arith.addf %1331, %1335 : vector<1x256xf32>
    %c44_317 = arith.constant 44 : index
    %c0_318 = arith.constant 0 : index
    %1337 = vector.load %arg4[%c44_317, %c0_318] : memref<49x256xf32, #tpu.memory_space<vmem>>, vector<1x256xf32>
    %1338 = arith.mulf %1337, %1336 : vector<1x256xf32>
    %1339 = arith.addf %1326, %1338 : vector<1x256xf32>
    %1340 = vector.extract_strided_slice %753 {offsets = [0, 48], sizes = [2, 256], strides = [1, 1]} : vector<2x512xf32> to vector<2x256xf32>
    %c45_319 = arith.constant 45 : index
    %1341 = memref.load %arg5[%c45_319] : memref<98xf32, #tpu.memory_space<smem>>
    %1342 = vector.extract_strided_slice %1340 {offsets = [0, 0], sizes = [1, 256], strides = [1, 1]} : vector<2x256xf32> to vector<1x256xf32>
    %1343 = vector.broadcast %1341 : f32 to vector<1x256xf32>
    %1344 = arith.mulf %1343, %1342 : vector<1x256xf32>
    %c94_320 = arith.constant 94 : index
    %1345 = memref.load %arg5[%c94_320] : memref<98xf32, #tpu.memory_space<smem>>
    %1346 = vector.extract_strided_slice %1340 {offsets = [1, 0], sizes = [1, 256], strides = [1, 1]} : vector<2x256xf32> to vector<1x256xf32>
    %1347 = vector.broadcast %1345 : f32 to vector<1x256xf32>
    %1348 = arith.mulf %1347, %1346 : vector<1x256xf32>
    %1349 = arith.addf %1344, %1348 : vector<1x256xf32>
    %c45_321 = arith.constant 45 : index
    %c0_322 = arith.constant 0 : index
    %1350 = vector.load %arg4[%c45_321, %c0_322] : memref<49x256xf32, #tpu.memory_space<vmem>>, vector<1x256xf32>
    %1351 = arith.mulf %1350, %1349 : vector<1x256xf32>
    %1352 = arith.addf %1339, %1351 : vector<1x256xf32>
    %1353 = vector.extract_strided_slice %753 {offsets = [0, 49], sizes = [2, 256], strides = [1, 1]} : vector<2x512xf32> to vector<2x256xf32>
    %c46_323 = arith.constant 46 : index
    %1354 = memref.load %arg5[%c46_323] : memref<98xf32, #tpu.memory_space<smem>>
    %1355 = vector.extract_strided_slice %1353 {offsets = [0, 0], sizes = [1, 256], strides = [1, 1]} : vector<2x256xf32> to vector<1x256xf32>
    %1356 = vector.broadcast %1354 : f32 to vector<1x256xf32>
    %1357 = arith.mulf %1356, %1355 : vector<1x256xf32>
    %c95_324 = arith.constant 95 : index
    %1358 = memref.load %arg5[%c95_324] : memref<98xf32, #tpu.memory_space<smem>>
    %1359 = vector.extract_strided_slice %1353 {offsets = [1, 0], sizes = [1, 256], strides = [1, 1]} : vector<2x256xf32> to vector<1x256xf32>
    %1360 = vector.broadcast %1358 : f32 to vector<1x256xf32>
    %1361 = arith.mulf %1360, %1359 : vector<1x256xf32>
    %1362 = arith.addf %1357, %1361 : vector<1x256xf32>
    %c46_325 = arith.constant 46 : index
    %c0_326 = arith.constant 0 : index
    %1363 = vector.load %arg4[%c46_325, %c0_326] : memref<49x256xf32, #tpu.memory_space<vmem>>, vector<1x256xf32>
    %1364 = arith.mulf %1363, %1362 : vector<1x256xf32>
    %1365 = arith.addf %1352, %1364 : vector<1x256xf32>
    %1366 = vector.extract_strided_slice %753 {offsets = [0, 50], sizes = [2, 256], strides = [1, 1]} : vector<2x512xf32> to vector<2x256xf32>
    %c47_327 = arith.constant 47 : index
    %1367 = memref.load %arg5[%c47_327] : memref<98xf32, #tpu.memory_space<smem>>
    %1368 = vector.extract_strided_slice %1366 {offsets = [0, 0], sizes = [1, 256], strides = [1, 1]} : vector<2x256xf32> to vector<1x256xf32>
    %1369 = vector.broadcast %1367 : f32 to vector<1x256xf32>
    %1370 = arith.mulf %1369, %1368 : vector<1x256xf32>
    %c96_328 = arith.constant 96 : index
    %1371 = memref.load %arg5[%c96_328] : memref<98xf32, #tpu.memory_space<smem>>
    %1372 = vector.extract_strided_slice %1366 {offsets = [1, 0], sizes = [1, 256], strides = [1, 1]} : vector<2x256xf32> to vector<1x256xf32>
    %1373 = vector.broadcast %1371 : f32 to vector<1x256xf32>
    %1374 = arith.mulf %1373, %1372 : vector<1x256xf32>
    %1375 = arith.addf %1370, %1374 : vector<1x256xf32>
    %c47_329 = arith.constant 47 : index
    %c0_330 = arith.constant 0 : index
    %1376 = vector.load %arg4[%c47_329, %c0_330] : memref<49x256xf32, #tpu.memory_space<vmem>>, vector<1x256xf32>
    %1377 = arith.mulf %1376, %1375 : vector<1x256xf32>
    %1378 = arith.addf %1365, %1377 : vector<1x256xf32>
    %1379 = vector.extract_strided_slice %753 {offsets = [0, 51], sizes = [2, 256], strides = [1, 1]} : vector<2x512xf32> to vector<2x256xf32>
    %c48_331 = arith.constant 48 : index
    %1380 = memref.load %arg5[%c48_331] : memref<98xf32, #tpu.memory_space<smem>>
    %1381 = vector.extract_strided_slice %1379 {offsets = [0, 0], sizes = [1, 256], strides = [1, 1]} : vector<2x256xf32> to vector<1x256xf32>
    %1382 = vector.broadcast %1380 : f32 to vector<1x256xf32>
    %1383 = arith.mulf %1382, %1381 : vector<1x256xf32>
    %c97_332 = arith.constant 97 : index
    %1384 = memref.load %arg5[%c97_332] : memref<98xf32, #tpu.memory_space<smem>>
    %1385 = vector.extract_strided_slice %1379 {offsets = [1, 0], sizes = [1, 256], strides = [1, 1]} : vector<2x256xf32> to vector<1x256xf32>
    %1386 = vector.broadcast %1384 : f32 to vector<1x256xf32>
    %1387 = arith.mulf %1386, %1385 : vector<1x256xf32>
    %1388 = arith.addf %1383, %1387 : vector<1x256xf32>
    %c48_333 = arith.constant 48 : index
    %c0_334 = arith.constant 0 : index
    %1389 = vector.load %arg4[%c48_333, %c0_334] : memref<49x256xf32, #tpu.memory_space<vmem>>, vector<1x256xf32>
    %1390 = arith.mulf %1389, %1388 : vector<1x256xf32>
    %1391 = arith.addf %1378, %1390 : vector<1x256xf32>
    %1392 = arith.negf %1391 : vector<1x256xf32>
    %1393 = math.exp %1392 : vector<1x256xf32>
    %cst_335 = arith.constant 1.000000e+00 : f32
    %1394 = vector.broadcast %cst_335 : f32 to vector<1x256xf32>
    %1395 = arith.addf %1394, %1393 : vector<1x256xf32>
    %1396 = arith.divf %1394, %1395 : vector<1x256xf32>
    %1397 = vector.broadcast %1396 : vector<1x256xf32> to vector<32x256xf32>
    %1398 = arith.mulf %745, %1397 : vector<32x256xf32>
    %c1_336 = arith.constant 1 : index
    %c0_337 = arith.constant 0 : index
    %c0_338 = arith.constant 0 : index
    %1399 = vector.load %arg6[%c1_336, %c0_337, %c0_338] : memref<2x32x256xf32, #tpu.memory_space<vmem>>, vector<1x32x256xf32>
    %1400 = vector.shape_cast %1399 : vector<1x32x256xf32> to vector<32x256xf32>
    %1401 = vector.shape_cast %1398 : vector<32x256xf32> to vector<1x32x256xf32>
    tpu.vector_store %arg6[%c1_336, %c0_337, %c0_338], %1401 {strides = array<i32>} : memref<2x32x256xf32, #tpu.memory_space<vmem>>, vector<1x32x256xf32>,
    return
  }
  func.func @transform_0(%arg0: i32) -> (i32, i32, i32) {
    %c0_i32 = arith.constant 0 : i32
    %c0_i32_0 = arith.constant 0 : i32
    %c0_i32_1 = arith.constant 0 : i32
    return %arg0, %c0_i32, %c0_i32_0 : i32, i32, i32
  }
  func.func @transform_1(%arg0: i32) -> (i32, i32) {
    %c0_i32 = arith.constant 0 : i32
    %c0_i32_0 = arith.constant 0 : i32
    %c0_i32_1 = arith.constant 0 : i32
    return %c0_i32, %c0_i32_0 : i32, i32
  }
  func.func @transform_2(%arg0: i32) -> (i32, i32) {
    %c0_i32 = arith.constant 0 : i32
    %c0_i32_0 = arith.constant 0 : i32
    %c0_i32_1 = arith.constant 0 : i32
    return %c0_i32, %c0_i32_0 : i32, i32
  }
  func.func @transform_3(%arg0: i32) -> (i32, i32) {
    %c0_i32 = arith.constant 0 : i32
    %c0_i32_0 = arith.constant 0 : i32
    %c0_i32_1 = arith.constant 0 : i32
    return %c0_i32, %c0_i32_0 : i32, i32
  }
  func.func @transform_4(%arg0: i32) -> i32 {
    %c0_i32 = arith.constant 0 : i32
    %c0_i32_0 = arith.constant 0 : i32
    return %c0_i32 : i32
  }
  func.func @transform_5(%arg0: i32) -> (i32, i32, i32) {
    %c0_i32 = arith.constant 0 : i32
    %c0_i32_0 = arith.constant 0 : i32
    %c0_i32_1 = arith.constant 0 : i32
    return %arg0, %c0_i32, %c0_i32_0 : i32, i32, i32
  }
}

</mosaic_0001>

<llo_original>
// kernel: tpu_custom_call.1
$region0: #{tpu_custom_call.1}
  #allocation0 [shape = 'u32[]', space=smem, size = 0x4, offset = 0x4, fixed_abs, tag = 'smem constant byte address 0x4 - core index']
  #allocation1 [shape = 'u32[144,128]{1,0:T(1,128)}', space=vmem, size = 0x12000, scoped, tag = 'internal scratch']
  %s0 = inlined_call_operand.hbm [shape: f32[2,32,256], index: 0, kind: input, shape index: {}]
  %s1 = inlined_call_operand.vmem [shape: f32[32,2], index: 1, kind: input, shape index: {}]
  %s2 = inlined_call_operand.vmem [shape: f32[32,2], index: 2, kind: input, shape index: {}]
  %s3 = inlined_call_operand.hbm [shape: f32[49,256], index: 3, kind: input, shape index: {}]
  %s4 = inlined_call_operand.vmem [shape: f32[98], index: 4, kind: input, shape index: {}]
  %s5 = inlined_call_operand.hbm [shape: f32[2,32,256], index: 5, kind: output, shape index: {}]
  %s6 = sld [smem:[#allocation0]]
  $region42: #{tpu_custom_call.1} parent=0
    _
  %s8 = ssub.s32 1, %s6
  %s9 = scalar_select 0, %s8, %s6
  $region1: #{tpu_custom_call.1} parent=0
    #allocation2 [shape = 'u8[65536]{0}', space=vmem, size = 0x10000, scoped, tag = 'input window, operand 0, single buffered']
    #allocation3 [shape = 's32[1]{0}', space=sflag, size = 0x4, scoped, tag = 'scoped memory for tpu_custom_call.1']
    #allocation4 [shape = 's32[1]{0}', space=sflag, size = 0x4, scoped, tag = 'scoped memory for tpu_custom_call.1']
    #allocation5 [shape = 's32[1]{0}', space=sflag, size = 0x4, scoped, tag = 'scoped memory for tpu_custom_call.1']
    #allocation6 [shape = 'u8[57344]{0}', space=vmem, size = 0xe000, scoped, tag = 'input window, operand 3, single buffered']
    #allocation7 [shape = 's32[1]{0}', space=sflag, size = 0x4, scoped, tag = 'scoped memory for tpu_custom_call.1']
    #allocation8 [shape = 'u8[512]{0}', space=smem, size = 0x200, scoped, tag = 'input window, operand 4, single buffered']
    #allocation9 [shape = 'u8[65536]{0}', space=vmem, size = 0x10000, scoped, tag = 'output window, operand 0, single buffered']
    %10 = vsyncpa [#allocation3], 0
    %11 = vsyncpa [#allocation7], 0
    %12 = vsyncpa [#allocation5], 0
    %13 = vsyncpa [#allocation4], 0
    // Predicated region
    $region2: #{tpu_custom_call.1} parent=1 // pred_check
      _
    $region3: #{tpu_custom_call.1} parent=1 // pred_check_branch
      %15 = sbr.rel (0) target = $region5
    $region4: #{tpu_custom_call.1} parent=1 // pred_region
      %s17 = ssub.s32 2048, 2048
      %18 = vsyncadd [#allocation3], %s17
      %s19 = sshll.u32 [#allocation2], 4
      %s20 = int_to_ptr.vmem [resolvable:$true] %s19
      %25 = dma.hbm_to_vmem [thread:$0]  %s0, 2048, %s20, [#allocation3], 256, 256, 16
    $region5: #{tpu_custom_call.1} parent=1 // pred_fallthru
      _
    // Predicated region
    $region6: #{tpu_custom_call.1} parent=1 // pred_check
      _
    $region7: #{tpu_custom_call.1} parent=1 // pred_check_branch
      %27 = sbr.rel (0) target = $region9
    $region8: #{tpu_custom_call.1} parent=1 // pred_region
      _
    $region9: #{tpu_custom_call.1} parent=1 // pred_fallthru
      _
    // Predicated region
    $region10: #{tpu_custom_call.1} parent=1 // pred_check
      _
    $region11: #{tpu_custom_call.1} parent=1 // pred_check_branch
      %29 = sbr.rel (0) target = $region13
    $region12: #{tpu_custom_call.1} parent=1 // pred_region
      _
    $region13: #{tpu_custom_call.1} parent=1 // pred_fallthru
      _
    // Predicated region
    $region14: #{tpu_custom_call.1} parent=1 // pred_check
      _
    $region15: #{tpu_custom_call.1} parent=1 // pred_check_branch
      %31 = sbr.rel (0) target = $region17
    $region16: #{tpu_custom_call.1} parent=1 // pred_region
      %s33 = ssub.s32 1792, 1792
      %34 = vsyncadd [#allocation7], %s33
      %s35 = sshll.u32 [#allocation6], 4
      %s36 = int_to_ptr.vmem [resolvable:$true] %s35
      %41 = dma.hbm_to_vmem [thread:$0]  %s3, 1792, %s36, [#allocation7], 256, 256, 16
    $region17: #{tpu_custom_call.1} parent=1 // pred_fallthru
      _
    // Predicated region
    $region18: #{tpu_custom_call.1} parent=1 // pred_check
      _
    $region19: #{tpu_custom_call.1} parent=1 // pred_check_branch
      %43 = sbr.rel (0) target = $region21
    $region20: #{tpu_custom_call.1} parent=1 // pred_region
      %s45 = ssub.s32 16, 16
      %46 = vsyncadd [#allocation5], %s45
      %s48 = sshll.u32 %s4, 4
      %s49 = int_to_ptr.vmem [resolvable:$true] %s48
      %51 = dma.vmem_to_smem %s49, 16, [#allocation8], [#allocation5]
    $region21: #{tpu_custom_call.1} parent=1 // pred_fallthru
      _
    // Predicated region
    $region22: #{tpu_custom_call.1} parent=1 // pred_check
      _
    $region23: #{tpu_custom_call.1} parent=1 // pred_check_branch
      %53 = sbr.rel (0) target = $region25
    $region24: #{tpu_custom_call.1} parent=1 // pred_region
      %54 = dma.done [#allocation3], 2048
    $region25: #{tpu_custom_call.1} parent=1 // pred_fallthru
      _
    // Predicated region
    $region26: #{tpu_custom_call.1} parent=1 // pred_check
      _
    $region27: #{tpu_custom_call.1} parent=1 // pred_check_branch
      %56 = sbr.rel (0) target = $region29
    $region28: #{tpu_custom_call.1} parent=1 // pred_region
      %57 = dma.done [#allocation7], 1792
    $region29: #{tpu_custom_call.1} parent=1 // pred_fallthru
      _
    // Predicated region
    $region30: #{tpu_custom_call.1} parent=1 // pred_check
      _
    $region31: #{tpu_custom_call.1} parent=1 // pred_check_branch
      %59 = sbr.rel (0) target = $region33
    $region32: #{tpu_custom_call.1} parent=1 // pred_region
      %60 = dma.done [#allocation5], 16
    $region33: #{tpu_custom_call.1} parent=1 // pred_fallthru
      _
    %61 = sfence
    %v62 = vld [vmem:[%s1] sm:$0xff]
    %v63 = vld [vmem:[%s1 + $0x8] sm:$0xff]
    %v64 = vld [vmem:[%s1 + $0x10] sm:$0xff]
    %v65 = vld [vmem:[%s1 + $0x18] sm:$0xff]
    %v66 = vld [vmem:[%s2] sm:$0xff]
    %v67 = vld [vmem:[%s2 + $0x8] sm:$0xff]
    %v68 = vld [vmem:[%s2 + $0x10] sm:$0xff]
    %v69 = vld [vmem:[%s2 + $0x18] sm:$0xff]
    %v70 = vld [vmem:[#allocation2] sm:$0xff]
    %v71 = vld [vmem:[#allocation2 + $0x8] sm:$0xff]
    %v72 = vld [vmem:[#allocation2 + $0x10] sm:$0xff]
    %v73 = vld [vmem:[#allocation2 + $0x18] sm:$0xff]
    %v74 = vld [vmem:[#allocation2 + $0x20] sm:$0xff]
    %v75 = vld [vmem:[#allocation2 + $0x28] sm:$0xff]
    %v76 = vld [vmem:[#allocation2 + $0x30] sm:$0xff]
    %v77 = vld [vmem:[#allocation2 + $0x38] sm:$0xff]
    %v78 = vadd.f32 %v70, %v71
    %79 = vadd.xlane.f32.xlu0 %v78
    %v80 = vpop.xlane.xlu0 %79
    %v81 = vadd.f32 %v72, %v73
    %82 = vadd.xlane.f32.xlu0 %v81
    %v83 = vpop.xlane.xlu0 %82
    %v84 = vadd.f32 %v74, %v75
    %85 = vadd.xlane.f32.xlu0 %v84
    %v86 = vpop.xlane.xlu0 %85
    %v87 = vadd.f32 %v76, %v77
    %88 = vadd.xlane.f32.xlu0 %v87
    %v89 = vpop.xlane.xlu0 %88
    %v90 = vrcp.pop 256.0
    %v91 = vmul.f32 %v80, %v90
    %v92 = vmul.f32 %v83, %v90
    %v93 = vmul.f32 %v86, %v90
    %v94 = vmul.f32 %v89, %v90
    %v95 = vmax.f32 %v70, %v71
    %96 = vmax.xlane.f32.xlu0 %v95
    %v97 = vpop.xlane.xlu0 %96
    %v98 = vmax.f32 %v72, %v73
    %99 = vmax.xlane.f32.xlu0 %v98
    %v100 = vpop.xlane.xlu0 %99
    %v101 = vmax.f32 %v74, %v75
    %102 = vmax.xlane.f32.xlu0 %v101
    %v103 = vpop.xlane.xlu0 %102
    %v104 = vmax.f32 %v76, %v77
    %105 = vmax.xlane.f32.xlu0 %v104
    %v106 = vpop.xlane.xlu0 %105
    %v107 = vmul.f32 %v62, %v91
    %v108 = vmul.f32 %v63, %v92
    %v109 = vmul.f32 %v64, %v93
    %v110 = vmul.f32 %v65, %v94
    %vm111 = vcmask 15360
    %v112 = vsel %vm111, %v107, 0.0
    %v113 = vsel %vm111, %v108, 0.0
    %v114 = vadd.f32 %v112, %v113
    %v115 = vsel %vm111, %v109, 0.0
    %v116 = vadd.f32 %v114, %v115
    %v117 = vsel %vm111, %v110, 0.0
    %v118 = vadd.f32 %v116, %v117
    %v119 = vrot.slane %v118, 4
    %v120 = vadd.f32 %v118, %v119
    %v121 = vrot.slane %v120, 2
    %v122 = vadd.f32 %v120, %v121
    %v123 = vrot.slane %v122, 1
    %v124 = vadd.f32 %v122, %v123
    %v125 = vmul.f32 %v62, %v97
    %v126 = vmul.f32 %v63, %v100
    %v127 = vmul.f32 %v64, %v103
    %v128 = vmul.f32 %v65, %v106
    %v129 = vsel %vm111, %v125, 0.0
    %v130 = vsel %vm111, %v126, 0.0
    %v131 = vadd.f32 %v129, %v130
    %v132 = vsel %vm111, %v127, 0.0
    %v133 = vadd.f32 %v131, %v132
    %v134 = vsel %vm111, %v128, 0.0
    %v135 = vadd.f32 %v133, %v134
    %v136 = vrot.slane %v135, 4
    %v137 = vadd.f32 %v135, %v136
    %v138 = vrot.slane %v137, 2
    %v139 = vadd.f32 %v137, %v138
    %v140 = vrot.slane %v139, 1
    %v141 = vadd.f32 %v139, %v140
    %v142 = vxor.u32 %v124, 2147483648
    %v143 = vmul.f32 %v142, 1.442695
    %v144 = vpow.pop %v143
    %v145 = vadd.f32 %v144, 1.0
    %v146 = vrcp.pop %v145
    %v147 = vmul.f32 1.0, %v146
    %v148 = vmul.f32 %v124, %v147
    %v149 = vxor.u32 %v141, 2147483648
    %v150 = vmul.f32 %v149, 1.442695
    %v151 = vpow.pop %v150
    %v152 = vadd.f32 %v151, 1.0
    %v153 = vrcp.pop %v152
    %v154 = vmul.f32 1.0, %v153
    %v155 = vmul.f32 %v141, %v154
    %v156 = vmul.f32 %v66, %v148
    %v157 = vmul.f32 %v67, %v148
    %v158 = vmul.f32 %v68, %v148
    %v159 = vmul.f32 %v69, %v148
    %v160 = vsel %vm111, %v156, 0.0
    %161 = vadd.xlane.f32.xlu0 %v160
    %v162 = vpop.xlane.xlu0 %161
    %v163 = vsel %vm111, %v157, 0.0
    %164 = vadd.xlane.f32.xlu0 %v163
    %v165 = vpop.xlane.xlu0 %164
    %v166 = vsel %vm111, %v158, 0.0
    %167 = vadd.xlane.f32.xlu0 %v166
    %v168 = vpop.xlane.xlu0 %167
    %v169 = vsel %vm111, %v159, 0.0
    %170 = vadd.xlane.f32.xlu0 %v169
    %v171 = vpop.xlane.xlu0 %170
    %v172 = vmul.f32 %v66, %v155
    %v173 = vmul.f32 %v67, %v155
    %v174 = vmul.f32 %v68, %v155
    %v175 = vmul.f32 %v69, %v155
    %v176 = vsel %vm111, %v172, 0.0
    %177 = vadd.xlane.f32.xlu0 %v176
    %v178 = vpop.xlane.xlu0 %177
    %v179 = vsel %vm111, %v173, 0.0
    %180 = vadd.xlane.f32.xlu0 %v179
    %v181 = vpop.xlane.xlu0 %180
    %v182 = vsel %vm111, %v174, 0.0
    %183 = vadd.xlane.f32.xlu0 %v182
    %v184 = vpop.xlane.xlu0 %183
    %v185 = vsel %vm111, %v175, 0.0
    %186 = vadd.xlane.f32.xlu0 %v185
    %v187 = vpop.xlane.xlu0 %186
    %v188 = vadd.f32 %v162, %v178
    %v189 = vadd.f32 %v165, %v181
    %v190 = vadd.f32 %v168, %v184
    %v191 = vadd.f32 %v171, %v187
    %v192 = vxor.u32 %v188, 2147483648
    %v193 = vxor.u32 %v189, 2147483648
    %v194 = vxor.u32 %v190, 2147483648
    %v195 = vxor.u32 %v191, 2147483648
    %v196 = vmul.f32 %v192, 1.442695
    %v197 = vpow.pop %v196
    %v198 = vmul.f32 %v193, 1.442695
    %v199 = vpow.pop %v198
    %v200 = vmul.f32 %v194, 1.442695
    %v201 = vpow.pop %v200
    %v202 = vmul.f32 %v195, 1.442695
    %v203 = vpow.pop %v202
    %v204 = vadd.f32 %v197, 1.0
    %v205 = vadd.f32 %v199, 1.0
    %v206 = vadd.f32 %v201, 1.0
    %v207 = vadd.f32 %v203, 1.0
    %v208 = vrcp.pop %v204
    %v209 = vmul.f32 1.0, %v208
    %v210 = vrcp.pop %v205
    %v211 = vmul.f32 1.0, %v210
    %v212 = vrcp.pop %v206
    %v213 = vmul.f32 1.0, %v212
    %v214 = vrcp.pop %v207
    %v215 = vmul.f32 1.0, %v214
    %v216 = vmul.f32 %v70, %v209
    %v217 = vmul.f32 %v71, %v209
    %v218 = vmul.f32 %v72, %v211
    %v219 = vmul.f32 %v73, %v211
    %v220 = vmul.f32 %v74, %v213
    %v221 = vmul.f32 %v75, %v213
    %v222 = vmul.f32 %v76, %v215
    %v223 = vmul.f32 %v77, %v215
    %v224 = vadd.f32 %v216, %v218
    %v225 = vadd.f32 %v224, %v220
    %v226 = vadd.f32 %v225, %v222
    %v227 = vrot.slane %v226, 4
    %v228 = vadd.f32 %v226, %v227
    %v229 = vrot.slane %v228, 2
    %v230 = vadd.f32 %v228, %v229
    %v231 = vrot.slane %v230, 1
    %v232 = vadd.f32 %v230, %v231
    %v233 = vadd.f32 %v217, %v219
    %v234 = vadd.f32 %v233, %v221
    %v235 = vadd.f32 %v234, %v223
    %v236 = vrot.slane %v235, 4
    %v237 = vadd.f32 %v235, %v236
    %v238 = vrot.slane %v237, 2
    %v239 = vadd.f32 %v237, %v238
    %v240 = vrot.slane %v239, 1
    %v241 = vadd.f32 %v239, %v240
    %v242 = vrcp.pop 32.0
    %v243 = vmul.f32 %v232, %v242
    %v244 = vmul.f32 %v241, %v242
    %v245 = vmax.f32 %v216, %v220
    %v246 = vmax.f32 %v218, %v222
    %v247 = vmax.f32 %v245, %v246
    %v248 = vrot.slane %v247, 4
    %v249 = vmax.f32 %v247, %v248
    %v250 = vrot.slane %v249, 2
    %v251 = vmax.f32 %v249, %v250
    %v252 = vrot.slane %v251, 1
    %v253 = vmax.f32 %v251, %v252
    %v254 = vmax.f32 %v217, %v221
    %v255 = vmax.f32 %v219, %v223
    %v256 = vmax.f32 %v254, %v255
    %v257 = vrot.slane %v256, 4
    %v258 = vmax.f32 %v256, %v257
    %v259 = vrot.slane %v258, 2
    %v260 = vmax.f32 %v258, %v259
    %v261 = vrot.slane %v260, 1
    %v262 = vmax.f32 %v260, %v261
    %vm263 = vcmask 1040384
    %v264 = vsel %vm263, %v243, %v253
    %v265 = vsel %vm263, %v244, %v262
    %s266 = sld [smem:[#allocation8]]
    %v267 = vstv %s266
    %v268 = vmul.f32 %v267, %v265
    %v269 = vmul.f32 %v267, %v264
    %s270 = sld [smem:[#allocation8 + $0x31]]
    %v271 = vstv %s270
    %v272 = vmul.f32 %v271, %v265
    %v273 = vmul.f32 %v271, %v264
    %v276 = vrot.slane %v272, 1
    %v277 = vrot.slane %v273, 1
    %v280 = vadd.f32 %v268, %v276
    %v281 = vadd.f32 %v269, %v277
    %v282 = vld [vmem:[#allocation6] ss:$8 sm:$0x3]
    %v285 = vcombine.low %v280, %v281
    %v287 = vunpack.c.l.s4 1966171168
    %v288 = vunpack.c.0.s8 %v287
    %v289 = vlaneseq
    %v290 = vshrl.u32 %v289, 7
    %v291 = vsub.s32 %v288, %v290
    %v292 = vrot.slane %v285, %v291
    %v294 = vunpack.c.l.s4 1966171168
    %v295 = vunpack.c.0.s8 %v294
    %v296 = vlaneseq
    %v297 = vshrl.u32 %v296, 7
    %v298 = vsub.s32 %v295, %v297
    %v299 = vrot.slane %v280, %v298
    %v300 = vcombine.low %v292, %v299
    %v302 = vunpack.c.l.s4 1966171168
    %v303 = vunpack.c.0.s8 %v302
    %v304 = vlaneseq
    %v305 = vshrl.u32 %v304, 7
    %v306 = vsub.s32 %v303, %v305
    %v307 = vrot.slane %v300, %v306
    %308 = vrot.lane.b32.xlu0 %v307, 51
    %v309 = vpop.permute.xlu0 %308
    %v310 = vrot.slane %v309, 1
    %vm311 = vcmask 416768
    %v312 = vsel %vm311, %v309, %v310
    %v314 = vmul.f32 %v282, %v312
    %v315 = vadd.f32 %v314, 0.0
    %s316 = sld [smem:[#allocation8 + $0x1]]
    %v317 = vstv %s316
    %v318 = vmul.f32 %v317, %v265
    %v319 = vmul.f32 %v317, %v264
    %s320 = sld [smem:[#allocation8 + $0x32]]
    %v321 = vstv %s320
    %v322 = vmul.f32 %v321, %v265
    %v323 = vmul.f32 %v321, %v264
    %v326 = vrot.slane %v322, 1
    %v327 = vrot.slane %v323, 1
    %v330 = vadd.f32 %v318, %v326
    %v331 = vadd.f32 %v319, %v327
    %s332 = scalar_lea.vmem [#allocation6], 1
    %v333 = vld [vmem:[%s332] ss:$8 sm:$0x3]
    %v336 = vcombine.low %v330, %v331
    %v338 = vunpack.c.l.s4 1966171168
    %v339 = vunpack.c.0.s8 %v338
    %v340 = vlaneseq
    %v341 = vshrl.u32 %v340, 7
    %v342 = vsub.s32 %v339, %v341
    %v343 = vrot.slane %v336, %v342
    %v345 = vunpack.c.l.s4 1966171168
    %v346 = vunpack.c.0.s8 %v345
    %v347 = vlaneseq
    %v348 = vshrl.u32 %v347, 7
    %v349 = vsub.s32 %v346, %v348
    %v350 = vrot.slane %v330, %v349
    %v351 = vcombine.low %v343, %v350
    %v353 = vunpack.c.l.s4 1966171168
    %v354 = vunpack.c.0.s8 %v353
    %v355 = vlaneseq
    %v356 = vshrl.u32 %v355, 7
    %v357 = vsub.s32 %v354, %v356
    %v358 = vrot.slane %v351, %v357
    %359 = vrot.lane.b32.xlu0 %v358, 50
    %v360 = vpop.permute.xlu0 %359
    %v361 = vrot.slane %v360, 1
    %vm362 = vcmask 408576
    %v363 = vsel %vm362, %v360, %v361
    %v365 = vmul.f32 %v333, %v363
    %v366 = vadd.f32 %v315, %v365
    %s367 = sld [smem:[#allocation8 + $0x2]]
    %v368 = vstv %s367
    %v369 = vmul.f32 %v368, %v265
    %v370 = vmul.f32 %v368, %v264
    %s371 = sld [smem:[#allocation8 + $0x33]]
    %v372 = vstv %s371
    %v373 = vmul.f32 %v372, %v265
    %v374 = vmul.f32 %v372, %v264
    %v377 = vrot.slane %v373, 1
    %v378 = vrot.slane %v374, 1
    %v381 = vadd.f32 %v369, %v377
    %v382 = vadd.f32 %v370, %v378
    %s383 = scalar_lea.vmem [#allocation6], 2
    %v384 = vld [vmem:[%s383] ss:$8 sm:$0x3]
    %v387 = vcombine.low %v381, %v382
    %v389 = vunpack.c.l.s4 1966171168
    %v390 = vunpack.c.0.s8 %v389
    %v391 = vlaneseq
    %v392 = vshrl.u32 %v391, 7
    %v393 = vsub.s32 %v390, %v392
    %v394 = vrot.slane %v387, %v393
    %v396 = vunpack.c.l.s4 1966171168
    %v397 = vunpack.c.0.s8 %v396
    %v398 = vlaneseq
    %v399 = vshrl.u32 %v398, 7
    %v400 = vsub.s32 %v397, %v399
    %v401 = vrot.slane %v381, %v400
    %v402 = vcombine.low %v394, %v401
    %v404 = vunpack.c.l.s4 1966171168
    %v405 = vunpack.c.0.s8 %v404
    %v406 = vlaneseq
    %v407 = vshrl.u32 %v406, 7
    %v408 = vsub.s32 %v405, %v407
    %v409 = vrot.slane %v402, %v408
    %410 = vrot.lane.b32.xlu0 %v409, 49
    %v411 = vpop.permute.xlu0 %410
    %v412 = vrot.slane %v411, 1
    %vm413 = vcmask 400384
    %v414 = vsel %vm413, %v411, %v412
    %v416 = vmul.f32 %v384, %v414
    %v417 = vadd.f32 %v366, %v416
    %s418 = sld [smem:[#allocation8 + $0x3]]
    %v419 = vstv %s418
    %v420 = vmul.f32 %v419, %v265
    %v421 = vmul.f32 %v419, %v264
    %s422 = sld [smem:[#allocation8 + $0x34]]
    %v423 = vstv %s422
    %v424 = vmul.f32 %v423, %v265
    %v425 = vmul.f32 %v423, %v264
    %v428 = vrot.slane %v424, 1
    %v429 = vrot.slane %v425, 1
    %v432 = vadd.f32 %v420, %v428
    %v433 = vadd.f32 %v421, %v429
    %s434 = scalar_lea.vmem [#allocation6], 3
    %v435 = vld [vmem:[%s434] ss:$8 sm:$0x3]
    %v438 = vcombine.low %v432, %v433
    %v440 = vunpack.c.l.s4 1966171168
    %v441 = vunpack.c.0.s8 %v440
    %v442 = vlaneseq
    %v443 = vshrl.u32 %v442, 7
    %v444 = vsub.s32 %v441, %v443
    %v445 = vrot.slane %v438, %v444
    %v447 = vunpack.c.l.s4 1966171168
    %v448 = vunpack.c.0.s8 %v447
    %v449 = vlaneseq
    %v450 = vshrl.u32 %v449, 7
    %v451 = vsub.s32 %v448, %v450
    %v452 = vrot.slane %v432, %v451
    %v453 = vcombine.low %v445, %v452
    %v455 = vunpack.c.l.s4 1966171168
    %v456 = vunpack.c.0.s8 %v455
    %v457 = vlaneseq
    %v458 = vshrl.u32 %v457, 7
    %v459 = vsub.s32 %v456, %v458
    %v460 = vrot.slane %v453, %v459
    %461 = vrot.lane.b32.xlu0 %v460, 48
    %v462 = vpop.permute.xlu0 %461
    %v463 = vrot.slane %v462, 1
    %vm464 = vcmask 392192
    %v465 = vsel %vm464, %v462, %v463
    %v467 = vmul.f32 %v435, %v465
    %v468 = vadd.f32 %v417, %v467
    %s469 = sld [smem:[#allocation8 + $0x4]]
    %v470 = vstv %s469
    %v471 = vmul.f32 %v470, %v265
    %v472 = vmul.f32 %v470, %v264
    %s473 = sld [smem:[#allocation8 + $0x35]]
    %v474 = vstv %s473
    %v475 = vmul.f32 %v474, %v265
    %v476 = vmul.f32 %v474, %v264
    %v479 = vrot.slane %v475, 1
    %v480 = vrot.slane %v476, 1
    %v483 = vadd.f32 %v471, %v479
    %v484 = vadd.f32 %v472, %v480
    %s485 = scalar_lea.vmem [#allocation6], 4
    %v486 = vld [vmem:[%s485] ss:$8 sm:$0x3]
    %v489 = vcombine.low %v483, %v484
    %v491 = vunpack.c.l.s4 1966171168
    %v492 = vunpack.c.0.s8 %v491
    %v493 = vlaneseq
    %v494 = vshrl.u32 %v493, 7
    %v495 = vsub.s32 %v492, %v494
    %v496 = vrot.slane %v489, %v495
    %v498 = vunpack.c.l.s4 1966171168
    %v499 = vunpack.c.0.s8 %v498
    %v500 = vlaneseq
    %v501 = vshrl.u32 %v500, 7
    %v502 = vsub.s32 %v499, %v501
    %v503 = vrot.slane %v483, %v502
    %v504 = vcombine.low %v496, %v503
    %v506 = vunpack.c.l.s4 1966171168
    %v507 = vunpack.c.0.s8 %v506
    %v508 = vlaneseq
    %v509 = vshrl.u32 %v508, 7
    %v510 = vsub.s32 %v507, %v509
    %v511 = vrot.slane %v504, %v510
    %512 = vrot.lane.b32.xlu0 %v511, 47
    %v513 = vpop.permute.xlu0 %512
    %v514 = vrot.slane %v513, 1
    %vm515 = vcmask 384000
    %v516 = vsel %vm515, %v513, %v514
    %v518 = vmul.f32 %v486, %v516
    %v519 = vadd.f32 %v468, %v518
    %s520 = sld [smem:[#allocation8 + $0x5]]
    %v521 = vstv %s520
    %v522 = vmul.f32 %v521, %v265
    %v523 = vmul.f32 %v521, %v264
    %s524 = sld [smem:[#allocation8 + $0x36]]
    %v525 = vstv %s524
    %v526 = vmul.f32 %v525, %v265
    %v527 = vmul.f32 %v525, %v264
    %v530 = vrot.slane %v526, 1
    %v531 = vrot.slane %v527, 1
    %v534 = vadd.f32 %v522, %v530
    %v535 = vadd.f32 %v523, %v531
    %s536 = scalar_lea.vmem [#allocation6], 5
    %v537 = vld [vmem:[%s536] ss:$8 sm:$0x3]
    %v540 = vcombine.low %v534, %v535
    %v542 = vunpack.c.l.s4 1966171168
    %v543 = vunpack.c.0.s8 %v542
    %v544 = vlaneseq
    %v545 = vshrl.u32 %v544, 7
    %v546 = vsub.s32 %v543, %v545
    %v547 = vrot.slane %v540, %v546
    %v549 = vunpack.c.l.s4 1966171168
    %v550 = vunpack.c.0.s8 %v549
    %v551 = vlaneseq
    %v552 = vshrl.u32 %v551, 7
    %v553 = vsub.s32 %v550, %v552
    %v554 = vrot.slane %v534, %v553
    %v555 = vcombine.low %v547, %v554
    %v557 = vunpack.c.l.s4 1966171168
    %v558 = vunpack.c.0.s8 %v557
    %v559 = vlaneseq
    %v560 = vshrl.u32 %v559, 7
    %v561 = vsub.s32 %v558, %v560
    %v562 = vrot.slane %v555, %v561
    %563 = vrot.lane.b32.xlu0 %v562, 46
    %v564 = vpop.permute.xlu0 %563
    %v565 = vrot.slane %v564, 1
    %vm566 = vcmask 375808
    %v567 = vsel %vm566, %v564, %v565
    %v569 = vmul.f32 %v537, %v567
    %v570 = vadd.f32 %v519, %v569
    %s571 = sld [smem:[#allocation8 + $0x6]]
    %v572 = vstv %s571
    %v573 = vmul.f32 %v572, %v265
    %v574 = vmul.f32 %v572, %v264
    %s575 = sld [smem:[#allocation8 + $0x37]]
    %v576 = vstv %s575
    %v577 = vmul.f32 %v576, %v265
    %v578 = vmul.f32 %v576, %v264
    %v581 = vrot.slane %v577, 1
    %v582 = vrot.slane %v578, 1
    %v585 = vadd.f32 %v573, %v581
    %v586 = vadd.f32 %v574, %v582
    %s587 = scalar_lea.vmem [#allocation6], 6
    %v588 = vld [vmem:[%s587] ss:$8 sm:$0x3]
    %v591 = vcombine.low %v585, %v586
    %v593 = vunpack.c.l.s4 1966171168
    %v594 = vunpack.c.0.s8 %v593
    %v595 = vlaneseq
    %v596 = vshrl.u32 %v595, 7
    %v597 = vsub.s32 %v594, %v596
    %v598 = vrot.slane %v591, %v597
    %v600 = vunpack.c.l.s4 1966171168
    %v601 = vunpack.c.0.s8 %v600
    %v602 = vlaneseq
    %v603 = vshrl.u32 %v602, 7
    %v604 = vsub.s32 %v601, %v603
    %v605 = vrot.slane %v585, %v604
    %v606 = vcombine.low %v598, %v605
    %v608 = vunpack.c.l.s4 1966171168
    %v609 = vunpack.c.0.s8 %v608
    %v610 = vlaneseq
    %v611 = vshrl.u32 %v610, 7
    %v612 = vsub.s32 %v609, %v611
    %v613 = vrot.slane %v606, %v612
    %614 = vrot.lane.b32.xlu0 %v613, 45
    %v615 = vpop.permute.xlu0 %614
    %v616 = vrot.slane %v615, 1
    %vm617 = vcmask 367616
    %v618 = vsel %vm617, %v615, %v616
    %v620 = vmul.f32 %v588, %v618
    %v621 = vadd.f32 %v570, %v620
    %s622 = sld [smem:[#allocation8 + $0x7]]
    %v623 = vstv %s622
    %v624 = vmul.f32 %v623, %v265
    %v625 = vmul.f32 %v623, %v264
    %s626 = sld [smem:[#allocation8 + $0x38]]
    %v627 = vstv %s626
    %v628 = vmul.f32 %v627, %v265
    %v629 = vmul.f32 %v627, %v264
    %v632 = vrot.slane %v628, 1
    %v633 = vrot.slane %v629, 1
    %v636 = vadd.f32 %v624, %v632
    %v637 = vadd.f32 %v625, %v633
    %s638 = scalar_lea.vmem [#allocation6], 7
    %v639 = vld [vmem:[%s638] ss:$8 sm:$0x3]
    %v642 = vcombine.low %v636, %v637
    %v644 = vunpack.c.l.s4 1966171168
    %v645 = vunpack.c.0.s8 %v644
    %v646 = vlaneseq
    %v647 = vshrl.u32 %v646, 7
    %v648 = vsub.s32 %v645, %v647
    %v649 = vrot.slane %v642, %v648
    %v651 = vunpack.c.l.s4 1966171168
    %v652 = vunpack.c.0.s8 %v651
    %v653 = vlaneseq
    %v654 = vshrl.u32 %v653, 7
    %v655 = vsub.s32 %v652, %v654
    %v656 = vrot.slane %v636, %v655
    %v657 = vcombine.low %v649, %v656
    %v659 = vunpack.c.l.s4 1966171168
    %v660 = vunpack.c.0.s8 %v659
    %v661 = vlaneseq
    %v662 = vshrl.u32 %v661, 7
    %v663 = vsub.s32 %v660, %v662
    %v664 = vrot.slane %v657, %v663
    %665 = vrot.lane.b32.xlu0 %v664, 35
    %v666 = vpop.permute.xlu0 %665
    %v667 = vrot.slane %v666, 1
    %vm668 = vcmask 285696
    %v669 = vsel %vm668, %v666, %v667
    %v671 = vmul.f32 %v639, %v669
    %v672 = vadd.f32 %v621, %v671
    %s673 = sld [smem:[#allocation8 + $0x8]]
    %v674 = vstv %s673
    %v675 = vmul.f32 %v674, %v265
    %v676 = vmul.f32 %v674, %v264
    %s677 = sld [smem:[#allocation8 + $0x39]]
    %v678 = vstv %s677
    %v679 = vmul.f32 %v678, %v265
    %v680 = vmul.f32 %v678, %v264
    %v683 = vrot.slane %v679, 1
    %v684 = vrot.slane %v680, 1
    %v687 = vadd.f32 %v675, %v683
    %v688 = vadd.f32 %v676, %v684
    %s689 = scalar_lea.vmem [#allocation6], 16
    %v690 = vld [vmem:[%s689] ss:$8 sm:$0x3]
    %v693 = vcombine.low %v687, %v688
    %v695 = vunpack.c.l.s4 1966171168
    %v696 = vunpack.c.0.s8 %v695
    %v697 = vlaneseq
    %v698 = vshrl.u32 %v697, 7
    %v699 = vsub.s32 %v696, %v698
    %v700 = vrot.slane %v693, %v699
    %v702 = vunpack.c.l.s4 1966171168
    %v703 = vunpack.c.0.s8 %v702
    %v704 = vlaneseq
    %v705 = vshrl.u32 %v704, 7
    %v706 = vsub.s32 %v703, %v705
    %v707 = vrot.slane %v687, %v706
    %v708 = vcombine.low %v700, %v707
    %v710 = vunpack.c.l.s4 1966171168
    %v711 = vunpack.c.0.s8 %v710
    %v712 = vlaneseq
    %v713 = vshrl.u32 %v712, 7
    %v714 = vsub.s32 %v711, %v713
    %v715 = vrot.slane %v708, %v714
    %716 = vrot.lane.b32.xlu0 %v715, 34
    %v717 = vpop.permute.xlu0 %716
    %v718 = vrot.slane %v717, 1
    %vm719 = vcmask 277504
    %v720 = vsel %vm719, %v717, %v718
    %v722 = vmul.f32 %v690, %v720
    %v723 = vadd.f32 %v672, %v722
    %s724 = sld [smem:[#allocation8 + $0x9]]
    %v725 = vstv %s724
    %v726 = vmul.f32 %v725, %v265
    %v727 = vmul.f32 %v725, %v264
    %s728 = sld [smem:[#allocation8 + $0x3a]]
    %v729 = vstv %s728
    %v730 = vmul.f32 %v729, %v265
    %v731 = vmul.f32 %v729, %v264
    %v734 = vrot.slane %v730, 1
    %v735 = vrot.slane %v731, 1
    %v738 = vadd.f32 %v726, %v734
    %v739 = vadd.f32 %v727, %v735
    %s740 = scalar_lea.vmem [#allocation6], 17
    %v741 = vld [vmem:[%s740] ss:$8 sm:$0x3]
    %v744 = vcombine.low %v738, %v739
    %v746 = vunpack.c.l.s4 1966171168
    %v747 = vunpack.c.0.s8 %v746
    %v748 = vlaneseq
    %v749 = vshrl.u32 %v748, 7
    %v750 = vsub.s32 %v747, %v749
    %v751 = vrot.slane %v744, %v750
    %v753 = vunpack.c.l.s4 1966171168
    %v754 = vunpack.c.0.s8 %v753
    %v755 = vlaneseq
    %v756 = vshrl.u32 %v755, 7
    %v757 = vsub.s32 %v754, %v756
    %v758 = vrot.slane %v738, %v757
    %v759 = vcombine.low %v751, %v758
    %v761 = vunpack.c.l.s4 1966171168
    %v762 = vunpack.c.0.s8 %v761
    %v763 = vlaneseq
    %v764 = vshrl.u32 %v763, 7
    %v765 = vsub.s32 %v762, %v764
    %v766 = vrot.slane %v759, %v765
    %767 = vrot.lane.b32.xlu0 %v766, 33
    %v768 = vpop.permute.xlu0 %767
    %v769 = vrot.slane %v768, 1
    %vm770 = vcmask 269312
    %v771 = vsel %vm770, %v768, %v769
    %v773 = vmul.f32 %v741, %v771
    %v774 = vadd.f32 %v723, %v773
    %s775 = sld [smem:[#allocation8 + $0xa]]
    %v776 = vstv %s775
    %v777 = vmul.f32 %v776, %v265
    %v778 = vmul.f32 %v776, %v264
    %s779 = sld [smem:[#allocation8 + $0x3b]]
    %v780 = vstv %s779
    %v781 = vmul.f32 %v780, %v265
    %v782 = vmul.f32 %v780, %v264
    %v785 = vrot.slane %v781, 1
    %v786 = vrot.slane %v782, 1
    %v789 = vadd.f32 %v777, %v785
    %v790 = vadd.f32 %v778, %v786
    %s791 = scalar_lea.vmem [#allocation6], 18
    %v792 = vld [vmem:[%s791] ss:$8 sm:$0x3]
    %v795 = vcombine.low %v789, %v790
    %v797 = vunpack.c.l.s4 1966171168
    %v798 = vunpack.c.0.s8 %v797
    %v799 = vlaneseq
    %v800 = vshrl.u32 %v799, 7
    %v801 = vsub.s32 %v798, %v800
    %v802 = vrot.slane %v795, %v801
    %v804 = vunpack.c.l.s4 1966171168
    %v805 = vunpack.c.0.s8 %v804
    %v806 = vlaneseq
    %v807 = vshrl.u32 %v806, 7
    %v808 = vsub.s32 %v805, %v807
    %v809 = vrot.slane %v789, %v808
    %v810 = vcombine.low %v802, %v809
    %v812 = vunpack.c.l.s4 1966171168
    %v813 = vunpack.c.0.s8 %v812
    %v814 = vlaneseq
    %v815 = vshrl.u32 %v814, 7
    %v816 = vsub.s32 %v813, %v815
    %v817 = vrot.slane %v810, %v816
    %818 = vrot.lane.b32.xlu0 %v817, 32
    %v819 = vpop.permute.xlu0 %818
    %v820 = vrot.slane %v819, 1
    %vm821 = vcmask 261120
    %v822 = vsel %vm821, %v819, %v820
    %v824 = vmul.f32 %v792, %v822
    %v825 = vadd.f32 %v774, %v824
    %s826 = sld [smem:[#allocation8 + $0xb]]
    %v827 = vstv %s826
    %v828 = vmul.f32 %v827, %v265
    %v829 = vmul.f32 %v827, %v264
    %s830 = sld [smem:[#allocation8 + $0x3c]]
    %v831 = vstv %s830
    %v832 = vmul.f32 %v831, %v265
    %v833 = vmul.f32 %v831, %v264
    %v836 = vrot.slane %v832, 1
    %v837 = vrot.slane %v833, 1
    %v840 = vadd.f32 %v828, %v836
    %v841 = vadd.f32 %v829, %v837
    %s842 = scalar_lea.vmem [#allocation6], 19
    %v843 = vld [vmem:[%s842] ss:$8 sm:$0x3]
    %v846 = vcombine.low %v840, %v841
    %v848 = vunpack.c.l.s4 1966171168
    %v849 = vunpack.c.0.s8 %v848
    %v850 = vlaneseq
    %v851 = vshrl.u32 %v850, 7
    %v852 = vsub.s32 %v849, %v851
    %v853 = vrot.slane %v846, %v852
    %v855 = vunpack.c.l.s4 1966171168
    %v856 = vunpack.c.0.s8 %v855
    %v857 = vlaneseq
    %v858 = vshrl.u32 %v857, 7
    %v859 = vsub.s32 %v856, %v858
    %v860 = vrot.slane %v840, %v859
    %v861 = vcombine.low %v853, %v860
    %v863 = vunpack.c.l.s4 1966171168
    %v864 = vunpack.c.0.s8 %v863
    %v865 = vlaneseq
    %v866 = vshrl.u32 %v865, 7
    %v867 = vsub.s32 %v864, %v866
    %v868 = vrot.slane %v861, %v867
    %869 = vrot.lane.b32.xlu0 %v868, 31
    %v870 = vpop.permute.xlu0 %869
    %v871 = vrot.slane %v870, 1
    %vm872 = vcmask 252928
    %v873 = vsel %vm872, %v870, %v871
    %v875 = vmul.f32 %v843, %v873
    %v876 = vadd.f32 %v825, %v875
    %s877 = sld [smem:[#allocation8 + $0xc]]
    %v878 = vstv %s877
    %v879 = vmul.f32 %v878, %v265
    %v880 = vmul.f32 %v878, %v264
    %s881 = sld [smem:[#allocation8 + $0x3d]]
    %v882 = vstv %s881
    %v883 = vmul.f32 %v882, %v265
    %v884 = vmul.f32 %v882, %v264
    %v887 = vrot.slane %v883, 1
    %v888 = vrot.slane %v884, 1
    %v891 = vadd.f32 %v879, %v887
    %v892 = vadd.f32 %v880, %v888
    %s893 = scalar_lea.vmem [#allocation6], 20
    %v894 = vld [vmem:[%s893] ss:$8 sm:$0x3]
    %v897 = vcombine.low %v891, %v892
    %v899 = vunpack.c.l.s4 1966171168
    %v900 = vunpack.c.0.s8 %v899
    %v901 = vlaneseq
    %v902 = vshrl.u32 %v901, 7
    %v903 = vsub.s32 %v900, %v902
    %v904 = vrot.slane %v897, %v903
    %v906 = vunpack.c.l.s4 1966171168
    %v907 = vunpack.c.0.s8 %v906
    %v908 = vlaneseq
    %v909 = vshrl.u32 %v908, 7
    %v910 = vsub.s32 %v907, %v909
    %v911 = vrot.slane %v891, %v910
    %v912 = vcombine.low %v904, %v911
    %v914 = vunpack.c.l.s4 1966171168
    %v915 = vunpack.c.0.s8 %v914
    %v916 = vlaneseq
    %v917 = vshrl.u32 %v916, 7
    %v918 = vsub.s32 %v915, %v917
    %v919 = vrot.slane %v912, %v918
    %920 = vrot.lane.b32.xlu0 %v919, 30
    %v921 = vpop.permute.xlu0 %920
    %v922 = vrot.slane %v921, 1
    %vm923 = vcmask 244736
    %v924 = vsel %vm923, %v921, %v922
    %v926 = vmul.f32 %v894, %v924
    %v927 = vadd.f32 %v876, %v926
    %s928 = sld [smem:[#allocation8 + $0xd]]
    %v929 = vstv %s928
    %v930 = vmul.f32 %v929, %v265
    %v931 = vmul.f32 %v929, %v264
    %s932 = sld [smem:[#allocation8 + $0x3e]]
    %v933 = vstv %s932
    %v934 = vmul.f32 %v933, %v265
    %v935 = vmul.f32 %v933, %v264
    %v938 = vrot.slane %v934, 1
    %v939 = vrot.slane %v935, 1
    %v942 = vadd.f32 %v930, %v938
    %v943 = vadd.f32 %v931, %v939
    %s944 = scalar_lea.vmem [#allocation6], 21
    %v945 = vld [vmem:[%s944] ss:$8 sm:$0x3]
    %v948 = vcombine.low %v942, %v943
    %v950 = vunpack.c.l.s4 1966171168
    %v951 = vunpack.c.0.s8 %v950
    %v952 = vlaneseq
    %v953 = vshrl.u32 %v952, 7
    %v954 = vsub.s32 %v951, %v953
    %v955 = vrot.slane %v948, %v954
    %v957 = vunpack.c.l.s4 1966171168
    %v958 = vunpack.c.0.s8 %v957
    %v959 = vlaneseq
    %v960 = vshrl.u32 %v959, 7
    %v961 = vsub.s32 %v958, %v960
    %v962 = vrot.slane %v942, %v961
    %v963 = vcombine.low %v955, %v962
    %v965 = vunpack.c.l.s4 1966171168
    %v966 = vunpack.c.0.s8 %v965
    %v967 = vlaneseq
    %v968 = vshrl.u32 %v967, 7
    %v969 = vsub.s32 %v966, %v968
    %v970 = vrot.slane %v963, %v969
    %971 = vrot.lane.b32.xlu0 %v970, 29
    %v972 = vpop.permute.xlu0 %971
    %v973 = vrot.slane %v972, 1
    %vm974 = vcmask 236544
    %v975 = vsel %vm974, %v972, %v973
    %v977 = vmul.f32 %v945, %v975
    %v978 = vadd.f32 %v927, %v977
    %s979 = sld [smem:[#allocation8 + $0xe]]
    %v980 = vstv %s979
    %v981 = vmul.f32 %v980, %v265
    %v982 = vmul.f32 %v980, %v264
    %s983 = sld [smem:[#allocation8 + $0x3f]]
    %v984 = vstv %s983
    %v985 = vmul.f32 %v984, %v265
    %v986 = vmul.f32 %v984, %v264
    %v989 = vrot.slane %v985, 1
    %v990 = vrot.slane %v986, 1
    %v993 = vadd.f32 %v981, %v989
    %v994 = vadd.f32 %v982, %v990
    %s995 = scalar_lea.vmem [#allocation6], 22
    %v996 = vld [vmem:[%s995] ss:$8 sm:$0x3]
    %v999 = vcombine.low %v993, %v994
    %v1001 = vunpack.c.l.s4 1966171168
    %v1002 = vunpack.c.0.s8 %v1001
    %v1003 = vlaneseq
    %v1004 = vshrl.u32 %v1003, 7
    %v1005 = vsub.s32 %v1002, %v1004
    %v1006 = vrot.slane %v999, %v1005
    %v1008 = vunpack.c.l.s4 1966171168
    %v1009 = vunpack.c.0.s8 %v1008
    %v1010 = vlaneseq
    %v1011 = vshrl.u32 %v1010, 7
    %v1012 = vsub.s32 %v1009, %v1011
    %v1013 = vrot.slane %v993, %v1012
    %v1014 = vcombine.low %v1006, %v1013
    %v1016 = vunpack.c.l.s4 1966171168
    %v1017 = vunpack.c.0.s8 %v1016
    %v1018 = vlaneseq
    %v1019 = vshrl.u32 %v1018, 7
    %v1020 = vsub.s32 %v1017, %v1019
    %v1021 = vrot.slane %v1014, %v1020
    %1022 = vrot.lane.b32.xlu0 %v1021, 19
    %v1023 = vpop.permute.xlu0 %1022
    %v1024 = vrot.slane %v1023, 1
    %vm1025 = vcmask 154624
    %v1026 = vsel %vm1025, %v1023, %v1024
    %v1028 = vmul.f32 %v996, %v1026
    %v1029 = vadd.f32 %v978, %v1028
    %s1030 = sld [smem:[#allocation8 + $0xf]]
    %v1031 = vstv %s1030
    %v1032 = vmul.f32 %v1031, %v265
    %v1033 = vmul.f32 %v1031, %v264
    %s1034 = sld [smem:[#allocation8 + $0x40]]
    %v1035 = vstv %s1034
    %v1036 = vmul.f32 %v1035, %v265
    %v1037 = vmul.f32 %v1035, %v264
    %v1040 = vrot.slane %v1036, 1
    %v1041 = vrot.slane %v1037, 1
    %v1044 = vadd.f32 %v1032, %v1040
    %v1045 = vadd.f32 %v1033, %v1041
    %s1046 = scalar_lea.vmem [#allocation6], 23
    %v1047 = vld [vmem:[%s1046] ss:$8 sm:$0x3]
    %v1050 = vcombine.low %v1044, %v1045
    %v1052 = vunpack.c.l.s4 1966171168
    %v1053 = vunpack.c.0.s8 %v1052
    %v1054 = vlaneseq
    %v1055 = vshrl.u32 %v1054, 7
    %v1056 = vsub.s32 %v1053, %v1055
    %v1057 = vrot.slane %v1050, %v1056
    %v1059 = vunpack.c.l.s4 1966171168
    %v1060 = vunpack.c.0.s8 %v1059
    %v1061 = vlaneseq
    %v1062 = vshrl.u32 %v1061, 7
    %v1063 = vsub.s32 %v1060, %v1062
    %v1064 = vrot.slane %v1044, %v1063
    %v1065 = vcombine.low %v1057, %v1064
    %v1067 = vunpack.c.l.s4 1966171168
    %v1068 = vunpack.c.0.s8 %v1067
    %v1069 = vlaneseq
    %v1070 = vshrl.u32 %v1069, 7
    %v1071 = vsub.s32 %v1068, %v1070
    %v1072 = vrot.slane %v1065, %v1071
    %1073 = vrot.lane.b32.xlu0 %v1072, 18
    %v1074 = vpop.permute.xlu0 %1073
    %v1075 = vrot.slane %v1074, 1
    %vm1076 = vcmask 146432
    %v1077 = vsel %vm1076, %v1074, %v1075
    %v1079 = vmul.f32 %v1047, %v1077
    %v1080 = vadd.f32 %v1029, %v1079
    %s1081 = sld [smem:[#allocation8 + $0x10]]
    %v1082 = vstv %s1081
    %v1083 = vmul.f32 %v1082, %v265
    %v1084 = vmul.f32 %v1082, %v264
    %s1085 = sld [smem:[#allocation8 + $0x41]]
    %v1086 = vstv %s1085
    %v1087 = vmul.f32 %v1086, %v265
    %v1088 = vmul.f32 %v1086, %v264
    %v1091 = vrot.slane %v1087, 1
    %v1092 = vrot.slane %v1088, 1
    %v1095 = vadd.f32 %v1083, %v1091
    %v1096 = vadd.f32 %v1084, %v1092
    %s1097 = scalar_lea.vmem [#allocation6], 32
    %v1098 = vld [vmem:[%s1097] ss:$8 sm:$0x3]
    %v1101 = vcombine.low %v1095, %v1096
    %v1103 = vunpack.c.l.s4 1966171168
    %v1104 = vunpack.c.0.s8 %v1103
    %v1105 = vlaneseq
    %v1106 = vshrl.u32 %v1105, 7
    %v1107 = vsub.s32 %v1104, %v1106
    %v1108 = vrot.slane %v1101, %v1107
    %v1110 = vunpack.c.l.s4 1966171168
    %v1111 = vunpack.c.0.s8 %v1110
    %v1112 = vlaneseq
    %v1113 = vshrl.u32 %v1112, 7
    %v1114 = vsub.s32 %v1111, %v1113
    %v1115 = vrot.slane %v1095, %v1114
    %v1116 = vcombine.low %v1108, %v1115
    %v1118 = vunpack.c.l.s4 1966171168
    %v1119 = vunpack.c.0.s8 %v1118
    %v1120 = vlaneseq
    %v1121 = vshrl.u32 %v1120, 7
    %v1122 = vsub.s32 %v1119, %v1121
    %v1123 = vrot.slane %v1116, %v1122
    %1124 = vrot.lane.b32.xlu0 %v1123, 17
    %v1125 = vpop.permute.xlu0 %1124
    %v1126 = vrot.slane %v1125, 1
    %vm1127 = vcmask 138240
    %v1128 = vsel %vm1127, %v1125, %v1126
    %v1130 = vmul.f32 %v1098, %v1128
    %v1131 = vadd.f32 %v1080, %v1130
    %s1132 = sld [smem:[#allocation8 + $0x11]]
    %v1133 = vstv %s1132
    %v1134 = vmul.f32 %v1133, %v265
    %v1135 = vmul.f32 %v1133, %v264
    %s1136 = sld [smem:[#allocation8 + $0x42]]
    %v1137 = vstv %s1136
    %v1138 = vmul.f32 %v1137, %v265
    %v1139 = vmul.f32 %v1137, %v264
    %v1142 = vrot.slane %v1138, 1
    %v1143 = vrot.slane %v1139, 1
    %v1146 = vadd.f32 %v1134, %v1142
    %v1147 = vadd.f32 %v1135, %v1143
    %s1148 = scalar_lea.vmem [#allocation6], 33
    %v1149 = vld [vmem:[%s1148] ss:$8 sm:$0x3]
    %v1152 = vcombine.low %v1146, %v1147
    %v1154 = vunpack.c.l.s4 1966171168
    %v1155 = vunpack.c.0.s8 %v1154
    %v1156 = vlaneseq
    %v1157 = vshrl.u32 %v1156, 7
    %v1158 = vsub.s32 %v1155, %v1157
    %v1159 = vrot.slane %v1152, %v1158
    %v1161 = vunpack.c.l.s4 1966171168
    %v1162 = vunpack.c.0.s8 %v1161
    %v1163 = vlaneseq
    %v1164 = vshrl.u32 %v1163, 7
    %v1165 = vsub.s32 %v1162, %v1164
    %v1166 = vrot.slane %v1146, %v1165
    %v1167 = vcombine.low %v1159, %v1166
    %v1169 = vunpack.c.l.s4 1966171168
    %v1170 = vunpack.c.0.s8 %v1169
    %v1171 = vlaneseq
    %v1172 = vshrl.u32 %v1171, 7
    %v1173 = vsub.s32 %v1170, %v1172
    %v1174 = vrot.slane %v1167, %v1173
    %1175 = vrot.lane.b32.xlu0 %v1174, 16
    %v1176 = vpop.permute.xlu0 %1175
    %v1177 = vrot.slane %v1176, 1
    %vm1178 = vcmask 130048
    %v1179 = vsel %vm1178, %v1176, %v1177
    %v1181 = vmul.f32 %v1149, %v1179
    %v1182 = vadd.f32 %v1131, %v1181
    %s1183 = sld [smem:[#allocation8 + $0x12]]
    %v1184 = vstv %s1183
    %v1185 = vmul.f32 %v1184, %v265
    %v1186 = vmul.f32 %v1184, %v264
    %s1187 = sld [smem:[#allocation8 + $0x43]]
    %v1188 = vstv %s1187
    %v1189 = vmul.f32 %v1188, %v265
    %v1190 = vmul.f32 %v1188, %v264
    %v1193 = vrot.slane %v1189, 1
    %v1194 = vrot.slane %v1190, 1
    %v1197 = vadd.f32 %v1185, %v1193
    %v1198 = vadd.f32 %v1186, %v1194
    %s1199 = scalar_lea.vmem [#allocation6], 34
    %v1200 = vld [vmem:[%s1199] ss:$8 sm:$0x3]
    %v1203 = vcombine.low %v1197, %v1198
    %v1205 = vunpack.c.l.s4 1966171168
    %v1206 = vunpack.c.0.s8 %v1205
    %v1207 = vlaneseq
    %v1208 = vshrl.u32 %v1207, 7
    %v1209 = vsub.s32 %v1206, %v1208
    %v1210 = vrot.slane %v1203, %v1209
    %v1212 = vunpack.c.l.s4 1966171168
    %v1213 = vunpack.c.0.s8 %v1212
    %v1214 = vlaneseq
    %v1215 = vshrl.u32 %v1214, 7
    %v1216 = vsub.s32 %v1213, %v1215
    %v1217 = vrot.slane %v1197, %v1216
    %v1218 = vcombine.low %v1210, %v1217
    %v1220 = vunpack.c.l.s4 1966171168
    %v1221 = vunpack.c.0.s8 %v1220
    %v1222 = vlaneseq
    %v1223 = vshrl.u32 %v1222, 7
    %v1224 = vsub.s32 %v1221, %v1223
    %v1225 = vrot.slane %v1218, %v1224
    %1226 = vrot.lane.b32.xlu0 %v1225, 15
    %v1227 = vpop.permute.xlu0 %1226
    %v1228 = vrot.slane %v1227, 1
    %vm1229 = vcmask 121856
    %v1230 = vsel %vm1229, %v1227, %v1228
    %v1232 = vmul.f32 %v1200, %v1230
    %v1233 = vadd.f32 %v1182, %v1232
    %s1234 = sld [smem:[#allocation8 + $0x13]]
    %v1235 = vstv %s1234
    %v1236 = vmul.f32 %v1235, %v265
    %v1237 = vmul.f32 %v1235, %v264
    %s1238 = sld [smem:[#allocation8 + $0x44]]
    %v1239 = vstv %s1238
    %v1240 = vmul.f32 %v1239, %v265
    %v1241 = vmul.f32 %v1239, %v264
    %v1244 = vrot.slane %v1240, 1
    %v1245 = vrot.slane %v1241, 1
    %v1248 = vadd.f32 %v1236, %v1244
    %v1249 = vadd.f32 %v1237, %v1245
    %s1250 = scalar_lea.vmem [#allocation6], 35
    %v1251 = vld [vmem:[%s1250] ss:$8 sm:$0x3]
    %v1254 = vcombine.low %v1248, %v1249
    %v1256 = vunpack.c.l.s4 1966171168
    %v1257 = vunpack.c.0.s8 %v1256
    %v1258 = vlaneseq
    %v1259 = vshrl.u32 %v1258, 7
    %v1260 = vsub.s32 %v1257, %v1259
    %v1261 = vrot.slane %v1254, %v1260
    %v1263 = vunpack.c.l.s4 1966171168
    %v1264 = vunpack.c.0.s8 %v1263
    %v1265 = vlaneseq
    %v1266 = vshrl.u32 %v1265, 7
    %v1267 = vsub.s32 %v1264, %v1266
    %v1268 = vrot.slane %v1248, %v1267
    %v1269 = vcombine.low %v1261, %v1268
    %v1271 = vunpack.c.l.s4 1966171168
    %v1272 = vunpack.c.0.s8 %v1271
    %v1273 = vlaneseq
    %v1274 = vshrl.u32 %v1273, 7
    %v1275 = vsub.s32 %v1272, %v1274
    %v1276 = vrot.slane %v1269, %v1275
    %1277 = vrot.lane.b32.xlu0 %v1276, 14
    %v1278 = vpop.permute.xlu0 %1277
    %v1279 = vrot.slane %v1278, 1
    %vm1280 = vcmask 113664
    %v1281 = vsel %vm1280, %v1278, %v1279
    %v1283 = vmul.f32 %v1251, %v1281
    %v1284 = vadd.f32 %v1233, %v1283
    %s1285 = sld [smem:[#allocation8 + $0x14]]
    %v1286 = vstv %s1285
    %v1287 = vmul.f32 %v1286, %v265
    %v1288 = vmul.f32 %v1286, %v264
    %s1289 = sld [smem:[#allocation8 + $0x45]]
    %v1290 = vstv %s1289
    %v1291 = vmul.f32 %v1290, %v265
    %v1292 = vmul.f32 %v1290, %v264
    %v1295 = vrot.slane %v1291, 1
    %v1296 = vrot.slane %v1292, 1
    %v1299 = vadd.f32 %v1287, %v1295
    %v1300 = vadd.f32 %v1288, %v1296
    %s1301 = scalar_lea.vmem [#allocation6], 36
    %v1302 = vld [vmem:[%s1301] ss:$8 sm:$0x3]
    %v1305 = vcombine.low %v1299, %v1300
    %v1307 = vunpack.c.l.s4 1966171168
    %v1308 = vunpack.c.0.s8 %v1307
    %v1309 = vlaneseq
    %v1310 = vshrl.u32 %v1309, 7
    %v1311 = vsub.s32 %v1308, %v1310
    %v1312 = vrot.slane %v1305, %v1311
    %v1314 = vunpack.c.l.s4 1966171168
    %v1315 = vunpack.c.0.s8 %v1314
    %v1316 = vlaneseq
    %v1317 = vshrl.u32 %v1316, 7
    %v1318 = vsub.s32 %v1315, %v1317
    %v1319 = vrot.slane %v1299, %v1318
    %v1320 = vcombine.low %v1312, %v1319
    %v1322 = vunpack.c.l.s4 1966171168
    %v1323 = vunpack.c.0.s8 %v1322
    %v1324 = vlaneseq
    %v1325 = vshrl.u32 %v1324, 7
    %v1326 = vsub.s32 %v1323, %v1325
    %v1327 = vrot.slane %v1320, %v1326
    %1328 = vrot.lane.b32.xlu0 %v1327, 13
    %v1329 = vpop.permute.xlu0 %1328
    %v1330 = vrot.slane %v1329, 1
    %vm1331 = vcmask 105472
    %v1332 = vsel %vm1331, %v1329, %v1330
    %v1334 = vmul.f32 %v1302, %v1332
    %v1335 = vadd.f32 %v1284, %v1334
    %s1336 = sld [smem:[#allocation8 + $0x15]]
    %v1337 = vstv %s1336
    %v1338 = vmul.f32 %v1337, %v265
    %v1339 = vmul.f32 %v1337, %v264
    %s1340 = sld [smem:[#allocation8 + $0x46]]
    %v1341 = vstv %s1340
    %v1342 = vmul.f32 %v1341, %v265
    %v1343 = vmul.f32 %v1341, %v264
    %v1346 = vrot.slane %v1342, 1
    %v1347 = vrot.slane %v1343, 1
    %v1350 = vadd.f32 %v1338, %v1346
    %v1351 = vadd.f32 %v1339, %v1347
    %s1352 = scalar_lea.vmem [#allocation6], 37
    %v1353 = vld [vmem:[%s1352] ss:$8 sm:$0x3]
    %v1356 = vcombine.low %v1350, %v1351
    %v1358 = vunpack.c.l.s4 1966171168
    %v1359 = vunpack.c.0.s8 %v1358
    %v1360 = vlaneseq
    %v1361 = vshrl.u32 %v1360, 7
    %v1362 = vsub.s32 %v1359, %v1361
    %v1363 = vrot.slane %v1356, %v1362
    %v1365 = vunpack.c.l.s4 1966171168
    %v1366 = vunpack.c.0.s8 %v1365
    %v1367 = vlaneseq
    %v1368 = vshrl.u32 %v1367, 7
    %v1369 = vsub.s32 %v1366, %v1368
    %v1370 = vrot.slane %v1350, %v1369
    %v1371 = vcombine.low %v1363, %v1370
    %v1373 = vunpack.c.l.s4 1966171168
    %v1374 = vunpack.c.0.s8 %v1373
    %v1375 = vlaneseq
    %v1376 = vshrl.u32 %v1375, 7
    %v1377 = vsub.s32 %v1374, %v1376
    %v1378 = vrot.slane %v1371, %v1377
    %1379 = vrot.lane.b32.xlu0 %v1378, 3
    %v1380 = vpop.permute.xlu0 %1379
    %v1381 = vrot.slane %v1380, 1
    %vm1382 = vcmask 23552
    %v1383 = vsel %vm1382, %v1380, %v1381
    %v1385 = vmul.f32 %v1353, %v1383
    %v1386 = vadd.f32 %v1335, %v1385
    %s1387 = sld [smem:[#allocation8 + $0x16]]
    %v1388 = vstv %s1387
    %v1389 = vmul.f32 %v1388, %v265
    %v1390 = vmul.f32 %v1388, %v264
    %s1391 = sld [smem:[#allocation8 + $0x47]]
    %v1392 = vstv %s1391
    %v1393 = vmul.f32 %v1392, %v265
    %v1394 = vmul.f32 %v1392, %v264
    %v1397 = vrot.slane %v1393, 1
    %v1398 = vrot.slane %v1394, 1
    %v1401 = vadd.f32 %v1389, %v1397
    %v1402 = vadd.f32 %v1390, %v1398
    %s1403 = scalar_lea.vmem [#allocation6], 38
    %v1404 = vld [vmem:[%s1403] ss:$8 sm:$0x3]
    %v1407 = vcombine.low %v1401, %v1402
    %v1409 = vunpack.c.l.s4 1966171168
    %v1410 = vunpack.c.0.s8 %v1409
    %v1411 = vlaneseq
    %v1412 = vshrl.u32 %v1411, 7
    %v1413 = vsub.s32 %v1410, %v1412
    %v1414 = vrot.slane %v1407, %v1413
    %v1416 = vunpack.c.l.s4 1966171168
    %v1417 = vunpack.c.0.s8 %v1416
    %v1418 = vlaneseq
    %v1419 = vshrl.u32 %v1418, 7
    %v1420 = vsub.s32 %v1417, %v1419
    %v1421 = vrot.slane %v1401, %v1420
    %v1422 = vcombine.low %v1414, %v1421
    %v1424 = vunpack.c.l.s4 1966171168
    %v1425 = vunpack.c.0.s8 %v1424
    %v1426 = vlaneseq
    %v1427 = vshrl.u32 %v1426, 7
    %v1428 = vsub.s32 %v1425, %v1427
    %v1429 = vrot.slane %v1422, %v1428
    %1430 = vrot.lane.b32.xlu0 %v1429, 2
    %v1431 = vpop.permute.xlu0 %1430
    %v1432 = vrot.slane %v1431, 1
    %v1433 = vsel %vm111, %v1431, %v1432
    %v1435 = vmul.f32 %v1404, %v1433
    %v1436 = vadd.f32 %v1386, %v1435
    %s1437 = sld [smem:[#allocation8 + $0x17]]
    %v1438 = vstv %s1437
    %v1439 = vmul.f32 %v1438, %v265
    %v1440 = vmul.f32 %v1438, %v264
    %s1441 = sld [smem:[#allocation8 + $0x48]]
    %v1442 = vstv %s1441
    %v1443 = vmul.f32 %v1442, %v265
    %v1444 = vmul.f32 %v1442, %v264
    %v1447 = vrot.slane %v1443, 1
    %v1448 = vrot.slane %v1444, 1
    %v1451 = vadd.f32 %v1439, %v1447
    %v1452 = vadd.f32 %v1440, %v1448
    %s1453 = scalar_lea.vmem [#allocation6], 39
    %v1454 = vld [vmem:[%s1453] ss:$8 sm:$0x3]
    %v1457 = vcombine.low %v1451, %v1452
    %v1459 = vunpack.c.l.s4 1966171168
    %v1460 = vunpack.c.0.s8 %v1459
    %v1461 = vlaneseq
    %v1462 = vshrl.u32 %v1461, 7
    %v1463 = vsub.s32 %v1460, %v1462
    %v1464 = vrot.slane %v1457, %v1463
    %v1466 = vunpack.c.l.s4 1966171168
    %v1467 = vunpack.c.0.s8 %v1466
    %v1468 = vlaneseq
    %v1469 = vshrl.u32 %v1468, 7
    %v1470 = vsub.s32 %v1467, %v1469
    %v1471 = vrot.slane %v1451, %v1470
    %v1472 = vcombine.low %v1464, %v1471
    %v1474 = vunpack.c.l.s4 1966171168
    %v1475 = vunpack.c.0.s8 %v1474
    %v1476 = vlaneseq
    %v1477 = vshrl.u32 %v1476, 7
    %v1478 = vsub.s32 %v1475, %v1477
    %v1479 = vrot.slane %v1472, %v1478
    %1480 = vrot.lane.b32.xlu0 %v1479, 1
    %v1481 = vpop.permute.xlu0 %1480
    %v1482 = vrot.slane %v1481, 1
    %vm1483 = vcmask 7168
    %v1484 = vsel %vm1483, %v1481, %v1482
    %v1486 = vmul.f32 %v1454, %v1484
    %v1487 = vadd.f32 %v1436, %v1486
    %s1488 = sld [smem:[#allocation8 + $0x18]]
    %v1489 = vstv %s1488
    %v1490 = vmul.f32 %v1489, %v264
    %v1491 = vmul.f32 %v1489, %v265
    %s1492 = sld [smem:[#allocation8 + $0x49]]
    %v1493 = vstv %s1492
    %v1494 = vmul.f32 %v1493, %v264
    %v1495 = vmul.f32 %v1493, %v265
    %v1498 = vrot.slane %v1494, 1
    %v1499 = vrot.slane %v1495, 1
    %v1502 = vadd.f32 %v1490, %v1498
    %v1503 = vadd.f32 %v1491, %v1499
    %s1504 = scalar_lea.vmem [#allocation6], 48
    %v1505 = vld [vmem:[%s1504] ss:$8 sm:$0x3]
    %v1508 = vcombine.low %v1502, %v1503
    %v1510 = vunpack.c.l.s4 1966171168
    %v1511 = vunpack.c.0.s8 %v1510
    %v1512 = vlaneseq
    %v1513 = vshrl.u32 %v1512, 7
    %v1514 = vsub.s32 %v1511, %v1513
    %v1515 = vrot.slane %v1508, %v1514
    %v1517 = vunpack.c.l.s4 1966171168
    %v1518 = vunpack.c.0.s8 %v1517
    %v1519 = vlaneseq
    %v1520 = vshrl.u32 %v1519, 7
    %v1521 = vsub.s32 %v1518, %v1520
    %v1522 = vrot.slane %v1515, %v1521
    %v1524 = vmul.f32 %v1505, %v1522
    %v1525 = vadd.f32 %v1487, %v1524
    %s1526 = sld [smem:[#allocation8 + $0x19]]
    %v1527 = vstv %s1526
    %v1528 = vmul.f32 %v1527, %v264
    %v1529 = vmul.f32 %v1527, %v265
    %s1530 = sld [smem:[#allocation8 + $0x4a]]
    %v1531 = vstv %s1530
    %v1532 = vmul.f32 %v1531, %v264
    %v1533 = vmul.f32 %v1531, %v265
    %v1536 = vrot.slane %v1532, 1
    %v1537 = vrot.slane %v1533, 1
    %v1540 = vadd.f32 %v1528, %v1536
    %v1541 = vadd.f32 %v1529, %v1537
    %s1542 = scalar_lea.vmem [#allocation6], 49
    %v1543 = vld [vmem:[%s1542] ss:$8 sm:$0x3]
    %v1546 = vcombine.low %v1540, %v1541
    %v1548 = vunpack.c.l.s4 1966171168
    %v1549 = vunpack.c.0.s8 %v1548
    %v1550 = vlaneseq
    %v1551 = vshrl.u32 %v1550, 7
    %v1552 = vsub.s32 %v1549, %v1551
    %v1553 = vrot.slane %v1546, %v1552
    %v1555 = vunpack.c.l.s4 1966171168
    %v1556 = vunpack.c.0.s8 %v1555
    %v1557 = vlaneseq
    %v1558 = vshrl.u32 %v1557, 7
    %v1559 = vsub.s32 %v1556, %v1558
    %v1560 = vrot.slane %v1540, %v1559
    %v1561 = vcombine.low %v1553, %v1560
    %v1563 = vunpack.c.l.s4 1966171168
    %v1564 = vunpack.c.0.s8 %v1563
    %v1565 = vlaneseq
    %v1566 = vshrl.u32 %v1565, 7
    %v1567 = vsub.s32 %v1564, %v1566
    %v1568 = vrot.slane %v1561, %v1567
    %1569 = vrot.lane.b32.xlu0 %v1568, 127
    %v1570 = vpop.permute.xlu0 %1569
    %v1571 = vrot.slane %v1570, 1
    %vm1572 = vcmask 1039360
    %v1573 = vsel %vm1572, %v1570, %v1571
    %v1575 = vmul.f32 %v1543, %v1573
    %v1576 = vadd.f32 %v1525, %v1575
    %s1577 = sld [smem:[#allocation8 + $0x1a]]
    %v1578 = vstv %s1577
    %v1579 = vmul.f32 %v1578, %v264
    %v1580 = vmul.f32 %v1578, %v265
    %s1581 = sld [smem:[#allocation8 + $0x4b]]
    %v1582 = vstv %s1581
    %v1583 = vmul.f32 %v1582, %v264
    %v1584 = vmul.f32 %v1582, %v265
    %v1587 = vrot.slane %v1583, 1
    %v1588 = vrot.slane %v1584, 1
    %v1591 = vadd.f32 %v1579, %v1587
    %v1592 = vadd.f32 %v1580, %v1588
    %s1593 = scalar_lea.vmem [#allocation6], 50
    %v1594 = vld [vmem:[%s1593] ss:$8 sm:$0x3]
    %v1597 = vcombine.low %v1591, %v1592
    %v1599 = vunpack.c.l.s4 1966171168
    %v1600 = vunpack.c.0.s8 %v1599
    %v1601 = vlaneseq
    %v1602 = vshrl.u32 %v1601, 7
    %v1603 = vsub.s32 %v1600, %v1602
    %v1604 = vrot.slane %v1597, %v1603
    %v1606 = vunpack.c.l.s4 1966171168
    %v1607 = vunpack.c.0.s8 %v1606
    %v1608 = vlaneseq
    %v1609 = vshrl.u32 %v1608, 7
    %v1610 = vsub.s32 %v1607, %v1609
    %v1611 = vrot.slane %v1591, %v1610
    %v1612 = vcombine.low %v1604, %v1611
    %v1614 = vunpack.c.l.s4 1966171168
    %v1615 = vunpack.c.0.s8 %v1614
    %v1616 = vlaneseq
    %v1617 = vshrl.u32 %v1616, 7
    %v1618 = vsub.s32 %v1615, %v1617
    %v1619 = vrot.slane %v1612, %v1618
    %1620 = vrot.lane.b32.xlu0 %v1619, 126
    %v1621 = vpop.permute.xlu0 %1620
    %v1622 = vrot.slane %v1621, 1
    %vm1623 = vcmask 1031168
    %v1624 = vsel %vm1623, %v1621, %v1622
    %v1626 = vmul.f32 %v1594, %v1624
    %v1627 = vadd.f32 %v1576, %v1626
    %s1628 = sld [smem:[#allocation8 + $0x1b]]
    %v1629 = vstv %s1628
    %v1630 = vmul.f32 %v1629, %v264
    %v1631 = vmul.f32 %v1629, %v265
    %s1632 = sld [smem:[#allocation8 + $0x4c]]
    %v1633 = vstv %s1632
    %v1634 = vmul.f32 %v1633, %v264
    %v1635 = vmul.f32 %v1633, %v265
    %v1638 = vrot.slane %v1634, 1
    %v1639 = vrot.slane %v1635, 1
    %v1642 = vadd.f32 %v1630, %v1638
    %v1643 = vadd.f32 %v1631, %v1639
    %s1644 = scalar_lea.vmem [#allocation6], 51
    %v1645 = vld [vmem:[%s1644] ss:$8 sm:$0x3]
    %v1648 = vcombine.low %v1642, %v1643
    %v1650 = vunpack.c.l.s4 1966171168
    %v1651 = vunpack.c.0.s8 %v1650
    %v1652 = vlaneseq
    %v1653 = vshrl.u32 %v1652, 7
    %v1654 = vsub.s32 %v1651, %v1653
    %v1655 = vrot.slane %v1648, %v1654
    %v1657 = vunpack.c.l.s4 1966171168
    %v1658 = vunpack.c.0.s8 %v1657
    %v1659 = vlaneseq
    %v1660 = vshrl.u32 %v1659, 7
    %v1661 = vsub.s32 %v1658, %v1660
    %v1662 = vrot.slane %v1642, %v1661
    %v1663 = vcombine.low %v1655, %v1662
    %v1665 = vunpack.c.l.s4 1966171168
    %v1666 = vunpack.c.0.s8 %v1665
    %v1667 = vlaneseq
    %v1668 = vshrl.u32 %v1667, 7
    %v1669 = vsub.s32 %v1666, %v1668
    %v1670 = vrot.slane %v1663, %v1669
    %1671 = vrot.lane.b32.xlu0 %v1670, 125
    %v1672 = vpop.permute.xlu0 %1671
    %v1673 = vrot.slane %v1672, 1
    %vm1674 = vcmask 1022976
    %v1675 = vsel %vm1674, %v1672, %v1673
    %v1677 = vmul.f32 %v1645, %v1675
    %v1678 = vadd.f32 %v1627, %v1677
    %s1679 = sld [smem:[#allocation8 + $0x1c]]
    %v1680 = vstv %s1679
    %v1681 = vmul.f32 %v1680, %v264
    %v1682 = vmul.f32 %v1680, %v265
    %s1683 = sld [smem:[#allocation8 + $0x4d]]
    %v1684 = vstv %s1683
    %v1685 = vmul.f32 %v1684, %v264
    %v1686 = vmul.f32 %v1684, %v265
    %v1689 = vrot.slane %v1685, 1
    %v1690 = vrot.slane %v1686, 1
    %v1693 = vadd.f32 %v1681, %v1689
    %v1694 = vadd.f32 %v1682, %v1690
    %s1695 = scalar_lea.vmem [#allocation6], 52
    %v1696 = vld [vmem:[%s1695] ss:$8 sm:$0x3]
    %v1699 = vcombine.low %v1693, %v1694
    %v1701 = vunpack.c.l.s4 1966171168
    %v1702 = vunpack.c.0.s8 %v1701
    %v1703 = vlaneseq
    %v1704 = vshrl.u32 %v1703, 7
    %v1705 = vsub.s32 %v1702, %v1704
    %v1706 = vrot.slane %v1699, %v1705
    %v1708 = vunpack.c.l.s4 1966171168
    %v1709 = vunpack.c.0.s8 %v1708
    %v1710 = vlaneseq
    %v1711 = vshrl.u32 %v1710, 7
    %v1712 = vsub.s32 %v1709, %v1711
    %v1713 = vrot.slane %v1693, %v1712
    %v1714 = vcombine.low %v1706, %v1713
    %v1716 = vunpack.c.l.s4 1966171168
    %v1717 = vunpack.c.0.s8 %v1716
    %v1718 = vlaneseq
    %v1719 = vshrl.u32 %v1718, 7
    %v1720 = vsub.s32 %v1717, %v1719
    %v1721 = vrot.slane %v1714, %v1720
    %1722 = vrot.lane.b32.xlu0 %v1721, 115
    %v1723 = vpop.permute.xlu0 %1722
    %v1724 = vrot.slane %v1723, 1
    %vm1725 = vcmask 941056
    %v1726 = vsel %vm1725, %v1723, %v1724
    %v1728 = vmul.f32 %v1696, %v1726
    %v1729 = vadd.f32 %v1678, %v1728
    %s1730 = sld [smem:[#allocation8 + $0x1d]]
    %v1731 = vstv %s1730
    %v1732 = vmul.f32 %v1731, %v264
    %v1733 = vmul.f32 %v1731, %v265
    %s1734 = sld [smem:[#allocation8 + $0x4e]]
    %v1735 = vstv %s1734
    %v1736 = vmul.f32 %v1735, %v264
    %v1737 = vmul.f32 %v1735, %v265
    %v1740 = vrot.slane %v1736, 1
    %v1741 = vrot.slane %v1737, 1
    %v1744 = vadd.f32 %v1732, %v1740
    %v1745 = vadd.f32 %v1733, %v1741
    %s1746 = scalar_lea.vmem [#allocation6], 53
    %v1747 = vld [vmem:[%s1746] ss:$8 sm:$0x3]
    %v1750 = vcombine.low %v1744, %v1745
    %v1752 = vunpack.c.l.s4 1966171168
    %v1753 = vunpack.c.0.s8 %v1752
    %v1754 = vlaneseq
    %v1755 = vshrl.u32 %v1754, 7
    %v1756 = vsub.s32 %v1753, %v1755
    %v1757 = vrot.slane %v1750, %v1756
    %v1759 = vunpack.c.l.s4 1966171168
    %v1760 = vunpack.c.0.s8 %v1759
    %v1761 = vlaneseq
    %v1762 = vshrl.u32 %v1761, 7
    %v1763 = vsub.s32 %v1760, %v1762
    %v1764 = vrot.slane %v1744, %v1763
    %v1765 = vcombine.low %v1757, %v1764
    %v1767 = vunpack.c.l.s4 1966171168
    %v1768 = vunpack.c.0.s8 %v1767
    %v1769 = vlaneseq
    %v1770 = vshrl.u32 %v1769, 7
    %v1771 = vsub.s32 %v1768, %v1770
    %v1772 = vrot.slane %v1765, %v1771
    %1773 = vrot.lane.b32.xlu0 %v1772, 114
    %v1774 = vpop.permute.xlu0 %1773
    %v1775 = vrot.slane %v1774, 1
    %vm1776 = vcmask 932864
    %v1777 = vsel %vm1776, %v1774, %v1775
    %v1779 = vmul.f32 %v1747, %v1777
    %v1780 = vadd.f32 %v1729, %v1779
    %s1781 = sld [smem:[#allocation8 + $0x1e]]
    %v1782 = vstv %s1781
    %v1783 = vmul.f32 %v1782, %v264
    %v1784 = vmul.f32 %v1782, %v265
    %s1785 = sld [smem:[#allocation8 + $0x4f]]
    %v1786 = vstv %s1785
    %v1787 = vmul.f32 %v1786, %v264
    %v1788 = vmul.f32 %v1786, %v265
    %v1791 = vrot.slane %v1787, 1
    %v1792 = vrot.slane %v1788, 1
    %v1795 = vadd.f32 %v1783, %v1791
    %v1796 = vadd.f32 %v1784, %v1792
    %s1797 = scalar_lea.vmem [#allocation6], 54
    %v1798 = vld [vmem:[%s1797] ss:$8 sm:$0x3]
    %v1801 = vcombine.low %v1795, %v1796
    %v1803 = vunpack.c.l.s4 1966171168
    %v1804 = vunpack.c.0.s8 %v1803
    %v1805 = vlaneseq
    %v1806 = vshrl.u32 %v1805, 7
    %v1807 = vsub.s32 %v1804, %v1806
    %v1808 = vrot.slane %v1801, %v1807
    %v1810 = vunpack.c.l.s4 1966171168
    %v1811 = vunpack.c.0.s8 %v1810
    %v1812 = vlaneseq
    %v1813 = vshrl.u32 %v1812, 7
    %v1814 = vsub.s32 %v1811, %v1813
    %v1815 = vrot.slane %v1795, %v1814
    %v1816 = vcombine.low %v1808, %v1815
    %v1818 = vunpack.c.l.s4 1966171168
    %v1819 = vunpack.c.0.s8 %v1818
    %v1820 = vlaneseq
    %v1821 = vshrl.u32 %v1820, 7
    %v1822 = vsub.s32 %v1819, %v1821
    %v1823 = vrot.slane %v1816, %v1822
    %1824 = vrot.lane.b32.xlu0 %v1823, 113
    %v1825 = vpop.permute.xlu0 %1824
    %v1826 = vrot.slane %v1825, 1
    %vm1827 = vcmask 924672
    %v1828 = vsel %vm1827, %v1825, %v1826
    %v1830 = vmul.f32 %v1798, %v1828
    %v1831 = vadd.f32 %v1780, %v1830
    %s1832 = sld [smem:[#allocation8 + $0x1f]]
    %v1833 = vstv %s1832
    %v1834 = vmul.f32 %v1833, %v264
    %v1835 = vmul.f32 %v1833, %v265
    %s1836 = sld [smem:[#allocation8 + $0x50]]
    %v1837 = vstv %s1836
    %v1838 = vmul.f32 %v1837, %v264
    %v1839 = vmul.f32 %v1837, %v265
    %v1842 = vrot.slane %v1838, 1
    %v1843 = vrot.slane %v1839, 1
    %v1846 = vadd.f32 %v1834, %v1842
    %v1847 = vadd.f32 %v1835, %v1843
    %s1848 = scalar_lea.vmem [#allocation6], 55
    %v1849 = vld [vmem:[%s1848] ss:$8 sm:$0x3]
    %v1852 = vcombine.low %v1846, %v1847
    %v1854 = vunpack.c.l.s4 1966171168
    %v1855 = vunpack.c.0.s8 %v1854
    %v1856 = vlaneseq
    %v1857 = vshrl.u32 %v1856, 7
    %v1858 = vsub.s32 %v1855, %v1857
    %v1859 = vrot.slane %v1852, %v1858
    %v1861 = vunpack.c.l.s4 1966171168
    %v1862 = vunpack.c.0.s8 %v1861
    %v1863 = vlaneseq
    %v1864 = vshrl.u32 %v1863, 7
    %v1865 = vsub.s32 %v1862, %v1864
    %v1866 = vrot.slane %v1846, %v1865
    %v1867 = vcombine.low %v1859, %v1866
    %v1869 = vunpack.c.l.s4 1966171168
    %v1870 = vunpack.c.0.s8 %v1869
    %v1871 = vlaneseq
    %v1872 = vshrl.u32 %v1871, 7
    %v1873 = vsub.s32 %v1870, %v1872
    %v1874 = vrot.slane %v1867, %v1873
    %1875 = vrot.lane.b32.xlu0 %v1874, 112
    %v1876 = vpop.permute.xlu0 %1875
    %v1877 = vrot.slane %v1876, 1
    %vm1878 = vcmask 916480
    %v1879 = vsel %vm1878, %v1876, %v1877
    %v1881 = vmul.f32 %v1849, %v1879
    %v1882 = vadd.f32 %v1831, %v1881
    %s1883 = sld [smem:[#allocation8 + $0x20]]
    %v1884 = vstv %s1883
    %v1885 = vmul.f32 %v1884, %v264
    %v1886 = vmul.f32 %v1884, %v265
    %s1887 = sld [smem:[#allocation8 + $0x51]]
    %v1888 = vstv %s1887
    %v1889 = vmul.f32 %v1888, %v264
    %v1890 = vmul.f32 %v1888, %v265
    %v1893 = vrot.slane %v1889, 1
    %v1894 = vrot.slane %v1890, 1
    %v1897 = vadd.f32 %v1885, %v1893
    %v1898 = vadd.f32 %v1886, %v1894
    %s1899 = scalar_lea.vmem [#allocation6], 64
    %v1900 = vld [vmem:[%s1899] ss:$8 sm:$0x3]
    %v1903 = vcombine.low %v1897, %v1898
    %v1905 = vunpack.c.l.s4 1966171168
    %v1906 = vunpack.c.0.s8 %v1905
    %v1907 = vlaneseq
    %v1908 = vshrl.u32 %v1907, 7
    %v1909 = vsub.s32 %v1906, %v1908
    %v1910 = vrot.slane %v1903, %v1909
    %v1912 = vunpack.c.l.s4 1966171168
    %v1913 = vunpack.c.0.s8 %v1912
    %v1914 = vlaneseq
    %v1915 = vshrl.u32 %v1914, 7
    %v1916 = vsub.s32 %v1913, %v1915
    %v1917 = vrot.slane %v1897, %v1916
    %v1918 = vcombine.low %v1910, %v1917
    %v1920 = vunpack.c.l.s4 1966171168
    %v1921 = vunpack.c.0.s8 %v1920
    %v1922 = vlaneseq
    %v1923 = vshrl.u32 %v1922, 7
    %v1924 = vsub.s32 %v1921, %v1923
    %v1925 = vrot.slane %v1918, %v1924
    %1926 = vrot.lane.b32.xlu0 %v1925, 111
    %v1927 = vpop.permute.xlu0 %1926
    %v1928 = vrot.slane %v1927, 1
    %vm1929 = vcmask 908288
    %v1930 = vsel %vm1929, %v1927, %v1928
    %v1932 = vmul.f32 %v1900, %v1930
    %v1933 = vadd.f32 %v1882, %v1932
    %s1934 = sld [smem:[#allocation8 + $0x21]]
    %v1935 = vstv %s1934
    %v1936 = vmul.f32 %v1935, %v264
    %v1937 = vmul.f32 %v1935, %v265
    %s1938 = sld [smem:[#allocation8 + $0x52]]
    %v1939 = vstv %s1938
    %v1940 = vmul.f32 %v1939, %v264
    %v1941 = vmul.f32 %v1939, %v265
    %v1944 = vrot.slane %v1940, 1
    %v1945 = vrot.slane %v1941, 1
    %v1948 = vadd.f32 %v1936, %v1944
    %v1949 = vadd.f32 %v1937, %v1945
    %s1950 = scalar_lea.vmem [#allocation6], 65
    %v1951 = vld [vmem:[%s1950] ss:$8 sm:$0x3]
    %v1954 = vcombine.low %v1948, %v1949
    %v1956 = vunpack.c.l.s4 1966171168
    %v1957 = vunpack.c.0.s8 %v1956
    %v1958 = vlaneseq
    %v1959 = vshrl.u32 %v1958, 7
    %v1960 = vsub.s32 %v1957, %v1959
    %v1961 = vrot.slane %v1954, %v1960
    %v1963 = vunpack.c.l.s4 1966171168
    %v1964 = vunpack.c.0.s8 %v1963
    %v1965 = vlaneseq
    %v1966 = vshrl.u32 %v1965, 7
    %v1967 = vsub.s32 %v1964, %v1966
    %v1968 = vrot.slane %v1948, %v1967
    %v1969 = vcombine.low %v1961, %v1968
    %v1971 = vunpack.c.l.s4 1966171168
    %v1972 = vunpack.c.0.s8 %v1971
    %v1973 = vlaneseq
    %v1974 = vshrl.u32 %v1973, 7
    %v1975 = vsub.s32 %v1972, %v1974
    %v1976 = vrot.slane %v1969, %v1975
    %1977 = vrot.lane.b32.xlu0 %v1976, 110
    %v1978 = vpop.permute.xlu0 %1977
    %v1979 = vrot.slane %v1978, 1
    %vm1980 = vcmask 900096
    %v1981 = vsel %vm1980, %v1978, %v1979
    %v1983 = vmul.f32 %v1951, %v1981
    %v1984 = vadd.f32 %v1933, %v1983
    %s1985 = sld [smem:[#allocation8 + $0x22]]
    %v1986 = vstv %s1985
    %v1987 = vmul.f32 %v1986, %v264
    %v1988 = vmul.f32 %v1986, %v265
    %s1989 = sld [smem:[#allocation8 + $0x53]]
    %v1990 = vstv %s1989
    %v1991 = vmul.f32 %v1990, %v264
    %v1992 = vmul.f32 %v1990, %v265
    %v1995 = vrot.slane %v1991, 1
    %v1996 = vrot.slane %v1992, 1
    %v1999 = vadd.f32 %v1987, %v1995
    %v2000 = vadd.f32 %v1988, %v1996
    %s2001 = scalar_lea.vmem [#allocation6], 66
    %v2002 = vld [vmem:[%s2001] ss:$8 sm:$0x3]
    %v2005 = vcombine.low %v1999, %v2000
    %v2007 = vunpack.c.l.s4 1966171168
    %v2008 = vunpack.c.0.s8 %v2007
    %v2009 = vlaneseq
    %v2010 = vshrl.u32 %v2009, 7
    %v2011 = vsub.s32 %v2008, %v2010
    %v2012 = vrot.slane %v2005, %v2011
    %v2014 = vunpack.c.l.s4 1966171168
    %v2015 = vunpack.c.0.s8 %v2014
    %v2016 = vlaneseq
    %v2017 = vshrl.u32 %v2016, 7
    %v2018 = vsub.s32 %v2015, %v2017
    %v2019 = vrot.slane %v1999, %v2018
    %v2020 = vcombine.low %v2012, %v2019
    %v2022 = vunpack.c.l.s4 1966171168
    %v2023 = vunpack.c.0.s8 %v2022
    %v2024 = vlaneseq
    %v2025 = vshrl.u32 %v2024, 7
    %v2026 = vsub.s32 %v2023, %v2025
    %v2027 = vrot.slane %v2020, %v2026
    %2028 = vrot.lane.b32.xlu0 %v2027, 109
    %v2029 = vpop.permute.xlu0 %2028
    %v2030 = vrot.slane %v2029, 1
    %vm2031 = vcmask 891904
    %v2032 = vsel %vm2031, %v2029, %v2030
    %v2034 = vmul.f32 %v2002, %v2032
    %v2035 = vadd.f32 %v1984, %v2034
    %s2036 = sld [smem:[#allocation8 + $0x23]]
    %v2037 = vstv %s2036
    %v2038 = vmul.f32 %v2037, %v264
    %v2039 = vmul.f32 %v2037, %v265
    %s2040 = sld [smem:[#allocation8 + $0x54]]
    %v2041 = vstv %s2040
    %v2042 = vmul.f32 %v2041, %v264
    %v2043 = vmul.f32 %v2041, %v265
    %v2046 = vrot.slane %v2042, 1
    %v2047 = vrot.slane %v2043, 1
    %v2050 = vadd.f32 %v2038, %v2046
    %v2051 = vadd.f32 %v2039, %v2047
    %s2052 = scalar_lea.vmem [#allocation6], 67
    %v2053 = vld [vmem:[%s2052] ss:$8 sm:$0x3]
    %v2056 = vcombine.low %v2050, %v2051
    %v2058 = vunpack.c.l.s4 1966171168
    %v2059 = vunpack.c.0.s8 %v2058
    %v2060 = vlaneseq
    %v2061 = vshrl.u32 %v2060, 7
    %v2062 = vsub.s32 %v2059, %v2061
    %v2063 = vrot.slane %v2056, %v2062
    %v2065 = vunpack.c.l.s4 1966171168
    %v2066 = vunpack.c.0.s8 %v2065
    %v2067 = vlaneseq
    %v2068 = vshrl.u32 %v2067, 7
    %v2069 = vsub.s32 %v2066, %v2068
    %v2070 = vrot.slane %v2050, %v2069
    %v2071 = vcombine.low %v2063, %v2070
    %v2073 = vunpack.c.l.s4 1966171168
    %v2074 = vunpack.c.0.s8 %v2073
    %v2075 = vlaneseq
    %v2076 = vshrl.u32 %v2075, 7
    %v2077 = vsub.s32 %v2074, %v2076
    %v2078 = vrot.slane %v2071, %v2077
    %2079 = vrot.lane.b32.xlu0 %v2078, 99
    %v2080 = vpop.permute.xlu0 %2079
    %v2081 = vrot.slane %v2080, 1
    %vm2082 = vcmask 809984
    %v2083 = vsel %vm2082, %v2080, %v2081
    %v2085 = vmul.f32 %v2053, %v2083
    %v2086 = vadd.f32 %v2035, %v2085
    %s2087 = sld [smem:[#allocation8 + $0x24]]
    %v2088 = vstv %s2087
    %v2089 = vmul.f32 %v2088, %v264
    %v2090 = vmul.f32 %v2088, %v265
    %s2091 = sld [smem:[#allocation8 + $0x55]]
    %v2092 = vstv %s2091
    %v2093 = vmul.f32 %v2092, %v264
    %v2094 = vmul.f32 %v2092, %v265
    %v2097 = vrot.slane %v2093, 1
    %v2098 = vrot.slane %v2094, 1
    %v2101 = vadd.f32 %v2089, %v2097
    %v2102 = vadd.f32 %v2090, %v2098
    %s2103 = scalar_lea.vmem [#allocation6], 68
    %v2104 = vld [vmem:[%s2103] ss:$8 sm:$0x3]
    %v2107 = vcombine.low %v2101, %v2102
    %v2109 = vunpack.c.l.s4 1966171168
    %v2110 = vunpack.c.0.s8 %v2109
    %v2111 = vlaneseq
    %v2112 = vshrl.u32 %v2111, 7
    %v2113 = vsub.s32 %v2110, %v2112
    %v2114 = vrot.slane %v2107, %v2113
    %v2116 = vunpack.c.l.s4 1966171168
    %v2117 = vunpack.c.0.s8 %v2116
    %v2118 = vlaneseq
    %v2119 = vshrl.u32 %v2118, 7
    %v2120 = vsub.s32 %v2117, %v2119
    %v2121 = vrot.slane %v2101, %v2120
    %v2122 = vcombine.low %v2114, %v2121
    %v2124 = vunpack.c.l.s4 1966171168
    %v2125 = vunpack.c.0.s8 %v2124
    %v2126 = vlaneseq
    %v2127 = vshrl.u32 %v2126, 7
    %v2128 = vsub.s32 %v2125, %v2127
    %v2129 = vrot.slane %v2122, %v2128
    %2130 = vrot.lane.b32.xlu0 %v2129, 98
    %v2131 = vpop.permute.xlu0 %2130
    %v2132 = vrot.slane %v2131, 1
    %vm2133 = vcmask 801792
    %v2134 = vsel %vm2133, %v2131, %v2132
    %v2136 = vmul.f32 %v2104, %v2134
    %v2137 = vadd.f32 %v2086, %v2136
    %s2138 = sld [smem:[#allocation8 + $0x25]]
    %v2139 = vstv %s2138
    %v2140 = vmul.f32 %v2139, %v264
    %v2141 = vmul.f32 %v2139, %v265
    %s2142 = sld [smem:[#allocation8 + $0x56]]
    %v2143 = vstv %s2142
    %v2144 = vmul.f32 %v2143, %v264
    %v2145 = vmul.f32 %v2143, %v265
    %v2148 = vrot.slane %v2144, 1
    %v2149 = vrot.slane %v2145, 1
    %v2152 = vadd.f32 %v2140, %v2148
    %v2153 = vadd.f32 %v2141, %v2149
    %s2154 = scalar_lea.vmem [#allocation6], 69
    %v2155 = vld [vmem:[%s2154] ss:$8 sm:$0x3]
    %v2158 = vcombine.low %v2152, %v2153
    %v2160 = vunpack.c.l.s4 1966171168
    %v2161 = vunpack.c.0.s8 %v2160
    %v2162 = vlaneseq
    %v2163 = vshrl.u32 %v2162, 7
    %v2164 = vsub.s32 %v2161, %v2163
    %v2165 = vrot.slane %v2158, %v2164
    %v2167 = vunpack.c.l.s4 1966171168
    %v2168 = vunpack.c.0.s8 %v2167
    %v2169 = vlaneseq
    %v2170 = vshrl.u32 %v2169, 7
    %v2171 = vsub.s32 %v2168, %v2170
    %v2172 = vrot.slane %v2152, %v2171
    %v2173 = vcombine.low %v2165, %v2172
    %v2175 = vunpack.c.l.s4 1966171168
    %v2176 = vunpack.c.0.s8 %v2175
    %v2177 = vlaneseq
    %v2178 = vshrl.u32 %v2177, 7
    %v2179 = vsub.s32 %v2176, %v2178
    %v2180 = vrot.slane %v2173, %v2179
    %2181 = vrot.lane.b32.xlu0 %v2180, 97
    %v2182 = vpop.permute.xlu0 %2181
    %v2183 = vrot.slane %v2182, 1
    %vm2184 = vcmask 793600
    %v2185 = vsel %vm2184, %v2182, %v2183
    %v2187 = vmul.f32 %v2155, %v2185
    %v2188 = vadd.f32 %v2137, %v2187
    %s2189 = sld [smem:[#allocation8 + $0x26]]
    %v2190 = vstv %s2189
    %v2191 = vmul.f32 %v2190, %v264
    %v2192 = vmul.f32 %v2190, %v265
    %s2193 = sld [smem:[#allocation8 + $0x57]]
    %v2194 = vstv %s2193
    %v2195 = vmul.f32 %v2194, %v264
    %v2196 = vmul.f32 %v2194, %v265
    %v2199 = vrot.slane %v2195, 1
    %v2200 = vrot.slane %v2196, 1
    %v2203 = vadd.f32 %v2191, %v2199
    %v2204 = vadd.f32 %v2192, %v2200
    %s2205 = scalar_lea.vmem [#allocation6], 70
    %v2206 = vld [vmem:[%s2205] ss:$8 sm:$0x3]
    %v2209 = vcombine.low %v2203, %v2204
    %v2211 = vunpack.c.l.s4 1966171168
    %v2212 = vunpack.c.0.s8 %v2211
    %v2213 = vlaneseq
    %v2214 = vshrl.u32 %v2213, 7
    %v2215 = vsub.s32 %v2212, %v2214
    %v2216 = vrot.slane %v2209, %v2215
    %v2218 = vunpack.c.l.s4 1966171168
    %v2219 = vunpack.c.0.s8 %v2218
    %v2220 = vlaneseq
    %v2221 = vshrl.u32 %v2220, 7
    %v2222 = vsub.s32 %v2219, %v2221
    %v2223 = vrot.slane %v2203, %v2222
    %v2224 = vcombine.low %v2216, %v2223
    %v2226 = vunpack.c.l.s4 1966171168
    %v2227 = vunpack.c.0.s8 %v2226
    %v2228 = vlaneseq
    %v2229 = vshrl.u32 %v2228, 7
    %v2230 = vsub.s32 %v2227, %v2229
    %v2231 = vrot.slane %v2224, %v2230
    %2232 = vrot.lane.b32.xlu0 %v2231, 96
    %v2233 = vpop.permute.xlu0 %2232
    %v2234 = vrot.slane %v2233, 1
    %vm2235 = vcmask 785408
    %v2236 = vsel %vm2235, %v2233, %v2234
    %v2238 = vmul.f32 %v2206, %v2236
    %v2239 = vadd.f32 %v2188, %v2238
    %s2240 = sld [smem:[#allocation8 + $0x27]]
    %v2241 = vstv %s2240
    %v2242 = vmul.f32 %v2241, %v264
    %v2243 = vmul.f32 %v2241, %v265
    %s2244 = sld [smem:[#allocation8 + $0x58]]
    %v2245 = vstv %s2244
    %v2246 = vmul.f32 %v2245, %v264
    %v2247 = vmul.f32 %v2245, %v265
    %v2250 = vrot.slane %v2246, 1
    %v2251 = vrot.slane %v2247, 1
    %v2254 = vadd.f32 %v2242, %v2250
    %v2255 = vadd.f32 %v2243, %v2251
    %s2256 = scalar_lea.vmem [#allocation6], 71
    %v2257 = vld [vmem:[%s2256] ss:$8 sm:$0x3]
    %v2260 = vcombine.low %v2254, %v2255
    %v2262 = vunpack.c.l.s4 1966171168
    %v2263 = vunpack.c.0.s8 %v2262
    %v2264 = vlaneseq
    %v2265 = vshrl.u32 %v2264, 7
    %v2266 = vsub.s32 %v2263, %v2265
    %v2267 = vrot.slane %v2260, %v2266
    %v2269 = vunpack.c.l.s4 1966171168
    %v2270 = vunpack.c.0.s8 %v2269
    %v2271 = vlaneseq
    %v2272 = vshrl.u32 %v2271, 7
    %v2273 = vsub.s32 %v2270, %v2272
    %v2274 = vrot.slane %v2254, %v2273
    %v2275 = vcombine.low %v2267, %v2274
    %v2277 = vunpack.c.l.s4 1966171168
    %v2278 = vunpack.c.0.s8 %v2277
    %v2279 = vlaneseq
    %v2280 = vshrl.u32 %v2279, 7
    %v2281 = vsub.s32 %v2278, %v2280
    %v2282 = vrot.slane %v2275, %v2281
    %2283 = vrot.lane.b32.xlu0 %v2282, 95
    %v2284 = vpop.permute.xlu0 %2283
    %v2285 = vrot.slane %v2284, 1
    %vm2286 = vcmask 777216
    %v2287 = vsel %vm2286, %v2284, %v2285
    %v2289 = vmul.f32 %v2257, %v2287
    %v2290 = vadd.f32 %v2239, %v2289
    %s2291 = sld [smem:[#allocation8 + $0x28]]
    %v2292 = vstv %s2291
    %v2293 = vmul.f32 %v2292, %v264
    %v2294 = vmul.f32 %v2292, %v265
    %s2295 = sld [smem:[#allocation8 + $0x59]]
    %v2296 = vstv %s2295
    %v2297 = vmul.f32 %v2296, %v264
    %v2298 = vmul.f32 %v2296, %v265
    %v2301 = vrot.slane %v2297, 1
    %v2302 = vrot.slane %v2298, 1
    %v2305 = vadd.f32 %v2293, %v2301
    %v2306 = vadd.f32 %v2294, %v2302
    %s2307 = scalar_lea.vmem [#allocation6], 80
    %v2308 = vld [vmem:[%s2307] ss:$8 sm:$0x3]
    %v2311 = vcombine.low %v2305, %v2306
    %v2313 = vunpack.c.l.s4 1966171168
    %v2314 = vunpack.c.0.s8 %v2313
    %v2315 = vlaneseq
    %v2316 = vshrl.u32 %v2315, 7
    %v2317 = vsub.s32 %v2314, %v2316
    %v2318 = vrot.slane %v2311, %v2317
    %v2320 = vunpack.c.l.s4 1966171168
    %v2321 = vunpack.c.0.s8 %v2320
    %v2322 = vlaneseq
    %v2323 = vshrl.u32 %v2322, 7
    %v2324 = vsub.s32 %v2321, %v2323
    %v2325 = vrot.slane %v2305, %v2324
    %v2326 = vcombine.low %v2318, %v2325
    %v2328 = vunpack.c.l.s4 1966171168
    %v2329 = vunpack.c.0.s8 %v2328
    %v2330 = vlaneseq
    %v2331 = vshrl.u32 %v2330, 7
    %v2332 = vsub.s32 %v2329, %v2331
    %v2333 = vrot.slane %v2326, %v2332
    %2334 = vrot.lane.b32.xlu0 %v2333, 94
    %v2335 = vpop.permute.xlu0 %2334
    %v2336 = vrot.slane %v2335, 1
    %vm2337 = vcmask 769024
    %v2338 = vsel %vm2337, %v2335, %v2336
    %v2340 = vmul.f32 %v2308, %v2338
    %v2341 = vadd.f32 %v2290, %v2340
    %s2342 = sld [smem:[#allocation8 + $0x29]]
    %v2343 = vstv %s2342
    %v2344 = vmul.f32 %v2343, %v264
    %v2345 = vmul.f32 %v2343, %v265
    %s2346 = sld [smem:[#allocation8 + $0x5a]]
    %v2347 = vstv %s2346
    %v2348 = vmul.f32 %v2347, %v264
    %v2349 = vmul.f32 %v2347, %v265
    %v2352 = vrot.slane %v2348, 1
    %v2353 = vrot.slane %v2349, 1
    %v2356 = vadd.f32 %v2344, %v2352
    %v2357 = vadd.f32 %v2345, %v2353
    %s2358 = scalar_lea.vmem [#allocation6], 81
    %v2359 = vld [vmem:[%s2358] ss:$8 sm:$0x3]
    %v2362 = vcombine.low %v2356, %v2357
    %v2364 = vunpack.c.l.s4 1966171168
    %v2365 = vunpack.c.0.s8 %v2364
    %v2366 = vlaneseq
    %v2367 = vshrl.u32 %v2366, 7
    %v2368 = vsub.s32 %v2365, %v2367
    %v2369 = vrot.slane %v2362, %v2368
    %v2371 = vunpack.c.l.s4 1966171168
    %v2372 = vunpack.c.0.s8 %v2371
    %v2373 = vlaneseq
    %v2374 = vshrl.u32 %v2373, 7
    %v2375 = vsub.s32 %v2372, %v2374
    %v2376 = vrot.slane %v2356, %v2375
    %v2377 = vcombine.low %v2369, %v2376
    %v2379 = vunpack.c.l.s4 1966171168
    %v2380 = vunpack.c.0.s8 %v2379
    %v2381 = vlaneseq
    %v2382 = vshrl.u32 %v2381, 7
    %v2383 = vsub.s32 %v2380, %v2382
    %v2384 = vrot.slane %v2377, %v2383
    %2385 = vrot.lane.b32.xlu0 %v2384, 93
    %v2386 = vpop.permute.xlu0 %2385
    %v2387 = vrot.slane %v2386, 1
    %vm2388 = vcmask 760832
    %v2389 = vsel %vm2388, %v2386, %v2387
    %v2391 = vmul.f32 %v2359, %v2389
    %v2392 = vadd.f32 %v2341, %v2391
    %s2393 = sld [smem:[#allocation8 + $0x2a]]
    %v2394 = vstv %s2393
    %v2395 = vmul.f32 %v2394, %v264
    %v2396 = vmul.f32 %v2394, %v265
    %s2397 = sld [smem:[#allocation8 + $0x5b]]
    %v2398 = vstv %s2397
    %v2399 = vmul.f32 %v2398, %v264
    %v2400 = vmul.f32 %v2398, %v265
    %v2403 = vrot.slane %v2399, 1
    %v2404 = vrot.slane %v2400, 1
    %v2407 = vadd.f32 %v2395, %v2403
    %v2408 = vadd.f32 %v2396, %v2404
    %s2409 = scalar_lea.vmem [#allocation6], 82
    %v2410 = vld [vmem:[%s2409] ss:$8 sm:$0x3]
    %v2413 = vcombine.low %v2407, %v2408
    %v2415 = vunpack.c.l.s4 1966171168
    %v2416 = vunpack.c.0.s8 %v2415
    %v2417 = vlaneseq
    %v2418 = vshrl.u32 %v2417, 7
    %v2419 = vsub.s32 %v2416, %v2418
    %v2420 = vrot.slane %v2413, %v2419
    %v2422 = vunpack.c.l.s4 1966171168
    %v2423 = vunpack.c.0.s8 %v2422
    %v2424 = vlaneseq
    %v2425 = vshrl.u32 %v2424, 7
    %v2426 = vsub.s32 %v2423, %v2425
    %v2427 = vrot.slane %v2407, %v2426
    %v2428 = vcombine.low %v2420, %v2427
    %v2430 = vunpack.c.l.s4 1966171168
    %v2431 = vunpack.c.0.s8 %v2430
    %v2432 = vlaneseq
    %v2433 = vshrl.u32 %v2432, 7
    %v2434 = vsub.s32 %v2431, %v2433
    %v2435 = vrot.slane %v2428, %v2434
    %2436 = vrot.lane.b32.xlu0 %v2435, 83
    %v2437 = vpop.permute.xlu0 %2436
    %v2438 = vrot.slane %v2437, 1
    %vm2439 = vcmask 678912
    %v2440 = vsel %vm2439, %v2437, %v2438
    %v2442 = vmul.f32 %v2410, %v2440
    %v2443 = vadd.f32 %v2392, %v2442
    %s2444 = sld [smem:[#allocation8 + $0x2b]]
    %v2445 = vstv %s2444
    %v2446 = vmul.f32 %v2445, %v264
    %v2447 = vmul.f32 %v2445, %v265
    %s2448 = sld [smem:[#allocation8 + $0x5c]]
    %v2449 = vstv %s2448
    %v2450 = vmul.f32 %v2449, %v264
    %v2451 = vmul.f32 %v2449, %v265
    %v2454 = vrot.slane %v2450, 1
    %v2455 = vrot.slane %v2451, 1
    %v2458 = vadd.f32 %v2446, %v2454
    %v2459 = vadd.f32 %v2447, %v2455
    %s2460 = scalar_lea.vmem [#allocation6], 83
    %v2461 = vld [vmem:[%s2460] ss:$8 sm:$0x3]
    %v2464 = vcombine.low %v2458, %v2459
    %v2466 = vunpack.c.l.s4 1966171168
    %v2467 = vunpack.c.0.s8 %v2466
    %v2468 = vlaneseq
    %v2469 = vshrl.u32 %v2468, 7
    %v2470 = vsub.s32 %v2467, %v2469
    %v2471 = vrot.slane %v2464, %v2470
    %v2473 = vunpack.c.l.s4 1966171168
    %v2474 = vunpack.c.0.s8 %v2473
    %v2475 = vlaneseq
    %v2476 = vshrl.u32 %v2475, 7
    %v2477 = vsub.s32 %v2474, %v2476
    %v2478 = vrot.slane %v2458, %v2477
    %v2479 = vcombine.low %v2471, %v2478
    %v2481 = vunpack.c.l.s4 1966171168
    %v2482 = vunpack.c.0.s8 %v2481
    %v2483 = vlaneseq
    %v2484 = vshrl.u32 %v2483, 7
    %v2485 = vsub.s32 %v2482, %v2484
    %v2486 = vrot.slane %v2479, %v2485
    %2487 = vrot.lane.b32.xlu0 %v2486, 82
    %v2488 = vpop.permute.xlu0 %2487
    %v2489 = vrot.slane %v2488, 1
    %vm2490 = vcmask 670720
    %v2491 = vsel %vm2490, %v2488, %v2489
    %v2493 = vmul.f32 %v2461, %v2491
    %v2494 = vadd.f32 %v2443, %v2493
    %s2495 = sld [smem:[#allocation8 + $0x2c]]
    %v2496 = vstv %s2495
    %v2497 = vmul.f32 %v2496, %v264
    %v2498 = vmul.f32 %v2496, %v265
    %s2499 = sld [smem:[#allocation8 + $0x5d]]
    %v2500 = vstv %s2499
    %v2501 = vmul.f32 %v2500, %v264
    %v2502 = vmul.f32 %v2500, %v265
    %v2505 = vrot.slane %v2501, 1
    %v2506 = vrot.slane %v2502, 1
    %v2509 = vadd.f32 %v2497, %v2505
    %v2510 = vadd.f32 %v2498, %v2506
    %s2511 = scalar_lea.vmem [#allocation6], 84
    %v2512 = vld [vmem:[%s2511] ss:$8 sm:$0x3]
    %v2515 = vcombine.low %v2509, %v2510
    %v2517 = vunpack.c.l.s4 1966171168
    %v2518 = vunpack.c.0.s8 %v2517
    %v2519 = vlaneseq
    %v2520 = vshrl.u32 %v2519, 7
    %v2521 = vsub.s32 %v2518, %v2520
    %v2522 = vrot.slane %v2515, %v2521
    %v2524 = vunpack.c.l.s4 1966171168
    %v2525 = vunpack.c.0.s8 %v2524
    %v2526 = vlaneseq
    %v2527 = vshrl.u32 %v2526, 7
    %v2528 = vsub.s32 %v2525, %v2527
    %v2529 = vrot.slane %v2509, %v2528
    %v2530 = vcombine.low %v2522, %v2529
    %v2532 = vunpack.c.l.s4 1966171168
    %v2533 = vunpack.c.0.s8 %v2532
    %v2534 = vlaneseq
    %v2535 = vshrl.u32 %v2534, 7
    %v2536 = vsub.s32 %v2533, %v2535
    %v2537 = vrot.slane %v2530, %v2536
    %2538 = vrot.lane.b32.xlu0 %v2537, 81
    %v2539 = vpop.permute.xlu0 %2538
    %v2540 = vrot.slane %v2539, 1
    %vm2541 = vcmask 662528
    %v2542 = vsel %vm2541, %v2539, %v2540
    %v2544 = vmul.f32 %v2512, %v2542
    %v2545 = vadd.f32 %v2494, %v2544
    %s2546 = sld [smem:[#allocation8 + $0x2d]]
    %v2547 = vstv %s2546
    %v2548 = vmul.f32 %v2547, %v264
    %v2549 = vmul.f32 %v2547, %v265
    %s2550 = sld [smem:[#allocation8 + $0x5e]]
    %v2551 = vstv %s2550
    %v2552 = vmul.f32 %v2551, %v264
    %v2553 = vmul.f32 %v2551, %v265
    %v2556 = vrot.slane %v2552, 1
    %v2557 = vrot.slane %v2553, 1
    %v2560 = vadd.f32 %v2548, %v2556
    %v2561 = vadd.f32 %v2549, %v2557
    %s2562 = scalar_lea.vmem [#allocation6], 85
    %v2563 = vld [vmem:[%s2562] ss:$8 sm:$0x3]
    %v2566 = vcombine.low %v2560, %v2561
    %v2568 = vunpack.c.l.s4 1966171168
    %v2569 = vunpack.c.0.s8 %v2568
    %v2570 = vlaneseq
    %v2571 = vshrl.u32 %v2570, 7
    %v2572 = vsub.s32 %v2569, %v2571
    %v2573 = vrot.slane %v2566, %v2572
    %v2575 = vunpack.c.l.s4 1966171168
    %v2576 = vunpack.c.0.s8 %v2575
    %v2577 = vlaneseq
    %v2578 = vshrl.u32 %v2577, 7
    %v2579 = vsub.s32 %v2576, %v2578
    %v2580 = vrot.slane %v2560, %v2579
    %v2581 = vcombine.low %v2573, %v2580
    %v2583 = vunpack.c.l.s4 1966171168
    %v2584 = vunpack.c.0.s8 %v2583
    %v2585 = vlaneseq
    %v2586 = vshrl.u32 %v2585, 7
    %v2587 = vsub.s32 %v2584, %v2586
    %v2588 = vrot.slane %v2581, %v2587
    %2589 = vrot.lane.b32.xlu0 %v2588, 80
    %v2590 = vpop.permute.xlu0 %2589
    %v2591 = vrot.slane %v2590, 1
    %vm2592 = vcmask 654336
    %v2593 = vsel %vm2592, %v2590, %v2591
    %v2595 = vmul.f32 %v2563, %v2593
    %v2596 = vadd.f32 %v2545, %v2595
    %s2597 = sld [smem:[#allocation8 + $0x2e]]
    %v2598 = vstv %s2597
    %v2599 = vmul.f32 %v2598, %v264
    %v2600 = vmul.f32 %v2598, %v265
    %s2601 = sld [smem:[#allocation8 + $0x5f]]
    %v2602 = vstv %s2601
    %v2603 = vmul.f32 %v2602, %v264
    %v2604 = vmul.f32 %v2602, %v265
    %v2607 = vrot.slane %v2603, 1
    %v2608 = vrot.slane %v2604, 1
    %v2611 = vadd.f32 %v2599, %v2607
    %v2612 = vadd.f32 %v2600, %v2608
    %s2613 = scalar_lea.vmem [#allocation6], 86
    %v2614 = vld [vmem:[%s2613] ss:$8 sm:$0x3]
    %v2617 = vcombine.low %v2611, %v2612
    %v2619 = vunpack.c.l.s4 1966171168
    %v2620 = vunpack.c.0.s8 %v2619
    %v2621 = vlaneseq
    %v2622 = vshrl.u32 %v2621, 7
    %v2623 = vsub.s32 %v2620, %v2622
    %v2624 = vrot.slane %v2617, %v2623
    %v2626 = vunpack.c.l.s4 1966171168
    %v2627 = vunpack.c.0.s8 %v2626
    %v2628 = vlaneseq
    %v2629 = vshrl.u32 %v2628, 7
    %v2630 = vsub.s32 %v2627, %v2629
    %v2631 = vrot.slane %v2611, %v2630
    %v2632 = vcombine.low %v2624, %v2631
    %v2634 = vunpack.c.l.s4 1966171168
    %v2635 = vunpack.c.0.s8 %v2634
    %v2636 = vlaneseq
    %v2637 = vshrl.u32 %v2636, 7
    %v2638 = vsub.s32 %v2635, %v2637
    %v2639 = vrot.slane %v2632, %v2638
    %2640 = vrot.lane.b32.xlu0 %v2639, 79
    %v2641 = vpop.permute.xlu0 %2640
    %v2642 = vrot.slane %v2641, 1
    %vm2643 = vcmask 646144
    %v2644 = vsel %vm2643, %v2641, %v2642
    %v2646 = vmul.f32 %v2614, %v2644
    %v2647 = vadd.f32 %v2596, %v2646
    %s2648 = sld [smem:[#allocation8 + $0x2f]]
    %v2649 = vstv %s2648
    %v2650 = vmul.f32 %v2649, %v264
    %v2651 = vmul.f32 %v2649, %v265
    %s2652 = sld [smem:[#allocation8 + $0x60]]
    %v2653 = vstv %s2652
    %v2654 = vmul.f32 %v2653, %v264
    %v2655 = vmul.f32 %v2653, %v265
    %v2658 = vrot.slane %v2654, 1
    %v2659 = vrot.slane %v2655, 1
    %v2662 = vadd.f32 %v2650, %v2658
    %v2663 = vadd.f32 %v2651, %v2659
    %s2664 = scalar_lea.vmem [#allocation6], 87
    %v2665 = vld [vmem:[%s2664] ss:$8 sm:$0x3]
    %v2668 = vcombine.low %v2662, %v2663
    %v2670 = vunpack.c.l.s4 1966171168
    %v2671 = vunpack.c.0.s8 %v2670
    %v2672 = vlaneseq
    %v2673 = vshrl.u32 %v2672, 7
    %v2674 = vsub.s32 %v2671, %v2673
    %v2675 = vrot.slane %v2668, %v2674
    %v2677 = vunpack.c.l.s4 1966171168
    %v2678 = vunpack.c.0.s8 %v2677
    %v2679 = vlaneseq
    %v2680 = vshrl.u32 %v2679, 7
    %v2681 = vsub.s32 %v2678, %v2680
    %v2682 = vrot.slane %v2662, %v2681
    %v2683 = vcombine.low %v2675, %v2682
    %v2685 = vunpack.c.l.s4 1966171168
    %v2686 = vunpack.c.0.s8 %v2685
    %v2687 = vlaneseq
    %v2688 = vshrl.u32 %v2687, 7
    %v2689 = vsub.s32 %v2686, %v2688
    %v2690 = vrot.slane %v2683, %v2689
    %2691 = vrot.lane.b32.xlu0 %v2690, 78
    %v2692 = vpop.permute.xlu0 %2691
    %v2693 = vrot.slane %v2692, 1
    %vm2694 = vcmask 637952
    %v2695 = vsel %vm2694, %v2692, %v2693
    %v2697 = vmul.f32 %v2665, %v2695
    %v2698 = vadd.f32 %v2647, %v2697
    %s2699 = sld [smem:[#allocation8 + $0x30]]
    %v2700 = vstv %s2699
    %v2701 = vmul.f32 %v2700, %v264
    %v2702 = vmul.f32 %v2700, %v265
    %s2703 = sld [smem:[#allocation8 + $0x61]]
    %v2704 = vstv %s2703
    %v2705 = vmul.f32 %v2704, %v264
    %v2706 = vmul.f32 %v2704, %v265
    %v2709 = vrot.slane %v2705, 1
    %v2710 = vrot.slane %v2706, 1
    %v2713 = vadd.f32 %v2701, %v2709
    %v2714 = vadd.f32 %v2702, %v2710
    %s2715 = scalar_lea.vmem [#allocation6], 96
    %v2716 = vld [vmem:[%s2715] ss:$8 sm:$0x3]
    %v2719 = vcombine.low %v2713, %v2714
    %v2721 = vunpack.c.l.s4 1966171168
    %v2722 = vunpack.c.0.s8 %v2721
    %v2723 = vlaneseq
    %v2724 = vshrl.u32 %v2723, 7
    %v2725 = vsub.s32 %v2722, %v2724
    %v2726 = vrot.slane %v2719, %v2725
    %v2728 = vunpack.c.l.s4 1966171168
    %v2729 = vunpack.c.0.s8 %v2728
    %v2730 = vlaneseq
    %v2731 = vshrl.u32 %v2730, 7
    %v2732 = vsub.s32 %v2729, %v2731
    %v2733 = vrot.slane %v2713, %v2732
    %v2734 = vcombine.low %v2726, %v2733
    %v2736 = vunpack.c.l.s4 1966171168
    %v2737 = vunpack.c.0.s8 %v2736
    %v2738 = vlaneseq
    %v2739 = vshrl.u32 %v2738, 7
    %v2740 = vsub.s32 %v2737, %v2739
    %v2741 = vrot.slane %v2734, %v2740
    %2742 = vrot.lane.b32.xlu0 %v2741, 77
    %v2743 = vpop.permute.xlu0 %2742
    %v2744 = vrot.slane %v2743, 1
    %vm2745 = vcmask 629760
    %v2746 = vsel %vm2745, %v2743, %v2744
    %v2748 = vmul.f32 %v2716, %v2746
    %v2749 = vadd.f32 %v2698, %v2748
    %v2750 = vxor.u32 %v2749, 2147483648
    %v2751 = vmul.f32 %v2750, 1.442695
    %v2752 = vpow.pop %v2751
    %v2753 = vadd.f32 %v2752, 1.0
    %v2754 = vrcp.pop %v2753
    %v2755 = vmul.f32 1.0, %v2754
    %v2757 = vlaneseq
    %v2758 = vshrl.u32 %v2757, 7
    %v2759 = vsub.s32 0, %v2758
    %v2760 = vrot.slane %v2755, %v2759
    %v2761 = vlaneseq
    %v2762 = vshrl.u32 %v2761, 7
    %v2763 = vsub.s32 1, %v2762
    %v2764 = vrot.slane %v2755, %v2763
    %v2767 = vmul.f32 %v216, %v2760
    %v2768 = vmul.f32 %v217, %v2764
    %v2769 = vmul.f32 %v218, %v2760
    %v2770 = vmul.f32 %v219, %v2764
    %v2771 = vmul.f32 %v220, %v2760
    %v2772 = vmul.f32 %v221, %v2764
    %v2773 = vmul.f32 %v222, %v2760
    %v2774 = vmul.f32 %v223, %v2764
    %2775 = vst [vmem:[#allocation9] sm:$0xff] %v2767
    %2776 = vst [vmem:[#allocation9 + $0x8] sm:$0xff] %v2768
    %2777 = vst [vmem:[#allocation9 + $0x10] sm:$0xff] %v2769
    %2778 = vst [vmem:[#allocation9 + $0x18] sm:$0xff] %v2770
    %2779 = vst [vmem:[#allocation9 + $0x20] sm:$0xff] %v2771
    %2780 = vst [vmem:[#allocation9 + $0x28] sm:$0xff] %v2772
    %2781 = vst [vmem:[#allocation9 + $0x30] sm:$0xff] %v2773
    %2782 = vst [vmem:[#allocation9 + $0x38] sm:$0xff] %v2774
    %s2783 = scalar_lea.vmem [#allocation2], 64
    %v2784 = vld [vmem:[%s2783] sm:$0xff]
    %v2785 = vld [vmem:[%s2783 + $0x8] sm:$0xff]
    %v2786 = vld [vmem:[%s2783 + $0x10] sm:$0xff]
    %v2787 = vld [vmem:[%s2783 + $0x18] sm:$0xff]
    %v2788 = vld [vmem:[%s2783 + $0x20] sm:$0xff]
    %v2789 = vld [vmem:[%s2783 + $0x28] sm:$0xff]
    %v2790 = vld [vmem:[%s2783 + $0x30] sm:$0xff]
    %v2791 = vld [vmem:[%s2783 + $0x38] sm:$0xff]
    %v2792 = vadd.f32 %v2784, %v2785
    %2793 = vadd.xlane.f32.xlu0 %v2792
    %v2794 = vpop.xlane.xlu0 %2793
    %v2795 = vadd.f32 %v2786, %v2787
    %2796 = vadd.xlane.f32.xlu0 %v2795
    %v2797 = vpop.xlane.xlu0 %2796
    %v2798 = vadd.f32 %v2788, %v2789
    %2799 = vadd.xlane.f32.xlu0 %v2798
    %v2800 = vpop.xlane.xlu0 %2799
    %v2801 = vadd.f32 %v2790, %v2791
    %2802 = vadd.xlane.f32.xlu0 %v2801
    %v2803 = vpop.xlane.xlu0 %2802
    %v2804 = vmul.f32 %v2794, %v90
    %v2805 = vmul.f32 %v2797, %v90
    %v2806 = vmul.f32 %v2800, %v90
    %v2807 = vmul.f32 %v2803, %v90
    %v2808 = vmax.f32 %v2784, %v2785
    %2809 = vmax.xlane.f32.xlu0 %v2808
    %v2810 = vpop.xlane.xlu0 %2809
    %v2811 = vmax.f32 %v2786, %v2787
    %2812 = vmax.xlane.f32.xlu0 %v2811
    %v2813 = vpop.xlane.xlu0 %2812
    %v2814 = vmax.f32 %v2788, %v2789
    %2815 = vmax.xlane.f32.xlu0 %v2814
    %v2816 = vpop.xlane.xlu0 %2815
    %v2817 = vmax.f32 %v2790, %v2791
    %2818 = vmax.xlane.f32.xlu0 %v2817
    %v2819 = vpop.xlane.xlu0 %2818
    %v2820 = vmul.f32 %v62, %v2804
    %v2821 = vmul.f32 %v63, %v2805
    %v2822 = vmul.f32 %v64, %v2806
    %v2823 = vmul.f32 %v65, %v2807
    %v2824 = vsel %vm111, %v2820, 0.0
    %v2825 = vsel %vm111, %v2821, 0.0
    %v2826 = vadd.f32 %v2824, %v2825
    %v2827 = vsel %vm111, %v2822, 0.0
    %v2828 = vadd.f32 %v2826, %v2827
    %v2829 = vsel %vm111, %v2823, 0.0
    %v2830 = vadd.f32 %v2828, %v2829
    %v2831 = vrot.slane %v2830, 4
    %v2832 = vadd.f32 %v2830, %v2831
    %v2833 = vrot.slane %v2832, 2
    %v2834 = vadd.f32 %v2832, %v2833
    %v2835 = vrot.slane %v2834, 1
    %v2836 = vadd.f32 %v2834, %v2835
    %v2837 = vmul.f32 %v62, %v2810
    %v2838 = vmul.f32 %v63, %v2813
    %v2839 = vmul.f32 %v64, %v2816
    %v2840 = vmul.f32 %v65, %v2819
    %v2841 = vsel %vm111, %v2837, 0.0
    %v2842 = vsel %vm111, %v2838, 0.0
    %v2843 = vadd.f32 %v2841, %v2842
    %v2844 = vsel %vm111, %v2839, 0.0
    %v2845 = vadd.f32 %v2843, %v2844
    %v2846 = vsel %vm111, %v2840, 0.0
    %v2847 = vadd.f32 %v2845, %v2846
    %v2848 = vrot.slane %v2847, 4
    %v2849 = vadd.f32 %v2847, %v2848
    %v2850 = vrot.slane %v2849, 2
    %v2851 = vadd.f32 %v2849, %v2850
    %v2852 = vrot.slane %v2851, 1
    %v2853 = vadd.f32 %v2851, %v2852
    %v2854 = vxor.u32 %v2836, 2147483648
    %v2855 = vmul.f32 %v2854, 1.442695
    %v2856 = vpow.pop %v2855
    %v2857 = vadd.f32 %v2856, 1.0
    %v2858 = vrcp.pop %v2857
    %v2859 = vmul.f32 1.0, %v2858
    %v2860 = vmul.f32 %v2836, %v2859
    %v2861 = vxor.u32 %v2853, 2147483648
    %v2862 = vmul.f32 %v2861, 1.442695
    %v2863 = vpow.pop %v2862
    %v2864 = vadd.f32 %v2863, 1.0
    %v2865 = vrcp.pop %v2864
    %v2866 = vmul.f32 1.0, %v2865
    %v2867 = vmul.f32 %v2853, %v2866
    %v2868 = vmul.f32 %v66, %v2860
    %v2869 = vmul.f32 %v67, %v2860
    %v2870 = vmul.f32 %v68, %v2860
    %v2871 = vmul.f32 %v69, %v2860
    %v2872 = vsel %vm111, %v2868, 0.0
    %2873 = vadd.xlane.f32.xlu0 %v2872
    %v2874 = vpop.xlane.xlu0 %2873
    %v2875 = vsel %vm111, %v2869, 0.0
    %2876 = vadd.xlane.f32.xlu0 %v2875
    %v2877 = vpop.xlane.xlu0 %2876
    %v2878 = vsel %vm111, %v2870, 0.0
    %2879 = vadd.xlane.f32.xlu0 %v2878
    %v2880 = vpop.xlane.xlu0 %2879
    %v2881 = vsel %vm111, %v2871, 0.0
    %2882 = vadd.xlane.f32.xlu0 %v2881
    %v2883 = vpop.xlane.xlu0 %2882
    %v2884 = vmul.f32 %v66, %v2867
    %v2885 = vmul.f32 %v67, %v2867
    %v2886 = vmul.f32 %v68, %v2867
    %v2887 = vmul.f32 %v69, %v2867
    %v2888 = vsel %vm111, %v2884, 0.0
    %2889 = vadd.xlane.f32.xlu0 %v2888
    %v2890 = vpop.xlane.xlu0 %2889
    %v2891 = vsel %vm111, %v2885, 0.0
    %2892 = vadd.xlane.f32.xlu0 %v2891
    %v2893 = vpop.xlane.xlu0 %2892
    %v2894 = vsel %vm111, %v2886, 0.0
    %2895 = vadd.xlane.f32.xlu0 %v2894
    %v2896 = vpop.xlane.xlu0 %2895
    %v2897 = vsel %vm111, %v2887, 0.0
    %2898 = vadd.xlane.f32.xlu0 %v2897
    %v2899 = vpop.xlane.xlu0 %2898
    %v2900 = vadd.f32 %v2874, %v2890
    %v2901 = vadd.f32 %v2877, %v2893
    %v2902 = vadd.f32 %v2880, %v2896
    %v2903 = vadd.f32 %v2883, %v2899
    %v2904 = vxor.u32 %v2900, 2147483648
    %v2905 = vxor.u32 %v2901, 2147483648
    %v2906 = vxor.u32 %v2902, 2147483648
    %v2907 = vxor.u32 %v2903, 2147483648
    %v2908 = vmul.f32 %v2904, 1.442695
    %v2909 = vpow.pop %v2908
    %v2910 = vmul.f32 %v2905, 1.442695
    %v2911 = vpow.pop %v2910
    %v2912 = vmul.f32 %v2906, 1.442695
    %v2913 = vpow.pop %v2912
    %v2914 = vmul.f32 %v2907, 1.442695
    %v2915 = vpow.pop %v2914
    %v2916 = vadd.f32 %v2909, 1.0
    %v2917 = vadd.f32 %v2911, 1.0
    %v2918 = vadd.f32 %v2913, 1.0
    %v2919 = vadd.f32 %v2915, 1.0
    %v2920 = vrcp.pop %v2916
    %v2921 = vmul.f32 1.0, %v2920
    %v2922 = vrcp.pop %v2917
    %v2923 = vmul.f32 1.0, %v2922
    %v2924 = vrcp.pop %v2918
    %v2925 = vmul.f32 1.0, %v2924
    %v2926 = vrcp.pop %v2919
    %v2927 = vmul.f32 1.0, %v2926
    %v2928 = vmul.f32 %v2784, %v2921
    %v2929 = vmul.f32 %v2785, %v2921
    %v2930 = vmul.f32 %v2786, %v2923
    %v2931 = vmul.f32 %v2787, %v2923
    %v2932 = vmul.f32 %v2788, %v2925
    %v2933 = vmul.f32 %v2789, %v2925
    %v2934 = vmul.f32 %v2790, %v2927
    %v2935 = vmul.f32 %v2791, %v2927
    %v2936 = vadd.f32 %v2928, %v2930
    %v2937 = vadd.f32 %v2936, %v2932
    %v2938 = vadd.f32 %v2937, %v2934
    %v2939 = vrot.slane %v2938, 4
    %v2940 = vadd.f32 %v2938, %v2939
    %v2941 = vrot.slane %v2940, 2
    %v2942 = vadd.f32 %v2940, %v2941
    %v2943 = vrot.slane %v2942, 1
    %v2944 = vadd.f32 %v2942, %v2943
    %v2945 = vadd.f32 %v2929, %v2931
    %v2946 = vadd.f32 %v2945, %v2933
    %v2947 = vadd.f32 %v2946, %v2935
    %v2948 = vrot.slane %v2947, 4
    %v2949 = vadd.f32 %v2947, %v2948
    %v2950 = vrot.slane %v2949, 2
    %v2951 = vadd.f32 %v2949, %v2950
    %v2952 = vrot.slane %v2951, 1
    %v2953 = vadd.f32 %v2951, %v2952
    %v2954 = vmul.f32 %v2944, %v242
    %v2955 = vmul.f32 %v2953, %v242
    %v2956 = vmax.f32 %v2928, %v2932
    %v2957 = vmax.f32 %v2930, %v2934
    %v2958 = vmax.f32 %v2956, %v2957
    %v2959 = vrot.slane %v2958, 4
    %v2960 = vmax.f32 %v2958, %v2959
    %v2961 = vrot.slane %v2960, 2
    %v2962 = vmax.f32 %v2960, %v2961
    %v2963 = vrot.slane %v2962, 1
    %v2964 = vmax.f32 %v2962, %v2963
    %v2965 = vmax.f32 %v2929, %v2933
    %v2966 = vmax.f32 %v2931, %v2935
    %v2967 = vmax.f32 %v2965, %v2966
    %v2968 = vrot.slane %v2967, 4
    %v2969 = vmax.f32 %v2967, %v2968
    %v2970 = vrot.slane %v2969, 2
    %v2971 = vmax.f32 %v2969, %v2970
    %v2972 = vrot.slane %v2971, 1
    %v2973 = vmax.f32 %v2971, %v2972
    %v2974 = vsel %vm263, %v2954, %v2964
    %v2975 = vsel %vm263, %v2955, %v2973
    %s2976 = sld [smem:[#allocation8]]
    %v2977 = vstv %s2976
    %v2978 = vmul.f32 %v2977, %v2975
    %v2979 = vmul.f32 %v2977, %v2974
    %s2980 = sld [smem:[#allocation8 + $0x31]]
    %v2981 = vstv %s2980
    %v2982 = vmul.f32 %v2981, %v2975
    %v2983 = vmul.f32 %v2981, %v2974
    %v2986 = vrot.slane %v2982, 1
    %v2987 = vrot.slane %v2983, 1
    %v2990 = vadd.f32 %v2978, %v2986
    %v2991 = vadd.f32 %v2979, %v2987
    %v2992 = vld [vmem:[#allocation6] ss:$8 sm:$0x3]
    %v2995 = vcombine.low %v2990, %v2991
    %v2997 = vunpack.c.l.s4 1966171168
    %v2998 = vunpack.c.0.s8 %v2997
    %v2999 = vlaneseq
    %v3000 = vshrl.u32 %v2999, 7
    %v3001 = vsub.s32 %v2998, %v3000
    %v3002 = vrot.slane %v2995, %v3001
    %v3004 = vunpack.c.l.s4 1966171168
    %v3005 = vunpack.c.0.s8 %v3004
    %v3006 = vlaneseq
    %v3007 = vshrl.u32 %v3006, 7
    %v3008 = vsub.s32 %v3005, %v3007
    %v3009 = vrot.slane %v2990, %v3008
    %v3010 = vcombine.low %v3002, %v3009
    %v3012 = vunpack.c.l.s4 1966171168
    %v3013 = vunpack.c.0.s8 %v3012
    %v3014 = vlaneseq
    %v3015 = vshrl.u32 %v3014, 7
    %v3016 = vsub.s32 %v3013, %v3015
    %v3017 = vrot.slane %v3010, %v3016
    %3018 = vrot.lane.b32.xlu0 %v3017, 51
    %v3019 = vpop.permute.xlu0 %3018
    %v3020 = vrot.slane %v3019, 1
    %v3021 = vsel %vm311, %v3019, %v3020
    %v3023 = vmul.f32 %v2992, %v3021
    %v3024 = vadd.f32 %v3023, 0.0
    %s3025 = sld [smem:[#allocation8 + $0x1]]
    %v3026 = vstv %s3025
    %v3027 = vmul.f32 %v3026, %v2975
    %v3028 = vmul.f32 %v3026, %v2974
    %s3029 = sld [smem:[#allocation8 + $0x32]]
    %v3030 = vstv %s3029
    %v3031 = vmul.f32 %v3030, %v2975
    %v3032 = vmul.f32 %v3030, %v2974
    %v3035 = vrot.slane %v3031, 1
    %v3036 = vrot.slane %v3032, 1
    %v3039 = vadd.f32 %v3027, %v3035
    %v3040 = vadd.f32 %v3028, %v3036
    %v3041 = vld [vmem:[%s332] ss:$8 sm:$0x3]
    %v3044 = vcombine.low %v3039, %v3040
    %v3046 = vunpack.c.l.s4 1966171168
    %v3047 = vunpack.c.0.s8 %v3046
    %v3048 = vlaneseq
    %v3049 = vshrl.u32 %v3048, 7
    %v3050 = vsub.s32 %v3047, %v3049
    %v3051 = vrot.slane %v3044, %v3050
    %v3053 = vunpack.c.l.s4 1966171168
    %v3054 = vunpack.c.0.s8 %v3053
    %v3055 = vlaneseq
    %v3056 = vshrl.u32 %v3055, 7
    %v3057 = vsub.s32 %v3054, %v3056
    %v3058 = vrot.slane %v3039, %v3057
    %v3059 = vcombine.low %v3051, %v3058
    %v3061 = vunpack.c.l.s4 1966171168
    %v3062 = vunpack.c.0.s8 %v3061
    %v3063 = vlaneseq
    %v3064 = vshrl.u32 %v3063, 7
    %v3065 = vsub.s32 %v3062, %v3064
    %v3066 = vrot.slane %v3059, %v3065
    %3067 = vrot.lane.b32.xlu0 %v3066, 50
    %v3068 = vpop.permute.xlu0 %3067
    %v3069 = vrot.slane %v3068, 1
    %v3070 = vsel %vm362, %v3068, %v3069
    %v3072 = vmul.f32 %v3041, %v3070
    %v3073 = vadd.f32 %v3024, %v3072
    %s3074 = sld [smem:[#allocation8 + $0x2]]
    %v3075 = vstv %s3074
    %v3076 = vmul.f32 %v3075, %v2975
    %v3077 = vmul.f32 %v3075, %v2974
    %s3078 = sld [smem:[#allocation8 + $0x33]]
    %v3079 = vstv %s3078
    %v3080 = vmul.f32 %v3079, %v2975
    %v3081 = vmul.f32 %v3079, %v2974
    %v3084 = vrot.slane %v3080, 1
    %v3085 = vrot.slane %v3081, 1
    %v3088 = vadd.f32 %v3076, %v3084
    %v3089 = vadd.f32 %v3077, %v3085
    %v3090 = vld [vmem:[%s383] ss:$8 sm:$0x3]
    %v3093 = vcombine.low %v3088, %v3089
    %v3095 = vunpack.c.l.s4 1966171168
    %v3096 = vunpack.c.0.s8 %v3095
    %v3097 = vlaneseq
    %v3098 = vshrl.u32 %v3097, 7
    %v3099 = vsub.s32 %v3096, %v3098
    %v3100 = vrot.slane %v3093, %v3099
    %v3102 = vunpack.c.l.s4 1966171168
    %v3103 = vunpack.c.0.s8 %v3102
    %v3104 = vlaneseq
    %v3105 = vshrl.u32 %v3104, 7
    %v3106 = vsub.s32 %v3103, %v3105
    %v3107 = vrot.slane %v3088, %v3106
    %v3108 = vcombine.low %v3100, %v3107
    %v3110 = vunpack.c.l.s4 1966171168
    %v3111 = vunpack.c.0.s8 %v3110
    %v3112 = vlaneseq
    %v3113 = vshrl.u32 %v3112, 7
    %v3114 = vsub.s32 %v3111, %v3113
    %v3115 = vrot.slane %v3108, %v3114
    %3116 = vrot.lane.b32.xlu0 %v3115, 49
    %v3117 = vpop.permute.xlu0 %3116
    %v3118 = vrot.slane %v3117, 1
    %v3119 = vsel %vm413, %v3117, %v3118
    %v3121 = vmul.f32 %v3090, %v3119
    %v3122 = vadd.f32 %v3073, %v3121
    %s3123 = sld [smem:[#allocation8 + $0x3]]
    %v3124 = vstv %s3123
    %v3125 = vmul.f32 %v3124, %v2975
    %v3126 = vmul.f32 %v3124, %v2974
    %s3127 = sld [smem:[#allocation8 + $0x34]]
    %v3128 = vstv %s3127
    %v3129 = vmul.f32 %v3128, %v2975
    %v3130 = vmul.f32 %v3128, %v2974
    %v3133 = vrot.slane %v3129, 1
    %v3134 = vrot.slane %v3130, 1
    %v3137 = vadd.f32 %v3125, %v3133
    %v3138 = vadd.f32 %v3126, %v3134
    %v3139 = vld [vmem:[%s434] ss:$8 sm:$0x3]
    %v3142 = vcombine.low %v3137, %v3138
    %v3144 = vunpack.c.l.s4 1966171168
    %v3145 = vunpack.c.0.s8 %v3144
    %v3146 = vlaneseq
    %v3147 = vshrl.u32 %v3146, 7
    %v3148 = vsub.s32 %v3145, %v3147
    %v3149 = vrot.slane %v3142, %v3148
    %v3151 = vunpack.c.l.s4 1966171168
    %v3152 = vunpack.c.0.s8 %v3151
    %v3153 = vlaneseq
    %v3154 = vshrl.u32 %v3153, 7
    %v3155 = vsub.s32 %v3152, %v3154
    %v3156 = vrot.slane %v3137, %v3155
    %v3157 = vcombine.low %v3149, %v3156
    %v3159 = vunpack.c.l.s4 1966171168
    %v3160 = vunpack.c.0.s8 %v3159
    %v3161 = vlaneseq
    %v3162 = vshrl.u32 %v3161, 7
    %v3163 = vsub.s32 %v3160, %v3162
    %v3164 = vrot.slane %v3157, %v3163
    %3165 = vrot.lane.b32.xlu0 %v3164, 48
    %v3166 = vpop.permute.xlu0 %3165
    %v3167 = vrot.slane %v3166, 1
    %v3168 = vsel %vm464, %v3166, %v3167
    %v3170 = vmul.f32 %v3139, %v3168
    %v3171 = vadd.f32 %v3122, %v3170
    %s3172 = sld [smem:[#allocation8 + $0x4]]
    %v3173 = vstv %s3172
    %v3174 = vmul.f32 %v3173, %v2975
    %v3175 = vmul.f32 %v3173, %v2974
    %s3176 = sld [smem:[#allocation8 + $0x35]]
    %v3177 = vstv %s3176
    %v3178 = vmul.f32 %v3177, %v2975
    %v3179 = vmul.f32 %v3177, %v2974
    %v3182 = vrot.slane %v3178, 1
    %v3183 = vrot.slane %v3179, 1
    %v3186 = vadd.f32 %v3174, %v3182
    %v3187 = vadd.f32 %v3175, %v3183
    %v3188 = vld [vmem:[%s485] ss:$8 sm:$0x3]
    %v3191 = vcombine.low %v3186, %v3187
    %v3193 = vunpack.c.l.s4 1966171168
    %v3194 = vunpack.c.0.s8 %v3193
    %v3195 = vlaneseq
    %v3196 = vshrl.u32 %v3195, 7
    %v3197 = vsub.s32 %v3194, %v3196
    %v3198 = vrot.slane %v3191, %v3197
    %v3200 = vunpack.c.l.s4 1966171168
    %v3201 = vunpack.c.0.s8 %v3200
    %v3202 = vlaneseq
    %v3203 = vshrl.u32 %v3202, 7
    %v3204 = vsub.s32 %v3201, %v3203
    %v3205 = vrot.slane %v3186, %v3204
    %v3206 = vcombine.low %v3198, %v3205
    %v3208 = vunpack.c.l.s4 1966171168
    %v3209 = vunpack.c.0.s8 %v3208
    %v3210 = vlaneseq
    %v3211 = vshrl.u32 %v3210, 7
    %v3212 = vsub.s32 %v3209, %v3211
    %v3213 = vrot.slane %v3206, %v3212
    %3214 = vrot.lane.b32.xlu0 %v3213, 47
    %v3215 = vpop.permute.xlu0 %3214
    %v3216 = vrot.slane %v3215, 1
    %v3217 = vsel %vm515, %v3215, %v3216
    %v3219 = vmul.f32 %v3188, %v3217
    %v3220 = vadd.f32 %v3171, %v3219
    %s3221 = sld [smem:[#allocation8 + $0x5]]
    %v3222 = vstv %s3221
    %v3223 = vmul.f32 %v3222, %v2975
    %v3224 = vmul.f32 %v3222, %v2974
    %s3225 = sld [smem:[#allocation8 + $0x36]]
    %v3226 = vstv %s3225
    %v3227 = vmul.f32 %v3226, %v2975
    %v3228 = vmul.f32 %v3226, %v2974
    %v3231 = vrot.slane %v3227, 1
    %v3232 = vrot.slane %v3228, 1
    %v3235 = vadd.f32 %v3223, %v3231
    %v3236 = vadd.f32 %v3224, %v3232
    %v3237 = vld [vmem:[%s536] ss:$8 sm:$0x3]
    %v3240 = vcombine.low %v3235, %v3236
    %v3242 = vunpack.c.l.s4 1966171168
    %v3243 = vunpack.c.0.s8 %v3242
    %v3244 = vlaneseq
    %v3245 = vshrl.u32 %v3244, 7
    %v3246 = vsub.s32 %v3243, %v3245
    %v3247 = vrot.slane %v3240, %v3246
    %v3249 = vunpack.c.l.s4 1966171168
    %v3250 = vunpack.c.0.s8 %v3249
    %v3251 = vlaneseq
    %v3252 = vshrl.u32 %v3251, 7
    %v3253 = vsub.s32 %v3250, %v3252
    %v3254 = vrot.slane %v3235, %v3253
    %v3255 = vcombine.low %v3247, %v3254
    %v3257 = vunpack.c.l.s4 1966171168
    %v3258 = vunpack.c.0.s8 %v3257
    %v3259 = vlaneseq
    %v3260 = vshrl.u32 %v3259, 7
    %v3261 = vsub.s32 %v3258, %v3260
    %v3262 = vrot.slane %v3255, %v3261
    %3263 = vrot.lane.b32.xlu0 %v3262, 46
    %v3264 = vpop.permute.xlu0 %3263
    %v3265 = vrot.slane %v3264, 1
    %v3266 = vsel %vm566, %v3264, %v3265
    %v3268 = vmul.f32 %v3237, %v3266
    %v3269 = vadd.f32 %v3220, %v3268
    %s3270 = sld [smem:[#allocation8 + $0x6]]
    %v3271 = vstv %s3270
    %v3272 = vmul.f32 %v3271, %v2975
    %v3273 = vmul.f32 %v3271, %v2974
    %s3274 = sld [smem:[#allocation8 + $0x37]]
    %v3275 = vstv %s3274
    %v3276 = vmul.f32 %v3275, %v2975
    %v3277 = vmul.f32 %v3275, %v2974
    %v3280 = vrot.slane %v3276, 1
    %v3281 = vrot.slane %v3277, 1
    %v3284 = vadd.f32 %v3272, %v3280
    %v3285 = vadd.f32 %v3273, %v3281
    %v3286 = vld [vmem:[%s587] ss:$8 sm:$0x3]
    %v3289 = vcombine.low %v3284, %v3285
    %v3291 = vunpack.c.l.s4 1966171168
    %v3292 = vunpack.c.0.s8 %v3291
    %v3293 = vlaneseq
    %v3294 = vshrl.u32 %v3293, 7
    %v3295 = vsub.s32 %v3292, %v3294
    %v3296 = vrot.slane %v3289, %v3295
    %v3298 = vunpack.c.l.s4 1966171168
    %v3299 = vunpack.c.0.s8 %v3298
    %v3300 = vlaneseq
    %v3301 = vshrl.u32 %v3300, 7
    %v3302 = vsub.s32 %v3299, %v3301
    %v3303 = vrot.slane %v3284, %v3302
    %v3304 = vcombine.low %v3296, %v3303
    %v3306 = vunpack.c.l.s4 1966171168
    %v3307 = vunpack.c.0.s8 %v3306
    %v3308 = vlaneseq
    %v3309 = vshrl.u32 %v3308, 7
    %v3310 = vsub.s32 %v3307, %v3309
    %v3311 = vrot.slane %v3304, %v3310
    %3312 = vrot.lane.b32.xlu0 %v3311, 45
    %v3313 = vpop.permute.xlu0 %3312
    %v3314 = vrot.slane %v3313, 1
    %v3315 = vsel %vm617, %v3313, %v3314
    %v3317 = vmul.f32 %v3286, %v3315
    %v3318 = vadd.f32 %v3269, %v3317
    %s3319 = sld [smem:[#allocation8 + $0x7]]
    %v3320 = vstv %s3319
    %v3321 = vmul.f32 %v3320, %v2975
    %v3322 = vmul.f32 %v3320, %v2974
    %s3323 = sld [smem:[#allocation8 + $0x38]]
    %v3324 = vstv %s3323
    %v3325 = vmul.f32 %v3324, %v2975
    %v3326 = vmul.f32 %v3324, %v2974
    %v3329 = vrot.slane %v3325, 1
    %v3330 = vrot.slane %v3326, 1
    %v3333 = vadd.f32 %v3321, %v3329
    %v3334 = vadd.f32 %v3322, %v3330
    %v3335 = vld [vmem:[%s638] ss:$8 sm:$0x3]
    %v3338 = vcombine.low %v3333, %v3334
    %v3340 = vunpack.c.l.s4 1966171168
    %v3341 = vunpack.c.0.s8 %v3340
    %v3342 = vlaneseq
    %v3343 = vshrl.u32 %v3342, 7
    %v3344 = vsub.s32 %v3341, %v3343
    %v3345 = vrot.slane %v3338, %v3344
    %v3347 = vunpack.c.l.s4 1966171168
    %v3348 = vunpack.c.0.s8 %v3347
    %v3349 = vlaneseq
    %v3350 = vshrl.u32 %v3349, 7
    %v3351 = vsub.s32 %v3348, %v3350
    %v3352 = vrot.slane %v3333, %v3351
    %v3353 = vcombine.low %v3345, %v3352
    %v3355 = vunpack.c.l.s4 1966171168
    %v3356 = vunpack.c.0.s8 %v3355
    %v3357 = vlaneseq
    %v3358 = vshrl.u32 %v3357, 7
    %v3359 = vsub.s32 %v3356, %v3358
    %v3360 = vrot.slane %v3353, %v3359
    %3361 = vrot.lane.b32.xlu0 %v3360, 35
    %v3362 = vpop.permute.xlu0 %3361
    %v3363 = vrot.slane %v3362, 1
    %v3364 = vsel %vm668, %v3362, %v3363
    %v3366 = vmul.f32 %v3335, %v3364
    %v3367 = vadd.f32 %v3318, %v3366
    %s3368 = sld [smem:[#allocation8 + $0x8]]
    %v3369 = vstv %s3368
    %v3370 = vmul.f32 %v3369, %v2975
    %v3371 = vmul.f32 %v3369, %v2974
    %s3372 = sld [smem:[#allocation8 + $0x39]]
    %v3373 = vstv %s3372
    %v3374 = vmul.f32 %v3373, %v2975
    %v3375 = vmul.f32 %v3373, %v2974
    %v3378 = vrot.slane %v3374, 1
    %v3379 = vrot.slane %v3375, 1
    %v3382 = vadd.f32 %v3370, %v3378
    %v3383 = vadd.f32 %v3371, %v3379
    %v3384 = vld [vmem:[%s689] ss:$8 sm:$0x3]
    %v3387 = vcombine.low %v3382, %v3383
    %v3389 = vunpack.c.l.s4 1966171168
    %v3390 = vunpack.c.0.s8 %v3389
    %v3391 = vlaneseq
    %v3392 = vshrl.u32 %v3391, 7
    %v3393 = vsub.s32 %v3390, %v3392
    %v3394 = vrot.slane %v3387, %v3393
    %v3396 = vunpack.c.l.s4 1966171168
    %v3397 = vunpack.c.0.s8 %v3396
    %v3398 = vlaneseq
    %v3399 = vshrl.u32 %v3398, 7
    %v3400 = vsub.s32 %v3397, %v3399
    %v3401 = vrot.slane %v3382, %v3400
    %v3402 = vcombine.low %v3394, %v3401
    %v3404 = vunpack.c.l.s4 1966171168
    %v3405 = vunpack.c.0.s8 %v3404
    %v3406 = vlaneseq
    %v3407 = vshrl.u32 %v3406, 7
    %v3408 = vsub.s32 %v3405, %v3407
    %v3409 = vrot.slane %v3402, %v3408
    %3410 = vrot.lane.b32.xlu0 %v3409, 34
    %v3411 = vpop.permute.xlu0 %3410
    %v3412 = vrot.slane %v3411, 1
    %v3413 = vsel %vm719, %v3411, %v3412
    %v3415 = vmul.f32 %v3384, %v3413
    %v3416 = vadd.f32 %v3367, %v3415
    %s3417 = sld [smem:[#allocation8 + $0x9]]
    %v3418 = vstv %s3417
    %v3419 = vmul.f32 %v3418, %v2975
    %v3420 = vmul.f32 %v3418, %v2974
    %s3421 = sld [smem:[#allocation8 + $0x3a]]
    %v3422 = vstv %s3421
    %v3423 = vmul.f32 %v3422, %v2975
    %v3424 = vmul.f32 %v3422, %v2974
    %v3427 = vrot.slane %v3423, 1
    %v3428 = vrot.slane %v3424, 1
    %v3431 = vadd.f32 %v3419, %v3427
    %v3432 = vadd.f32 %v3420, %v3428
    %v3433 = vld [vmem:[%s740] ss:$8 sm:$0x3]
    %v3436 = vcombine.low %v3431, %v3432
    %v3438 = vunpack.c.l.s4 1966171168
    %v3439 = vunpack.c.0.s8 %v3438
    %v3440 = vlaneseq
    %v3441 = vshrl.u32 %v3440, 7
    %v3442 = vsub.s32 %v3439, %v3441
    %v3443 = vrot.slane %v3436, %v3442
    %v3445 = vunpack.c.l.s4 1966171168
    %v3446 = vunpack.c.0.s8 %v3445
    %v3447 = vlaneseq
    %v3448 = vshrl.u32 %v3447, 7
    %v3449 = vsub.s32 %v3446, %v3448
    %v3450 = vrot.slane %v3431, %v3449
    %v3451 = vcombine.low %v3443, %v3450
    %v3453 = vunpack.c.l.s4 1966171168
    %v3454 = vunpack.c.0.s8 %v3453
    %v3455 = vlaneseq
    %v3456 = vshrl.u32 %v3455, 7
    %v3457 = vsub.s32 %v3454, %v3456
    %v3458 = vrot.slane %v3451, %v3457
    %3459 = vrot.lane.b32.xlu0 %v3458, 33
    %v3460 = vpop.permute.xlu0 %3459
    %v3461 = vrot.slane %v3460, 1
    %v3462 = vsel %vm770, %v3460, %v3461
    %v3464 = vmul.f32 %v3433, %v3462
    %v3465 = vadd.f32 %v3416, %v3464
    %s3466 = sld [smem:[#allocation8 + $0xa]]
    %v3467 = vstv %s3466
    %v3468 = vmul.f32 %v3467, %v2975
    %v3469 = vmul.f32 %v3467, %v2974
    %s3470 = sld [smem:[#allocation8 + $0x3b]]
    %v3471 = vstv %s3470
    %v3472 = vmul.f32 %v3471, %v2975
    %v3473 = vmul.f32 %v3471, %v2974
    %v3476 = vrot.slane %v3472, 1
    %v3477 = vrot.slane %v3473, 1
    %v3480 = vadd.f32 %v3468, %v3476
    %v3481 = vadd.f32 %v3469, %v3477
    %v3482 = vld [vmem:[%s791] ss:$8 sm:$0x3]
    %v3485 = vcombine.low %v3480, %v3481
    %v3487 = vunpack.c.l.s4 1966171168
    %v3488 = vunpack.c.0.s8 %v3487
    %v3489 = vlaneseq
    %v3490 = vshrl.u32 %v3489, 7
    %v3491 = vsub.s32 %v3488, %v3490
    %v3492 = vrot.slane %v3485, %v3491
    %v3494 = vunpack.c.l.s4 1966171168
    %v3495 = vunpack.c.0.s8 %v3494
    %v3496 = vlaneseq
    %v3497 = vshrl.u32 %v3496, 7
    %v3498 = vsub.s32 %v3495, %v3497
    %v3499 = vrot.slane %v3480, %v3498
    %v3500 = vcombine.low %v3492, %v3499
    %v3502 = vunpack.c.l.s4 1966171168
    %v3503 = vunpack.c.0.s8 %v3502
    %v3504 = vlaneseq
    %v3505 = vshrl.u32 %v3504, 7
    %v3506 = vsub.s32 %v3503, %v3505
    %v3507 = vrot.slane %v3500, %v3506
    %3508 = vrot.lane.b32.xlu0 %v3507, 32
    %v3509 = vpop.permute.xlu0 %3508
    %v3510 = vrot.slane %v3509, 1
    %v3511 = vsel %vm821, %v3509, %v3510
    %v3513 = vmul.f32 %v3482, %v3511
    %v3514 = vadd.f32 %v3465, %v3513
    %s3515 = sld [smem:[#allocation8 + $0xb]]
    %v3516 = vstv %s3515
    %v3517 = vmul.f32 %v3516, %v2975
    %v3518 = vmul.f32 %v3516, %v2974
    %s3519 = sld [smem:[#allocation8 + $0x3c]]
    %v3520 = vstv %s3519
    %v3521 = vmul.f32 %v3520, %v2975
    %v3522 = vmul.f32 %v3520, %v2974
    %v3525 = vrot.slane %v3521, 1
    %v3526 = vrot.slane %v3522, 1
    %v3529 = vadd.f32 %v3517, %v3525
    %v3530 = vadd.f32 %v3518, %v3526
    %v3531 = vld [vmem:[%s842] ss:$8 sm:$0x3]
    %v3534 = vcombine.low %v3529, %v3530
    %v3536 = vunpack.c.l.s4 1966171168
    %v3537 = vunpack.c.0.s8 %v3536
    %v3538 = vlaneseq
    %v3539 = vshrl.u32 %v3538, 7
    %v3540 = vsub.s32 %v3537, %v3539
    %v3541 = vrot.slane %v3534, %v3540
    %v3543 = vunpack.c.l.s4 1966171168
    %v3544 = vunpack.c.0.s8 %v3543
    %v3545 = vlaneseq
    %v3546 = vshrl.u32 %v3545, 7
    %v3547 = vsub.s32 %v3544, %v3546
    %v3548 = vrot.slane %v3529, %v3547
    %v3549 = vcombine.low %v3541, %v3548
    %v3551 = vunpack.c.l.s4 1966171168
    %v3552 = vunpack.c.0.s8 %v3551
    %v3553 = vlaneseq
    %v3554 = vshrl.u32 %v3553, 7
    %v3555 = vsub.s32 %v3552, %v3554
    %v3556 = vrot.slane %v3549, %v3555
    %3557 = vrot.lane.b32.xlu0 %v3556, 31
    %v3558 = vpop.permute.xlu0 %3557
    %v3559 = vrot.slane %v3558, 1
    %v3560 = vsel %vm872, %v3558, %v3559
    %v3562 = vmul.f32 %v3531, %v3560
    %v3563 = vadd.f32 %v3514, %v3562
    %s3564 = sld [smem:[#allocation8 + $0xc]]
    %v3565 = vstv %s3564
    %v3566 = vmul.f32 %v3565, %v2975
    %v3567 = vmul.f32 %v3565, %v2974
    %s3568 = sld [smem:[#allocation8 + $0x3d]]
    %v3569 = vstv %s3568
    %v3570 = vmul.f32 %v3569, %v2975
    %v3571 = vmul.f32 %v3569, %v2974
    %v3574 = vrot.slane %v3570, 1
    %v3575 = vrot.slane %v3571, 1
    %v3578 = vadd.f32 %v3566, %v3574
    %v3579 = vadd.f32 %v3567, %v3575
    %v3580 = vld [vmem:[%s893] ss:$8 sm:$0x3]
    %v3583 = vcombine.low %v3578, %v3579
    %v3585 = vunpack.c.l.s4 1966171168
    %v3586 = vunpack.c.0.s8 %v3585
    %v3587 = vlaneseq
    %v3588 = vshrl.u32 %v3587, 7
    %v3589 = vsub.s32 %v3586, %v3588
    %v3590 = vrot.slane %v3583, %v3589
    %v3592 = vunpack.c.l.s4 1966171168
    %v3593 = vunpack.c.0.s8 %v3592
    %v3594 = vlaneseq
    %v3595 = vshrl.u32 %v3594, 7
    %v3596 = vsub.s32 %v3593, %v3595
    %v3597 = vrot.slane %v3578, %v3596
    %v3598 = vcombine.low %v3590, %v3597
    %v3600 = vunpack.c.l.s4 1966171168
    %v3601 = vunpack.c.0.s8 %v3600
    %v3602 = vlaneseq
    %v3603 = vshrl.u32 %v3602, 7
    %v3604 = vsub.s32 %v3601, %v3603
    %v3605 = vrot.slane %v3598, %v3604
    %3606 = vrot.lane.b32.xlu0 %v3605, 30
    %v3607 = vpop.permute.xlu0 %3606
    %v3608 = vrot.slane %v3607, 1
    %v3609 = vsel %vm923, %v3607, %v3608
    %v3611 = vmul.f32 %v3580, %v3609
    %v3612 = vadd.f32 %v3563, %v3611
    %s3613 = sld [smem:[#allocation8 + $0xd]]
    %v3614 = vstv %s3613
    %v3615 = vmul.f32 %v3614, %v2975
    %v3616 = vmul.f32 %v3614, %v2974
    %s3617 = sld [smem:[#allocation8 + $0x3e]]
    %v3618 = vstv %s3617
    %v3619 = vmul.f32 %v3618, %v2975
    %v3620 = vmul.f32 %v3618, %v2974
    %v3623 = vrot.slane %v3619, 1
    %v3624 = vrot.slane %v3620, 1
    %v3627 = vadd.f32 %v3615, %v3623
    %v3628 = vadd.f32 %v3616, %v3624
    %v3629 = vld [vmem:[%s944] ss:$8 sm:$0x3]
    %v3632 = vcombine.low %v3627, %v3628
    %v3634 = vunpack.c.l.s4 1966171168
    %v3635 = vunpack.c.0.s8 %v3634
    %v3636 = vlaneseq
    %v3637 = vshrl.u32 %v3636, 7
    %v3638 = vsub.s32 %v3635, %v3637
    %v3639 = vrot.slane %v3632, %v3638
    %v3641 = vunpack.c.l.s4 1966171168
    %v3642 = vunpack.c.0.s8 %v3641
    %v3643 = vlaneseq
    %v3644 = vshrl.u32 %v3643, 7
    %v3645 = vsub.s32 %v3642, %v3644
    %v3646 = vrot.slane %v3627, %v3645
    %v3647 = vcombine.low %v3639, %v3646
    %v3649 = vunpack.c.l.s4 1966171168
    %v3650 = vunpack.c.0.s8 %v3649
    %v3651 = vlaneseq
    %v3652 = vshrl.u32 %v3651, 7
    %v3653 = vsub.s32 %v3650, %v3652
    %v3654 = vrot.slane %v3647, %v3653
    %3655 = vrot.lane.b32.xlu0 %v3654, 29
    %v3656 = vpop.permute.xlu0 %3655
    %v3657 = vrot.slane %v3656, 1
    %v3658 = vsel %vm974, %v3656, %v3657
    %v3660 = vmul.f32 %v3629, %v3658
    %v3661 = vadd.f32 %v3612, %v3660
    %s3662 = sld [smem:[#allocation8 + $0xe]]
    %v3663 = vstv %s3662
    %v3664 = vmul.f32 %v3663, %v2975
    %v3665 = vmul.f32 %v3663, %v2974
    %s3666 = sld [smem:[#allocation8 + $0x3f]]
    %v3667 = vstv %s3666
    %v3668 = vmul.f32 %v3667, %v2975
    %v3669 = vmul.f32 %v3667, %v2974
    %v3672 = vrot.slane %v3668, 1
    %v3673 = vrot.slane %v3669, 1
    %v3676 = vadd.f32 %v3664, %v3672
    %v3677 = vadd.f32 %v3665, %v3673
    %v3678 = vld [vmem:[%s995] ss:$8 sm:$0x3]
    %v3681 = vcombine.low %v3676, %v3677
    %v3683 = vunpack.c.l.s4 1966171168
    %v3684 = vunpack.c.0.s8 %v3683
    %v3685 = vlaneseq
    %v3686 = vshrl.u32 %v3685, 7
    %v3687 = vsub.s32 %v3684, %v3686
    %v3688 = vrot.slane %v3681, %v3687
    %v3690 = vunpack.c.l.s4 1966171168
    %v3691 = vunpack.c.0.s8 %v3690
    %v3692 = vlaneseq
    %v3693 = vshrl.u32 %v3692, 7
    %v3694 = vsub.s32 %v3691, %v3693
    %v3695 = vrot.slane %v3676, %v3694
    %v3696 = vcombine.low %v3688, %v3695
    %v3698 = vunpack.c.l.s4 1966171168
    %v3699 = vunpack.c.0.s8 %v3698
    %v3700 = vlaneseq
    %v3701 = vshrl.u32 %v3700, 7
    %v3702 = vsub.s32 %v3699, %v3701
    %v3703 = vrot.slane %v3696, %v3702
    %3704 = vrot.lane.b32.xlu0 %v3703, 19
    %v3705 = vpop.permute.xlu0 %3704
    %v3706 = vrot.slane %v3705, 1
    %v3707 = vsel %vm1025, %v3705, %v3706
    %v3709 = vmul.f32 %v3678, %v3707
    %v3710 = vadd.f32 %v3661, %v3709
    %s3711 = sld [smem:[#allocation8 + $0xf]]
    %v3712 = vstv %s3711
    %v3713 = vmul.f32 %v3712, %v2975
    %v3714 = vmul.f32 %v3712, %v2974
    %s3715 = sld [smem:[#allocation8 + $0x40]]
    %v3716 = vstv %s3715
    %v3717 = vmul.f32 %v3716, %v2975
    %v3718 = vmul.f32 %v3716, %v2974
    %v3721 = vrot.slane %v3717, 1
    %v3722 = vrot.slane %v3718, 1
    %v3725 = vadd.f32 %v3713, %v3721
    %v3726 = vadd.f32 %v3714, %v3722
    %v3727 = vld [vmem:[%s1046] ss:$8 sm:$0x3]
    %v3730 = vcombine.low %v3725, %v3726
    %v3732 = vunpack.c.l.s4 1966171168
    %v3733 = vunpack.c.0.s8 %v3732
    %v3734 = vlaneseq
    %v3735 = vshrl.u32 %v3734, 7
    %v3736 = vsub.s32 %v3733, %v3735
    %v3737 = vrot.slane %v3730, %v3736
    %v3739 = vunpack.c.l.s4 1966171168
    %v3740 = vunpack.c.0.s8 %v3739
    %v3741 = vlaneseq
    %v3742 = vshrl.u32 %v3741, 7
    %v3743 = vsub.s32 %v3740, %v3742
    %v3744 = vrot.slane %v3725, %v3743
    %v3745 = vcombine.low %v3737, %v3744
    %v3747 = vunpack.c.l.s4 1966171168
    %v3748 = vunpack.c.0.s8 %v3747
    %v3749 = vlaneseq
    %v3750 = vshrl.u32 %v3749, 7
    %v3751 = vsub.s32 %v3748, %v3750
    %v3752 = vrot.slane %v3745, %v3751
    %3753 = vrot.lane.b32.xlu0 %v3752, 18
    %v3754 = vpop.permute.xlu0 %3753
    %v3755 = vrot.slane %v3754, 1
    %v3756 = vsel %vm1076, %v3754, %v3755
    %v3758 = vmul.f32 %v3727, %v3756
    %v3759 = vadd.f32 %v3710, %v3758
    %s3760 = sld [smem:[#allocation8 + $0x10]]
    %v3761 = vstv %s3760
    %v3762 = vmul.f32 %v3761, %v2975
    %v3763 = vmul.f32 %v3761, %v2974
    %s3764 = sld [smem:[#allocation8 + $0x41]]
    %v3765 = vstv %s3764
    %v3766 = vmul.f32 %v3765, %v2975
    %v3767 = vmul.f32 %v3765, %v2974
    %v3770 = vrot.slane %v3766, 1
    %v3771 = vrot.slane %v3767, 1
    %v3774 = vadd.f32 %v3762, %v3770
    %v3775 = vadd.f32 %v3763, %v3771
    %v3776 = vld [vmem:[%s1097] ss:$8 sm:$0x3]
    %v3779 = vcombine.low %v3774, %v3775
    %v3781 = vunpack.c.l.s4 1966171168
    %v3782 = vunpack.c.0.s8 %v3781
    %v3783 = vlaneseq
    %v3784 = vshrl.u32 %v3783, 7
    %v3785 = vsub.s32 %v3782, %v3784
    %v3786 = vrot.slane %v3779, %v3785
    %v3788 = vunpack.c.l.s4 1966171168
    %v3789 = vunpack.c.0.s8 %v3788
    %v3790 = vlaneseq
    %v3791 = vshrl.u32 %v3790, 7
    %v3792 = vsub.s32 %v3789, %v3791
    %v3793 = vrot.slane %v3774, %v3792
    %v3794 = vcombine.low %v3786, %v3793
    %v3796 = vunpack.c.l.s4 1966171168
    %v3797 = vunpack.c.0.s8 %v3796
    %v3798 = vlaneseq
    %v3799 = vshrl.u32 %v3798, 7
    %v3800 = vsub.s32 %v3797, %v3799
    %v3801 = vrot.slane %v3794, %v3800
    %3802 = vrot.lane.b32.xlu0 %v3801, 17
    %v3803 = vpop.permute.xlu0 %3802
    %v3804 = vrot.slane %v3803, 1
    %v3805 = vsel %vm1127, %v3803, %v3804
    %v3807 = vmul.f32 %v3776, %v3805
    %v3808 = vadd.f32 %v3759, %v3807
    %s3809 = sld [smem:[#allocation8 + $0x11]]
    %v3810 = vstv %s3809
    %v3811 = vmul.f32 %v3810, %v2975
    %v3812 = vmul.f32 %v3810, %v2974
    %s3813 = sld [smem:[#allocation8 + $0x42]]
    %v3814 = vstv %s3813
    %v3815 = vmul.f32 %v3814, %v2975
    %v3816 = vmul.f32 %v3814, %v2974
    %v3819 = vrot.slane %v3815, 1
    %v3820 = vrot.slane %v3816, 1
    %v3823 = vadd.f32 %v3811, %v3819
    %v3824 = vadd.f32 %v3812, %v3820
    %v3825 = vld [vmem:[%s1148] ss:$8 sm:$0x3]
    %v3828 = vcombine.low %v3823, %v3824
    %v3830 = vunpack.c.l.s4 1966171168
    %v3831 = vunpack.c.0.s8 %v3830
    %v3832 = vlaneseq
    %v3833 = vshrl.u32 %v3832, 7
    %v3834 = vsub.s32 %v3831, %v3833
    %v3835 = vrot.slane %v3828, %v3834
    %v3837 = vunpack.c.l.s4 1966171168
    %v3838 = vunpack.c.0.s8 %v3837
    %v3839 = vlaneseq
    %v3840 = vshrl.u32 %v3839, 7
    %v3841 = vsub.s32 %v3838, %v3840
    %v3842 = vrot.slane %v3823, %v3841
    %v3843 = vcombine.low %v3835, %v3842
    %v3845 = vunpack.c.l.s4 1966171168
    %v3846 = vunpack.c.0.s8 %v3845
    %v3847 = vlaneseq
    %v3848 = vshrl.u32 %v3847, 7
    %v3849 = vsub.s32 %v3846, %v3848
    %v3850 = vrot.slane %v3843, %v3849
    %3851 = vrot.lane.b32.xlu0 %v3850, 16
    %v3852 = vpop.permute.xlu0 %3851
    %v3853 = vrot.slane %v3852, 1
    %v3854 = vsel %vm1178, %v3852, %v3853
    %v3856 = vmul.f32 %v3825, %v3854
    %v3857 = vadd.f32 %v3808, %v3856
    %s3858 = sld [smem:[#allocation8 + $0x12]]
    %v3859 = vstv %s3858
    %v3860 = vmul.f32 %v3859, %v2975
    %v3861 = vmul.f32 %v3859, %v2974
    %s3862 = sld [smem:[#allocation8 + $0x43]]
    %v3863 = vstv %s3862
    %v3864 = vmul.f32 %v3863, %v2975
    %v3865 = vmul.f32 %v3863, %v2974
    %v3868 = vrot.slane %v3864, 1
    %v3869 = vrot.slane %v3865, 1
    %v3872 = vadd.f32 %v3860, %v3868
    %v3873 = vadd.f32 %v3861, %v3869
    %v3874 = vld [vmem:[%s1199] ss:$8 sm:$0x3]
    %v3877 = vcombine.low %v3872, %v3873
    %v3879 = vunpack.c.l.s4 1966171168
    %v3880 = vunpack.c.0.s8 %v3879
    %v3881 = vlaneseq
    %v3882 = vshrl.u32 %v3881, 7
    %v3883 = vsub.s32 %v3880, %v3882
    %v3884 = vrot.slane %v3877, %v3883
    %v3886 = vunpack.c.l.s4 1966171168
    %v3887 = vunpack.c.0.s8 %v3886
    %v3888 = vlaneseq
    %v3889 = vshrl.u32 %v3888, 7
    %v3890 = vsub.s32 %v3887, %v3889
    %v3891 = vrot.slane %v3872, %v3890
    %v3892 = vcombine.low %v3884, %v3891
    %v3894 = vunpack.c.l.s4 1966171168
    %v3895 = vunpack.c.0.s8 %v3894
    %v3896 = vlaneseq
    %v3897 = vshrl.u32 %v3896, 7
    %v3898 = vsub.s32 %v3895, %v3897
    %v3899 = vrot.slane %v3892, %v3898
    %3900 = vrot.lane.b32.xlu0 %v3899, 15
    %v3901 = vpop.permute.xlu0 %3900
    %v3902 = vrot.slane %v3901, 1
    %v3903 = vsel %vm1229, %v3901, %v3902
    %v3905 = vmul.f32 %v3874, %v3903
    %v3906 = vadd.f32 %v3857, %v3905
    %s3907 = sld [smem:[#allocation8 + $0x13]]
    %v3908 = vstv %s3907
    %v3909 = vmul.f32 %v3908, %v2975
    %v3910 = vmul.f32 %v3908, %v2974
    %s3911 = sld [smem:[#allocation8 + $0x44]]
    %v3912 = vstv %s3911
    %v3913 = vmul.f32 %v3912, %v2975
    %v3914 = vmul.f32 %v3912, %v2974
    %v3917 = vrot.slane %v3913, 1
    %v3918 = vrot.slane %v3914, 1
    %v3921 = vadd.f32 %v3909, %v3917
    %v3922 = vadd.f32 %v3910, %v3918
    %v3923 = vld [vmem:[%s1250] ss:$8 sm:$0x3]
    %v3926 = vcombine.low %v3921, %v3922
    %v3928 = vunpack.c.l.s4 1966171168
    %v3929 = vunpack.c.0.s8 %v3928
    %v3930 = vlaneseq
    %v3931 = vshrl.u32 %v3930, 7
    %v3932 = vsub.s32 %v3929, %v3931
    %v3933 = vrot.slane %v3926, %v3932
    %v3935 = vunpack.c.l.s4 1966171168
    %v3936 = vunpack.c.0.s8 %v3935
    %v3937 = vlaneseq
    %v3938 = vshrl.u32 %v3937, 7
    %v3939 = vsub.s32 %v3936, %v3938
    %v3940 = vrot.slane %v3921, %v3939
    %v3941 = vcombine.low %v3933, %v3940
    %v3943 = vunpack.c.l.s4 1966171168
    %v3944 = vunpack.c.0.s8 %v3943
    %v3945 = vlaneseq
    %v3946 = vshrl.u32 %v3945, 7
    %v3947 = vsub.s32 %v3944, %v3946
    %v3948 = vrot.slane %v3941, %v3947
    %3949 = vrot.lane.b32.xlu0 %v3948, 14
    %v3950 = vpop.permute.xlu0 %3949
    %v3951 = vrot.slane %v3950, 1
    %v3952 = vsel %vm1280, %v3950, %v3951
    %v3954 = vmul.f32 %v3923, %v3952
    %v3955 = vadd.f32 %v3906, %v3954
    %s3956 = sld [smem:[#allocation8 + $0x14]]
    %v3957 = vstv %s3956
    %v3958 = vmul.f32 %v3957, %v2975
    %v3959 = vmul.f32 %v3957, %v2974
    %s3960 = sld [smem:[#allocation8 + $0x45]]
    %v3961 = vstv %s3960
    %v3962 = vmul.f32 %v3961, %v2975
    %v3963 = vmul.f32 %v3961, %v2974
    %v3966 = vrot.slane %v3962, 1
    %v3967 = vrot.slane %v3963, 1
    %v3970 = vadd.f32 %v3958, %v3966
    %v3971 = vadd.f32 %v3959, %v3967
    %v3972 = vld [vmem:[%s1301] ss:$8 sm:$0x3]
    %v3975 = vcombine.low %v3970, %v3971
    %v3977 = vunpack.c.l.s4 1966171168
    %v3978 = vunpack.c.0.s8 %v3977
    %v3979 = vlaneseq
    %v3980 = vshrl.u32 %v3979, 7
    %v3981 = vsub.s32 %v3978, %v3980
    %v3982 = vrot.slane %v3975, %v3981
    %v3984 = vunpack.c.l.s4 1966171168
    %v3985 = vunpack.c.0.s8 %v3984
    %v3986 = vlaneseq
    %v3987 = vshrl.u32 %v3986, 7
    %v3988 = vsub.s32 %v3985, %v3987
    %v3989 = vrot.slane %v3970, %v3988
    %v3990 = vcombine.low %v3982, %v3989
    %v3992 = vunpack.c.l.s4 1966171168
    %v3993 = vunpack.c.0.s8 %v3992
    %v3994 = vlaneseq
    %v3995 = vshrl.u32 %v3994, 7
    %v3996 = vsub.s32 %v3993, %v3995
    %v3997 = vrot.slane %v3990, %v3996
    %3998 = vrot.lane.b32.xlu0 %v3997, 13
    %v3999 = vpop.permute.xlu0 %3998
    %v4000 = vrot.slane %v3999, 1
    %v4001 = vsel %vm1331, %v3999, %v4000
    %v4003 = vmul.f32 %v3972, %v4001
    %v4004 = vadd.f32 %v3955, %v4003
    %s4005 = sld [smem:[#allocation8 + $0x15]]
    %v4006 = vstv %s4005
    %v4007 = vmul.f32 %v4006, %v2975
    %v4008 = vmul.f32 %v4006, %v2974
    %s4009 = sld [smem:[#allocation8 + $0x46]]
    %v4010 = vstv %s4009
    %v4011 = vmul.f32 %v4010, %v2975
    %v4012 = vmul.f32 %v4010, %v2974
    %v4015 = vrot.slane %v4011, 1
    %v4016 = vrot.slane %v4012, 1
    %v4019 = vadd.f32 %v4007, %v4015
    %v4020 = vadd.f32 %v4008, %v4016
    %v4021 = vld [vmem:[%s1352] ss:$8 sm:$0x3]
    %v4024 = vcombine.low %v4019, %v4020
    %v4026 = vunpack.c.l.s4 1966171168
    %v4027 = vunpack.c.0.s8 %v4026
    %v4028 = vlaneseq
    %v4029 = vshrl.u32 %v4028, 7
    %v4030 = vsub.s32 %v4027, %v4029
    %v4031 = vrot.slane %v4024, %v4030
    %v4033 = vunpack.c.l.s4 1966171168
    %v4034 = vunpack.c.0.s8 %v4033
    %v4035 = vlaneseq
    %v4036 = vshrl.u32 %v4035, 7
    %v4037 = vsub.s32 %v4034, %v4036
    %v4038 = vrot.slane %v4019, %v4037
    %v4039 = vcombine.low %v4031, %v4038
    %v4041 = vunpack.c.l.s4 1966171168
    %v4042 = vunpack.c.0.s8 %v4041
    %v4043 = vlaneseq
    %v4044 = vshrl.u32 %v4043, 7
    %v4045 = vsub.s32 %v4042, %v4044
    %v4046 = vrot.slane %v4039, %v4045
    %4047 = vrot.lane.b32.xlu0 %v4046, 3
    %v4048 = vpop.permute.xlu0 %4047
    %v4049 = vrot.slane %v4048, 1
    %v4050 = vsel %vm1382, %v4048, %v4049
    %v4052 = vmul.f32 %v4021, %v4050
    %v4053 = vadd.f32 %v4004, %v4052
    %s4054 = sld [smem:[#allocation8 + $0x16]]
    %v4055 = vstv %s4054
    %v4056 = vmul.f32 %v4055, %v2975
    %v4057 = vmul.f32 %v4055, %v2974
    %s4058 = sld [smem:[#allocation8 + $0x47]]
    %v4059 = vstv %s4058
    %v4060 = vmul.f32 %v4059, %v2975
    %v4061 = vmul.f32 %v4059, %v2974
    %v4064 = vrot.slane %v4060, 1
    %v4065 = vrot.slane %v4061, 1
    %v4068 = vadd.f32 %v4056, %v4064
    %v4069 = vadd.f32 %v4057, %v4065
    %v4070 = vld [vmem:[%s1403] ss:$8 sm:$0x3]
    %v4073 = vcombine.low %v4068, %v4069
    %v4075 = vunpack.c.l.s4 1966171168
    %v4076 = vunpack.c.0.s8 %v4075
    %v4077 = vlaneseq
    %v4078 = vshrl.u32 %v4077, 7
    %v4079 = vsub.s32 %v4076, %v4078
    %v4080 = vrot.slane %v4073, %v4079
    %v4082 = vunpack.c.l.s4 1966171168
    %v4083 = vunpack.c.0.s8 %v4082
    %v4084 = vlaneseq
    %v4085 = vshrl.u32 %v4084, 7
    %v4086 = vsub.s32 %v4083, %v4085
    %v4087 = vrot.slane %v4068, %v4086
    %v4088 = vcombine.low %v4080, %v4087
    %v4090 = vunpack.c.l.s4 1966171168
    %v4091 = vunpack.c.0.s8 %v4090
    %v4092 = vlaneseq
    %v4093 = vshrl.u32 %v4092, 7
    %v4094 = vsub.s32 %v4091, %v4093
    %v4095 = vrot.slane %v4088, %v4094
    %4096 = vrot.lane.b32.xlu0 %v4095, 2
    %v4097 = vpop.permute.xlu0 %4096
    %v4098 = vrot.slane %v4097, 1
    %v4099 = vsel %vm111, %v4097, %v4098
    %v4101 = vmul.f32 %v4070, %v4099
    %v4102 = vadd.f32 %v4053, %v4101
    %s4103 = sld [smem:[#allocation8 + $0x17]]
    %v4104 = vstv %s4103
    %v4105 = vmul.f32 %v4104, %v2975
    %v4106 = vmul.f32 %v4104, %v2974
    %s4107 = sld [smem:[#allocation8 + $0x48]]
    %v4108 = vstv %s4107
    %v4109 = vmul.f32 %v4108, %v2975
    %v4110 = vmul.f32 %v4108, %v2974
    %v4113 = vrot.slane %v4109, 1
    %v4114 = vrot.slane %v4110, 1
    %v4117 = vadd.f32 %v4105, %v4113
    %v4118 = vadd.f32 %v4106, %v4114
    %v4119 = vld [vmem:[%s1453] ss:$8 sm:$0x3]
    %v4122 = vcombine.low %v4117, %v4118
    %v4124 = vunpack.c.l.s4 1966171168
    %v4125 = vunpack.c.0.s8 %v4124
    %v4126 = vlaneseq
    %v4127 = vshrl.u32 %v4126, 7
    %v4128 = vsub.s32 %v4125, %v4127
    %v4129 = vrot.slane %v4122, %v4128
    %v4131 = vunpack.c.l.s4 1966171168
    %v4132 = vunpack.c.0.s8 %v4131
    %v4133 = vlaneseq
    %v4134 = vshrl.u32 %v4133, 7
    %v4135 = vsub.s32 %v4132, %v4134
    %v4136 = vrot.slane %v4117, %v4135
    %v4137 = vcombine.low %v4129, %v4136
    %v4139 = vunpack.c.l.s4 1966171168
    %v4140 = vunpack.c.0.s8 %v4139
    %v4141 = vlaneseq
    %v4142 = vshrl.u32 %v4141, 7
    %v4143 = vsub.s32 %v4140, %v4142
    %v4144 = vrot.slane %v4137, %v4143
    %4145 = vrot.lane.b32.xlu0 %v4144, 1
    %v4146 = vpop.permute.xlu0 %4145
    %v4147 = vrot.slane %v4146, 1
    %v4148 = vsel %vm1483, %v4146, %v4147
    %v4150 = vmul.f32 %v4119, %v4148
    %v4151 = vadd.f32 %v4102, %v4150
    %s4152 = sld [smem:[#allocation8 + $0x18]]
    %v4153 = vstv %s4152
    %v4154 = vmul.f32 %v4153, %v2974
    %v4155 = vmul.f32 %v4153, %v2975
    %s4156 = sld [smem:[#allocation8 + $0x49]]
    %v4157 = vstv %s4156
    %v4158 = vmul.f32 %v4157, %v2974
    %v4159 = vmul.f32 %v4157, %v2975
    %v4162 = vrot.slane %v4158, 1
    %v4163 = vrot.slane %v4159, 1
    %v4166 = vadd.f32 %v4154, %v4162
    %v4167 = vadd.f32 %v4155, %v4163
    %v4168 = vld [vmem:[%s1504] ss:$8 sm:$0x3]
    %v4171 = vcombine.low %v4166, %v4167
    %v4173 = vunpack.c.l.s4 1966171168
    %v4174 = vunpack.c.0.s8 %v4173
    %v4175 = vlaneseq
    %v4176 = vshrl.u32 %v4175, 7
    %v4177 = vsub.s32 %v4174, %v4176
    %v4178 = vrot.slane %v4171, %v4177
    %v4180 = vunpack.c.l.s4 1966171168
    %v4181 = vunpack.c.0.s8 %v4180
    %v4182 = vlaneseq
    %v4183 = vshrl.u32 %v4182, 7
    %v4184 = vsub.s32 %v4181, %v4183
    %v4185 = vrot.slane %v4178, %v4184
    %v4187 = vmul.f32 %v4168, %v4185
    %v4188 = vadd.f32 %v4151, %v4187
    %s4189 = sld [smem:[#allocation8 + $0x19]]
    %v4190 = vstv %s4189
    %v4191 = vmul.f32 %v4190, %v2974
    %v4192 = vmul.f32 %v4190, %v2975
    %s4193 = sld [smem:[#allocation8 + $0x4a]]
    %v4194 = vstv %s4193
    %v4195 = vmul.f32 %v4194, %v2974
    %v4196 = vmul.f32 %v4194, %v2975
    %v4199 = vrot.slane %v4195, 1
    %v4200 = vrot.slane %v4196, 1
    %v4203 = vadd.f32 %v4191, %v4199
    %v4204 = vadd.f32 %v4192, %v4200
    %v4205 = vld [vmem:[%s1542] ss:$8 sm:$0x3]
    %v4208 = vcombine.low %v4203, %v4204
    %v4210 = vunpack.c.l.s4 1966171168
    %v4211 = vunpack.c.0.s8 %v4210
    %v4212 = vlaneseq
    %v4213 = vshrl.u32 %v4212, 7
    %v4214 = vsub.s32 %v4211, %v4213
    %v4215 = vrot.slane %v4208, %v4214
    %v4217 = vunpack.c.l.s4 1966171168
    %v4218 = vunpack.c.0.s8 %v4217
    %v4219 = vlaneseq
    %v4220 = vshrl.u32 %v4219, 7
    %v4221 = vsub.s32 %v4218, %v4220
    %v4222 = vrot.slane %v4203, %v4221
    %v4223 = vcombine.low %v4215, %v4222
    %v4225 = vunpack.c.l.s4 1966171168
    %v4226 = vunpack.c.0.s8 %v4225
    %v4227 = vlaneseq
    %v4228 = vshrl.u32 %v4227, 7
    %v4229 = vsub.s32 %v4226, %v4228
    %v4230 = vrot.slane %v4223, %v4229
    %4231 = vrot.lane.b32.xlu0 %v4230, 127
    %v4232 = vpop.permute.xlu0 %4231
    %v4233 = vrot.slane %v4232, 1
    %v4234 = vsel %vm1572, %v4232, %v4233
    %v4236 = vmul.f32 %v4205, %v4234
    %v4237 = vadd.f32 %v4188, %v4236
    %s4238 = sld [smem:[#allocation8 + $0x1a]]
    %v4239 = vstv %s4238
    %v4240 = vmul.f32 %v4239, %v2974
    %v4241 = vmul.f32 %v4239, %v2975
    %s4242 = sld [smem:[#allocation8 + $0x4b]]
    %v4243 = vstv %s4242
    %v4244 = vmul.f32 %v4243, %v2974
    %v4245 = vmul.f32 %v4243, %v2975
    %v4248 = vrot.slane %v4244, 1
    %v4249 = vrot.slane %v4245, 1
    %v4252 = vadd.f32 %v4240, %v4248
    %v4253 = vadd.f32 %v4241, %v4249
    %v4254 = vld [vmem:[%s1593] ss:$8 sm:$0x3]
    %v4257 = vcombine.low %v4252, %v4253
    %v4259 = vunpack.c.l.s4 1966171168
    %v4260 = vunpack.c.0.s8 %v4259
    %v4261 = vlaneseq
    %v4262 = vshrl.u32 %v4261, 7
    %v4263 = vsub.s32 %v4260, %v4262
    %v4264 = vrot.slane %v4257, %v4263
    %v4266 = vunpack.c.l.s4 1966171168
    %v4267 = vunpack.c.0.s8 %v4266
    %v4268 = vlaneseq
    %v4269 = vshrl.u32 %v4268, 7
    %v4270 = vsub.s32 %v4267, %v4269
    %v4271 = vrot.slane %v4252, %v4270
    %v4272 = vcombine.low %v4264, %v4271
    %v4274 = vunpack.c.l.s4 1966171168
    %v4275 = vunpack.c.0.s8 %v4274
    %v4276 = vlaneseq
    %v4277 = vshrl.u32 %v4276, 7
    %v4278 = vsub.s32 %v4275, %v4277
    %v4279 = vrot.slane %v4272, %v4278
    %4280 = vrot.lane.b32.xlu0 %v4279, 126
    %v4281 = vpop.permute.xlu0 %4280
    %v4282 = vrot.slane %v4281, 1
    %v4283 = vsel %vm1623, %v4281, %v4282
    %v4285 = vmul.f32 %v4254, %v4283
    %v4286 = vadd.f32 %v4237, %v4285
    %s4287 = sld [smem:[#allocation8 + $0x1b]]
    %v4288 = vstv %s4287
    %v4289 = vmul.f32 %v4288, %v2974
    %v4290 = vmul.f32 %v4288, %v2975
    %s4291 = sld [smem:[#allocation8 + $0x4c]]
    %v4292 = vstv %s4291
    %v4293 = vmul.f32 %v4292, %v2974
    %v4294 = vmul.f32 %v4292, %v2975
    %v4297 = vrot.slane %v4293, 1
    %v4298 = vrot.slane %v4294, 1
    %v4301 = vadd.f32 %v4289, %v4297
    %v4302 = vadd.f32 %v4290, %v4298
    %v4303 = vld [vmem:[%s1644] ss:$8 sm:$0x3]
    %v4306 = vcombine.low %v4301, %v4302
    %v4308 = vunpack.c.l.s4 1966171168
    %v4309 = vunpack.c.0.s8 %v4308
    %v4310 = vlaneseq
    %v4311 = vshrl.u32 %v4310, 7
    %v4312 = vsub.s32 %v4309, %v4311
    %v4313 = vrot.slane %v4306, %v4312
    %v4315 = vunpack.c.l.s4 1966171168
    %v4316 = vunpack.c.0.s8 %v4315
    %v4317 = vlaneseq
    %v4318 = vshrl.u32 %v4317, 7
    %v4319 = vsub.s32 %v4316, %v4318
    %v4320 = vrot.slane %v4301, %v4319
    %v4321 = vcombine.low %v4313, %v4320
    %v4323 = vunpack.c.l.s4 1966171168
    %v4324 = vunpack.c.0.s8 %v4323
    %v4325 = vlaneseq
    %v4326 = vshrl.u32 %v4325, 7
    %v4327 = vsub.s32 %v4324, %v4326
    %v4328 = vrot.slane %v4321, %v4327
    %4329 = vrot.lane.b32.xlu0 %v4328, 125
    %v4330 = vpop.permute.xlu0 %4329
    %v4331 = vrot.slane %v4330, 1
    %v4332 = vsel %vm1674, %v4330, %v4331
    %v4334 = vmul.f32 %v4303, %v4332
    %v4335 = vadd.f32 %v4286, %v4334
    %s4336 = sld [smem:[#allocation8 + $0x1c]]
    %v4337 = vstv %s4336
    %v4338 = vmul.f32 %v4337, %v2974
    %v4339 = vmul.f32 %v4337, %v2975
    %s4340 = sld [smem:[#allocation8 + $0x4d]]
    %v4341 = vstv %s4340
    %v4342 = vmul.f32 %v4341, %v2974
    %v4343 = vmul.f32 %v4341, %v2975
    %v4346 = vrot.slane %v4342, 1
    %v4347 = vrot.slane %v4343, 1
    %v4350 = vadd.f32 %v4338, %v4346
    %v4351 = vadd.f32 %v4339, %v4347
    %v4352 = vld [vmem:[%s1695] ss:$8 sm:$0x3]
    %v4355 = vcombine.low %v4350, %v4351
    %v4357 = vunpack.c.l.s4 1966171168
    %v4358 = vunpack.c.0.s8 %v4357
    %v4359 = vlaneseq
    %v4360 = vshrl.u32 %v4359, 7
    %v4361 = vsub.s32 %v4358, %v4360
    %v4362 = vrot.slane %v4355, %v4361
    %v4364 = vunpack.c.l.s4 1966171168
    %v4365 = vunpack.c.0.s8 %v4364
    %v4366 = vlaneseq
    %v4367 = vshrl.u32 %v4366, 7
    %v4368 = vsub.s32 %v4365, %v4367
    %v4369 = vrot.slane %v4350, %v4368
    %v4370 = vcombine.low %v4362, %v4369
    %v4372 = vunpack.c.l.s4 1966171168
    %v4373 = vunpack.c.0.s8 %v4372
    %v4374 = vlaneseq
    %v4375 = vshrl.u32 %v4374, 7
    %v4376 = vsub.s32 %v4373, %v4375
    %v4377 = vrot.slane %v4370, %v4376
    %4378 = vrot.lane.b32.xlu0 %v4377, 115
    %v4379 = vpop.permute.xlu0 %4378
    %v4380 = vrot.slane %v4379, 1
    %v4381 = vsel %vm1725, %v4379, %v4380
    %v4383 = vmul.f32 %v4352, %v4381
    %v4384 = vadd.f32 %v4335, %v4383
    %s4385 = sld [smem:[#allocation8 + $0x1d]]
    %v4386 = vstv %s4385
    %v4387 = vmul.f32 %v4386, %v2974
    %v4388 = vmul.f32 %v4386, %v2975
    %s4389 = sld [smem:[#allocation8 + $0x4e]]
    %v4390 = vstv %s4389
    %v4391 = vmul.f32 %v4390, %v2974
    %v4392 = vmul.f32 %v4390, %v2975
    %v4395 = vrot.slane %v4391, 1
    %v4396 = vrot.slane %v4392, 1
    %v4399 = vadd.f32 %v4387, %v4395
    %v4400 = vadd.f32 %v4388, %v4396
    %v4401 = vld [vmem:[%s1746] ss:$8 sm:$0x3]
    %v4404 = vcombine.low %v4399, %v4400
    %v4406 = vunpack.c.l.s4 1966171168
    %v4407 = vunpack.c.0.s8 %v4406
    %v4408 = vlaneseq
    %v4409 = vshrl.u32 %v4408, 7
    %v4410 = vsub.s32 %v4407, %v4409
    %v4411 = vrot.slane %v4404, %v4410
    %v4413 = vunpack.c.l.s4 1966171168
    %v4414 = vunpack.c.0.s8 %v4413
    %v4415 = vlaneseq
    %v4416 = vshrl.u32 %v4415, 7
    %v4417 = vsub.s32 %v4414, %v4416
    %v4418 = vrot.slane %v4399, %v4417
    %v4419 = vcombine.low %v4411, %v4418
    %v4421 = vunpack.c.l.s4 1966171168
    %v4422 = vunpack.c.0.s8 %v4421
    %v4423 = vlaneseq
    %v4424 = vshrl.u32 %v4423, 7
    %v4425 = vsub.s32 %v4422, %v4424
    %v4426 = vrot.slane %v4419, %v4425
    %4427 = vrot.lane.b32.xlu0 %v4426, 114
    %v4428 = vpop.permute.xlu0 %4427
    %v4429 = vrot.slane %v4428, 1
    %v4430 = vsel %vm1776, %v4428, %v4429
    %v4432 = vmul.f32 %v4401, %v4430
    %v4433 = vadd.f32 %v4384, %v4432
    %s4434 = sld [smem:[#allocation8 + $0x1e]]
    %v4435 = vstv %s4434
    %v4436 = vmul.f32 %v4435, %v2974
    %v4437 = vmul.f32 %v4435, %v2975
    %s4438 = sld [smem:[#allocation8 + $0x4f]]
    %v4439 = vstv %s4438
    %v4440 = vmul.f32 %v4439, %v2974
    %v4441 = vmul.f32 %v4439, %v2975
    %v4444 = vrot.slane %v4440, 1
    %v4445 = vrot.slane %v4441, 1
    %v4448 = vadd.f32 %v4436, %v4444
    %v4449 = vadd.f32 %v4437, %v4445
    %v4450 = vld [vmem:[%s1797] ss:$8 sm:$0x3]
    %v4453 = vcombine.low %v4448, %v4449
    %v4455 = vunpack.c.l.s4 1966171168
    %v4456 = vunpack.c.0.s8 %v4455
    %v4457 = vlaneseq
    %v4458 = vshrl.u32 %v4457, 7
    %v4459 = vsub.s32 %v4456, %v4458
    %v4460 = vrot.slane %v4453, %v4459
    %v4462 = vunpack.c.l.s4 1966171168
    %v4463 = vunpack.c.0.s8 %v4462
    %v4464 = vlaneseq
    %v4465 = vshrl.u32 %v4464, 7
    %v4466 = vsub.s32 %v4463, %v4465
    %v4467 = vrot.slane %v4448, %v4466
    %v4468 = vcombine.low %v4460, %v4467
    %v4470 = vunpack.c.l.s4 1966171168
    %v4471 = vunpack.c.0.s8 %v4470
    %v4472 = vlaneseq
    %v4473 = vshrl.u32 %v4472, 7
    %v4474 = vsub.s32 %v4471, %v4473
    %v4475 = vrot.slane %v4468, %v4474
    %4476 = vrot.lane.b32.xlu0 %v4475, 113
    %v4477 = vpop.permute.xlu0 %4476
    %v4478 = vrot.slane %v4477, 1
    %v4479 = vsel %vm1827, %v4477, %v4478
    %v4481 = vmul.f32 %v4450, %v4479
    %v4482 = vadd.f32 %v4433, %v4481
    %s4483 = sld [smem:[#allocation8 + $0x1f]]
    %v4484 = vstv %s4483
    %v4485 = vmul.f32 %v4484, %v2974
    %v4486 = vmul.f32 %v4484, %v2975
    %s4487 = sld [smem:[#allocation8 + $0x50]]
    %v4488 = vstv %s4487
    %v4489 = vmul.f32 %v4488, %v2974
    %v4490 = vmul.f32 %v4488, %v2975
    %v4493 = vrot.slane %v4489, 1
    %v4494 = vrot.slane %v4490, 1
    %v4497 = vadd.f32 %v4485, %v4493
    %v4498 = vadd.f32 %v4486, %v4494
    %v4499 = vld [vmem:[%s1848] ss:$8 sm:$0x3]
    %v4502 = vcombine.low %v4497, %v4498
    %v4504 = vunpack.c.l.s4 1966171168
    %v4505 = vunpack.c.0.s8 %v4504
    %v4506 = vlaneseq
    %v4507 = vshrl.u32 %v4506, 7
    %v4508 = vsub.s32 %v4505, %v4507
    %v4509 = vrot.slane %v4502, %v4508
    %v4511 = vunpack.c.l.s4 1966171168
    %v4512 = vunpack.c.0.s8 %v4511
    %v4513 = vlaneseq
    %v4514 = vshrl.u32 %v4513, 7
    %v4515 = vsub.s32 %v4512, %v4514
    %v4516 = vrot.slane %v4497, %v4515
    %v4517 = vcombine.low %v4509, %v4516
    %v4519 = vunpack.c.l.s4 1966171168
    %v4520 = vunpack.c.0.s8 %v4519
    %v4521 = vlaneseq
    %v4522 = vshrl.u32 %v4521, 7
    %v4523 = vsub.s32 %v4520, %v4522
    %v4524 = vrot.slane %v4517, %v4523
    %4525 = vrot.lane.b32.xlu0 %v4524, 112
    %v4526 = vpop.permute.xlu0 %4525
    %v4527 = vrot.slane %v4526, 1
    %v4528 = vsel %vm1878, %v4526, %v4527
    %v4530 = vmul.f32 %v4499, %v4528
    %v4531 = vadd.f32 %v4482, %v4530
    %s4532 = sld [smem:[#allocation8 + $0x20]]
    %v4533 = vstv %s4532
    %v4534 = vmul.f32 %v4533, %v2974
    %v4535 = vmul.f32 %v4533, %v2975
    %s4536 = sld [smem:[#allocation8 + $0x51]]
    %v4537 = vstv %s4536
    %v4538 = vmul.f32 %v4537, %v2974
    %v4539 = vmul.f32 %v4537, %v2975
    %v4542 = vrot.slane %v4538, 1
    %v4543 = vrot.slane %v4539, 1
    %v4546 = vadd.f32 %v4534, %v4542
    %v4547 = vadd.f32 %v4535, %v4543
    %v4548 = vld [vmem:[%s1899] ss:$8 sm:$0x3]
    %v4551 = vcombine.low %v4546, %v4547
    %v4553 = vunpack.c.l.s4 1966171168
    %v4554 = vunpack.c.0.s8 %v4553
    %v4555 = vlaneseq
    %v4556 = vshrl.u32 %v4555, 7
    %v4557 = vsub.s32 %v4554, %v4556
    %v4558 = vrot.slane %v4551, %v4557
    %v4560 = vunpack.c.l.s4 1966171168
    %v4561 = vunpack.c.0.s8 %v4560
    %v4562 = vlaneseq
    %v4563 = vshrl.u32 %v4562, 7
    %v4564 = vsub.s32 %v4561, %v4563
    %v4565 = vrot.slane %v4546, %v4564
    %v4566 = vcombine.low %v4558, %v4565
    %v4568 = vunpack.c.l.s4 1966171168
    %v4569 = vunpack.c.0.s8 %v4568
    %v4570 = vlaneseq
    %v4571 = vshrl.u32 %v4570, 7
    %v4572 = vsub.s32 %v4569, %v4571
    %v4573 = vrot.slane %v4566, %v4572
    %4574 = vrot.lane.b32.xlu0 %v4573, 111
    %v4575 = vpop.permute.xlu0 %4574
    %v4576 = vrot.slane %v4575, 1
    %v4577 = vsel %vm1929, %v4575, %v4576
    %v4579 = vmul.f32 %v4548, %v4577
    %v4580 = vadd.f32 %v4531, %v4579
    %s4581 = sld [smem:[#allocation8 + $0x21]]
    %v4582 = vstv %s4581
    %v4583 = vmul.f32 %v4582, %v2974
    %v4584 = vmul.f32 %v4582, %v2975
    %s4585 = sld [smem:[#allocation8 + $0x52]]
    %v4586 = vstv %s4585
    %v4587 = vmul.f32 %v4586, %v2974
    %v4588 = vmul.f32 %v4586, %v2975
    %v4591 = vrot.slane %v4587, 1
    %v4592 = vrot.slane %v4588, 1
    %v4595 = vadd.f32 %v4583, %v4591
    %v4596 = vadd.f32 %v4584, %v4592
    %v4597 = vld [vmem:[%s1950] ss:$8 sm:$0x3]
    %v4600 = vcombine.low %v4595, %v4596
    %v4602 = vunpack.c.l.s4 1966171168
    %v4603 = vunpack.c.0.s8 %v4602
    %v4604 = vlaneseq
    %v4605 = vshrl.u32 %v4604, 7
    %v4606 = vsub.s32 %v4603, %v4605
    %v4607 = vrot.slane %v4600, %v4606
    %v4609 = vunpack.c.l.s4 1966171168
    %v4610 = vunpack.c.0.s8 %v4609
    %v4611 = vlaneseq
    %v4612 = vshrl.u32 %v4611, 7
    %v4613 = vsub.s32 %v4610, %v4612
    %v4614 = vrot.slane %v4595, %v4613
    %v4615 = vcombine.low %v4607, %v4614
    %v4617 = vunpack.c.l.s4 1966171168
    %v4618 = vunpack.c.0.s8 %v4617
    %v4619 = vlaneseq
    %v4620 = vshrl.u32 %v4619, 7
    %v4621 = vsub.s32 %v4618, %v4620
    %v4622 = vrot.slane %v4615, %v4621
    %4623 = vrot.lane.b32.xlu0 %v4622, 110
    %v4624 = vpop.permute.xlu0 %4623
    %v4625 = vrot.slane %v4624, 1
    %v4626 = vsel %vm1980, %v4624, %v4625
    %v4628 = vmul.f32 %v4597, %v4626
    %v4629 = vadd.f32 %v4580, %v4628
    %s4630 = sld [smem:[#allocation8 + $0x22]]
    %v4631 = vstv %s4630
    %v4632 = vmul.f32 %v4631, %v2974
    %v4633 = vmul.f32 %v4631, %v2975
    %s4634 = sld [smem:[#allocation8 + $0x53]]
    %v4635 = vstv %s4634
    %v4636 = vmul.f32 %v4635, %v2974
    %v4637 = vmul.f32 %v4635, %v2975
    %v4640 = vrot.slane %v4636, 1
    %v4641 = vrot.slane %v4637, 1
    %v4644 = vadd.f32 %v4632, %v4640
    %v4645 = vadd.f32 %v4633, %v4641
    %v4646 = vld [vmem:[%s2001] ss:$8 sm:$0x3]
    %v4649 = vcombine.low %v4644, %v4645
    %v4651 = vunpack.c.l.s4 1966171168
    %v4652 = vunpack.c.0.s8 %v4651
    %v4653 = vlaneseq
    %v4654 = vshrl.u32 %v4653, 7
    %v4655 = vsub.s32 %v4652, %v4654
    %v4656 = vrot.slane %v4649, %v4655
    %v4658 = vunpack.c.l.s4 1966171168
    %v4659 = vunpack.c.0.s8 %v4658
    %v4660 = vlaneseq
    %v4661 = vshrl.u32 %v4660, 7
    %v4662 = vsub.s32 %v4659, %v4661
    %v4663 = vrot.slane %v4644, %v4662
    %v4664 = vcombine.low %v4656, %v4663
    %v4666 = vunpack.c.l.s4 1966171168
    %v4667 = vunpack.c.0.s8 %v4666
    %v4668 = vlaneseq
    %v4669 = vshrl.u32 %v4668, 7
    %v4670 = vsub.s32 %v4667, %v4669
    %v4671 = vrot.slane %v4664, %v4670
    %4672 = vrot.lane.b32.xlu0 %v4671, 109
    %v4673 = vpop.permute.xlu0 %4672
    %v4674 = vrot.slane %v4673, 1
    %v4675 = vsel %vm2031, %v4673, %v4674
    %v4677 = vmul.f32 %v4646, %v4675
    %v4678 = vadd.f32 %v4629, %v4677
    %s4679 = sld [smem:[#allocation8 + $0x23]]
    %v4680 = vstv %s4679
    %v4681 = vmul.f32 %v4680, %v2974
    %v4682 = vmul.f32 %v4680, %v2975
    %s4683 = sld [smem:[#allocation8 + $0x54]]
    %v4684 = vstv %s4683
    %v4685 = vmul.f32 %v4684, %v2974
    %v4686 = vmul.f32 %v4684, %v2975
    %v4689 = vrot.slane %v4685, 1
    %v4690 = vrot.slane %v4686, 1
    %v4693 = vadd.f32 %v4681, %v4689
    %v4694 = vadd.f32 %v4682, %v4690
    %v4695 = vld [vmem:[%s2052] ss:$8 sm:$0x3]
    %v4698 = vcombine.low %v4693, %v4694
    %v4700 = vunpack.c.l.s4 1966171168
    %v4701 = vunpack.c.0.s8 %v4700
    %v4702 = vlaneseq
    %v4703 = vshrl.u32 %v4702, 7
    %v4704 = vsub.s32 %v4701, %v4703
    %v4705 = vrot.slane %v4698, %v4704
    %v4707 = vunpack.c.l.s4 1966171168
    %v4708 = vunpack.c.0.s8 %v4707
    %v4709 = vlaneseq
    %v4710 = vshrl.u32 %v4709, 7
    %v4711 = vsub.s32 %v4708, %v4710
    %v4712 = vrot.slane %v4693, %v4711
    %v4713 = vcombine.low %v4705, %v4712
    %v4715 = vunpack.c.l.s4 1966171168
    %v4716 = vunpack.c.0.s8 %v4715
    %v4717 = vlaneseq
    %v4718 = vshrl.u32 %v4717, 7
    %v4719 = vsub.s32 %v4716, %v4718
    %v4720 = vrot.slane %v4713, %v4719
    %4721 = vrot.lane.b32.xlu0 %v4720, 99
    %v4722 = vpop.permute.xlu0 %4721
    %v4723 = vrot.slane %v4722, 1
    %v4724 = vsel %vm2082, %v4722, %v4723
    %v4726 = vmul.f32 %v4695, %v4724
    %v4727 = vadd.f32 %v4678, %v4726
    %s4728 = sld [smem:[#allocation8 + $0x24]]
    %v4729 = vstv %s4728
    %v4730 = vmul.f32 %v4729, %v2974
    %v4731 = vmul.f32 %v4729, %v2975
    %s4732 = sld [smem:[#allocation8 + $0x55]]
    %v4733 = vstv %s4732
    %v4734 = vmul.f32 %v4733, %v2974
    %v4735 = vmul.f32 %v4733, %v2975
    %v4738 = vrot.slane %v4734, 1
    %v4739 = vrot.slane %v4735, 1
    %v4742 = vadd.f32 %v4730, %v4738
    %v4743 = vadd.f32 %v4731, %v4739
    %v4744 = vld [vmem:[%s2103] ss:$8 sm:$0x3]
    %v4747 = vcombine.low %v4742, %v4743
    %v4749 = vunpack.c.l.s4 1966171168
    %v4750 = vunpack.c.0.s8 %v4749
    %v4751 = vlaneseq
    %v4752 = vshrl.u32 %v4751, 7
    %v4753 = vsub.s32 %v4750, %v4752
    %v4754 = vrot.slane %v4747, %v4753
    %v4756 = vunpack.c.l.s4 1966171168
    %v4757 = vunpack.c.0.s8 %v4756
    %v4758 = vlaneseq
    %v4759 = vshrl.u32 %v4758, 7
    %v4760 = vsub.s32 %v4757, %v4759
    %v4761 = vrot.slane %v4742, %v4760
    %v4762 = vcombine.low %v4754, %v4761
    %v4764 = vunpack.c.l.s4 1966171168
    %v4765 = vunpack.c.0.s8 %v4764
    %v4766 = vlaneseq
    %v4767 = vshrl.u32 %v4766, 7
    %v4768 = vsub.s32 %v4765, %v4767
    %v4769 = vrot.slane %v4762, %v4768
    %4770 = vrot.lane.b32.xlu0 %v4769, 98
    %v4771 = vpop.permute.xlu0 %4770
    %v4772 = vrot.slane %v4771, 1
    %v4773 = vsel %vm2133, %v4771, %v4772
    %v4775 = vmul.f32 %v4744, %v4773
    %v4776 = vadd.f32 %v4727, %v4775
    %s4777 = sld [smem:[#allocation8 + $0x25]]
    %v4778 = vstv %s4777
    %v4779 = vmul.f32 %v4778, %v2974
    %v4780 = vmul.f32 %v4778, %v2975
    %s4781 = sld [smem:[#allocation8 + $0x56]]
    %v4782 = vstv %s4781
    %v4783 = vmul.f32 %v4782, %v2974
    %v4784 = vmul.f32 %v4782, %v2975
    %v4787 = vrot.slane %v4783, 1
    %v4788 = vrot.slane %v4784, 1
    %v4791 = vadd.f32 %v4779, %v4787
    %v4792 = vadd.f32 %v4780, %v4788
    %v4793 = vld [vmem:[%s2154] ss:$8 sm:$0x3]
    %v4796 = vcombine.low %v4791, %v4792
    %v4798 = vunpack.c.l.s4 1966171168
    %v4799 = vunpack.c.0.s8 %v4798
    %v4800 = vlaneseq
    %v4801 = vshrl.u32 %v4800, 7
    %v4802 = vsub.s32 %v4799, %v4801
    %v4803 = vrot.slane %v4796, %v4802
    %v4805 = vunpack.c.l.s4 1966171168
    %v4806 = vunpack.c.0.s8 %v4805
    %v4807 = vlaneseq
    %v4808 = vshrl.u32 %v4807, 7
    %v4809 = vsub.s32 %v4806, %v4808
    %v4810 = vrot.slane %v4791, %v4809
    %v4811 = vcombine.low %v4803, %v4810
    %v4813 = vunpack.c.l.s4 1966171168
    %v4814 = vunpack.c.0.s8 %v4813
    %v4815 = vlaneseq
    %v4816 = vshrl.u32 %v4815, 7
    %v4817 = vsub.s32 %v4814, %v4816
    %v4818 = vrot.slane %v4811, %v4817
    %4819 = vrot.lane.b32.xlu0 %v4818, 97
    %v4820 = vpop.permute.xlu0 %4819
    %v4821 = vrot.slane %v4820, 1
    %v4822 = vsel %vm2184, %v4820, %v4821
    %v4824 = vmul.f32 %v4793, %v4822
    %v4825 = vadd.f32 %v4776, %v4824
    %s4826 = sld [smem:[#allocation8 + $0x26]]
    %v4827 = vstv %s4826
    %v4828 = vmul.f32 %v4827, %v2974
    %v4829 = vmul.f32 %v4827, %v2975
    %s4830 = sld [smem:[#allocation8 + $0x57]]
    %v4831 = vstv %s4830
    %v4832 = vmul.f32 %v4831, %v2974
    %v4833 = vmul.f32 %v4831, %v2975
    %v4836 = vrot.slane %v4832, 1
    %v4837 = vrot.slane %v4833, 1
    %v4840 = vadd.f32 %v4828, %v4836
    %v4841 = vadd.f32 %v4829, %v4837
    %v4842 = vld [vmem:[%s2205] ss:$8 sm:$0x3]
    %v4845 = vcombine.low %v4840, %v4841
    %v4847 = vunpack.c.l.s4 1966171168
    %v4848 = vunpack.c.0.s8 %v4847
    %v4849 = vlaneseq
    %v4850 = vshrl.u32 %v4849, 7
    %v4851 = vsub.s32 %v4848, %v4850
    %v4852 = vrot.slane %v4845, %v4851
    %v4854 = vunpack.c.l.s4 1966171168
    %v4855 = vunpack.c.0.s8 %v4854
    %v4856 = vlaneseq
    %v4857 = vshrl.u32 %v4856, 7
    %v4858 = vsub.s32 %v4855, %v4857
    %v4859 = vrot.slane %v4840, %v4858
    %v4860 = vcombine.low %v4852, %v4859
    %v4862 = vunpack.c.l.s4 1966171168
    %v4863 = vunpack.c.0.s8 %v4862
    %v4864 = vlaneseq
    %v4865 = vshrl.u32 %v4864, 7
    %v4866 = vsub.s32 %v4863, %v4865
    %v4867 = vrot.slane %v4860, %v4866
    %4868 = vrot.lane.b32.xlu0 %v4867, 96
    %v4869 = vpop.permute.xlu0 %4868
    %v4870 = vrot.slane %v4869, 1
    %v4871 = vsel %vm2235, %v4869, %v4870
    %v4873 = vmul.f32 %v4842, %v4871
    %v4874 = vadd.f32 %v4825, %v4873
    %s4875 = sld [smem:[#allocation8 + $0x27]]
    %v4876 = vstv %s4875
    %v4877 = vmul.f32 %v4876, %v2974
    %v4878 = vmul.f32 %v4876, %v2975
    %s4879 = sld [smem:[#allocation8 + $0x58]]
    %v4880 = vstv %s4879
    %v4881 = vmul.f32 %v4880, %v2974
    %v4882 = vmul.f32 %v4880, %v2975
    %v4885 = vrot.slane %v4881, 1
    %v4886 = vrot.slane %v4882, 1
    %v4889 = vadd.f32 %v4877, %v4885
    %v4890 = vadd.f32 %v4878, %v4886
    %v4891 = vld [vmem:[%s2256] ss:$8 sm:$0x3]
    %v4894 = vcombine.low %v4889, %v4890
    %v4896 = vunpack.c.l.s4 1966171168
    %v4897 = vunpack.c.0.s8 %v4896
    %v4898 = vlaneseq
    %v4899 = vshrl.u32 %v4898, 7
    %v4900 = vsub.s32 %v4897, %v4899
    %v4901 = vrot.slane %v4894, %v4900
    %v4903 = vunpack.c.l.s4 1966171168
    %v4904 = vunpack.c.0.s8 %v4903
    %v4905 = vlaneseq
    %v4906 = vshrl.u32 %v4905, 7
    %v4907 = vsub.s32 %v4904, %v4906
    %v4908 = vrot.slane %v4889, %v4907
    %v4909 = vcombine.low %v4901, %v4908
    %v4911 = vunpack.c.l.s4 1966171168
    %v4912 = vunpack.c.0.s8 %v4911
    %v4913 = vlaneseq
    %v4914 = vshrl.u32 %v4913, 7
    %v4915 = vsub.s32 %v4912, %v4914
    %v4916 = vrot.slane %v4909, %v4915
    %4917 = vrot.lane.b32.xlu0 %v4916, 95
    %v4918 = vpop.permute.xlu0 %4917
    %v4919 = vrot.slane %v4918, 1
    %v4920 = vsel %vm2286, %v4918, %v4919
    %v4922 = vmul.f32 %v4891, %v4920
    %v4923 = vadd.f32 %v4874, %v4922
    %s4924 = sld [smem:[#allocation8 + $0x28]]
    %v4925 = vstv %s4924
    %v4926 = vmul.f32 %v4925, %v2974
    %v4927 = vmul.f32 %v4925, %v2975
    %s4928 = sld [smem:[#allocation8 + $0x59]]
    %v4929 = vstv %s4928
    %v4930 = vmul.f32 %v4929, %v2974
    %v4931 = vmul.f32 %v4929, %v2975
    %v4934 = vrot.slane %v4930, 1
    %v4935 = vrot.slane %v4931, 1
    %v4938 = vadd.f32 %v4926, %v4934
    %v4939 = vadd.f32 %v4927, %v4935
    %v4940 = vld [vmem:[%s2307] ss:$8 sm:$0x3]
    %v4943 = vcombine.low %v4938, %v4939
    %v4945 = vunpack.c.l.s4 1966171168
    %v4946 = vunpack.c.0.s8 %v4945
    %v4947 = vlaneseq
    %v4948 = vshrl.u32 %v4947, 7
    %v4949 = vsub.s32 %v4946, %v4948
    %v4950 = vrot.slane %v4943, %v4949
    %v4952 = vunpack.c.l.s4 1966171168
    %v4953 = vunpack.c.0.s8 %v4952
    %v4954 = vlaneseq
    %v4955 = vshrl.u32 %v4954, 7
    %v4956 = vsub.s32 %v4953, %v4955
    %v4957 = vrot.slane %v4938, %v4956
    %v4958 = vcombine.low %v4950, %v4957
    %v4960 = vunpack.c.l.s4 1966171168
    %v4961 = vunpack.c.0.s8 %v4960
    %v4962 = vlaneseq
    %v4963 = vshrl.u32 %v4962, 7
    %v4964 = vsub.s32 %v4961, %v4963
    %v4965 = vrot.slane %v4958, %v4964
    %4966 = vrot.lane.b32.xlu0 %v4965, 94
    %v4967 = vpop.permute.xlu0 %4966
    %v4968 = vrot.slane %v4967, 1
    %v4969 = vsel %vm2337, %v4967, %v4968
    %v4971 = vmul.f32 %v4940, %v4969
    %v4972 = vadd.f32 %v4923, %v4971
    %s4973 = sld [smem:[#allocation8 + $0x29]]
    %v4974 = vstv %s4973
    %v4975 = vmul.f32 %v4974, %v2974
    %v4976 = vmul.f32 %v4974, %v2975
    %s4977 = sld [smem:[#allocation8 + $0x5a]]
    %v4978 = vstv %s4977
    %v4979 = vmul.f32 %v4978, %v2974
    %v4980 = vmul.f32 %v4978, %v2975
    %v4983 = vrot.slane %v4979, 1
    %v4984 = vrot.slane %v4980, 1
    %v4987 = vadd.f32 %v4975, %v4983
    %v4988 = vadd.f32 %v4976, %v4984
    %v4989 = vld [vmem:[%s2358] ss:$8 sm:$0x3]
    %v4992 = vcombine.low %v4987, %v4988
    %v4994 = vunpack.c.l.s4 1966171168
    %v4995 = vunpack.c.0.s8 %v4994
    %v4996 = vlaneseq
    %v4997 = vshrl.u32 %v4996, 7
    %v4998 = vsub.s32 %v4995, %v4997
    %v4999 = vrot.slane %v4992, %v4998
    %v5001 = vunpack.c.l.s4 1966171168
    %v5002 = vunpack.c.0.s8 %v5001
    %v5003 = vlaneseq
    %v5004 = vshrl.u32 %v5003, 7
    %v5005 = vsub.s32 %v5002, %v5004
    %v5006 = vrot.slane %v4987, %v5005
    %v5007 = vcombine.low %v4999, %v5006
    %v5009 = vunpack.c.l.s4 1966171168
    %v5010 = vunpack.c.0.s8 %v5009
    %v5011 = vlaneseq
    %v5012 = vshrl.u32 %v5011, 7
    %v5013 = vsub.s32 %v5010, %v5012
    %v5014 = vrot.slane %v5007, %v5013
    %5015 = vrot.lane.b32.xlu0 %v5014, 93
    %v5016 = vpop.permute.xlu0 %5015
    %v5017 = vrot.slane %v5016, 1
    %v5018 = vsel %vm2388, %v5016, %v5017
    %v5020 = vmul.f32 %v4989, %v5018
    %v5021 = vadd.f32 %v4972, %v5020
    %s5022 = sld [smem:[#allocation8 + $0x2a]]
    %v5023 = vstv %s5022
    %v5024 = vmul.f32 %v5023, %v2974
    %v5025 = vmul.f32 %v5023, %v2975
    %s5026 = sld [smem:[#allocation8 + $0x5b]]
    %v5027 = vstv %s5026
    %v5028 = vmul.f32 %v5027, %v2974
    %v5029 = vmul.f32 %v5027, %v2975
    %v5032 = vrot.slane %v5028, 1
    %v5033 = vrot.slane %v5029, 1
    %v5036 = vadd.f32 %v5024, %v5032
    %v5037 = vadd.f32 %v5025, %v5033
    %v5038 = vld [vmem:[%s2409] ss:$8 sm:$0x3]
    %v5041 = vcombine.low %v5036, %v5037
    %v5043 = vunpack.c.l.s4 1966171168
    %v5044 = vunpack.c.0.s8 %v5043
    %v5045 = vlaneseq
    %v5046 = vshrl.u32 %v5045, 7
    %v5047 = vsub.s32 %v5044, %v5046
    %v5048 = vrot.slane %v5041, %v5047
    %v5050 = vunpack.c.l.s4 1966171168
    %v5051 = vunpack.c.0.s8 %v5050
    %v5052 = vlaneseq
    %v5053 = vshrl.u32 %v5052, 7
    %v5054 = vsub.s32 %v5051, %v5053
    %v5055 = vrot.slane %v5036, %v5054
    %v5056 = vcombine.low %v5048, %v5055
    %v5058 = vunpack.c.l.s4 1966171168
    %v5059 = vunpack.c.0.s8 %v5058
    %v5060 = vlaneseq
    %v5061 = vshrl.u32 %v5060, 7
    %v5062 = vsub.s32 %v5059, %v5061
    %v5063 = vrot.slane %v5056, %v5062
    %5064 = vrot.lane.b32.xlu0 %v5063, 83
    %v5065 = vpop.permute.xlu0 %5064
    %v5066 = vrot.slane %v5065, 1
    %v5067 = vsel %vm2439, %v5065, %v5066
    %v5069 = vmul.f32 %v5038, %v5067
    %v5070 = vadd.f32 %v5021, %v5069
    %s5071 = sld [smem:[#allocation8 + $0x2b]]
    %v5072 = vstv %s5071
    %v5073 = vmul.f32 %v5072, %v2974
    %v5074 = vmul.f32 %v5072, %v2975
    %s5075 = sld [smem:[#allocation8 + $0x5c]]
    %v5076 = vstv %s5075
    %v5077 = vmul.f32 %v5076, %v2974
    %v5078 = vmul.f32 %v5076, %v2975
    %v5081 = vrot.slane %v5077, 1
    %v5082 = vrot.slane %v5078, 1
    %v5085 = vadd.f32 %v5073, %v5081
    %v5086 = vadd.f32 %v5074, %v5082
    %v5087 = vld [vmem:[%s2460] ss:$8 sm:$0x3]
    %v5090 = vcombine.low %v5085, %v5086
    %v5092 = vunpack.c.l.s4 1966171168
    %v5093 = vunpack.c.0.s8 %v5092
    %v5094 = vlaneseq
    %v5095 = vshrl.u32 %v5094, 7
    %v5096 = vsub.s32 %v5093, %v5095
    %v5097 = vrot.slane %v5090, %v5096
    %v5099 = vunpack.c.l.s4 1966171168
    %v5100 = vunpack.c.0.s8 %v5099
    %v5101 = vlaneseq
    %v5102 = vshrl.u32 %v5101, 7
    %v5103 = vsub.s32 %v5100, %v5102
    %v5104 = vrot.slane %v5085, %v5103
    %v5105 = vcombine.low %v5097, %v5104
    %v5107 = vunpack.c.l.s4 1966171168
    %v5108 = vunpack.c.0.s8 %v5107
    %v5109 = vlaneseq
    %v5110 = vshrl.u32 %v5109, 7
    %v5111 = vsub.s32 %v5108, %v5110
    %v5112 = vrot.slane %v5105, %v5111
    %5113 = vrot.lane.b32.xlu0 %v5112, 82
    %v5114 = vpop.permute.xlu0 %5113
    %v5115 = vrot.slane %v5114, 1
    %v5116 = vsel %vm2490, %v5114, %v5115
    %v5118 = vmul.f32 %v5087, %v5116
    %v5119 = vadd.f32 %v5070, %v5118
    %s5120 = sld [smem:[#allocation8 + $0x2c]]
    %v5121 = vstv %s5120
    %v5122 = vmul.f32 %v5121, %v2974
    %v5123 = vmul.f32 %v5121, %v2975
    %s5124 = sld [smem:[#allocation8 + $0x5d]]
    %v5125 = vstv %s5124
    %v5126 = vmul.f32 %v5125, %v2974
    %v5127 = vmul.f32 %v5125, %v2975
    %v5130 = vrot.slane %v5126, 1
    %v5131 = vrot.slane %v5127, 1
    %v5134 = vadd.f32 %v5122, %v5130
    %v5135 = vadd.f32 %v5123, %v5131
    %v5136 = vld [vmem:[%s2511] ss:$8 sm:$0x3]
    %v5139 = vcombine.low %v5134, %v5135
    %v5141 = vunpack.c.l.s4 1966171168
    %v5142 = vunpack.c.0.s8 %v5141
    %v5143 = vlaneseq
    %v5144 = vshrl.u32 %v5143, 7
    %v5145 = vsub.s32 %v5142, %v5144
    %v5146 = vrot.slane %v5139, %v5145
    %v5148 = vunpack.c.l.s4 1966171168
    %v5149 = vunpack.c.0.s8 %v5148
    %v5150 = vlaneseq
    %v5151 = vshrl.u32 %v5150, 7
    %v5152 = vsub.s32 %v5149, %v5151
    %v5153 = vrot.slane %v5134, %v5152
    %v5154 = vcombine.low %v5146, %v5153
    %v5156 = vunpack.c.l.s4 1966171168
    %v5157 = vunpack.c.0.s8 %v5156
    %v5158 = vlaneseq
    %v5159 = vshrl.u32 %v5158, 7
    %v5160 = vsub.s32 %v5157, %v5159
    %v5161 = vrot.slane %v5154, %v5160
    %5162 = vrot.lane.b32.xlu0 %v5161, 81
    %v5163 = vpop.permute.xlu0 %5162
    %v5164 = vrot.slane %v5163, 1
    %v5165 = vsel %vm2541, %v5163, %v5164
    %v5167 = vmul.f32 %v5136, %v5165
    %v5168 = vadd.f32 %v5119, %v5167
    %s5169 = sld [smem:[#allocation8 + $0x2d]]
    %v5170 = vstv %s5169
    %v5171 = vmul.f32 %v5170, %v2974
    %v5172 = vmul.f32 %v5170, %v2975
    %s5173 = sld [smem:[#allocation8 + $0x5e]]
    %v5174 = vstv %s5173
    %v5175 = vmul.f32 %v5174, %v2974
    %v5176 = vmul.f32 %v5174, %v2975
    %v5179 = vrot.slane %v5175, 1
    %v5180 = vrot.slane %v5176, 1
    %v5183 = vadd.f32 %v5171, %v5179
    %v5184 = vadd.f32 %v5172, %v5180
    %v5185 = vld [vmem:[%s2562] ss:$8 sm:$0x3]
    %v5188 = vcombine.low %v5183, %v5184
    %v5190 = vunpack.c.l.s4 1966171168
    %v5191 = vunpack.c.0.s8 %v5190
    %v5192 = vlaneseq
    %v5193 = vshrl.u32 %v5192, 7
    %v5194 = vsub.s32 %v5191, %v5193
    %v5195 = vrot.slane %v5188, %v5194
    %v5197 = vunpack.c.l.s4 1966171168
    %v5198 = vunpack.c.0.s8 %v5197
    %v5199 = vlaneseq
    %v5200 = vshrl.u32 %v5199, 7
    %v5201 = vsub.s32 %v5198, %v5200
    %v5202 = vrot.slane %v5183, %v5201
    %v5203 = vcombine.low %v5195, %v5202
    %v5205 = vunpack.c.l.s4 1966171168
    %v5206 = vunpack.c.0.s8 %v5205
    %v5207 = vlaneseq
    %v5208 = vshrl.u32 %v5207, 7
    %v5209 = vsub.s32 %v5206, %v5208
    %v5210 = vrot.slane %v5203, %v5209
    %5211 = vrot.lane.b32.xlu0 %v5210, 80
    %v5212 = vpop.permute.xlu0 %5211
    %v5213 = vrot.slane %v5212, 1
    %v5214 = vsel %vm2592, %v5212, %v5213
    %v5216 = vmul.f32 %v5185, %v5214
    %v5217 = vadd.f32 %v5168, %v5216
    %s5218 = sld [smem:[#allocation8 + $0x2e]]
    %v5219 = vstv %s5218
    %v5220 = vmul.f32 %v5219, %v2974
    %v5221 = vmul.f32 %v5219, %v2975
    %s5222 = sld [smem:[#allocation8 + $0x5f]]
    %v5223 = vstv %s5222
    %v5224 = vmul.f32 %v5223, %v2974
    %v5225 = vmul.f32 %v5223, %v2975
    %v5228 = vrot.slane %v5224, 1
    %v5229 = vrot.slane %v5225, 1
    %v5232 = vadd.f32 %v5220, %v5228
    %v5233 = vadd.f32 %v5221, %v5229
    %v5234 = vld [vmem:[%s2613] ss:$8 sm:$0x3]
    %v5237 = vcombine.low %v5232, %v5233
    %v5239 = vunpack.c.l.s4 1966171168
    %v5240 = vunpack.c.0.s8 %v5239
    %v5241 = vlaneseq
    %v5242 = vshrl.u32 %v5241, 7
    %v5243 = vsub.s32 %v5240, %v5242
    %v5244 = vrot.slane %v5237, %v5243
    %v5246 = vunpack.c.l.s4 1966171168
    %v5247 = vunpack.c.0.s8 %v5246
    %v5248 = vlaneseq
    %v5249 = vshrl.u32 %v5248, 7
    %v5250 = vsub.s32 %v5247, %v5249
    %v5251 = vrot.slane %v5232, %v5250
    %v5252 = vcombine.low %v5244, %v5251
    %v5254 = vunpack.c.l.s4 1966171168
    %v5255 = vunpack.c.0.s8 %v5254
    %v5256 = vlaneseq
    %v5257 = vshrl.u32 %v5256, 7
    %v5258 = vsub.s32 %v5255, %v5257
    %v5259 = vrot.slane %v5252, %v5258
    %5260 = vrot.lane.b32.xlu0 %v5259, 79
    %v5261 = vpop.permute.xlu0 %5260
    %v5262 = vrot.slane %v5261, 1
    %v5263 = vsel %vm2643, %v5261, %v5262
    %v5265 = vmul.f32 %v5234, %v5263
    %v5266 = vadd.f32 %v5217, %v5265
    %s5267 = sld [smem:[#allocation8 + $0x2f]]
    %v5268 = vstv %s5267
    %v5269 = vmul.f32 %v5268, %v2974
    %v5270 = vmul.f32 %v5268, %v2975
    %s5271 = sld [smem:[#allocation8 + $0x60]]
    %v5272 = vstv %s5271
    %v5273 = vmul.f32 %v5272, %v2974
    %v5274 = vmul.f32 %v5272, %v2975
    %v5277 = vrot.slane %v5273, 1
    %v5278 = vrot.slane %v5274, 1
    %v5281 = vadd.f32 %v5269, %v5277
    %v5282 = vadd.f32 %v5270, %v5278
    %v5283 = vld [vmem:[%s2664] ss:$8 sm:$0x3]
    %v5286 = vcombine.low %v5281, %v5282
    %v5288 = vunpack.c.l.s4 1966171168
    %v5289 = vunpack.c.0.s8 %v5288
    %v5290 = vlaneseq
    %v5291 = vshrl.u32 %v5290, 7
    %v5292 = vsub.s32 %v5289, %v5291
    %v5293 = vrot.slane %v5286, %v5292
    %v5295 = vunpack.c.l.s4 1966171168
    %v5296 = vunpack.c.0.s8 %v5295
    %v5297 = vlaneseq
    %v5298 = vshrl.u32 %v5297, 7
    %v5299 = vsub.s32 %v5296, %v5298
    %v5300 = vrot.slane %v5281, %v5299
    %v5301 = vcombine.low %v5293, %v5300
    %v5303 = vunpack.c.l.s4 1966171168
    %v5304 = vunpack.c.0.s8 %v5303
    %v5305 = vlaneseq
    %v5306 = vshrl.u32 %v5305, 7
    %v5307 = vsub.s32 %v5304, %v5306
    %v5308 = vrot.slane %v5301, %v5307
    %5309 = vrot.lane.b32.xlu0 %v5308, 78
    %v5310 = vpop.permute.xlu0 %5309
    %v5311 = vrot.slane %v5310, 1
    %v5312 = vsel %vm2694, %v5310, %v5311
    %v5314 = vmul.f32 %v5283, %v5312
    %v5315 = vadd.f32 %v5266, %v5314
    %s5316 = sld [smem:[#allocation8 + $0x30]]
    %v5317 = vstv %s5316
    %v5318 = vmul.f32 %v5317, %v2974
    %v5319 = vmul.f32 %v5317, %v2975
    %s5320 = sld [smem:[#allocation8 + $0x61]]
    %v5321 = vstv %s5320
    %v5322 = vmul.f32 %v5321, %v2974
    %v5323 = vmul.f32 %v5321, %v2975
    %v5326 = vrot.slane %v5322, 1
    %v5327 = vrot.slane %v5323, 1
    %v5330 = vadd.f32 %v5318, %v5326
    %v5331 = vadd.f32 %v5319, %v5327
    %v5332 = vld [vmem:[%s2715] ss:$8 sm:$0x3]
    %v5335 = vcombine.low %v5330, %v5331
    %v5337 = vunpack.c.l.s4 1966171168
    %v5338 = vunpack.c.0.s8 %v5337
    %v5339 = vlaneseq
    %v5340 = vshrl.u32 %v5339, 7
    %v5341 = vsub.s32 %v5338, %v5340
    %v5342 = vrot.slane %v5335, %v5341
    %v5344 = vunpack.c.l.s4 1966171168
    %v5345 = vunpack.c.0.s8 %v5344
    %v5346 = vlaneseq
    %v5347 = vshrl.u32 %v5346, 7
    %v5348 = vsub.s32 %v5345, %v5347
    %v5349 = vrot.slane %v5330, %v5348
    %v5350 = vcombine.low %v5342, %v5349
    %v5352 = vunpack.c.l.s4 1966171168
    %v5353 = vunpack.c.0.s8 %v5352
    %v5354 = vlaneseq
    %v5355 = vshrl.u32 %v5354, 7
    %v5356 = vsub.s32 %v5353, %v5355
    %v5357 = vrot.slane %v5350, %v5356
    %5358 = vrot.lane.b32.xlu0 %v5357, 77
    %v5359 = vpop.permute.xlu0 %5358
    %v5360 = vrot.slane %v5359, 1
    %v5361 = vsel %vm2745, %v5359, %v5360
    %v5363 = vmul.f32 %v5332, %v5361
    %v5364 = vadd.f32 %v5315, %v5363
    %v5365 = vxor.u32 %v5364, 2147483648
    %v5366 = vmul.f32 %v5365, 1.442695
    %v5367 = vpow.pop %v5366
    %v5368 = vadd.f32 %v5367, 1.0
    %v5369 = vrcp.pop %v5368
    %v5370 = vmul.f32 1.0, %v5369
    %v5372 = vlaneseq
    %v5373 = vshrl.u32 %v5372, 7
    %v5374 = vsub.s32 0, %v5373
    %v5375 = vrot.slane %v5370, %v5374
    %v5376 = vlaneseq
    %v5377 = vshrl.u32 %v5376, 7
    %v5378 = vsub.s32 1, %v5377
    %v5379 = vrot.slane %v5370, %v5378
    %v5382 = vmul.f32 %v2928, %v5375
    %v5383 = vmul.f32 %v2929, %v5379
    %v5384 = vmul.f32 %v2930, %v5375
    %v5385 = vmul.f32 %v2931, %v5379
    %v5386 = vmul.f32 %v2932, %v5375
    %v5387 = vmul.f32 %v2933, %v5379
    %v5388 = vmul.f32 %v2934, %v5375
    %v5389 = vmul.f32 %v2935, %v5379
    %s5390 = scalar_lea.vmem [#allocation9], 64
    %5391 = vst [vmem:[%s5390] sm:$0xff] %v5382
    %5392 = vst [vmem:[%s5390 + $0x8] sm:$0xff] %v5383
    %5393 = vst [vmem:[%s5390 + $0x10] sm:$0xff] %v5384
    %5394 = vst [vmem:[%s5390 + $0x18] sm:$0xff] %v5385
    %5395 = vst [vmem:[%s5390 + $0x20] sm:$0xff] %v5386
    %5396 = vst [vmem:[%s5390 + $0x28] sm:$0xff] %v5387
    %5397 = vst [vmem:[%s5390 + $0x30] sm:$0xff] %v5388
    %5398 = vst [vmem:[%s5390 + $0x38] sm:$0xff] %v5389
    // Predicated region
    $region34: #{tpu_custom_call.1} parent=1 // pred_check
      _
    $region35: #{tpu_custom_call.1} parent=1 // pred_check_branch
      %5400 = sbr.rel (0) target = $region37
    $region36: #{tpu_custom_call.1} parent=1 // pred_region
      %s5402 = ssub.s32 2048, 2048
      %5403 = vsyncadd [#allocation4], %s5402
      %s5404 = sshll.u32 [#allocation9], 4
      %s5405 = int_to_ptr.vmem [resolvable:$true] %s5404
      %5410 = dma.vmem_to_hbm [thread:$0]  %s5405, 2048, %s5, [#allocation4], 256, 256, 16
    $region37: #{tpu_custom_call.1} parent=1 // pred_fallthru
      _
    // Predicated region
    $region38: #{tpu_custom_call.1} parent=1 // pred_check
      _
    $region39: #{tpu_custom_call.1} parent=1 // pred_check_branch
      %5412 = sbr.rel (0) target = $region41
    $region40: #{tpu_custom_call.1} parent=1 // pred_region
      %5413 = dma.done [#allocation4], 2048
    $region41: #{tpu_custom_call.1} parent=1 // pred_fallthru
      _
    %5414 = vsyncpa [#allocation3], 1
    %5415 = vsyncpa [#allocation7], 1
    %5416 = vsyncpa [#allocation4], 1
    %5417 = vsyncpa [#allocation5], 1

</llo_original>
